<compile_context>
chip_gen: v6e
topology: v6e:2x2x1
jax: 0.10.0
libtpu: 0.0.40
codegen_flags: <defaults>
</compile_context>

<pallas_src>
import functools

import jax
import jax.numpy as jnp
from jax.experimental import pallas as pl
from jax.experimental.pallas import tpu as pltpu

# ----------------------------- config ---------------------------------------
D_MODEL = 32
NUM_HEADS = 4
D_HEAD = D_MODEL // NUM_HEADS
D_FF = 4 * D_MODEL
NUM_LAYERS = 2
VOCAB = 16
MAX_POS = 64
LN_EPS = 1e-5                      # nn.LayerNorm default
NEG_MIN = float(jnp.finfo(jnp.float32).min)


# ------------------------ shared math ----------------------------------------
def _layer_norm(x, g, b):
    mu = jnp.mean(x, axis=-1, keepdims=True)
    var = jnp.mean((x - mu) ** 2, axis=-1, keepdims=True)
    return (x - mu) * jax.lax.rsqrt(var + LN_EPS) * g + b


# ------------------------------- Pallas kernel --------------------------------
def encoder_kernel(ids_ref, mask_ref, table_ref, emb_ln_ref,
                   wqkv_ref, bqkv_ref, wout_ref, bout_ref,
                   wfc1_ref, bfc1_ref, wfc2_ref, bfc2_ref, ln_ref,
                   o_ref):
    n_b = ids_ref.shape[0]                  # batch elements in this invocation (B or 1)
    seq = ids_ref.shape[1]                  # T
    vocab = table_ref.shape[0]
    n_layers = wqkv_ref.shape[0]

    # ---- fused token+position embedding: one_hot(ids) @ (tok_table + pos_table) ----
    table = table_ref[...]                                     # (V, D)
    emb = emb_ln_ref[...]                                      # (2, D)
    iota_v = jax.lax.broadcasted_iota(jnp.int32, (seq, vocab), 1)
    rows = []
    for b in range(n_b):
        onehot = (iota_v == ids_ref[b]).astype(jnp.float32)    # (T, V), ids_ref[b] is (T, 1)
        rows.append(jnp.dot(onehot, table, preferred_element_type=jnp.float32))
    x = jnp.concatenate(rows, axis=0) if n_b > 1 else rows[0]  # folded (N, D), N = n_b*T

    # embedding LayerNorm on the folded slab (F.dropout p=0.1 is identity in eval mode)
    h = _layer_norm(x, emb[0:1, :], emb[1:2, :])

    # additive key-padding bias per batch (== masked_fill(mask != 0, -1e9) post-softmax),
    # hoisted out of the layer / head loops.
    biases = []
    for b in range(n_b):
        inv = 1.0 - mask_ref[b]                                # (1, T), torch _expand_mask
        biases.append(jnp.where(inv != 0.0, jnp.float32(-1e9), jnp.float32(0.0)))

    for l in range(n_layers):
        lnp = ln_ref[l]                                        # (2, D)
        g, beta = lnp[0:1, :], lnp[1:2, :]

        # fused q|k|v projection over the whole (N, D) slab; 1/sqrt(d_model) pre-folded
        # into the q columns of wqkv at pack time.
        qkv = jnp.dot(h, wqkv_ref[l], preferred_element_type=jnp.float32) + bqkv_ref[l]

        wo = wout_ref[l]                                       # (D, D), loaded near use
        attn_rows = []
        for b in range(n_b):                                   # scores mix tokens per batch only
            qkv_b = qkv[b * seq:(b + 1) * seq, :]              # (T, 3D)
            bias_b = biases[b]                                 # (1, T)
            acc = None
            for hh in range(NUM_HEADS):
                lo = hh * D_HEAD
                q_h = qkv_b[:, lo:lo + D_HEAD]
                k_h = qkv_b[:, D_MODEL + lo:D_MODEL + lo + D_HEAD]
                v_h = qkv_b[:, 2 * D_MODEL + lo:2 * D_MODEL + lo + D_HEAD]
                s = jax.lax.dot_general(q_h, k_h, (((1,), (1,)), ((), ())),
                                        preferred_element_type=jnp.float32) + bias_b
                m = jnp.max(s, axis=-1, keepdims=True)
                e = jnp.exp(s - m)
                p = e * pl.reciprocal(jnp.sum(e, axis=-1, keepdims=True), approx=True)
                ctx = jnp.dot(p, v_h, preferred_element_type=jnp.float32)      # (T, d_head)
                # per-head accumulation against a sublane-aligned row slice of W_out
                part = jnp.dot(ctx, wo[lo:lo + D_HEAD, :],
                               preferred_element_type=jnp.float32)             # (T, D)
                acc = part if acc is None else acc + part
            attn_rows.append(acc)
        attn = (jnp.concatenate(attn_rows, axis=0) if n_b > 1 else attn_rows[0]) + bout_ref[l]

        a = _layer_norm(h + attn, g, beta)                      # self_attn_layer_norm
        ff = jnp.maximum(jnp.dot(a, wfc1_ref[l], preferred_element_type=jnp.float32)
                         + bfc1_ref[l], 0.0)
        ff = jnp.dot(ff, wfc2_ref[l], preferred_element_type=jnp.float32) + bfc2_ref[l]
        # torch quirk: self_attn_layer_norm reused, residual from the *layer input* h.
        h = _layer_norm(h + ff, g, beta)

    for b in range(n_b):
        o_ref[b] = h[b * seq:(b + 1) * seq, :]


# ----------------------------- wrapper / glue ---------------------------------
def expand_mask(mask, tgt_len):
    """torch _expand_mask with the broadcast head dim dropped: (B, S) -> (B, T, S)."""
    B, S = mask.shape
    expanded = jnp.broadcast_to(mask.astype(jnp.float32)[:, None, :], (B, tgt_len, S))
    inverted = 1.0 - expanded
    return jnp.where(inverted != 0.0, jnp.float32(NEG_MIN), inverted)


def pack_params(params):
    """Done ONCE at init (outside the per-call hot path):
    stack per-layer weights along (NUM_LAYERS, ...), fuse q|k|v, fold the 1/sqrt(d_model)
    score scale into Wq/bq, and pre-sum the token + position tables (positions are
    indexed by token ids per the spec quirk, and ids < VOCAB)."""
    layers = params["layers"]
    scale = 1.0 / jnp.sqrt(jnp.float32(D_MODEL))
    stack = lambda f: jnp.stack([f(lp) for lp in layers])
    w_qkv = stack(lambda lp: jnp.concatenate(
        [lp["wq"] * scale, lp["wk"], lp["wv"]], axis=1))                        # (L,H,3H)
    b_qkv = stack(lambda lp: jnp.concatenate(
        [lp["bq"] * scale, lp["bk"], lp["bv"]])[None, :])                       # (L,1,3H)
    w_out = stack(lambda lp: lp["wo"])                                          # (L,H,H)
    b_out = stack(lambda lp: lp["bo"][None, :])                                 # (L,1,H)
    w_fc1 = stack(lambda lp: lp["fc1_w"])                                       # (L,H,4H)
    b_fc1 = stack(lambda lp: lp["fc1_b"][None, :])                              # (L,1,4H)
    w_fc2 = stack(lambda lp: lp["fc2_w"])                                       # (L,4H,H)
    b_fc2 = stack(lambda lp: lp["fc2_b"][None, :])                              # (L,1,H)
    ln = stack(lambda lp: jnp.stack([lp["ln_g"], lp["ln_b"]]))                  # (L,2,H)
    emb_ln = jnp.stack([params["emb_ln_g"], params["emb_ln_b"]])                # (2,H)
    table = params["embed_tokens"] + params["embed_positions"][:VOCAB, :]       # (V,H)
    return (table, emb_ln, w_qkv, b_qkv, w_out, b_out, w_fc1, b_fc1, w_fc2, b_fc2, ln)


def _cost_estimate(B, T):
    N = B * T
    flops = 2 * N * VOCAB * D_MODEL
    flops += 2 * NUM_LAYERS * N * (D_MODEL * 3 * D_MODEL + D_MODEL * D_MODEL
                                   + D_MODEL * D_FF + D_FF * D_MODEL)
    flops += 2 * NUM_LAYERS * B * NUM_HEADS * 2 * T * T * D_HEAD
    transcendentals = NUM_LAYERS * B * NUM_HEADS * T * T
    weights_bytes = 4 * (VOCAB * D_MODEL + 2 * D_MODEL + NUM_LAYERS * (
        D_MODEL * 3 * D_MODEL + D_MODEL * D_MODEL + 2 * D_MODEL * D_FF + 10 * D_MODEL))
    bytes_accessed = weights_bytes + 4 * (N * (1 + T) + N * D_MODEL)
    return pl.CostEstimate(flops=int(flops), transcendentals=int(transcendentals),
                           bytes_accessed=int(bytes_accessed))


@functools.partial(jax.jit, static_argnames=("batch_parallel",))
def encoder_forward(packed, enc_ids, enc_mask, *, batch_parallel=False):
    B, T = enc_ids.shape
    ids = enc_ids.astype(jnp.int32).reshape(B, T, 1)       # column layout for one_hot
    mask = enc_mask.astype(jnp.float32).reshape(B, 1, T)   # key-padding row per batch
    out_shape = jax.ShapeDtypeStruct((B, T, D_MODEL), jnp.float32)
    ce = _cost_estimate(B, T)

    if not batch_parallel:
        # Single-TC chips (v5e/v6e): grid-less single invocation — no per-step overhead.
        return pl.pallas_call(encoder_kernel, out_shape=out_shape,
                              cost_estimate=ce)(ids, mask, *packed)

    # Dual-TC chips (v7x): split the batch across TensorCores with a parallel grid.
    def _full(a):
        return pl.BlockSpec(a.shape, lambda b: (0,) * a.ndim)

    in_specs = ([pl.BlockSpec((1, T, 1), lambda b: (b, 0, 0)),
                 pl.BlockSpec((1, 1, T), lambda b: (b, 0, 0))]
                + [_full(a) for a in packed])
    out_specs = pl.BlockSpec((1, T, D_MODEL), lambda b: (b, 0, 0))
    return pl.pallas_call(
        encoder_kernel,
        out_shape=out_shape,
        grid=(B,),
        in_specs=in_specs,
        out_specs=out_specs,
        cost_estimate=ce,
        compiler_params=pltpu.CompilerParams(dimension_semantics=("parallel",)),
    )(ids, mask, *packed)


def _dual_core_tpu():
    # TODO(synk): device_kind sniffing is a heuristic; pltpu.get_tpu_info() field names
    #             for TC count are not stable enough to rely on here.
    try:
        kind = jax.devices()[0].device_kind.lower()
    except Exception:
        return False
    return ("v7" in kind) or ("7x" in kind)


# ------------------------------ parameter init --------------------------------
def init_params(key):
    ks = jax.random.split(key, 4 + NUM_LAYERS)

    def lin(k, din, dout):
        kw, kb = jax.random.split(k)
        w = jax.random.normal(kw, (din, dout), jnp.float32) * 0.05   # stored (in, out)
        b = jax.random.normal(kb, (dout,), jnp.float32) * 0.05
        return w, b

    params = {
        "embed_tokens": jax.random.normal(ks[0], (VOCAB, D_MODEL), jnp.float32) * 0.02,
        "embed_positions": jax.random.normal(ks[1], (MAX_POS, D_MODEL), jnp.float32) * 0.02,
        "emb_ln_g": 1.0 + 0.1 * jax.random.normal(ks[2], (D_MODEL,), jnp.float32),
        "emb_ln_b": 0.1 * jax.random.normal(ks[3], (D_MODEL,), jnp.float32),
        "layers": [],
    }
    for li in range(NUM_LAYERS):
        lk = jax.random.split(ks[4 + li], 8)
        lp = {}
        lp["wq"], lp["bq"] = lin(lk[0], D_MODEL, D_MODEL)
        lp["wk"], lp["bk"] = lin(lk[1], D_MODEL, D_MODEL)
        lp["wv"], lp["bv"] = lin(lk[2], D_MODEL, D_MODEL)
        lp["wo"], lp["bo"] = lin(lk[3], D_MODEL, D_MODEL)
        lp["fc1_w"], lp["fc1_b"] = lin(lk[4], D_MODEL, D_FF)
        lp["fc2_w"], lp["fc2_b"] = lin(lk[5], D_FF, D_MODEL)
        lp["ln_g"] = 1.0 + 0.1 * jax.random.normal(lk[6], (D_MODEL,), jnp.float32)
        lp["ln_b"] = 0.1 * jax.random.normal(lk[7], (D_MODEL,), jnp.float32)
        # final_layer_norm exists in the torch module but is never used in forward.
        params["layers"].append(lp)
    return params


# ------------------------------ pure-JAX reference -----------------------------
def ref_mha(x, mask, lp):
    B, T, H = x.shape
    q = x @ lp["wq"] + lp["bq"]
    k = x @ lp["wk"] + lp["bk"]
    v = x @ lp["wv"] + lp["bv"]
    split = lambda t: t.reshape(B, T, NUM_HEADS, D_HEAD).transpose(0, 2, 1, 3)
    qs, ks, vs = split(q), split(k), split(v)
    s = jnp.einsum("bhtd,bhsd->bhts", qs, ks) / jnp.sqrt(jnp.float32(D_MODEL))
    s = jnp.where(mask[:, None, :, :] != 0.0, jnp.float32(-1e9), s)
    p = jax.nn.softmax(s, axis=-1)
    ctx = jnp.einsum("bhts,bhsd->bhtd", p, vs).transpose(0, 2, 1, 3).reshape(B, T, H)
    return ctx @ lp["wo"] + lp["bo"]


def ref_forward(params, enc_ids, enc_mask):
    B, T = enc_ids.shape
    tok = jnp.take(params["embed_tokens"], enc_ids, axis=0)
    pos = jnp.take(params["embed_positions"], enc_ids, axis=0)   # spec quirk: same ids
    h = _layer_norm(tok + pos, params["emb_ln_g"], params["emb_ln_b"])
    mask = expand_mask(enc_mask, T)
    for lp in params["layers"]:
        attn = ref_mha(h, mask, lp)
        a = _layer_norm(h + attn, lp["ln_g"], lp["ln_b"])
        ff = jnp.maximum(a @ lp["fc1_w"] + lp["fc1_b"], 0.0) @ lp["fc2_w"] + lp["fc2_b"]
        h = _layer_norm(h + ff, lp["ln_g"], lp["ln_b"])          # same quirks as the kernel
    return h


# ----------------------------------- main --------------------------------------
if __name__ == "__main__":
    B, E_L = 2, 12
    key = jax.random.PRNGKey(0)
    k_par, k_ids = jax.random.split(key)

    params = init_params(k_par)
    packed = pack_params(params)          # packed ONCE, outside the per-call hot path
    enc_ids = jax.random.randint(k_ids, (B, E_L), 0, VOCAB, dtype=jnp.int32)
    # 1 = real token, 0 = padding
    enc_mask = jnp.array([[1] * 10 + [0] * 2,
                          [1] * 12], jnp.float32)

    use_parallel = _dual_core_tpu()
    if use_parallel:
        try:
            out = encoder_forward(packed, enc_ids, enc_mask, batch_parallel=True)
        except Exception:
            out = encoder_forward(packed, enc_ids, enc_mask, batch_parallel=False)
    else:
        out = encoder_forward(packed, enc_ids, enc_mask, batch_parallel=False)
    out = jax.block_until_ready(out)
    ref = jax.block_until_ready(ref_forward(params, enc_ids, enc_mask))

    assert out.shape == (B, E_L, D_MODEL)
    assert bool(jnp.all(jnp.isfinite(out)))
    assert bool(jnp.allclose(out, ref, rtol=2e-2, atol=2e-2)), "mismatch vs pure-JAX reference"

    print("KERNEL_OK")
</pallas_src>

<mosaic_0001>
module attributes {stable_mosaic.version = 11 : i64} {
  func.func @encoder_kernel(%arg0: memref<2x12x1xi32, #tpu.memory_space<vmem>>, %arg1: memref<2x1x12xf32, #tpu.memory_space<vmem>>, %arg2: memref<16x32xf32, #tpu.memory_space<vmem>>, %arg3: memref<2x32xf32, #tpu.memory_space<vmem>>, %arg4: memref<2x32x96xf32, #tpu.memory_space<vmem>>, %arg5: memref<2x1x96xf32, #tpu.memory_space<vmem>>, %arg6: memref<2x32x32xf32, #tpu.memory_space<vmem>>, %arg7: memref<2x1x32xf32, #tpu.memory_space<vmem>>, %arg8: memref<2x32x128xf32, #tpu.memory_space<vmem>>, %arg9: memref<2x1x128xf32, #tpu.memory_space<vmem>>, %arg10: memref<2x128x32xf32, #tpu.memory_space<vmem>>, %arg11: memref<2x1x32xf32, #tpu.memory_space<vmem>>, %arg12: memref<2x2x32xf32, #tpu.memory_space<vmem>>, %arg13: memref<2x12x32xf32, #tpu.memory_space<vmem>>) attributes {dimension_semantics = [], scalar_prefetch = 0 : i64, scratch_operands = 0 : i64, tpu.core_type = #tpu.core_type<tc>} {
    %c0 = arith.constant 0 : index
    %c0_0 = arith.constant 0 : index
    %0 = vector.load %arg2[%c0, %c0_0] : memref<16x32xf32, #tpu.memory_space<vmem>>, vector<16x32xf32>
    %c0_1 = arith.constant 0 : index
    %c0_2 = arith.constant 0 : index
    %1 = vector.load %arg3[%c0_1, %c0_2] : memref<2x32xf32, #tpu.memory_space<vmem>>, vector<2x32xf32>
    %2 = tpu.iota {dimensions = array<i32: 1>} : vector<12x16xi32>
    %c0_3 = arith.constant 0 : index
    %c0_4 = arith.constant 0 : index
    %c0_5 = arith.constant 0 : index
    %3 = vector.load %arg0[%c0_3, %c0_4, %c0_5] : memref<2x12x1xi32, #tpu.memory_space<vmem>>, vector<1x12x1xi32>
    %4 = vector.shape_cast %3 : vector<1x12x1xi32> to vector<12x1xi32>
    %5 = vector.broadcast %4 : vector<12x1xi32> to vector<12x16xi32>
    %6 = arith.cmpi eq, %2, %5 : vector<12x16xi32>
    %7 = arith.extui %6 : vector<12x16xi1> to vector<12x16xi32>
    %8 = arith.sitofp %7 : vector<12x16xi32> to vector<12x16xf32>
    %cst = arith.constant dense<0.000000e+00> : vector<12x32xf32>
    %9 = tpu.matmul %8, %0, %cst {dimension_numbers = #tpu.dot_dimension_numbers<[1], [0], [0], [1], [0, 0, 1, 1], [], []>} : vector<12x16xf32>, vector<16x32xf32>, vector<12x32xf32> -> vector<12x32xf32>
    %c1 = arith.constant 1 : index
    %c0_6 = arith.constant 0 : index
    %c0_7 = arith.constant 0 : index
    %10 = vector.load %arg0[%c1, %c0_6, %c0_7] : memref<2x12x1xi32, #tpu.memory_space<vmem>>, vector<1x12x1xi32>
    %11 = vector.shape_cast %10 : vector<1x12x1xi32> to vector<12x1xi32>
    %12 = vector.broadcast %11 : vector<12x1xi32> to vector<12x16xi32>
    %13 = arith.cmpi eq, %2, %12 : vector<12x16xi32>
    %14 = arith.extui %13 : vector<12x16xi1> to vector<12x16xi32>
    %15 = arith.sitofp %14 : vector<12x16xi32> to vector<12x16xf32>
    %cst_8 = arith.constant dense<0.000000e+00> : vector<12x32xf32>
    %16 = tpu.matmul %15, %0, %cst_8 {dimension_numbers = #tpu.dot_dimension_numbers<[1], [0], [0], [1], [0, 0, 1, 1], [], []>} : vector<12x16xf32>, vector<16x32xf32>, vector<12x32xf32> -> vector<12x32xf32>
    %17 = tpu.concatenate %9, %16 in 0 : vector<12x32xf32>, vector<12x32xf32> -> vector<24x32xf32>
    %18 = vector.extract_strided_slice %1 {offsets = [0, 0], sizes = [1, 32], strides = [1, 1]} : vector<2x32xf32> to vector<1x32xf32>
    %19 = vector.extract_strided_slice %1 {offsets = [1, 0], sizes = [1, 32], strides = [1, 1]} : vector<2x32xf32> to vector<1x32xf32>
    %cst_9 = arith.constant dense<0.000000e+00> : vector<24xf32>
    %20 = vector.multi_reduction <add>, %17, %cst_9 [1] : vector<24x32xf32> to vector<24xf32>
    %21 = vector.shape_cast %20 : vector<24xf32> to vector<24x1xf32>
    %cst_10 = arith.constant 3.200000e+01 : f32
    %22 = vector.broadcast %cst_10 : f32 to vector<24x1xf32>
    %23 = arith.divf %21, %22 : vector<24x1xf32>
    %24 = vector.broadcast %23 : vector<24x1xf32> to vector<24x32xf32>
    %25 = arith.subf %17, %24 : vector<24x32xf32>
    %26 = arith.mulf %25, %25 : vector<24x32xf32>
    %cst_11 = arith.constant dense<0.000000e+00> : vector<24xf32>
    %27 = vector.multi_reduction <add>, %26, %cst_11 [1] : vector<24x32xf32> to vector<24xf32>
    %28 = vector.shape_cast %27 : vector<24xf32> to vector<24x1xf32>
    %cst_12 = arith.constant 3.200000e+01 : f32
    %29 = vector.broadcast %cst_12 : f32 to vector<24x1xf32>
    %30 = arith.divf %28, %29 : vector<24x1xf32>
    %31 = vector.broadcast %23 : vector<24x1xf32> to vector<24x32xf32>
    %32 = arith.subf %17, %31 : vector<24x32xf32>
    %cst_13 = arith.constant 9.99999974E-6 : f32
    %33 = vector.broadcast %cst_13 : f32 to vector<24x1xf32>
    %34 = arith.addf %30, %33 : vector<24x1xf32>
    %35 = math.rsqrt %34 : vector<24x1xf32>
    %36 = vector.broadcast %35 : vector<24x1xf32> to vector<24x32xf32>
    %37 = arith.mulf %32, %36 : vector<24x32xf32>
    %38 = vector.broadcast %18 : vector<1x32xf32> to vector<24x32xf32>
    %39 = arith.mulf %37, %38 : vector<24x32xf32>
    %40 = vector.broadcast %19 : vector<1x32xf32> to vector<24x32xf32>
    %41 = arith.addf %39, %40 : vector<24x32xf32>
    %c0_14 = arith.constant 0 : index
    %c0_15 = arith.constant 0 : index
    %c0_16 = arith.constant 0 : index
    %42 = vector.load %arg1[%c0_14, %c0_15, %c0_16] : memref<2x1x12xf32, #tpu.memory_space<vmem>>, vector<1x1x12xf32>
    %43 = vector.shape_cast %42 : vector<1x1x12xf32> to vector<1x12xf32>
    %cst_17 = arith.constant 1.000000e+00 : f32
    %44 = vector.broadcast %cst_17 : f32 to vector<1x12xf32>
    %45 = arith.subf %44, %43 : vector<1x12xf32>
    %cst_18 = arith.constant 0.000000e+00 : f32
    %46 = vector.broadcast %cst_18 : f32 to vector<1x12xf32>
    %47 = arith.cmpf one, %45, %46 : vector<1x12xf32>
    %cst_19 = arith.constant -1.000000e+09 : f32
    %cst_20 = arith.constant 0.000000e+00 : f32
    %48 = vector.broadcast %cst_19 : f32 to vector<1x12xf32>
    %49 = vector.broadcast %cst_20 : f32 to vector<1x12xf32>
    %50 = arith.select %47, %48, %49 : vector<1x12xi1>, vector<1x12xf32>
    %c1_21 = arith.constant 1 : index
    %c0_22 = arith.constant 0 : index
    %c0_23 = arith.constant 0 : index
    %51 = vector.load %arg1[%c1_21, %c0_22, %c0_23] : memref<2x1x12xf32, #tpu.memory_space<vmem>>, vector<1x1x12xf32>
    %52 = vector.shape_cast %51 : vector<1x1x12xf32> to vector<1x12xf32>
    %cst_24 = arith.constant 1.000000e+00 : f32
    %53 = vector.broadcast %cst_24 : f32 to vector<1x12xf32>
    %54 = arith.subf %53, %52 : vector<1x12xf32>
    %cst_25 = arith.constant 0.000000e+00 : f32
    %55 = vector.broadcast %cst_25 : f32 to vector<1x12xf32>
    %56 = arith.cmpf one, %54, %55 : vector<1x12xf32>
    %cst_26 = arith.constant -1.000000e+09 : f32
    %cst_27 = arith.constant 0.000000e+00 : f32
    %57 = vector.broadcast %cst_26 : f32 to vector<1x12xf32>
    %58 = vector.broadcast %cst_27 : f32 to vector<1x12xf32>
    %59 = arith.select %56, %57, %58 : vector<1x12xi1>, vector<1x12xf32>
    %c0_28 = arith.constant 0 : index
    %c0_29 = arith.constant 0 : index
    %c0_30 = arith.constant 0 : index
    %60 = vector.load %arg12[%c0_28, %c0_29, %c0_30] : memref<2x2x32xf32, #tpu.memory_space<vmem>>, vector<1x2x32xf32>
    %61 = vector.shape_cast %60 : vector<1x2x32xf32> to vector<2x32xf32>
    %62 = vector.extract_strided_slice %61 {offsets = [0, 0], sizes = [1, 32], strides = [1, 1]} : vector<2x32xf32> to vector<1x32xf32>
    %63 = vector.extract_strided_slice %61 {offsets = [1, 0], sizes = [1, 32], strides = [1, 1]} : vector<2x32xf32> to vector<1x32xf32>
    %c0_31 = arith.constant 0 : index
    %c0_32 = arith.constant 0 : index
    %c0_33 = arith.constant 0 : index
    %64 = vector.load %arg4[%c0_31, %c0_32, %c0_33] : memref<2x32x96xf32, #tpu.memory_space<vmem>>, vector<1x32x96xf32>
    %65 = vector.shape_cast %64 : vector<1x32x96xf32> to vector<32x96xf32>
    %cst_34 = arith.constant dense<0.000000e+00> : vector<24x96xf32>
    %66 = tpu.matmul %41, %65, %cst_34 {dimension_numbers = #tpu.dot_dimension_numbers<[1], [0], [0], [1], [0, 0, 1, 1], [], []>} : vector<24x32xf32>, vector<32x96xf32>, vector<24x96xf32> -> vector<24x96xf32>
    %c0_35 = arith.constant 0 : index
    %c0_36 = arith.constant 0 : index
    %c0_37 = arith.constant 0 : index
    %67 = vector.load %arg5[%c0_35, %c0_36, %c0_37] : memref<2x1x96xf32, #tpu.memory_space<vmem>>, vector<1x1x96xf32>
    %68 = vector.shape_cast %67 : vector<1x1x96xf32> to vector<1x96xf32>
    %69 = vector.broadcast %68 : vector<1x96xf32> to vector<24x96xf32>
    %70 = arith.addf %66, %69 : vector<24x96xf32>
    %c0_38 = arith.constant 0 : index
    %c0_39 = arith.constant 0 : index
    %c0_40 = arith.constant 0 : index
    %71 = vector.load %arg6[%c0_38, %c0_39, %c0_40] : memref<2x32x32xf32, #tpu.memory_space<vmem>>, vector<1x32x32xf32>
    %72 = vector.shape_cast %71 : vector<1x32x32xf32> to vector<32x32xf32>
    %73 = vector.extract_strided_slice %70 {offsets = [0, 0], sizes = [12, 96], strides = [1, 1]} : vector<24x96xf32> to vector<12x96xf32>
    %74 = vector.extract_strided_slice %73 {offsets = [0, 0], sizes = [12, 8], strides = [1, 1]} : vector<12x96xf32> to vector<12x8xf32>
    %75 = vector.extract_strided_slice %73 {offsets = [0, 32], sizes = [12, 8], strides = [1, 1]} : vector<12x96xf32> to vector<12x8xf32>
    %76 = vector.extract_strided_slice %73 {offsets = [0, 64], sizes = [12, 8], strides = [1, 1]} : vector<12x96xf32> to vector<12x8xf32>
    %cst_41 = arith.constant dense<0.000000e+00> : vector<12x12xf32>
    %77 = tpu.matmul %74, %75, %cst_41 {dimension_numbers = #tpu.dot_dimension_numbers<[1], [1], [0], [0], [0, 0, 1, 0], [], []>} : vector<12x8xf32>, vector<12x8xf32>, vector<12x12xf32> -> vector<12x12xf32>
    %78 = vector.broadcast %50 : vector<1x12xf32> to vector<12x12xf32>
    %79 = arith.addf %77, %78 : vector<12x12xf32>
    %cst_42 = arith.constant dense<0xFF800000> : vector<12xf32>
    %80 = vector.multi_reduction <maximumf>, %79, %cst_42 [1] : vector<12x12xf32> to vector<12xf32>
    %81 = vector.shape_cast %80 : vector<12xf32> to vector<12x1xf32>
    %82 = vector.broadcast %81 : vector<12x1xf32> to vector<12x12xf32>
    %83 = arith.subf %79, %82 : vector<12x12xf32>
    %84 = math.exp %83 : vector<12x12xf32>
    %cst_43 = arith.constant dense<0.000000e+00> : vector<12xf32>
    %85 = vector.multi_reduction <add>, %84, %cst_43 [1] : vector<12x12xf32> to vector<12xf32>
    %86 = vector.shape_cast %85 : vector<12xf32> to vector<12x1xf32>
    %87 = tpu.reciprocal %86 {approx = true} : vector<12x1xf32> -> vector<12x1xf32>
    %88 = vector.broadcast %87 : vector<12x1xf32> to vector<12x12xf32>
    %89 = arith.mulf %84, %88 : vector<12x12xf32>
    %cst_44 = arith.constant dense<0.000000e+00> : vector<12x8xf32>
    %90 = tpu.matmul %89, %76, %cst_44 {dimension_numbers = #tpu.dot_dimension_numbers<[1], [0], [0], [1], [0, 0, 1, 1], [], []>} : vector<12x12xf32>, vector<12x8xf32>, vector<12x8xf32> -> vector<12x8xf32>
    %91 = vector.extract_strided_slice %72 {offsets = [0, 0], sizes = [8, 32], strides = [1, 1]} : vector<32x32xf32> to vector<8x32xf32>
    %cst_45 = arith.constant dense<0.000000e+00> : vector<12x32xf32>
    %92 = tpu.matmul %90, %91, %cst_45 {dimension_numbers = #tpu.dot_dimension_numbers<[1], [0], [0], [1], [0, 0, 1, 1], [], []>} : vector<12x8xf32>, vector<8x32xf32>, vector<12x32xf32> -> vector<12x32xf32>
    %93 = vector.extract_strided_slice %73 {offsets = [0, 8], sizes = [12, 8], strides = [1, 1]} : vector<12x96xf32> to vector<12x8xf32>
    %94 = vector.extract_strided_slice %73 {offsets = [0, 40], sizes = [12, 8], strides = [1, 1]} : vector<12x96xf32> to vector<12x8xf32>
    %95 = vector.extract_strided_slice %73 {offsets = [0, 72], sizes = [12, 8], strides = [1, 1]} : vector<12x96xf32> to vector<12x8xf32>
    %cst_46 = arith.constant dense<0.000000e+00> : vector<12x12xf32>
    %96 = tpu.matmul %93, %94, %cst_46 {dimension_numbers = #tpu.dot_dimension_numbers<[1], [1], [0], [0], [0, 0, 1, 0], [], []>} : vector<12x8xf32>, vector<12x8xf32>, vector<12x12xf32> -> vector<12x12xf32>
    %97 = vector.broadcast %50 : vector<1x12xf32> to vector<12x12xf32>
    %98 = arith.addf %96, %97 : vector<12x12xf32>
    %cst_47 = arith.constant dense<0xFF800000> : vector<12xf32>
    %99 = vector.multi_reduction <maximumf>, %98, %cst_47 [1] : vector<12x12xf32> to vector<12xf32>
    %100 = vector.shape_cast %99 : vector<12xf32> to vector<12x1xf32>
    %101 = vector.broadcast %100 : vector<12x1xf32> to vector<12x12xf32>
    %102 = arith.subf %98, %101 : vector<12x12xf32>
    %103 = math.exp %102 : vector<12x12xf32>
    %cst_48 = arith.constant dense<0.000000e+00> : vector<12xf32>
    %104 = vector.multi_reduction <add>, %103, %cst_48 [1] : vector<12x12xf32> to vector<12xf32>
    %105 = vector.shape_cast %104 : vector<12xf32> to vector<12x1xf32>
    %106 = tpu.reciprocal %105 {approx = true} : vector<12x1xf32> -> vector<12x1xf32>
    %107 = vector.broadcast %106 : vector<12x1xf32> to vector<12x12xf32>
    %108 = arith.mulf %103, %107 : vector<12x12xf32>
    %cst_49 = arith.constant dense<0.000000e+00> : vector<12x8xf32>
    %109 = tpu.matmul %108, %95, %cst_49 {dimension_numbers = #tpu.dot_dimension_numbers<[1], [0], [0], [1], [0, 0, 1, 1], [], []>} : vector<12x12xf32>, vector<12x8xf32>, vector<12x8xf32> -> vector<12x8xf32>
    %110 = vector.extract_strided_slice %72 {offsets = [8, 0], sizes = [8, 32], strides = [1, 1]} : vector<32x32xf32> to vector<8x32xf32>
    %cst_50 = arith.constant dense<0.000000e+00> : vector<12x32xf32>
    %111 = tpu.matmul %109, %110, %cst_50 {dimension_numbers = #tpu.dot_dimension_numbers<[1], [0], [0], [1], [0, 0, 1, 1], [], []>} : vector<12x8xf32>, vector<8x32xf32>, vector<12x32xf32> -> vector<12x32xf32>
    %112 = arith.addf %92, %111 : vector<12x32xf32>
    %113 = vector.extract_strided_slice %73 {offsets = [0, 16], sizes = [12, 8], strides = [1, 1]} : vector<12x96xf32> to vector<12x8xf32>
    %114 = vector.extract_strided_slice %73 {offsets = [0, 48], sizes = [12, 8], strides = [1, 1]} : vector<12x96xf32> to vector<12x8xf32>
    %115 = vector.extract_strided_slice %73 {offsets = [0, 80], sizes = [12, 8], strides = [1, 1]} : vector<12x96xf32> to vector<12x8xf32>
    %cst_51 = arith.constant dense<0.000000e+00> : vector<12x12xf32>
    %116 = tpu.matmul %113, %114, %cst_51 {dimension_numbers = #tpu.dot_dimension_numbers<[1], [1], [0], [0], [0, 0, 1, 0], [], []>} : vector<12x8xf32>, vector<12x8xf32>, vector<12x12xf32> -> vector<12x12xf32>
    %117 = vector.broadcast %50 : vector<1x12xf32> to vector<12x12xf32>
    %118 = arith.addf %116, %117 : vector<12x12xf32>
    %cst_52 = arith.constant dense<0xFF800000> : vector<12xf32>
    %119 = vector.multi_reduction <maximumf>, %118, %cst_52 [1] : vector<12x12xf32> to vector<12xf32>
    %120 = vector.shape_cast %119 : vector<12xf32> to vector<12x1xf32>
    %121 = vector.broadcast %120 : vector<12x1xf32> to vector<12x12xf32>
    %122 = arith.subf %118, %121 : vector<12x12xf32>
    %123 = math.exp %122 : vector<12x12xf32>
    %cst_53 = arith.constant dense<0.000000e+00> : vector<12xf32>
    %124 = vector.multi_reduction <add>, %123, %cst_53 [1] : vector<12x12xf32> to vector<12xf32>
    %125 = vector.shape_cast %124 : vector<12xf32> to vector<12x1xf32>
    %126 = tpu.reciprocal %125 {approx = true} : vector<12x1xf32> -> vector<12x1xf32>
    %127 = vector.broadcast %126 : vector<12x1xf32> to vector<12x12xf32>
    %128 = arith.mulf %123, %127 : vector<12x12xf32>
    %cst_54 = arith.constant dense<0.000000e+00> : vector<12x8xf32>
    %129 = tpu.matmul %128, %115, %cst_54 {dimension_numbers = #tpu.dot_dimension_numbers<[1], [0], [0], [1], [0, 0, 1, 1], [], []>} : vector<12x12xf32>, vector<12x8xf32>, vector<12x8xf32> -> vector<12x8xf32>
    %130 = vector.extract_strided_slice %72 {offsets = [16, 0], sizes = [8, 32], strides = [1, 1]} : vector<32x32xf32> to vector<8x32xf32>
    %cst_55 = arith.constant dense<0.000000e+00> : vector<12x32xf32>
    %131 = tpu.matmul %129, %130, %cst_55 {dimension_numbers = #tpu.dot_dimension_numbers<[1], [0], [0], [1], [0, 0, 1, 1], [], []>} : vector<12x8xf32>, vector<8x32xf32>, vector<12x32xf32> -> vector<12x32xf32>
    %132 = arith.addf %112, %131 : vector<12x32xf32>
    %133 = vector.extract_strided_slice %73 {offsets = [0, 24], sizes = [12, 8], strides = [1, 1]} : vector<12x96xf32> to vector<12x8xf32>
    %134 = vector.extract_strided_slice %73 {offsets = [0, 56], sizes = [12, 8], strides = [1, 1]} : vector<12x96xf32> to vector<12x8xf32>
    %135 = vector.extract_strided_slice %73 {offsets = [0, 88], sizes = [12, 8], strides = [1, 1]} : vector<12x96xf32> to vector<12x8xf32>
    %cst_56 = arith.constant dense<0.000000e+00> : vector<12x12xf32>
    %136 = tpu.matmul %133, %134, %cst_56 {dimension_numbers = #tpu.dot_dimension_numbers<[1], [1], [0], [0], [0, 0, 1, 0], [], []>} : vector<12x8xf32>, vector<12x8xf32>, vector<12x12xf32> -> vector<12x12xf32>
    %137 = vector.broadcast %50 : vector<1x12xf32> to vector<12x12xf32>
    %138 = arith.addf %136, %137 : vector<12x12xf32>
    %cst_57 = arith.constant dense<0xFF800000> : vector<12xf32>
    %139 = vector.multi_reduction <maximumf>, %138, %cst_57 [1] : vector<12x12xf32> to vector<12xf32>
    %140 = vector.shape_cast %139 : vector<12xf32> to vector<12x1xf32>
    %141 = vector.broadcast %140 : vector<12x1xf32> to vector<12x12xf32>
    %142 = arith.subf %138, %141 : vector<12x12xf32>
    %143 = math.exp %142 : vector<12x12xf32>
    %cst_58 = arith.constant dense<0.000000e+00> : vector<12xf32>
    %144 = vector.multi_reduction <add>, %143, %cst_58 [1] : vector<12x12xf32> to vector<12xf32>
    %145 = vector.shape_cast %144 : vector<12xf32> to vector<12x1xf32>
    %146 = tpu.reciprocal %145 {approx = true} : vector<12x1xf32> -> vector<12x1xf32>
    %147 = vector.broadcast %146 : vector<12x1xf32> to vector<12x12xf32>
    %148 = arith.mulf %143, %147 : vector<12x12xf32>
    %cst_59 = arith.constant dense<0.000000e+00> : vector<12x8xf32>
    %149 = tpu.matmul %148, %135, %cst_59 {dimension_numbers = #tpu.dot_dimension_numbers<[1], [0], [0], [1], [0, 0, 1, 1], [], []>} : vector<12x12xf32>, vector<12x8xf32>, vector<12x8xf32> -> vector<12x8xf32>
    %150 = vector.extract_strided_slice %72 {offsets = [24, 0], sizes = [8, 32], strides = [1, 1]} : vector<32x32xf32> to vector<8x32xf32>
    %cst_60 = arith.constant dense<0.000000e+00> : vector<12x32xf32>
    %151 = tpu.matmul %149, %150, %cst_60 {dimension_numbers = #tpu.dot_dimension_numbers<[1], [0], [0], [1], [0, 0, 1, 1], [], []>} : vector<12x8xf32>, vector<8x32xf32>, vector<12x32xf32> -> vector<12x32xf32>
    %152 = arith.addf %132, %151 : vector<12x32xf32>
    %153 = vector.extract_strided_slice %70 {offsets = [12, 0], sizes = [12, 96], strides = [1, 1]} : vector<24x96xf32> to vector<12x96xf32>
    %154 = vector.extract_strided_slice %153 {offsets = [0, 0], sizes = [12, 8], strides = [1, 1]} : vector<12x96xf32> to vector<12x8xf32>
    %155 = vector.extract_strided_slice %153 {offsets = [0, 32], sizes = [12, 8], strides = [1, 1]} : vector<12x96xf32> to vector<12x8xf32>
    %156 = vector.extract_strided_slice %153 {offsets = [0, 64], sizes = [12, 8], strides = [1, 1]} : vector<12x96xf32> to vector<12x8xf32>
    %cst_61 = arith.constant dense<0.000000e+00> : vector<12x12xf32>
    %157 = tpu.matmul %154, %155, %cst_61 {dimension_numbers = #tpu.dot_dimension_numbers<[1], [1], [0], [0], [0, 0, 1, 0], [], []>} : vector<12x8xf32>, vector<12x8xf32>, vector<12x12xf32> -> vector<12x12xf32>
    %158 = vector.broadcast %59 : vector<1x12xf32> to vector<12x12xf32>
    %159 = arith.addf %157, %158 : vector<12x12xf32>
    %cst_62 = arith.constant dense<0xFF800000> : vector<12xf32>
    %160 = vector.multi_reduction <maximumf>, %159, %cst_62 [1] : vector<12x12xf32> to vector<12xf32>
    %161 = vector.shape_cast %160 : vector<12xf32> to vector<12x1xf32>
    %162 = vector.broadcast %161 : vector<12x1xf32> to vector<12x12xf32>
    %163 = arith.subf %159, %162 : vector<12x12xf32>
    %164 = math.exp %163 : vector<12x12xf32>
    %cst_63 = arith.constant dense<0.000000e+00> : vector<12xf32>
    %165 = vector.multi_reduction <add>, %164, %cst_63 [1] : vector<12x12xf32> to vector<12xf32>
    %166 = vector.shape_cast %165 : vector<12xf32> to vector<12x1xf32>
    %167 = tpu.reciprocal %166 {approx = true} : vector<12x1xf32> -> vector<12x1xf32>
    %168 = vector.broadcast %167 : vector<12x1xf32> to vector<12x12xf32>
    %169 = arith.mulf %164, %168 : vector<12x12xf32>
    %cst_64 = arith.constant dense<0.000000e+00> : vector<12x8xf32>
    %170 = tpu.matmul %169, %156, %cst_64 {dimension_numbers = #tpu.dot_dimension_numbers<[1], [0], [0], [1], [0, 0, 1, 1], [], []>} : vector<12x12xf32>, vector<12x8xf32>, vector<12x8xf32> -> vector<12x8xf32>
    %171 = vector.extract_strided_slice %72 {offsets = [0, 0], sizes = [8, 32], strides = [1, 1]} : vector<32x32xf32> to vector<8x32xf32>
    %cst_65 = arith.constant dense<0.000000e+00> : vector<12x32xf32>
    %172 = tpu.matmul %170, %171, %cst_65 {dimension_numbers = #tpu.dot_dimension_numbers<[1], [0], [0], [1], [0, 0, 1, 1], [], []>} : vector<12x8xf32>, vector<8x32xf32>, vector<12x32xf32> -> vector<12x32xf32>
    %173 = vector.extract_strided_slice %153 {offsets = [0, 8], sizes = [12, 8], strides = [1, 1]} : vector<12x96xf32> to vector<12x8xf32>
    %174 = vector.extract_strided_slice %153 {offsets = [0, 40], sizes = [12, 8], strides = [1, 1]} : vector<12x96xf32> to vector<12x8xf32>
    %175 = vector.extract_strided_slice %153 {offsets = [0, 72], sizes = [12, 8], strides = [1, 1]} : vector<12x96xf32> to vector<12x8xf32>
    %cst_66 = arith.constant dense<0.000000e+00> : vector<12x12xf32>
    %176 = tpu.matmul %173, %174, %cst_66 {dimension_numbers = #tpu.dot_dimension_numbers<[1], [1], [0], [0], [0, 0, 1, 0], [], []>} : vector<12x8xf32>, vector<12x8xf32>, vector<12x12xf32> -> vector<12x12xf32>
    %177 = vector.broadcast %59 : vector<1x12xf32> to vector<12x12xf32>
    %178 = arith.addf %176, %177 : vector<12x12xf32>
    %cst_67 = arith.constant dense<0xFF800000> : vector<12xf32>
    %179 = vector.multi_reduction <maximumf>, %178, %cst_67 [1] : vector<12x12xf32> to vector<12xf32>
    %180 = vector.shape_cast %179 : vector<12xf32> to vector<12x1xf32>
    %181 = vector.broadcast %180 : vector<12x1xf32> to vector<12x12xf32>
    %182 = arith.subf %178, %181 : vector<12x12xf32>
    %183 = math.exp %182 : vector<12x12xf32>
    %cst_68 = arith.constant dense<0.000000e+00> : vector<12xf32>
    %184 = vector.multi_reduction <add>, %183, %cst_68 [1] : vector<12x12xf32> to vector<12xf32>
    %185 = vector.shape_cast %184 : vector<12xf32> to vector<12x1xf32>
    %186 = tpu.reciprocal %185 {approx = true} : vector<12x1xf32> -> vector<12x1xf32>
    %187 = vector.broadcast %186 : vector<12x1xf32> to vector<12x12xf32>
    %188 = arith.mulf %183, %187 : vector<12x12xf32>
    %cst_69 = arith.constant dense<0.000000e+00> : vector<12x8xf32>
    %189 = tpu.matmul %188, %175, %cst_69 {dimension_numbers = #tpu.dot_dimension_numbers<[1], [0], [0], [1], [0, 0, 1, 1], [], []>} : vector<12x12xf32>, vector<12x8xf32>, vector<12x8xf32> -> vector<12x8xf32>
    %190 = vector.extract_strided_slice %72 {offsets = [8, 0], sizes = [8, 32], strides = [1, 1]} : vector<32x32xf32> to vector<8x32xf32>
    %cst_70 = arith.constant dense<0.000000e+00> : vector<12x32xf32>
    %191 = tpu.matmul %189, %190, %cst_70 {dimension_numbers = #tpu.dot_dimension_numbers<[1], [0], [0], [1], [0, 0, 1, 1], [], []>} : vector<12x8xf32>, vector<8x32xf32>, vector<12x32xf32> -> vector<12x32xf32>
    %192 = arith.addf %172, %191 : vector<12x32xf32>
    %193 = vector.extract_strided_slice %153 {offsets = [0, 16], sizes = [12, 8], strides = [1, 1]} : vector<12x96xf32> to vector<12x8xf32>
    %194 = vector.extract_strided_slice %153 {offsets = [0, 48], sizes = [12, 8], strides = [1, 1]} : vector<12x96xf32> to vector<12x8xf32>
    %195 = vector.extract_strided_slice %153 {offsets = [0, 80], sizes = [12, 8], strides = [1, 1]} : vector<12x96xf32> to vector<12x8xf32>
    %cst_71 = arith.constant dense<0.000000e+00> : vector<12x12xf32>
    %196 = tpu.matmul %193, %194, %cst_71 {dimension_numbers = #tpu.dot_dimension_numbers<[1], [1], [0], [0], [0, 0, 1, 0], [], []>} : vector<12x8xf32>, vector<12x8xf32>, vector<12x12xf32> -> vector<12x12xf32>
    %197 = vector.broadcast %59 : vector<1x12xf32> to vector<12x12xf32>
    %198 = arith.addf %196, %197 : vector<12x12xf32>
    %cst_72 = arith.constant dense<0xFF800000> : vector<12xf32>
    %199 = vector.multi_reduction <maximumf>, %198, %cst_72 [1] : vector<12x12xf32> to vector<12xf32>
    %200 = vector.shape_cast %199 : vector<12xf32> to vector<12x1xf32>
    %201 = vector.broadcast %200 : vector<12x1xf32> to vector<12x12xf32>
    %202 = arith.subf %198, %201 : vector<12x12xf32>
    %203 = math.exp %202 : vector<12x12xf32>
    %cst_73 = arith.constant dense<0.000000e+00> : vector<12xf32>
    %204 = vector.multi_reduction <add>, %203, %cst_73 [1] : vector<12x12xf32> to vector<12xf32>
    %205 = vector.shape_cast %204 : vector<12xf32> to vector<12x1xf32>
    %206 = tpu.reciprocal %205 {approx = true} : vector<12x1xf32> -> vector<12x1xf32>
    %207 = vector.broadcast %206 : vector<12x1xf32> to vector<12x12xf32>
    %208 = arith.mulf %203, %207 : vector<12x12xf32>
    %cst_74 = arith.constant dense<0.000000e+00> : vector<12x8xf32>
    %209 = tpu.matmul %208, %195, %cst_74 {dimension_numbers = #tpu.dot_dimension_numbers<[1], [0], [0], [1], [0, 0, 1, 1], [], []>} : vector<12x12xf32>, vector<12x8xf32>, vector<12x8xf32> -> vector<12x8xf32>
    %210 = vector.extract_strided_slice %72 {offsets = [16, 0], sizes = [8, 32], strides = [1, 1]} : vector<32x32xf32> to vector<8x32xf32>
    %cst_75 = arith.constant dense<0.000000e+00> : vector<12x32xf32>
    %211 = tpu.matmul %209, %210, %cst_75 {dimension_numbers = #tpu.dot_dimension_numbers<[1], [0], [0], [1], [0, 0, 1, 1], [], []>} : vector<12x8xf32>, vector<8x32xf32>, vector<12x32xf32> -> vector<12x32xf32>
    %212 = arith.addf %192, %211 : vector<12x32xf32>
    %213 = vector.extract_strided_slice %153 {offsets = [0, 24], sizes = [12, 8], strides = [1, 1]} : vector<12x96xf32> to vector<12x8xf32>
    %214 = vector.extract_strided_slice %153 {offsets = [0, 56], sizes = [12, 8], strides = [1, 1]} : vector<12x96xf32> to vector<12x8xf32>
    %215 = vector.extract_strided_slice %153 {offsets = [0, 88], sizes = [12, 8], strides = [1, 1]} : vector<12x96xf32> to vector<12x8xf32>
    %cst_76 = arith.constant dense<0.000000e+00> : vector<12x12xf32>
    %216 = tpu.matmul %213, %214, %cst_76 {dimension_numbers = #tpu.dot_dimension_numbers<[1], [1], [0], [0], [0, 0, 1, 0], [], []>} : vector<12x8xf32>, vector<12x8xf32>, vector<12x12xf32> -> vector<12x12xf32>
    %217 = vector.broadcast %59 : vector<1x12xf32> to vector<12x12xf32>
    %218 = arith.addf %216, %217 : vector<12x12xf32>
    %cst_77 = arith.constant dense<0xFF800000> : vector<12xf32>
    %219 = vector.multi_reduction <maximumf>, %218, %cst_77 [1] : vector<12x12xf32> to vector<12xf32>
    %220 = vector.shape_cast %219 : vector<12xf32> to vector<12x1xf32>
    %221 = vector.broadcast %220 : vector<12x1xf32> to vector<12x12xf32>
    %222 = arith.subf %218, %221 : vector<12x12xf32>
    %223 = math.exp %222 : vector<12x12xf32>
    %cst_78 = arith.constant dense<0.000000e+00> : vector<12xf32>
    %224 = vector.multi_reduction <add>, %223, %cst_78 [1] : vector<12x12xf32> to vector<12xf32>
    %225 = vector.shape_cast %224 : vector<12xf32> to vector<12x1xf32>
    %226 = tpu.reciprocal %225 {approx = true} : vector<12x1xf32> -> vector<12x1xf32>
    %227 = vector.broadcast %226 : vector<12x1xf32> to vector<12x12xf32>
    %228 = arith.mulf %223, %227 : vector<12x12xf32>
    %cst_79 = arith.constant dense<0.000000e+00> : vector<12x8xf32>
    %229 = tpu.matmul %228, %215, %cst_79 {dimension_numbers = #tpu.dot_dimension_numbers<[1], [0], [0], [1], [0, 0, 1, 1], [], []>} : vector<12x12xf32>, vector<12x8xf32>, vector<12x8xf32> -> vector<12x8xf32>
    %230 = vector.extract_strided_slice %72 {offsets = [24, 0], sizes = [8, 32], strides = [1, 1]} : vector<32x32xf32> to vector<8x32xf32>
    %cst_80 = arith.constant dense<0.000000e+00> : vector<12x32xf32>
    %231 = tpu.matmul %229, %230, %cst_80 {dimension_numbers = #tpu.dot_dimension_numbers<[1], [0], [0], [1], [0, 0, 1, 1], [], []>} : vector<12x8xf32>, vector<8x32xf32>, vector<12x32xf32> -> vector<12x32xf32>
    %232 = arith.addf %212, %231 : vector<12x32xf32>
    %233 = tpu.concatenate %152, %232 in 0 : vector<12x32xf32>, vector<12x32xf32> -> vector<24x32xf32>
    %c0_81 = arith.constant 0 : index
    %c0_82 = arith.constant 0 : index
    %c0_83 = arith.constant 0 : index
    %234 = vector.load %arg7[%c0_81, %c0_82, %c0_83] : memref<2x1x32xf32, #tpu.memory_space<vmem>>, vector<1x1x32xf32>
    %235 = vector.shape_cast %234 : vector<1x1x32xf32> to vector<1x32xf32>
    %236 = vector.broadcast %235 : vector<1x32xf32> to vector<24x32xf32>
    %237 = arith.addf %233, %236 : vector<24x32xf32>
    %238 = arith.addf %41, %237 : vector<24x32xf32>
    %cst_84 = arith.constant dense<0.000000e+00> : vector<24xf32>
    %239 = vector.multi_reduction <add>, %238, %cst_84 [1] : vector<24x32xf32> to vector<24xf32>
    %240 = vector.shape_cast %239 : vector<24xf32> to vector<24x1xf32>
    %cst_85 = arith.constant 3.200000e+01 : f32
    %241 = vector.broadcast %cst_85 : f32 to vector<24x1xf32>
    %242 = arith.divf %240, %241 : vector<24x1xf32>
    %243 = vector.broadcast %242 : vector<24x1xf32> to vector<24x32xf32>
    %244 = arith.subf %238, %243 : vector<24x32xf32>
    %245 = arith.mulf %244, %244 : vector<24x32xf32>
    %cst_86 = arith.constant dense<0.000000e+00> : vector<24xf32>
    %246 = vector.multi_reduction <add>, %245, %cst_86 [1] : vector<24x32xf32> to vector<24xf32>
    %247 = vector.shape_cast %246 : vector<24xf32> to vector<24x1xf32>
    %cst_87 = arith.constant 3.200000e+01 : f32
    %248 = vector.broadcast %cst_87 : f32 to vector<24x1xf32>
    %249 = arith.divf %247, %248 : vector<24x1xf32>
    %250 = vector.broadcast %242 : vector<24x1xf32> to vector<24x32xf32>
    %251 = arith.subf %238, %250 : vector<24x32xf32>
    %cst_88 = arith.constant 9.99999974E-6 : f32
    %252 = vector.broadcast %cst_88 : f32 to vector<24x1xf32>
    %253 = arith.addf %249, %252 : vector<24x1xf32>
    %254 = math.rsqrt %253 : vector<24x1xf32>
    %255 = vector.broadcast %254 : vector<24x1xf32> to vector<24x32xf32>
    %256 = arith.mulf %251, %255 : vector<24x32xf32>
    %257 = vector.broadcast %62 : vector<1x32xf32> to vector<24x32xf32>
    %258 = arith.mulf %256, %257 : vector<24x32xf32>
    %259 = vector.broadcast %63 : vector<1x32xf32> to vector<24x32xf32>
    %260 = arith.addf %258, %259 : vector<24x32xf32>
    %c0_89 = arith.constant 0 : index
    %c0_90 = arith.constant 0 : index
    %c0_91 = arith.constant 0 : index
    %261 = vector.load %arg8[%c0_89, %c0_90, %c0_91] : memref<2x32x128xf32, #tpu.memory_space<vmem>>, vector<1x32x128xf32>
    %262 = vector.shape_cast %261 : vector<1x32x128xf32> to vector<32x128xf32>
    %cst_92 = arith.constant dense<0.000000e+00> : vector<24x128xf32>
    %263 = tpu.matmul %260, %262, %cst_92 {dimension_numbers = #tpu.dot_dimension_numbers<[1], [0], [0], [1], [0, 0, 1, 1], [], []>} : vector<24x32xf32>, vector<32x128xf32>, vector<24x128xf32> -> vector<24x128xf32>
    %c0_93 = arith.constant 0 : index
    %c0_94 = arith.constant 0 : index
    %c0_95 = arith.constant 0 : index
    %264 = vector.load %arg9[%c0_93, %c0_94, %c0_95] : memref<2x1x128xf32, #tpu.memory_space<vmem>>, vector<1x1x128xf32>
    %265 = vector.shape_cast %264 : vector<1x1x128xf32> to vector<1x128xf32>
    %266 = vector.broadcast %265 : vector<1x128xf32> to vector<24x128xf32>
    %267 = arith.addf %263, %266 : vector<24x128xf32>
    %cst_96 = arith.constant 0.000000e+00 : f32
    %268 = vector.broadcast %cst_96 : f32 to vector<24x128xf32>
    %269 = arith.maximumf %267, %268 : vector<24x128xf32>
    %c0_97 = arith.constant 0 : index
    %c0_98 = arith.constant 0 : index
    %c0_99 = arith.constant 0 : index
    %270 = vector.load %arg10[%c0_97, %c0_98, %c0_99] : memref<2x128x32xf32, #tpu.memory_space<vmem>>, vector<1x128x32xf32>
    %271 = vector.shape_cast %270 : vector<1x128x32xf32> to vector<128x32xf32>
    %cst_100 = arith.constant dense<0.000000e+00> : vector<24x32xf32>
    %272 = tpu.matmul %269, %271, %cst_100 {dimension_numbers = #tpu.dot_dimension_numbers<[1], [0], [0], [1], [0, 0, 1, 1], [], []>} : vector<24x128xf32>, vector<128x32xf32>, vector<24x32xf32> -> vector<24x32xf32>
    %c0_101 = arith.constant 0 : index
    %c0_102 = arith.constant 0 : index
    %c0_103 = arith.constant 0 : index
    %273 = vector.load %arg11[%c0_101, %c0_102, %c0_103] : memref<2x1x32xf32, #tpu.memory_space<vmem>>, vector<1x1x32xf32>
    %274 = vector.shape_cast %273 : vector<1x1x32xf32> to vector<1x32xf32>
    %275 = vector.broadcast %274 : vector<1x32xf32> to vector<24x32xf32>
    %276 = arith.addf %272, %275 : vector<24x32xf32>
    %277 = arith.addf %41, %276 : vector<24x32xf32>
    %cst_104 = arith.constant dense<0.000000e+00> : vector<24xf32>
    %278 = vector.multi_reduction <add>, %277, %cst_104 [1] : vector<24x32xf32> to vector<24xf32>
    %279 = vector.shape_cast %278 : vector<24xf32> to vector<24x1xf32>
    %cst_105 = arith.constant 3.200000e+01 : f32
    %280 = vector.broadcast %cst_105 : f32 to vector<24x1xf32>
    %281 = arith.divf %279, %280 : vector<24x1xf32>
    %282 = vector.broadcast %281 : vector<24x1xf32> to vector<24x32xf32>
    %283 = arith.subf %277, %282 : vector<24x32xf32>
    %284 = arith.mulf %283, %283 : vector<24x32xf32>
    %cst_106 = arith.constant dense<0.000000e+00> : vector<24xf32>
    %285 = vector.multi_reduction <add>, %284, %cst_106 [1] : vector<24x32xf32> to vector<24xf32>
    %286 = vector.shape_cast %285 : vector<24xf32> to vector<24x1xf32>
    %cst_107 = arith.constant 3.200000e+01 : f32
    %287 = vector.broadcast %cst_107 : f32 to vector<24x1xf32>
    %288 = arith.divf %286, %287 : vector<24x1xf32>
    %289 = vector.broadcast %281 : vector<24x1xf32> to vector<24x32xf32>
    %290 = arith.subf %277, %289 : vector<24x32xf32>
    %cst_108 = arith.constant 9.99999974E-6 : f32
    %291 = vector.broadcast %cst_108 : f32 to vector<24x1xf32>
    %292 = arith.addf %288, %291 : vector<24x1xf32>
    %293 = math.rsqrt %292 : vector<24x1xf32>
    %294 = vector.broadcast %293 : vector<24x1xf32> to vector<24x32xf32>
    %295 = arith.mulf %290, %294 : vector<24x32xf32>
    %296 = vector.broadcast %62 : vector<1x32xf32> to vector<24x32xf32>
    %297 = arith.mulf %295, %296 : vector<24x32xf32>
    %298 = vector.broadcast %63 : vector<1x32xf32> to vector<24x32xf32>
    %299 = arith.addf %297, %298 : vector<24x32xf32>
    %c1_109 = arith.constant 1 : index
    %c0_110 = arith.constant 0 : index
    %c0_111 = arith.constant 0 : index
    %300 = vector.load %arg12[%c1_109, %c0_110, %c0_111] : memref<2x2x32xf32, #tpu.memory_space<vmem>>, vector<1x2x32xf32>
    %301 = vector.shape_cast %300 : vector<1x2x32xf32> to vector<2x32xf32>
    %302 = vector.extract_strided_slice %301 {offsets = [0, 0], sizes = [1, 32], strides = [1, 1]} : vector<2x32xf32> to vector<1x32xf32>
    %303 = vector.extract_strided_slice %301 {offsets = [1, 0], sizes = [1, 32], strides = [1, 1]} : vector<2x32xf32> to vector<1x32xf32>
    %c1_112 = arith.constant 1 : index
    %c0_113 = arith.constant 0 : index
    %c0_114 = arith.constant 0 : index
    %304 = vector.load %arg4[%c1_112, %c0_113, %c0_114] : memref<2x32x96xf32, #tpu.memory_space<vmem>>, vector<1x32x96xf32>
    %305 = vector.shape_cast %304 : vector<1x32x96xf32> to vector<32x96xf32>
    %cst_115 = arith.constant dense<0.000000e+00> : vector<24x96xf32>
    %306 = tpu.matmul %299, %305, %cst_115 {dimension_numbers = #tpu.dot_dimension_numbers<[1], [0], [0], [1], [0, 0, 1, 1], [], []>} : vector<24x32xf32>, vector<32x96xf32>, vector<24x96xf32> -> vector<24x96xf32>
    %c1_116 = arith.constant 1 : index
    %c0_117 = arith.constant 0 : index
    %c0_118 = arith.constant 0 : index
    %307 = vector.load %arg5[%c1_116, %c0_117, %c0_118] : memref<2x1x96xf32, #tpu.memory_space<vmem>>, vector<1x1x96xf32>
    %308 = vector.shape_cast %307 : vector<1x1x96xf32> to vector<1x96xf32>
    %309 = vector.broadcast %308 : vector<1x96xf32> to vector<24x96xf32>
    %310 = arith.addf %306, %309 : vector<24x96xf32>
    %c1_119 = arith.constant 1 : index
    %c0_120 = arith.constant 0 : index
    %c0_121 = arith.constant 0 : index
    %311 = vector.load %arg6[%c1_119, %c0_120, %c0_121] : memref<2x32x32xf32, #tpu.memory_space<vmem>>, vector<1x32x32xf32>
    %312 = vector.shape_cast %311 : vector<1x32x32xf32> to vector<32x32xf32>
    %313 = vector.extract_strided_slice %310 {offsets = [0, 0], sizes = [12, 96], strides = [1, 1]} : vector<24x96xf32> to vector<12x96xf32>
    %314 = vector.extract_strided_slice %313 {offsets = [0, 0], sizes = [12, 8], strides = [1, 1]} : vector<12x96xf32> to vector<12x8xf32>
    %315 = vector.extract_strided_slice %313 {offsets = [0, 32], sizes = [12, 8], strides = [1, 1]} : vector<12x96xf32> to vector<12x8xf32>
    %316 = vector.extract_strided_slice %313 {offsets = [0, 64], sizes = [12, 8], strides = [1, 1]} : vector<12x96xf32> to vector<12x8xf32>
    %cst_122 = arith.constant dense<0.000000e+00> : vector<12x12xf32>
    %317 = tpu.matmul %314, %315, %cst_122 {dimension_numbers = #tpu.dot_dimension_numbers<[1], [1], [0], [0], [0, 0, 1, 0], [], []>} : vector<12x8xf32>, vector<12x8xf32>, vector<12x12xf32> -> vector<12x12xf32>
    %318 = vector.broadcast %50 : vector<1x12xf32> to vector<12x12xf32>
    %319 = arith.addf %317, %318 : vector<12x12xf32>
    %cst_123 = arith.constant dense<0xFF800000> : vector<12xf32>
    %320 = vector.multi_reduction <maximumf>, %319, %cst_123 [1] : vector<12x12xf32> to vector<12xf32>
    %321 = vector.shape_cast %320 : vector<12xf32> to vector<12x1xf32>
    %322 = vector.broadcast %321 : vector<12x1xf32> to vector<12x12xf32>
    %323 = arith.subf %319, %322 : vector<12x12xf32>
    %324 = math.exp %323 : vector<12x12xf32>
    %cst_124 = arith.constant dense<0.000000e+00> : vector<12xf32>
    %325 = vector.multi_reduction <add>, %324, %cst_124 [1] : vector<12x12xf32> to vector<12xf32>
    %326 = vector.shape_cast %325 : vector<12xf32> to vector<12x1xf32>
    %327 = tpu.reciprocal %326 {approx = true} : vector<12x1xf32> -> vector<12x1xf32>
    %328 = vector.broadcast %327 : vector<12x1xf32> to vector<12x12xf32>
    %329 = arith.mulf %324, %328 : vector<12x12xf32>
    %cst_125 = arith.constant dense<0.000000e+00> : vector<12x8xf32>
    %330 = tpu.matmul %329, %316, %cst_125 {dimension_numbers = #tpu.dot_dimension_numbers<[1], [0], [0], [1], [0, 0, 1, 1], [], []>} : vector<12x12xf32>, vector<12x8xf32>, vector<12x8xf32> -> vector<12x8xf32>
    %331 = vector.extract_strided_slice %312 {offsets = [0, 0], sizes = [8, 32], strides = [1, 1]} : vector<32x32xf32> to vector<8x32xf32>
    %cst_126 = arith.constant dense<0.000000e+00> : vector<12x32xf32>
    %332 = tpu.matmul %330, %331, %cst_126 {dimension_numbers = #tpu.dot_dimension_numbers<[1], [0], [0], [1], [0, 0, 1, 1], [], []>} : vector<12x8xf32>, vector<8x32xf32>, vector<12x32xf32> -> vector<12x32xf32>
    %333 = vector.extract_strided_slice %313 {offsets = [0, 8], sizes = [12, 8], strides = [1, 1]} : vector<12x96xf32> to vector<12x8xf32>
    %334 = vector.extract_strided_slice %313 {offsets = [0, 40], sizes = [12, 8], strides = [1, 1]} : vector<12x96xf32> to vector<12x8xf32>
    %335 = vector.extract_strided_slice %313 {offsets = [0, 72], sizes = [12, 8], strides = [1, 1]} : vector<12x96xf32> to vector<12x8xf32>
    %cst_127 = arith.constant dense<0.000000e+00> : vector<12x12xf32>
    %336 = tpu.matmul %333, %334, %cst_127 {dimension_numbers = #tpu.dot_dimension_numbers<[1], [1], [0], [0], [0, 0, 1, 0], [], []>} : vector<12x8xf32>, vector<12x8xf32>, vector<12x12xf32> -> vector<12x12xf32>
    %337 = vector.broadcast %50 : vector<1x12xf32> to vector<12x12xf32>
    %338 = arith.addf %336, %337 : vector<12x12xf32>
    %cst_128 = arith.constant dense<0xFF800000> : vector<12xf32>
    %339 = vector.multi_reduction <maximumf>, %338, %cst_128 [1] : vector<12x12xf32> to vector<12xf32>
    %340 = vector.shape_cast %339 : vector<12xf32> to vector<12x1xf32>
    %341 = vector.broadcast %340 : vector<12x1xf32> to vector<12x12xf32>
    %342 = arith.subf %338, %341 : vector<12x12xf32>
    %343 = math.exp %342 : vector<12x12xf32>
    %cst_129 = arith.constant dense<0.000000e+00> : vector<12xf32>
    %344 = vector.multi_reduction <add>, %343, %cst_129 [1] : vector<12x12xf32> to vector<12xf32>
    %345 = vector.shape_cast %344 : vector<12xf32> to vector<12x1xf32>
    %346 = tpu.reciprocal %345 {approx = true} : vector<12x1xf32> -> vector<12x1xf32>
    %347 = vector.broadcast %346 : vector<12x1xf32> to vector<12x12xf32>
    %348 = arith.mulf %343, %347 : vector<12x12xf32>
    %cst_130 = arith.constant dense<0.000000e+00> : vector<12x8xf32>
    %349 = tpu.matmul %348, %335, %cst_130 {dimension_numbers = #tpu.dot_dimension_numbers<[1], [0], [0], [1], [0, 0, 1, 1], [], []>} : vector<12x12xf32>, vector<12x8xf32>, vector<12x8xf32> -> vector<12x8xf32>
    %350 = vector.extract_strided_slice %312 {offsets = [8, 0], sizes = [8, 32], strides = [1, 1]} : vector<32x32xf32> to vector<8x32xf32>
    %cst_131 = arith.constant dense<0.000000e+00> : vector<12x32xf32>
    %351 = tpu.matmul %349, %350, %cst_131 {dimension_numbers = #tpu.dot_dimension_numbers<[1], [0], [0], [1], [0, 0, 1, 1], [], []>} : vector<12x8xf32>, vector<8x32xf32>, vector<12x32xf32> -> vector<12x32xf32>
    %352 = arith.addf %332, %351 : vector<12x32xf32>
    %353 = vector.extract_strided_slice %313 {offsets = [0, 16], sizes = [12, 8], strides = [1, 1]} : vector<12x96xf32> to vector<12x8xf32>
    %354 = vector.extract_strided_slice %313 {offsets = [0, 48], sizes = [12, 8], strides = [1, 1]} : vector<12x96xf32> to vector<12x8xf32>
    %355 = vector.extract_strided_slice %313 {offsets = [0, 80], sizes = [12, 8], strides = [1, 1]} : vector<12x96xf32> to vector<12x8xf32>
    %cst_132 = arith.constant dense<0.000000e+00> : vector<12x12xf32>
    %356 = tpu.matmul %353, %354, %cst_132 {dimension_numbers = #tpu.dot_dimension_numbers<[1], [1], [0], [0], [0, 0, 1, 0], [], []>} : vector<12x8xf32>, vector<12x8xf32>, vector<12x12xf32> -> vector<12x12xf32>
    %357 = vector.broadcast %50 : vector<1x12xf32> to vector<12x12xf32>
    %358 = arith.addf %356, %357 : vector<12x12xf32>
    %cst_133 = arith.constant dense<0xFF800000> : vector<12xf32>
    %359 = vector.multi_reduction <maximumf>, %358, %cst_133 [1] : vector<12x12xf32> to vector<12xf32>
    %360 = vector.shape_cast %359 : vector<12xf32> to vector<12x1xf32>
    %361 = vector.broadcast %360 : vector<12x1xf32> to vector<12x12xf32>
    %362 = arith.subf %358, %361 : vector<12x12xf32>
    %363 = math.exp %362 : vector<12x12xf32>
    %cst_134 = arith.constant dense<0.000000e+00> : vector<12xf32>
    %364 = vector.multi_reduction <add>, %363, %cst_134 [1] : vector<12x12xf32> to vector<12xf32>
    %365 = vector.shape_cast %364 : vector<12xf32> to vector<12x1xf32>
    %366 = tpu.reciprocal %365 {approx = true} : vector<12x1xf32> -> vector<12x1xf32>
    %367 = vector.broadcast %366 : vector<12x1xf32> to vector<12x12xf32>
    %368 = arith.mulf %363, %367 : vector<12x12xf32>
    %cst_135 = arith.constant dense<0.000000e+00> : vector<12x8xf32>
    %369 = tpu.matmul %368, %355, %cst_135 {dimension_numbers = #tpu.dot_dimension_numbers<[1], [0], [0], [1], [0, 0, 1, 1], [], []>} : vector<12x12xf32>, vector<12x8xf32>, vector<12x8xf32> -> vector<12x8xf32>
    %370 = vector.extract_strided_slice %312 {offsets = [16, 0], sizes = [8, 32], strides = [1, 1]} : vector<32x32xf32> to vector<8x32xf32>
    %cst_136 = arith.constant dense<0.000000e+00> : vector<12x32xf32>
    %371 = tpu.matmul %369, %370, %cst_136 {dimension_numbers = #tpu.dot_dimension_numbers<[1], [0], [0], [1], [0, 0, 1, 1], [], []>} : vector<12x8xf32>, vector<8x32xf32>, vector<12x32xf32> -> vector<12x32xf32>
    %372 = arith.addf %352, %371 : vector<12x32xf32>
    %373 = vector.extract_strided_slice %313 {offsets = [0, 24], sizes = [12, 8], strides = [1, 1]} : vector<12x96xf32> to vector<12x8xf32>
    %374 = vector.extract_strided_slice %313 {offsets = [0, 56], sizes = [12, 8], strides = [1, 1]} : vector<12x96xf32> to vector<12x8xf32>
    %375 = vector.extract_strided_slice %313 {offsets = [0, 88], sizes = [12, 8], strides = [1, 1]} : vector<12x96xf32> to vector<12x8xf32>
    %cst_137 = arith.constant dense<0.000000e+00> : vector<12x12xf32>
    %376 = tpu.matmul %373, %374, %cst_137 {dimension_numbers = #tpu.dot_dimension_numbers<[1], [1], [0], [0], [0, 0, 1, 0], [], []>} : vector<12x8xf32>, vector<12x8xf32>, vector<12x12xf32> -> vector<12x12xf32>
    %377 = vector.broadcast %50 : vector<1x12xf32> to vector<12x12xf32>
    %378 = arith.addf %376, %377 : vector<12x12xf32>
    %cst_138 = arith.constant dense<0xFF800000> : vector<12xf32>
    %379 = vector.multi_reduction <maximumf>, %378, %cst_138 [1] : vector<12x12xf32> to vector<12xf32>
    %380 = vector.shape_cast %379 : vector<12xf32> to vector<12x1xf32>
    %381 = vector.broadcast %380 : vector<12x1xf32> to vector<12x12xf32>
    %382 = arith.subf %378, %381 : vector<12x12xf32>
    %383 = math.exp %382 : vector<12x12xf32>
    %cst_139 = arith.constant dense<0.000000e+00> : vector<12xf32>
    %384 = vector.multi_reduction <add>, %383, %cst_139 [1] : vector<12x12xf32> to vector<12xf32>
    %385 = vector.shape_cast %384 : vector<12xf32> to vector<12x1xf32>
    %386 = tpu.reciprocal %385 {approx = true} : vector<12x1xf32> -> vector<12x1xf32>
    %387 = vector.broadcast %386 : vector<12x1xf32> to vector<12x12xf32>
    %388 = arith.mulf %383, %387 : vector<12x12xf32>
    %cst_140 = arith.constant dense<0.000000e+00> : vector<12x8xf32>
    %389 = tpu.matmul %388, %375, %cst_140 {dimension_numbers = #tpu.dot_dimension_numbers<[1], [0], [0], [1], [0, 0, 1, 1], [], []>} : vector<12x12xf32>, vector<12x8xf32>, vector<12x8xf32> -> vector<12x8xf32>
    %390 = vector.extract_strided_slice %312 {offsets = [24, 0], sizes = [8, 32], strides = [1, 1]} : vector<32x32xf32> to vector<8x32xf32>
    %cst_141 = arith.constant dense<0.000000e+00> : vector<12x32xf32>
    %391 = tpu.matmul %389, %390, %cst_141 {dimension_numbers = #tpu.dot_dimension_numbers<[1], [0], [0], [1], [0, 0, 1, 1], [], []>} : vector<12x8xf32>, vector<8x32xf32>, vector<12x32xf32> -> vector<12x32xf32>
    %392 = arith.addf %372, %391 : vector<12x32xf32>
    %393 = vector.extract_strided_slice %310 {offsets = [12, 0], sizes = [12, 96], strides = [1, 1]} : vector<24x96xf32> to vector<12x96xf32>
    %394 = vector.extract_strided_slice %393 {offsets = [0, 0], sizes = [12, 8], strides = [1, 1]} : vector<12x96xf32> to vector<12x8xf32>
    %395 = vector.extract_strided_slice %393 {offsets = [0, 32], sizes = [12, 8], strides = [1, 1]} : vector<12x96xf32> to vector<12x8xf32>
    %396 = vector.extract_strided_slice %393 {offsets = [0, 64], sizes = [12, 8], strides = [1, 1]} : vector<12x96xf32> to vector<12x8xf32>
    %cst_142 = arith.constant dense<0.000000e+00> : vector<12x12xf32>
    %397 = tpu.matmul %394, %395, %cst_142 {dimension_numbers = #tpu.dot_dimension_numbers<[1], [1], [0], [0], [0, 0, 1, 0], [], []>} : vector<12x8xf32>, vector<12x8xf32>, vector<12x12xf32> -> vector<12x12xf32>
    %398 = vector.broadcast %59 : vector<1x12xf32> to vector<12x12xf32>
    %399 = arith.addf %397, %398 : vector<12x12xf32>
    %cst_143 = arith.constant dense<0xFF800000> : vector<12xf32>
    %400 = vector.multi_reduction <maximumf>, %399, %cst_143 [1] : vector<12x12xf32> to vector<12xf32>
    %401 = vector.shape_cast %400 : vector<12xf32> to vector<12x1xf32>
    %402 = vector.broadcast %401 : vector<12x1xf32> to vector<12x12xf32>
    %403 = arith.subf %399, %402 : vector<12x12xf32>
    %404 = math.exp %403 : vector<12x12xf32>
    %cst_144 = arith.constant dense<0.000000e+00> : vector<12xf32>
    %405 = vector.multi_reduction <add>, %404, %cst_144 [1] : vector<12x12xf32> to vector<12xf32>
    %406 = vector.shape_cast %405 : vector<12xf32> to vector<12x1xf32>
    %407 = tpu.reciprocal %406 {approx = true} : vector<12x1xf32> -> vector<12x1xf32>
    %408 = vector.broadcast %407 : vector<12x1xf32> to vector<12x12xf32>
    %409 = arith.mulf %404, %408 : vector<12x12xf32>
    %cst_145 = arith.constant dense<0.000000e+00> : vector<12x8xf32>
    %410 = tpu.matmul %409, %396, %cst_145 {dimension_numbers = #tpu.dot_dimension_numbers<[1], [0], [0], [1], [0, 0, 1, 1], [], []>} : vector<12x12xf32>, vector<12x8xf32>, vector<12x8xf32> -> vector<12x8xf32>
    %411 = vector.extract_strided_slice %312 {offsets = [0, 0], sizes = [8, 32], strides = [1, 1]} : vector<32x32xf32> to vector<8x32xf32>
    %cst_146 = arith.constant dense<0.000000e+00> : vector<12x32xf32>
    %412 = tpu.matmul %410, %411, %cst_146 {dimension_numbers = #tpu.dot_dimension_numbers<[1], [0], [0], [1], [0, 0, 1, 1], [], []>} : vector<12x8xf32>, vector<8x32xf32>, vector<12x32xf32> -> vector<12x32xf32>
    %413 = vector.extract_strided_slice %393 {offsets = [0, 8], sizes = [12, 8], strides = [1, 1]} : vector<12x96xf32> to vector<12x8xf32>
    %414 = vector.extract_strided_slice %393 {offsets = [0, 40], sizes = [12, 8], strides = [1, 1]} : vector<12x96xf32> to vector<12x8xf32>
    %415 = vector.extract_strided_slice %393 {offsets = [0, 72], sizes = [12, 8], strides = [1, 1]} : vector<12x96xf32> to vector<12x8xf32>
    %cst_147 = arith.constant dense<0.000000e+00> : vector<12x12xf32>
    %416 = tpu.matmul %413, %414, %cst_147 {dimension_numbers = #tpu.dot_dimension_numbers<[1], [1], [0], [0], [0, 0, 1, 0], [], []>} : vector<12x8xf32>, vector<12x8xf32>, vector<12x12xf32> -> vector<12x12xf32>
    %417 = vector.broadcast %59 : vector<1x12xf32> to vector<12x12xf32>
    %418 = arith.addf %416, %417 : vector<12x12xf32>
    %cst_148 = arith.constant dense<0xFF800000> : vector<12xf32>
    %419 = vector.multi_reduction <maximumf>, %418, %cst_148 [1] : vector<12x12xf32> to vector<12xf32>
    %420 = vector.shape_cast %419 : vector<12xf32> to vector<12x1xf32>
    %421 = vector.broadcast %420 : vector<12x1xf32> to vector<12x12xf32>
    %422 = arith.subf %418, %421 : vector<12x12xf32>
    %423 = math.exp %422 : vector<12x12xf32>
    %cst_149 = arith.constant dense<0.000000e+00> : vector<12xf32>
    %424 = vector.multi_reduction <add>, %423, %cst_149 [1] : vector<12x12xf32> to vector<12xf32>
    %425 = vector.shape_cast %424 : vector<12xf32> to vector<12x1xf32>
    %426 = tpu.reciprocal %425 {approx = true} : vector<12x1xf32> -> vector<12x1xf32>
    %427 = vector.broadcast %426 : vector<12x1xf32> to vector<12x12xf32>
    %428 = arith.mulf %423, %427 : vector<12x12xf32>
    %cst_150 = arith.constant dense<0.000000e+00> : vector<12x8xf32>
    %429 = tpu.matmul %428, %415, %cst_150 {dimension_numbers = #tpu.dot_dimension_numbers<[1], [0], [0], [1], [0, 0, 1, 1], [], []>} : vector<12x12xf32>, vector<12x8xf32>, vector<12x8xf32> -> vector<12x8xf32>
    %430 = vector.extract_strided_slice %312 {offsets = [8, 0], sizes = [8, 32], strides = [1, 1]} : vector<32x32xf32> to vector<8x32xf32>
    %cst_151 = arith.constant dense<0.000000e+00> : vector<12x32xf32>
    %431 = tpu.matmul %429, %430, %cst_151 {dimension_numbers = #tpu.dot_dimension_numbers<[1], [0], [0], [1], [0, 0, 1, 1], [], []>} : vector<12x8xf32>, vector<8x32xf32>, vector<12x32xf32> -> vector<12x32xf32>
    %432 = arith.addf %412, %431 : vector<12x32xf32>
    %433 = vector.extract_strided_slice %393 {offsets = [0, 16], sizes = [12, 8], strides = [1, 1]} : vector<12x96xf32> to vector<12x8xf32>
    %434 = vector.extract_strided_slice %393 {offsets = [0, 48], sizes = [12, 8], strides = [1, 1]} : vector<12x96xf32> to vector<12x8xf32>
    %435 = vector.extract_strided_slice %393 {offsets = [0, 80], sizes = [12, 8], strides = [1, 1]} : vector<12x96xf32> to vector<12x8xf32>
    %cst_152 = arith.constant dense<0.000000e+00> : vector<12x12xf32>
    %436 = tpu.matmul %433, %434, %cst_152 {dimension_numbers = #tpu.dot_dimension_numbers<[1], [1], [0], [0], [0, 0, 1, 0], [], []>} : vector<12x8xf32>, vector<12x8xf32>, vector<12x12xf32> -> vector<12x12xf32>
    %437 = vector.broadcast %59 : vector<1x12xf32> to vector<12x12xf32>
    %438 = arith.addf %436, %437 : vector<12x12xf32>
    %cst_153 = arith.constant dense<0xFF800000> : vector<12xf32>
    %439 = vector.multi_reduction <maximumf>, %438, %cst_153 [1] : vector<12x12xf32> to vector<12xf32>
    %440 = vector.shape_cast %439 : vector<12xf32> to vector<12x1xf32>
    %441 = vector.broadcast %440 : vector<12x1xf32> to vector<12x12xf32>
    %442 = arith.subf %438, %441 : vector<12x12xf32>
    %443 = math.exp %442 : vector<12x12xf32>
    %cst_154 = arith.constant dense<0.000000e+00> : vector<12xf32>
    %444 = vector.multi_reduction <add>, %443, %cst_154 [1] : vector<12x12xf32> to vector<12xf32>
    %445 = vector.shape_cast %444 : vector<12xf32> to vector<12x1xf32>
    %446 = tpu.reciprocal %445 {approx = true} : vector<12x1xf32> -> vector<12x1xf32>
    %447 = vector.broadcast %446 : vector<12x1xf32> to vector<12x12xf32>
    %448 = arith.mulf %443, %447 : vector<12x12xf32>
    %cst_155 = arith.constant dense<0.000000e+00> : vector<12x8xf32>
    %449 = tpu.matmul %448, %435, %cst_155 {dimension_numbers = #tpu.dot_dimension_numbers<[1], [0], [0], [1], [0, 0, 1, 1], [], []>} : vector<12x12xf32>, vector<12x8xf32>, vector<12x8xf32> -> vector<12x8xf32>
    %450 = vector.extract_strided_slice %312 {offsets = [16, 0], sizes = [8, 32], strides = [1, 1]} : vector<32x32xf32> to vector<8x32xf32>
    %cst_156 = arith.constant dense<0.000000e+00> : vector<12x32xf32>
    %451 = tpu.matmul %449, %450, %cst_156 {dimension_numbers = #tpu.dot_dimension_numbers<[1], [0], [0], [1], [0, 0, 1, 1], [], []>} : vector<12x8xf32>, vector<8x32xf32>, vector<12x32xf32> -> vector<12x32xf32>
    %452 = arith.addf %432, %451 : vector<12x32xf32>
    %453 = vector.extract_strided_slice %393 {offsets = [0, 24], sizes = [12, 8], strides = [1, 1]} : vector<12x96xf32> to vector<12x8xf32>
    %454 = vector.extract_strided_slice %393 {offsets = [0, 56], sizes = [12, 8], strides = [1, 1]} : vector<12x96xf32> to vector<12x8xf32>
    %455 = vector.extract_strided_slice %393 {offsets = [0, 88], sizes = [12, 8], strides = [1, 1]} : vector<12x96xf32> to vector<12x8xf32>
    %cst_157 = arith.constant dense<0.000000e+00> : vector<12x12xf32>
    %456 = tpu.matmul %453, %454, %cst_157 {dimension_numbers = #tpu.dot_dimension_numbers<[1], [1], [0], [0], [0, 0, 1, 0], [], []>} : vector<12x8xf32>, vector<12x8xf32>, vector<12x12xf32> -> vector<12x12xf32>
    %457 = vector.broadcast %59 : vector<1x12xf32> to vector<12x12xf32>
    %458 = arith.addf %456, %457 : vector<12x12xf32>
    %cst_158 = arith.constant dense<0xFF800000> : vector<12xf32>
    %459 = vector.multi_reduction <maximumf>, %458, %cst_158 [1] : vector<12x12xf32> to vector<12xf32>
    %460 = vector.shape_cast %459 : vector<12xf32> to vector<12x1xf32>
    %461 = vector.broadcast %460 : vector<12x1xf32> to vector<12x12xf32>
    %462 = arith.subf %458, %461 : vector<12x12xf32>
    %463 = math.exp %462 : vector<12x12xf32>
    %cst_159 = arith.constant dense<0.000000e+00> : vector<12xf32>
    %464 = vector.multi_reduction <add>, %463, %cst_159 [1] : vector<12x12xf32> to vector<12xf32>
    %465 = vector.shape_cast %464 : vector<12xf32> to vector<12x1xf32>
    %466 = tpu.reciprocal %465 {approx = true} : vector<12x1xf32> -> vector<12x1xf32>
    %467 = vector.broadcast %466 : vector<12x1xf32> to vector<12x12xf32>
    %468 = arith.mulf %463, %467 : vector<12x12xf32>
    %cst_160 = arith.constant dense<0.000000e+00> : vector<12x8xf32>
    %469 = tpu.matmul %468, %455, %cst_160 {dimension_numbers = #tpu.dot_dimension_numbers<[1], [0], [0], [1], [0, 0, 1, 1], [], []>} : vector<12x12xf32>, vector<12x8xf32>, vector<12x8xf32> -> vector<12x8xf32>
    %470 = vector.extract_strided_slice %312 {offsets = [24, 0], sizes = [8, 32], strides = [1, 1]} : vector<32x32xf32> to vector<8x32xf32>
    %cst_161 = arith.constant dense<0.000000e+00> : vector<12x32xf32>
    %471 = tpu.matmul %469, %470, %cst_161 {dimension_numbers = #tpu.dot_dimension_numbers<[1], [0], [0], [1], [0, 0, 1, 1], [], []>} : vector<12x8xf32>, vector<8x32xf32>, vector<12x32xf32> -> vector<12x32xf32>
    %472 = arith.addf %452, %471 : vector<12x32xf32>
    %473 = tpu.concatenate %392, %472 in 0 : vector<12x32xf32>, vector<12x32xf32> -> vector<24x32xf32>
    %c1_162 = arith.constant 1 : index
    %c0_163 = arith.constant 0 : index
    %c0_164 = arith.constant 0 : index
    %474 = vector.load %arg7[%c1_162, %c0_163, %c0_164] : memref<2x1x32xf32, #tpu.memory_space<vmem>>, vector<1x1x32xf32>
    %475 = vector.shape_cast %474 : vector<1x1x32xf32> to vector<1x32xf32>
    %476 = vector.broadcast %475 : vector<1x32xf32> to vector<24x32xf32>
    %477 = arith.addf %473, %476 : vector<24x32xf32>
    %478 = arith.addf %299, %477 : vector<24x32xf32>
    %cst_165 = arith.constant dense<0.000000e+00> : vector<24xf32>
    %479 = vector.multi_reduction <add>, %478, %cst_165 [1] : vector<24x32xf32> to vector<24xf32>
    %480 = vector.shape_cast %479 : vector<24xf32> to vector<24x1xf32>
    %cst_166 = arith.constant 3.200000e+01 : f32
    %481 = vector.broadcast %cst_166 : f32 to vector<24x1xf32>
    %482 = arith.divf %480, %481 : vector<24x1xf32>
    %483 = vector.broadcast %482 : vector<24x1xf32> to vector<24x32xf32>
    %484 = arith.subf %478, %483 : vector<24x32xf32>
    %485 = arith.mulf %484, %484 : vector<24x32xf32>
    %cst_167 = arith.constant dense<0.000000e+00> : vector<24xf32>
    %486 = vector.multi_reduction <add>, %485, %cst_167 [1] : vector<24x32xf32> to vector<24xf32>
    %487 = vector.shape_cast %486 : vector<24xf32> to vector<24x1xf32>
    %cst_168 = arith.constant 3.200000e+01 : f32
    %488 = vector.broadcast %cst_168 : f32 to vector<24x1xf32>
    %489 = arith.divf %487, %488 : vector<24x1xf32>
    %490 = vector.broadcast %482 : vector<24x1xf32> to vector<24x32xf32>
    %491 = arith.subf %478, %490 : vector<24x32xf32>
    %cst_169 = arith.constant 9.99999974E-6 : f32
    %492 = vector.broadcast %cst_169 : f32 to vector<24x1xf32>
    %493 = arith.addf %489, %492 : vector<24x1xf32>
    %494 = math.rsqrt %493 : vector<24x1xf32>
    %495 = vector.broadcast %494 : vector<24x1xf32> to vector<24x32xf32>
    %496 = arith.mulf %491, %495 : vector<24x32xf32>
    %497 = vector.broadcast %302 : vector<1x32xf32> to vector<24x32xf32>
    %498 = arith.mulf %496, %497 : vector<24x32xf32>
    %499 = vector.broadcast %303 : vector<1x32xf32> to vector<24x32xf32>
    %500 = arith.addf %498, %499 : vector<24x32xf32>
    %c1_170 = arith.constant 1 : index
    %c0_171 = arith.constant 0 : index
    %c0_172 = arith.constant 0 : index
    %501 = vector.load %arg8[%c1_170, %c0_171, %c0_172] : memref<2x32x128xf32, #tpu.memory_space<vmem>>, vector<1x32x128xf32>
    %502 = vector.shape_cast %501 : vector<1x32x128xf32> to vector<32x128xf32>
    %cst_173 = arith.constant dense<0.000000e+00> : vector<24x128xf32>
    %503 = tpu.matmul %500, %502, %cst_173 {dimension_numbers = #tpu.dot_dimension_numbers<[1], [0], [0], [1], [0, 0, 1, 1], [], []>} : vector<24x32xf32>, vector<32x128xf32>, vector<24x128xf32> -> vector<24x128xf32>
    %c1_174 = arith.constant 1 : index
    %c0_175 = arith.constant 0 : index
    %c0_176 = arith.constant 0 : index
    %504 = vector.load %arg9[%c1_174, %c0_175, %c0_176] : memref<2x1x128xf32, #tpu.memory_space<vmem>>, vector<1x1x128xf32>
    %505 = vector.shape_cast %504 : vector<1x1x128xf32> to vector<1x128xf32>
    %506 = vector.broadcast %505 : vector<1x128xf32> to vector<24x128xf32>
    %507 = arith.addf %503, %506 : vector<24x128xf32>
    %cst_177 = arith.constant 0.000000e+00 : f32
    %508 = vector.broadcast %cst_177 : f32 to vector<24x128xf32>
    %509 = arith.maximumf %507, %508 : vector<24x128xf32>
    %c1_178 = arith.constant 1 : index
    %c0_179 = arith.constant 0 : index
    %c0_180 = arith.constant 0 : index
    %510 = vector.load %arg10[%c1_178, %c0_179, %c0_180] : memref<2x128x32xf32, #tpu.memory_space<vmem>>, vector<1x128x32xf32>
    %511 = vector.shape_cast %510 : vector<1x128x32xf32> to vector<128x32xf32>
    %cst_181 = arith.constant dense<0.000000e+00> : vector<24x32xf32>
    %512 = tpu.matmul %509, %511, %cst_181 {dimension_numbers = #tpu.dot_dimension_numbers<[1], [0], [0], [1], [0, 0, 1, 1], [], []>} : vector<24x128xf32>, vector<128x32xf32>, vector<24x32xf32> -> vector<24x32xf32>
    %c1_182 = arith.constant 1 : index
    %c0_183 = arith.constant 0 : index
    %c0_184 = arith.constant 0 : index
    %513 = vector.load %arg11[%c1_182, %c0_183, %c0_184] : memref<2x1x32xf32, #tpu.memory_space<vmem>>, vector<1x1x32xf32>
    %514 = vector.shape_cast %513 : vector<1x1x32xf32> to vector<1x32xf32>
    %515 = vector.broadcast %514 : vector<1x32xf32> to vector<24x32xf32>
    %516 = arith.addf %512, %515 : vector<24x32xf32>
    %517 = arith.addf %299, %516 : vector<24x32xf32>
    %cst_185 = arith.constant dense<0.000000e+00> : vector<24xf32>
    %518 = vector.multi_reduction <add>, %517, %cst_185 [1] : vector<24x32xf32> to vector<24xf32>
    %519 = vector.shape_cast %518 : vector<24xf32> to vector<24x1xf32>
    %cst_186 = arith.constant 3.200000e+01 : f32
    %520 = vector.broadcast %cst_186 : f32 to vector<24x1xf32>
    %521 = arith.divf %519, %520 : vector<24x1xf32>
    %522 = vector.broadcast %521 : vector<24x1xf32> to vector<24x32xf32>
    %523 = arith.subf %517, %522 : vector<24x32xf32>
    %524 = arith.mulf %523, %523 : vector<24x32xf32>
    %cst_187 = arith.constant dense<0.000000e+00> : vector<24xf32>
    %525 = vector.multi_reduction <add>, %524, %cst_187 [1] : vector<24x32xf32> to vector<24xf32>
    %526 = vector.shape_cast %525 : vector<24xf32> to vector<24x1xf32>
    %cst_188 = arith.constant 3.200000e+01 : f32
    %527 = vector.broadcast %cst_188 : f32 to vector<24x1xf32>
    %528 = arith.divf %526, %527 : vector<24x1xf32>
    %529 = vector.broadcast %521 : vector<24x1xf32> to vector<24x32xf32>
    %530 = arith.subf %517, %529 : vector<24x32xf32>
    %cst_189 = arith.constant 9.99999974E-6 : f32
    %531 = vector.broadcast %cst_189 : f32 to vector<24x1xf32>
    %532 = arith.addf %528, %531 : vector<24x1xf32>
    %533 = math.rsqrt %532 : vector<24x1xf32>
    %534 = vector.broadcast %533 : vector<24x1xf32> to vector<24x32xf32>
    %535 = arith.mulf %530, %534 : vector<24x32xf32>
    %536 = vector.broadcast %302 : vector<1x32xf32> to vector<24x32xf32>
    %537 = arith.mulf %535, %536 : vector<24x32xf32>
    %538 = vector.broadcast %303 : vector<1x32xf32> to vector<24x32xf32>
    %539 = arith.addf %537, %538 : vector<24x32xf32>
    %540 = vector.extract_strided_slice %539 {offsets = [0, 0], sizes = [12, 32], strides = [1, 1]} : vector<24x32xf32> to vector<12x32xf32>
    %c0_190 = arith.constant 0 : index
    %c0_191 = arith.constant 0 : index
    %c0_192 = arith.constant 0 : index
    %541 = vector.load %arg13[%c0_190, %c0_191, %c0_192] : memref<2x12x32xf32, #tpu.memory_space<vmem>>, vector<1x12x32xf32>
    %542 = vector.shape_cast %541 : vector<1x12x32xf32> to vector<12x32xf32>
    %543 = vector.shape_cast %540 : vector<12x32xf32> to vector<1x12x32xf32>
    tpu.vector_store %arg13[%c0_190, %c0_191, %c0_192], %543 {strides = array<i32>} : memref<2x12x32xf32, #tpu.memory_space<vmem>>, vector<1x12x32xf32>,
    %544 = vector.extract_strided_slice %539 {offsets = [12, 0], sizes = [12, 32], strides = [1, 1]} : vector<24x32xf32> to vector<12x32xf32>
    %c1_193 = arith.constant 1 : index
    %c0_194 = arith.constant 0 : index
    %c0_195 = arith.constant 0 : index
    %545 = vector.load %arg13[%c1_193, %c0_194, %c0_195] : memref<2x12x32xf32, #tpu.memory_space<vmem>>, vector<1x12x32xf32>
    %546 = vector.shape_cast %545 : vector<1x12x32xf32> to vector<12x32xf32>
    %547 = vector.shape_cast %544 : vector<12x32xf32> to vector<1x12x32xf32>
    tpu.vector_store %arg13[%c1_193, %c0_194, %c0_195], %547 {strides = array<i32>} : memref<2x12x32xf32, #tpu.memory_space<vmem>>, vector<1x12x32xf32>,
    return
  }
}

</mosaic_0001>

<llo_original>
// kernel: encoder_forward.1
$region0: #{encoder_forward.1}
  #allocation0 [shape = 'u32[]', space=smem, size = 0x4, offset = 0x4, fixed_abs, tag = 'smem constant byte address 0x4 - core index']
  #allocation1 [shape = 'u32[144,128]{1,0:T(1,128)}', space=vmem, size = 0x12000, scoped, tag = 'internal scratch']
  %s0 = inlined_call_operand.vmem [shape: s32[2,12,1], index: 0, kind: input, shape index: {}]
  %s1 = inlined_call_operand.vmem [shape: f32[2,1,12], index: 1, kind: input, shape index: {}]
  %s2 = inlined_call_operand.vmem [shape: f32[16,32], index: 2, kind: input, shape index: {}]
  %s3 = inlined_call_operand.vmem [shape: f32[2,32], index: 3, kind: input, shape index: {}]
  %s4 = inlined_call_operand.vmem [shape: f32[2,32,96], index: 4, kind: input, shape index: {}]
  %s5 = inlined_call_operand.vmem [shape: f32[2,1,96], index: 5, kind: input, shape index: {}]
  %s6 = inlined_call_operand.vmem [shape: f32[2,32,32], index: 6, kind: input, shape index: {}]
  %s7 = inlined_call_operand.vmem [shape: f32[2,1,32], index: 7, kind: input, shape index: {}]
  %s8 = inlined_call_operand.vmem [shape: f32[2,32,128], index: 8, kind: input, shape index: {}]
  %s9 = inlined_call_operand.vmem [shape: f32[2,1,128], index: 9, kind: input, shape index: {}]
  %s10 = inlined_call_operand.vmem [shape: f32[2,128,32], index: 10, kind: input, shape index: {}]
  %s11 = inlined_call_operand.vmem [shape: f32[2,1,32], index: 11, kind: input, shape index: {}]
  %s12 = inlined_call_operand.vmem [shape: f32[2,2,32], index: 12, kind: input, shape index: {}]
  %s13 = inlined_call_operand.vmem [shape: f32[2,12,32], index: 13, kind: output, shape index: {}]
  %s14 = sld [smem:[#allocation0]]
  $region62: #{encoder_forward.1} parent=0
    _
  %s16 = ssub.s32 1, %s14
  %s17 = scalar_select 0, %s16, %s14
  // Predicated region
  $region2: #{encoder_forward.1} parent=0 // pred_check
    _
  $region3: #{encoder_forward.1} parent=0 // pred_check_branch
    %19 = sbr.rel (0) target = $region5
  $region4: #{encoder_forward.1} parent=0 // pred_region
    _
  $region5: #{encoder_forward.1} parent=0 // pred_fallthru
    _
  // Predicated region
  $region6: #{encoder_forward.1} parent=0 // pred_check
    _
  $region7: #{encoder_forward.1} parent=0 // pred_check_branch
    %21 = sbr.rel (0) target = $region9
  $region8: #{encoder_forward.1} parent=0 // pred_region
    _
  $region9: #{encoder_forward.1} parent=0 // pred_fallthru
    _
  // Predicated region
  $region10: #{encoder_forward.1} parent=0 // pred_check
    _
  $region11: #{encoder_forward.1} parent=0 // pred_check_branch
    %23 = sbr.rel (0) target = $region13
  $region12: #{encoder_forward.1} parent=0 // pred_region
    _
  $region13: #{encoder_forward.1} parent=0 // pred_fallthru
    _
  // Predicated region
  $region14: #{encoder_forward.1} parent=0 // pred_check
    _
  $region15: #{encoder_forward.1} parent=0 // pred_check_branch
    %25 = sbr.rel (0) target = $region17
  $region16: #{encoder_forward.1} parent=0 // pred_region
    _
  $region17: #{encoder_forward.1} parent=0 // pred_fallthru
    _
  // Predicated region
  $region18: #{encoder_forward.1} parent=0 // pred_check
    _
  $region19: #{encoder_forward.1} parent=0 // pred_check_branch
    %27 = sbr.rel (0) target = $region21
  $region20: #{encoder_forward.1} parent=0 // pred_region
    _
  $region21: #{encoder_forward.1} parent=0 // pred_fallthru
    _
  // Predicated region
  $region22: #{encoder_forward.1} parent=0 // pred_check
    _
  $region23: #{encoder_forward.1} parent=0 // pred_check_branch
    %29 = sbr.rel (0) target = $region25
  $region24: #{encoder_forward.1} parent=0 // pred_region
    _
  $region25: #{encoder_forward.1} parent=0 // pred_fallthru
    _
  // Predicated region
  $region26: #{encoder_forward.1} parent=0 // pred_check
    _
  $region27: #{encoder_forward.1} parent=0 // pred_check_branch
    %31 = sbr.rel (0) target = $region29
  $region28: #{encoder_forward.1} parent=0 // pred_region
    _
  $region29: #{encoder_forward.1} parent=0 // pred_fallthru
    _
  // Predicated region
  $region30: #{encoder_forward.1} parent=0 // pred_check
    _
  $region31: #{encoder_forward.1} parent=0 // pred_check_branch
    %33 = sbr.rel (0) target = $region33
  $region32: #{encoder_forward.1} parent=0 // pred_region
    _
  $region33: #{encoder_forward.1} parent=0 // pred_fallthru
    _
  // Predicated region
  $region34: #{encoder_forward.1} parent=0 // pred_check
    _
  $region35: #{encoder_forward.1} parent=0 // pred_check_branch
    %35 = sbr.rel (0) target = $region37
  $region36: #{encoder_forward.1} parent=0 // pred_region
    _
  $region37: #{encoder_forward.1} parent=0 // pred_fallthru
    _
  // Predicated region
  $region38: #{encoder_forward.1} parent=0 // pred_check
    _
  $region39: #{encoder_forward.1} parent=0 // pred_check_branch
    %37 = sbr.rel (0) target = $region41
  $region40: #{encoder_forward.1} parent=0 // pred_region
    _
  $region41: #{encoder_forward.1} parent=0 // pred_fallthru
    _
  // Predicated region
  $region42: #{encoder_forward.1} parent=0 // pred_check
    _
  $region43: #{encoder_forward.1} parent=0 // pred_check_branch
    %39 = sbr.rel (0) target = $region45
  $region44: #{encoder_forward.1} parent=0 // pred_region
    _
  $region45: #{encoder_forward.1} parent=0 // pred_fallthru
    _
  // Predicated region
  $region46: #{encoder_forward.1} parent=0 // pred_check
    _
  $region47: #{encoder_forward.1} parent=0 // pred_check_branch
    %41 = sbr.rel (0) target = $region49
  $region48: #{encoder_forward.1} parent=0 // pred_region
    _
  $region49: #{encoder_forward.1} parent=0 // pred_fallthru
    _
  // Predicated region
  $region50: #{encoder_forward.1} parent=0 // pred_check
    _
  $region51: #{encoder_forward.1} parent=0 // pred_check_branch
    %43 = sbr.rel (0) target = $region53
  $region52: #{encoder_forward.1} parent=0 // pred_region
    _
  $region53: #{encoder_forward.1} parent=0 // pred_fallthru
    _
  %v44 = vld [vmem:[%s2] sm:$0xff]
  %v45 = vld [vmem:[%s2 + $0x8] sm:$0xff]
  %v46 = vld [vmem:[%s3] sm:$0x3]
  %v47 = vlaneseq
  %v48 = vand.u32 %v47, 127
  %v49 = vld [vmem:[%s0] sm:$0xff]
  %v50 = vld [vmem:[%s0 + $0x8] sm:$0xf]
  %51 = vset.pattern.permute.xlu0 0
  %52 = vperm.xlu0 %51, %v49
  %v53 = vpop.permute.xlu0 %52
  %54 = vset.pattern.permute.xlu0 0
  %55 = vperm.xlu0 %54, %v50
  %v56 = vpop.permute.xlu0 %55
  %vm57 = vcmp.eq.s32.totalorder %v48, %v53
  %vm58 = vcmp.eq.s32.totalorder %v48, %v56
  %v59 = vsel %vm57, 1, 0
  %v60 = vsel %vm58, 1, 0
  %v61 = vcvt.s32.f32 %v59
  %v62 = vcvt.s32.f32 %v60
  %vm63 = vcmask 130048
  %v65 = vsel %vm63, %v61, 0
  %v68 = vsel %vm63, %v62, 0
  %70 = vmatprep.subr.mxu0 0.0
  %71 = vmatpush1.msra.mxu0 0.0
  %72 = vmatprep.subr.mxu0 0.0
  %73 = vmatpush1.msra.mxu0 0.0
  %74 = vmatprep.subr.mxu0 0.0
  %75 = vmatpush1.msra.mxu0 0.0
  %76 = vmatprep.subr.mxu0 0.0
  %77 = vmatpush1.msra.mxu0 0.0
  %78 = vmatprep.subr.mxu0 0.0
  %79 = vmatpush1.msra.mxu0 0.0
  %80 = vmatprep.subr.mxu0 0.0
  %81 = vmatpush1.msra.mxu0 0.0
  %82 = vmatprep.subr.mxu0 0.0
  %83 = vmatpush1.msra.mxu0 0.0
  %84 = vmatprep.subr.mxu0 0.0
  %85 = vmatpush1.msra.mxu0 0.0
  %86 = vmatprep.subr.mxu0 0.0
  %87 = vmatpush1.msra.mxu0 0.0
  %88 = vmatprep.subr.mxu0 0.0
  %89 = vmatpush1.msra.mxu0 0.0
  %90 = vmatprep.subr.mxu0 0.0
  %91 = vmatpush1.msra.mxu0 0.0
  %92 = vmatprep.subr.mxu0 0.0
  %93 = vmatpush1.msra.mxu0 0.0
  %94 = vmatprep.subr.mxu0 0.0
  %95 = vmatpush1.msra.mxu0 0.0
  %96 = vmatprep.subr.mxu0 0.0
  %97 = vmatpush1.msra.mxu0 0.0
  %98 = vmatprep.subr.mxu0 0.0
  %99 = vmatpush1.msra.mxu0 %v45
  %100 = vmatprep.subr.mxu0 0.0
  %101 = vmatpush1.msra.mxu0 %v44
  %102 = vmatprep.subr.mxu0 0.0
  %103 = vmatpush2.msra.mxu0 0.0
  %104 = vmatprep.subr.mxu0 0.0
  %105 = vmatpush2.msra.mxu0 0.0
  %106 = vmatprep.subr.mxu0 0.0
  %107 = vmatpush2.msra.mxu0 0.0
  %108 = vmatprep.subr.mxu0 0.0
  %109 = vmatpush2.msra.mxu0 0.0
  %110 = vmatprep.subr.mxu0 0.0
  %111 = vmatpush2.msra.mxu0 0.0
  %112 = vmatprep.subr.mxu0 0.0
  %113 = vmatpush2.msra.mxu0 0.0
  %114 = vmatprep.subr.mxu0 0.0
  %115 = vmatpush2.msra.mxu0 0.0
  %116 = vmatprep.subr.mxu0 0.0
  %117 = vmatpush2.msra.mxu0 0.0
  %118 = vmatprep.subr.mxu0 0.0
  %119 = vmatpush2.msra.mxu0 0.0
  %120 = vmatprep.subr.mxu0 0.0
  %121 = vmatpush2.msra.mxu0 0.0
  %122 = vmatprep.subr.mxu0 0.0
  %123 = vmatpush2.msra.mxu0 0.0
  %124 = vmatprep.subr.mxu0 0.0
  %125 = vmatpush2.msra.mxu0 0.0
  %126 = vmatprep.subr.mxu0 0.0
  %127 = vmatpush2.msra.mxu0 0.0
  %128 = vmatprep.subr.mxu0 0.0
  %129 = vmatpush2.msra.mxu0 0.0
  %130 = vmatprep.subr.mxu0 0.0
  %131 = vmatpush2.msra.mxu0 0.0
  %132 = vmatprep.subr.mxu0 0.0
  %133 = vmatpush2.msra.mxu0 0.0
  %134 = vmatprep.mubr.f32.mxu0 0.0
  %135 = vmatmul.mubr.f32.gmra.mxu0 %v65
  %v136 = vpop.f32.mrf.mxu0
  %v137 = vadd.f32 0.0, %v136
  %v138 = vpop.f32.mrf.mxu0
  %139 = vmatprep.mubr.f32.mxu0 0.0
  %140 = vmatmul.mubr.f32.gmra.mxu0 %v68
  %v141 = vpop.f32.mrf.mxu0
  %v142 = vadd.f32 0.0, %v141
  %v143 = vpop.f32.mrf.mxu0
  %144 = vdwg.mxu0
  %s145 = scalar_lea.vmem %s0, 16
  %v146 = vld [vmem:[%s145] sm:$0xff]
  %v147 = vld [vmem:[%s145 + $0x8] sm:$0xf]
  %148 = vset.pattern.permute.xlu0 0
  %149 = vperm.xlu0 %148, %v146
  %v150 = vpop.permute.xlu0 %149
  %151 = vset.pattern.permute.xlu0 0
  %152 = vperm.xlu0 %151, %v147
  %v153 = vpop.permute.xlu0 %152
  %vm154 = vcmp.eq.s32.totalorder %v48, %v150
  %vm155 = vcmp.eq.s32.totalorder %v48, %v153
  %v156 = vsel %vm154, 1, 0
  %v157 = vsel %vm155, 1, 0
  %v158 = vcvt.s32.f32 %v156
  %v159 = vcvt.s32.f32 %v157
  %v161 = vsel %vm63, %v158, 0
  %v164 = vsel %vm63, %v159, 0
  %166 = vmatprep.subr.mxu0 0.0
  %167 = vmatpush1.msra.mxu0 0.0
  %168 = vmatprep.subr.mxu0 0.0
  %169 = vmatpush1.msra.mxu0 0.0
  %170 = vmatprep.subr.mxu0 0.0
  %171 = vmatpush1.msra.mxu0 0.0
  %172 = vmatprep.subr.mxu0 0.0
  %173 = vmatpush1.msra.mxu0 0.0
  %174 = vmatprep.subr.mxu0 0.0
  %175 = vmatpush1.msra.mxu0 0.0
  %176 = vmatprep.subr.mxu0 0.0
  %177 = vmatpush1.msra.mxu0 0.0
  %178 = vmatprep.subr.mxu0 0.0
  %179 = vmatpush1.msra.mxu0 0.0
  %180 = vmatprep.subr.mxu0 0.0
  %181 = vmatpush1.msra.mxu0 0.0
  %182 = vmatprep.subr.mxu0 0.0
  %183 = vmatpush1.msra.mxu0 0.0
  %184 = vmatprep.subr.mxu0 0.0
  %185 = vmatpush1.msra.mxu0 0.0
  %186 = vmatprep.subr.mxu0 0.0
  %187 = vmatpush1.msra.mxu0 0.0
  %188 = vmatprep.subr.mxu0 0.0
  %189 = vmatpush1.msra.mxu0 0.0
  %190 = vmatprep.subr.mxu0 0.0
  %191 = vmatpush1.msra.mxu0 0.0
  %192 = vmatprep.subr.mxu0 0.0
  %193 = vmatpush1.msra.mxu0 0.0
  %194 = vmatprep.subr.mxu0 0.0
  %195 = vmatpush1.msra.mxu0 %v45
  %196 = vmatprep.subr.mxu0 0.0
  %197 = vmatpush1.msra.mxu0 %v44
  %198 = vmatprep.subr.mxu0 0.0
  %199 = vmatpush2.msra.mxu0 0.0
  %200 = vmatprep.subr.mxu0 0.0
  %201 = vmatpush2.msra.mxu0 0.0
  %202 = vmatprep.subr.mxu0 0.0
  %203 = vmatpush2.msra.mxu0 0.0
  %204 = vmatprep.subr.mxu0 0.0
  %205 = vmatpush2.msra.mxu0 0.0
  %206 = vmatprep.subr.mxu0 0.0
  %207 = vmatpush2.msra.mxu0 0.0
  %208 = vmatprep.subr.mxu0 0.0
  %209 = vmatpush2.msra.mxu0 0.0
  %210 = vmatprep.subr.mxu0 0.0
  %211 = vmatpush2.msra.mxu0 0.0
  %212 = vmatprep.subr.mxu0 0.0
  %213 = vmatpush2.msra.mxu0 0.0
  %214 = vmatprep.subr.mxu0 0.0
  %215 = vmatpush2.msra.mxu0 0.0
  %216 = vmatprep.subr.mxu0 0.0
  %217 = vmatpush2.msra.mxu0 0.0
  %218 = vmatprep.subr.mxu0 0.0
  %219 = vmatpush2.msra.mxu0 0.0
  %220 = vmatprep.subr.mxu0 0.0
  %221 = vmatpush2.msra.mxu0 0.0
  %222 = vmatprep.subr.mxu0 0.0
  %223 = vmatpush2.msra.mxu0 0.0
  %224 = vmatprep.subr.mxu0 0.0
  %225 = vmatpush2.msra.mxu0 0.0
  %226 = vmatprep.subr.mxu0 0.0
  %227 = vmatpush2.msra.mxu0 0.0
  %228 = vmatprep.subr.mxu0 0.0
  %229 = vmatpush2.msra.mxu0 0.0
  %230 = vmatprep.mubr.f32.mxu0 0.0
  %231 = vmatmul.mubr.f32.gmra.mxu0 %v161
  %v232 = vpop.f32.mrf.mxu0
  %v233 = vadd.f32 0.0, %v232
  %v234 = vpop.f32.mrf.mxu0
  %235 = vmatprep.mubr.f32.mxu0 0.0
  %236 = vmatmul.mubr.f32.gmra.mxu0 %v164
  %v237 = vpop.f32.mrf.mxu0
  %v238 = vadd.f32 0.0, %v237
  %v239 = vpop.f32.mrf.mxu0
  %240 = vdwg.mxu0
  %vm243 = vcmask 1043456
  %v244 = vrot.slane %v233, 4
  %v245 = vrot.slane %v238, 4
  %v246 = vsel %vm243, %v244, %v245
  %v249 = vsel %vm243, %v142, %v244
  %vm250 = vcmask 261120
  %v251 = vsel %vm250, %v137, 0.0
  %252 = vadd.xlane.f32.xlu0 %v251
  %v253 = vpop.xlane.xlu0 %252
  %v254 = vsel %vm250, %v249, 0.0
  %255 = vadd.xlane.f32.xlu0 %v254
  %v256 = vpop.xlane.xlu0 %255
  %v257 = vsel %vm250, %v246, 0.0
  %258 = vadd.xlane.f32.xlu0 %v257
  %v259 = vpop.xlane.xlu0 %258
  %v260 = vrcp.pop 32.0
  %v261 = vmul.f32 %v253, %v260
  %v262 = vmul.f32 %v256, %v260
  %v263 = vmul.f32 %v259, %v260
  %v264 = vsub.f32 %v137, %v261
  %v265 = vsub.f32 %v249, %v262
  %v266 = vsub.f32 %v246, %v263
  %v267 = vmul.f32 %v264, %v264
  %v268 = vmul.f32 %v265, %v265
  %v269 = vmul.f32 %v266, %v266
  %v270 = vsel %vm250, %v267, 0.0
  %271 = vadd.xlane.f32.xlu0 %v270
  %v272 = vpop.xlane.xlu0 %271
  %v273 = vsel %vm250, %v268, 0.0
  %274 = vadd.xlane.f32.xlu0 %v273
  %v275 = vpop.xlane.xlu0 %274
  %v276 = vsel %vm250, %v269, 0.0
  %277 = vadd.xlane.f32.xlu0 %v276
  %v278 = vpop.xlane.xlu0 %277
  %v279 = vmul.f32 %v272, %v260
  %v280 = vmul.f32 %v275, %v260
  %v281 = vmul.f32 %v278, %v260
  %v282 = vadd.f32 %v279, 1e-05
  %v283 = vadd.f32 %v280, 1e-05
  %v284 = vadd.f32 %v281, 1e-05
  %v285 = vrsqrt.pop %v282
  %v286 = vrsqrt.pop %v283
  %v287 = vrsqrt.pop %v284
  %v288 = vmul.f32 %v264, %v285
  %v289 = vmul.f32 %v265, %v286
  %v290 = vmul.f32 %v266, %v287
  %v291 = vlaneseq
  %v292 = vshrl.u32 %v291, 7
  %v293 = vsub.s32 0, %v292
  %v294 = vrot.slane %v46, %v293
  %v295 = vmul.f32 %v288, %v294
  %v296 = vmul.f32 %v289, %v294
  %v297 = vmul.f32 %v290, %v294
  %v298 = vlaneseq
  %v299 = vshrl.u32 %v298, 7
  %v300 = vsub.s32 1, %v299
  %v301 = vrot.slane %v46, %v300
  %v302 = vadd.f32 %v295, %v301
  %v303 = vadd.f32 %v296, %v301
  %v304 = vadd.f32 %v297, %v301
  %v305 = vld [vmem:[%s1] sm:$0x1]
  %v306 = vsub.f32 1.0, %v305
  %vm307 = vcmp.ne.f32.partialorder %v306, 0.0
  %v308 = vsel %vm307, -1e+09, 0.0
  %s309 = scalar_lea.vmem %s1, 1
  %v310 = vld [vmem:[%s309] sm:$0x1]
  %v311 = vsub.f32 1.0, %v310
  %vm312 = vcmp.ne.f32.partialorder %v311, 0.0
  %v313 = vsel %vm312, -1e+09, 0.0
  %v314 = vld [vmem:[%s12] sm:$0x3]
  %v315 = vld [vmem:[%s4] sm:$0xff]
  %v316 = vld [vmem:[%s4 + $0x8] sm:$0xff]
  %v317 = vld [vmem:[%s4 + $0x10] sm:$0xff]
  %v318 = vld [vmem:[%s4 + $0x18] sm:$0xff]
  %v319 = vld [vmem:[%s5] sm:$0x1]
  %v321 = vlaneseq
  %v322 = vshrl.u32 %v321, 7
  %v323 = vsub.s32 0, %v322
  %v324 = vrot.slane %v319, %v323
  %v327 = vsel %vm250, %v302, 0
  %v330 = vsel %vm250, %v303, 0
  %v333 = vsel %vm250, %v304, 0
  %335 = vmatprep.subr.mxu0 0.0
  %336 = vmatpush1.msra.mxu0 0.0
  %337 = vmatprep.subr.mxu0 0.0
  %338 = vmatpush1.msra.mxu0 0.0
  %339 = vmatprep.subr.mxu0 0.0
  %340 = vmatpush1.msra.mxu0 0.0
  %341 = vmatprep.subr.mxu0 0.0
  %342 = vmatpush1.msra.mxu0 0.0
  %343 = vmatprep.subr.mxu0 0.0
  %344 = vmatpush1.msra.mxu0 0.0
  %345 = vmatprep.subr.mxu0 0.0
  %346 = vmatpush1.msra.mxu0 0.0
  %347 = vmatprep.subr.mxu0 0.0
  %348 = vmatpush1.msra.mxu0 0.0
  %349 = vmatprep.subr.mxu0 0.0
  %350 = vmatpush1.msra.mxu0 0.0
  %351 = vmatprep.subr.mxu0 0.0
  %352 = vmatpush1.msra.mxu0 0.0
  %353 = vmatprep.subr.mxu0 0.0
  %354 = vmatpush1.msra.mxu0 0.0
  %355 = vmatprep.subr.mxu0 0.0
  %356 = vmatpush1.msra.mxu0 0.0
  %357 = vmatprep.subr.mxu0 0.0
  %358 = vmatpush1.msra.mxu0 0.0
  %359 = vmatprep.subr.mxu0 0.0
  %360 = vmatpush1.msra.mxu0 %v318
  %361 = vmatprep.subr.mxu0 0.0
  %362 = vmatpush1.msra.mxu0 %v317
  %363 = vmatprep.subr.mxu0 0.0
  %364 = vmatpush1.msra.mxu0 %v316
  %365 = vmatprep.subr.mxu0 0.0
  %366 = vmatpush1.msra.mxu0 %v315
  %367 = vmatprep.subr.mxu0 0.0
  %368 = vmatpush2.msra.mxu0 0.0
  %369 = vmatprep.subr.mxu0 0.0
  %370 = vmatpush2.msra.mxu0 0.0
  %371 = vmatprep.subr.mxu0 0.0
  %372 = vmatpush2.msra.mxu0 0.0
  %373 = vmatprep.subr.mxu0 0.0
  %374 = vmatpush2.msra.mxu0 0.0
  %375 = vmatprep.subr.mxu0 0.0
  %376 = vmatpush2.msra.mxu0 0.0
  %377 = vmatprep.subr.mxu0 0.0
  %378 = vmatpush2.msra.mxu0 0.0
  %379 = vmatprep.subr.mxu0 0.0
  %380 = vmatpush2.msra.mxu0 0.0
  %381 = vmatprep.subr.mxu0 0.0
  %382 = vmatpush2.msra.mxu0 0.0
  %383 = vmatprep.subr.mxu0 0.0
  %384 = vmatpush2.msra.mxu0 0.0
  %385 = vmatprep.subr.mxu0 0.0
  %386 = vmatpush2.msra.mxu0 0.0
  %387 = vmatprep.subr.mxu0 0.0
  %388 = vmatpush2.msra.mxu0 0.0
  %389 = vmatprep.subr.mxu0 0.0
  %390 = vmatpush2.msra.mxu0 0.0
  %391 = vmatprep.subr.mxu0 0.0
  %392 = vmatpush2.msra.mxu0 0.0
  %393 = vmatprep.subr.mxu0 0.0
  %394 = vmatpush2.msra.mxu0 0.0
  %395 = vmatprep.subr.mxu0 0.0
  %396 = vmatpush2.msra.mxu0 0.0
  %397 = vmatprep.subr.mxu0 0.0
  %398 = vmatpush2.msra.mxu0 0.0
  %399 = vmatprep.mubr.f32.mxu0 0.0
  %400 = vmatmul.mubr.f32.gmra.mxu0 %v327
  %v401 = vpop.f32.mrf.mxu0
  %v402 = vadd.f32 %v324, %v401
  %v403 = vpop.f32.mrf.mxu0
  %404 = vmatprep.mubr.f32.mxu0 0.0
  %405 = vmatmul.mubr.f32.gmra.mxu0 %v330
  %v406 = vpop.f32.mrf.mxu0
  %v407 = vadd.f32 %v324, %v406
  %v408 = vpop.f32.mrf.mxu0
  %409 = vmatprep.mubr.f32.mxu0 0.0
  %410 = vmatmul.mubr.f32.gmra.mxu0 %v333
  %v411 = vpop.f32.mrf.mxu0
  %v412 = vadd.f32 %v324, %v411
  %v413 = vpop.f32.mrf.mxu0
  %414 = vdwg.mxu0
  %v415 = vld [vmem:[%s6] sm:$0xff]
  %v416 = vld [vmem:[%s6 + $0x8] sm:$0xff]
  %v417 = vld [vmem:[%s6 + $0x10] sm:$0xff]
  %v418 = vld [vmem:[%s6 + $0x18] sm:$0xff]
  %v420 = vlaneseq
  %v421 = vshrl.u32 %v420, 7
  %v422 = vsub.s32 0, %v421
  %v423 = vrot.slane %v308, %v422
  %427 = vrot.lane.b32.xlu0 %v402, 96
  %v428 = vpop.permute.xlu0 %427
  %429 = vrot.lane.b32.xlu0 %v407, 96
  %v430 = vpop.permute.xlu0 %429
  %vm431 = vcmask 64512
  %v432 = vsel %vm431, %v402, 0
  %v434 = vsel %vm431, %v407, 0
  %v436 = vsel %vm431, %v428, 0
  %v438 = vsel %vm431, %v430, 0
  %440 = vmatprep.subr.mxu0 0.0
  %441 = vmatpush1.xpose.msra.mxu0 0.0
  %442 = vmatprep.subr.mxu0 0.0
  %443 = vmatpush1.xpose.msra.mxu0 0.0
  %444 = vmatprep.subr.mxu0 0.0
  %445 = vmatpush1.xpose.msra.mxu0 0.0
  %446 = vmatprep.subr.mxu0 0.0
  %447 = vmatpush1.xpose.msra.mxu0 0.0
  %448 = vmatprep.subr.mxu0 0.0
  %449 = vmatpush1.xpose.msra.mxu0 0.0
  %450 = vmatprep.subr.mxu0 0.0
  %451 = vmatpush1.xpose.msra.mxu0 0.0
  %452 = vmatprep.subr.mxu0 0.0
  %453 = vmatpush1.xpose.msra.mxu0 0.0
  %454 = vmatprep.subr.mxu0 0.0
  %455 = vmatpush1.xpose.msra.mxu0 0.0
  %456 = vmatprep.subr.mxu0 0.0
  %457 = vmatpush1.xpose.msra.mxu0 0.0
  %458 = vmatprep.subr.mxu0 0.0
  %459 = vmatpush1.xpose.msra.mxu0 0.0
  %460 = vmatprep.subr.mxu0 0.0
  %461 = vmatpush1.xpose.msra.mxu0 0.0
  %462 = vmatprep.subr.mxu0 0.0
  %463 = vmatpush1.xpose.msra.mxu0 0.0
  %464 = vmatprep.subr.mxu0 0.0
  %465 = vmatpush1.xpose.msra.mxu0 0.0
  %466 = vmatprep.subr.mxu0 0.0
  %467 = vmatpush1.xpose.msra.mxu0 0.0
  %468 = vmatprep.subr.mxu0 0.0
  %469 = vmatpush1.xpose.msra.mxu0 %v438
  %470 = vmatprep.subr.mxu0 0.0
  %471 = vmatpush1.xpose.msra.mxu0 %v436
  %472 = vmatprep.subr.mxu0 0.0
  %473 = vmatpush2.xpose.msra.mxu0 0.0
  %474 = vmatprep.subr.mxu0 0.0
  %475 = vmatpush2.xpose.msra.mxu0 0.0
  %476 = vmatprep.subr.mxu0 0.0
  %477 = vmatpush2.xpose.msra.mxu0 0.0
  %478 = vmatprep.subr.mxu0 0.0
  %479 = vmatpush2.xpose.msra.mxu0 0.0
  %480 = vmatprep.subr.mxu0 0.0
  %481 = vmatpush2.xpose.msra.mxu0 0.0
  %482 = vmatprep.subr.mxu0 0.0
  %483 = vmatpush2.xpose.msra.mxu0 0.0
  %484 = vmatprep.subr.mxu0 0.0
  %485 = vmatpush2.xpose.msra.mxu0 0.0
  %486 = vmatprep.subr.mxu0 0.0
  %487 = vmatpush2.xpose.msra.mxu0 0.0
  %488 = vmatprep.subr.mxu0 0.0
  %489 = vmatpush2.xpose.msra.mxu0 0.0
  %490 = vmatprep.subr.mxu0 0.0
  %491 = vmatpush2.xpose.msra.mxu0 0.0
  %492 = vmatprep.subr.mxu0 0.0
  %493 = vmatpush2.xpose.msra.mxu0 0.0
  %494 = vmatprep.subr.mxu0 0.0
  %495 = vmatpush2.xpose.msra.mxu0 0.0
  %496 = vmatprep.subr.mxu0 0.0
  %497 = vmatpush2.xpose.msra.mxu0 0.0
  %498 = vmatprep.subr.mxu0 0.0
  %499 = vmatpush2.xpose.msra.mxu0 0.0
  %500 = vmatprep.subr.mxu0 0.0
  %501 = vmatpush2.xpose.msra.mxu0 0.0
  %502 = vmatprep.subr.mxu0 0.0
  %503 = vmatpush2.xpose.msra.mxu0 0.0
  %504 = vmatprep.mubr.f32.mxu0 0.0
  %505 = vmatmul.mubr.f32.gmra.mxu0 %v432
  %v506 = vpop.f32.mrf.mxu0
  %v507 = vadd.f32 %v423, %v506
  %v508 = vpop.f32.mrf.mxu0
  %509 = vmatprep.mubr.f32.mxu0 0.0
  %510 = vmatmul.mubr.f32.gmra.mxu0 %v434
  %v511 = vpop.f32.mrf.mxu0
  %v512 = vadd.f32 %v423, %v511
  %v513 = vpop.f32.mrf.mxu0
  %514 = vdwg.mxu0
  %vm515 = vcmask 97280
  %v516 = vsel %vm515, %v507, -inf
  %517 = vmax.xlane.f32.xlu0 %v516
  %v518 = vpop.xlane.xlu0 %517
  %vm519 = vcmask 93184
  %v520 = vsel %vm519, %v512, -inf
  %521 = vmax.xlane.f32.xlu0 %v520
  %v522 = vpop.xlane.xlu0 %521
  %v523 = vsub.f32 %v507, %v518
  %v524 = vsub.f32 %v512, %v522
  %v525 = vmul.f32 %v523, 1.442695
  %v526 = vpow.pop %v525
  %v527 = vmul.f32 %v524, 1.442695
  %v528 = vpow.pop %v527
  %v529 = vsel %vm515, %v526, 0.0
  %530 = vadd.xlane.f32.xlu0 %v529
  %v531 = vpop.xlane.xlu0 %530
  %v532 = vsel %vm519, %v528, 0.0
  %533 = vadd.xlane.f32.xlu0 %v532
  %v534 = vpop.xlane.xlu0 %533
  %v535 = vrcp.pop %v531
  %v536 = vrcp.pop %v534
  %v537 = vmul.f32 %v526, %v535
  %v538 = vmul.f32 %v528, %v536
  %539 = vrot.lane.b32.xlu0 %v402, 64
  %v540 = vpop.permute.xlu0 %539
  %541 = vrot.lane.b32.xlu0 %v407, 64
  %v542 = vpop.permute.xlu0 %541
  %v545 = vsel %vm515, %v537, 0
  %v548 = vsel %vm515, %v538, 0
  %v550 = vsel %vm243, %v542, 0
  %552 = vmatprep.subr.mxu0 0.0
  %553 = vmatpush1.msra.mxu0 0.0
  %554 = vmatprep.subr.mxu0 0.0
  %555 = vmatpush1.msra.mxu0 0.0
  %556 = vmatprep.subr.mxu0 0.0
  %557 = vmatpush1.msra.mxu0 0.0
  %558 = vmatprep.subr.mxu0 0.0
  %559 = vmatpush1.msra.mxu0 0.0
  %560 = vmatprep.subr.mxu0 0.0
  %561 = vmatpush1.msra.mxu0 0.0
  %562 = vmatprep.subr.mxu0 0.0
  %563 = vmatpush1.msra.mxu0 0.0
  %564 = vmatprep.subr.mxu0 0.0
  %565 = vmatpush1.msra.mxu0 0.0
  %566 = vmatprep.subr.mxu0 0.0
  %567 = vmatpush1.msra.mxu0 0.0
  %568 = vmatprep.subr.mxu0 0.0
  %569 = vmatpush1.msra.mxu0 0.0
  %570 = vmatprep.subr.mxu0 0.0
  %571 = vmatpush1.msra.mxu0 0.0
  %572 = vmatprep.subr.mxu0 0.0
  %573 = vmatpush1.msra.mxu0 0.0
  %574 = vmatprep.subr.mxu0 0.0
  %575 = vmatpush1.msra.mxu0 0.0
  %576 = vmatprep.subr.mxu0 0.0
  %577 = vmatpush1.msra.mxu0 0.0
  %578 = vmatprep.subr.mxu0 0.0
  %579 = vmatpush1.msra.mxu0 0.0
  %580 = vmatprep.subr.mxu0 0.0
  %581 = vmatpush1.msra.mxu0 %v550
  %582 = vmatprep.subr.mxu0 0.0
  %583 = vmatpush1.msra.mxu0 %v540
  %584 = vmatprep.subr.mxu0 0.0
  %585 = vmatpush2.msra.mxu0 0.0
  %586 = vmatprep.subr.mxu0 0.0
  %587 = vmatpush2.msra.mxu0 0.0
  %588 = vmatprep.subr.mxu0 0.0
  %589 = vmatpush2.msra.mxu0 0.0
  %590 = vmatprep.subr.mxu0 0.0
  %591 = vmatpush2.msra.mxu0 0.0
  %592 = vmatprep.subr.mxu0 0.0
  %593 = vmatpush2.msra.mxu0 0.0
  %594 = vmatprep.subr.mxu0 0.0
  %595 = vmatpush2.msra.mxu0 0.0
  %596 = vmatprep.subr.mxu0 0.0
  %597 = vmatpush2.msra.mxu0 0.0
  %598 = vmatprep.subr.mxu0 0.0
  %599 = vmatpush2.msra.mxu0 0.0
  %600 = vmatprep.subr.mxu0 0.0
  %601 = vmatpush2.msra.mxu0 0.0
  %602 = vmatprep.subr.mxu0 0.0
  %603 = vmatpush2.msra.mxu0 0.0
  %604 = vmatprep.subr.mxu0 0.0
  %605 = vmatpush2.msra.mxu0 0.0
  %606 = vmatprep.subr.mxu0 0.0
  %607 = vmatpush2.msra.mxu0 0.0
  %608 = vmatprep.subr.mxu0 0.0
  %609 = vmatpush2.msra.mxu0 0.0
  %610 = vmatprep.subr.mxu0 0.0
  %611 = vmatpush2.msra.mxu0 0.0
  %612 = vmatprep.subr.mxu0 0.0
  %613 = vmatpush2.msra.mxu0 0.0
  %614 = vmatprep.subr.mxu0 0.0
  %615 = vmatpush2.msra.mxu0 0.0
  %616 = vmatprep.mubr.f32.mxu0 0.0
  %617 = vmatmul.mubr.f32.gmra.mxu0 %v545
  %v618 = vpop.f32.mrf.mxu0
  %v619 = vadd.f32 0.0, %v618
  %v620 = vpop.f32.mrf.mxu0
  %621 = vmatprep.mubr.f32.mxu0 0.0
  %622 = vmatmul.mubr.f32.gmra.mxu0 %v548
  %v623 = vpop.f32.mrf.mxu0
  %v624 = vadd.f32 0.0, %v623
  %v625 = vpop.f32.mrf.mxu0
  %626 = vdwg.mxu0
  %627 = vrot.lane.b32.xlu0 %v402, 120
  %v628 = vpop.permute.xlu0 %627
  %629 = vrot.lane.b32.xlu0 %v407, 120
  %v630 = vpop.permute.xlu0 %629
  %631 = vrot.lane.b32.xlu0 %v402, 88
  %v632 = vpop.permute.xlu0 %631
  %633 = vrot.lane.b32.xlu0 %v407, 88
  %v634 = vpop.permute.xlu0 %633
  %v635 = vsel %vm431, %v628, 0
  %v637 = vsel %vm431, %v630, 0
  %v639 = vsel %vm431, %v632, 0
  %v641 = vsel %vm431, %v634, 0
  %643 = vmatprep.subr.mxu0 0.0
  %644 = vmatpush1.xpose.msra.mxu0 0.0
  %645 = vmatprep.subr.mxu0 0.0
  %646 = vmatpush1.xpose.msra.mxu0 0.0
  %647 = vmatprep.subr.mxu0 0.0
  %648 = vmatpush1.xpose.msra.mxu0 0.0
  %649 = vmatprep.subr.mxu0 0.0
  %650 = vmatpush1.xpose.msra.mxu0 0.0
  %651 = vmatprep.subr.mxu0 0.0
  %652 = vmatpush1.xpose.msra.mxu0 0.0
  %653 = vmatprep.subr.mxu0 0.0
  %654 = vmatpush1.xpose.msra.mxu0 0.0
  %655 = vmatprep.subr.mxu0 0.0
  %656 = vmatpush1.xpose.msra.mxu0 0.0
  %657 = vmatprep.subr.mxu0 0.0
  %658 = vmatpush1.xpose.msra.mxu0 0.0
  %659 = vmatprep.subr.mxu0 0.0
  %660 = vmatpush1.xpose.msra.mxu0 0.0
  %661 = vmatprep.subr.mxu0 0.0
  %662 = vmatpush1.xpose.msra.mxu0 0.0
  %663 = vmatprep.subr.mxu0 0.0
  %664 = vmatpush1.xpose.msra.mxu0 0.0
  %665 = vmatprep.subr.mxu0 0.0
  %666 = vmatpush1.xpose.msra.mxu0 0.0
  %667 = vmatprep.subr.mxu0 0.0
  %668 = vmatpush1.xpose.msra.mxu0 0.0
  %669 = vmatprep.subr.mxu0 0.0
  %670 = vmatpush1.xpose.msra.mxu0 0.0
  %671 = vmatprep.subr.mxu0 0.0
  %672 = vmatpush1.xpose.msra.mxu0 %v641
  %673 = vmatprep.subr.mxu0 0.0
  %674 = vmatpush1.xpose.msra.mxu0 %v639
  %675 = vmatprep.subr.mxu0 0.0
  %676 = vmatpush2.xpose.msra.mxu0 0.0
  %677 = vmatprep.subr.mxu0 0.0
  %678 = vmatpush2.xpose.msra.mxu0 0.0
  %679 = vmatprep.subr.mxu0 0.0
  %680 = vmatpush2.xpose.msra.mxu0 0.0
  %681 = vmatprep.subr.mxu0 0.0
  %682 = vmatpush2.xpose.msra.mxu0 0.0
  %683 = vmatprep.subr.mxu0 0.0
  %684 = vmatpush2.xpose.msra.mxu0 0.0
  %685 = vmatprep.subr.mxu0 0.0
  %686 = vmatpush2.xpose.msra.mxu0 0.0
  %687 = vmatprep.subr.mxu0 0.0
  %688 = vmatpush2.xpose.msra.mxu0 0.0
  %689 = vmatprep.subr.mxu0 0.0
  %690 = vmatpush2.xpose.msra.mxu0 0.0
  %691 = vmatprep.subr.mxu0 0.0
  %692 = vmatpush2.xpose.msra.mxu0 0.0
  %693 = vmatprep.subr.mxu0 0.0
  %694 = vmatpush2.xpose.msra.mxu0 0.0
  %695 = vmatprep.subr.mxu0 0.0
  %696 = vmatpush2.xpose.msra.mxu0 0.0
  %697 = vmatprep.subr.mxu0 0.0
  %698 = vmatpush2.xpose.msra.mxu0 0.0
  %699 = vmatprep.subr.mxu0 0.0
  %700 = vmatpush2.xpose.msra.mxu0 0.0
  %701 = vmatprep.subr.mxu0 0.0
  %702 = vmatpush2.xpose.msra.mxu0 0.0
  %703 = vmatprep.subr.mxu0 0.0
  %704 = vmatpush2.xpose.msra.mxu0 0.0
  %705 = vmatprep.subr.mxu0 0.0
  %706 = vmatpush2.xpose.msra.mxu0 0.0
  %707 = vmatprep.mubr.f32.mxu0 0.0
  %708 = vmatmul.mubr.f32.gmra.mxu0 %v635
  %v709 = vpop.f32.mrf.mxu0
  %v710 = vadd.f32 %v423, %v709
  %v711 = vpop.f32.mrf.mxu0
  %712 = vmatprep.mubr.f32.mxu0 0.0
  %713 = vmatmul.mubr.f32.gmra.mxu0 %v637
  %v714 = vpop.f32.mrf.mxu0
  %v715 = vadd.f32 %v423, %v714
  %v716 = vpop.f32.mrf.mxu0
  %717 = vdwg.mxu0
  %v718 = vsel %vm515, %v710, -inf
  %719 = vmax.xlane.f32.xlu0 %v718
  %v720 = vpop.xlane.xlu0 %719
  %v721 = vsel %vm519, %v715, -inf
  %722 = vmax.xlane.f32.xlu0 %v721
  %v723 = vpop.xlane.xlu0 %722
  %v724 = vsub.f32 %v710, %v720
  %v725 = vsub.f32 %v715, %v723
  %v726 = vmul.f32 %v724, 1.442695
  %v727 = vpow.pop %v726
  %v728 = vmul.f32 %v725, 1.442695
  %v729 = vpow.pop %v728
  %v730 = vsel %vm515, %v727, 0.0
  %731 = vadd.xlane.f32.xlu0 %v730
  %v732 = vpop.xlane.xlu0 %731
  %v733 = vsel %vm519, %v729, 0.0
  %734 = vadd.xlane.f32.xlu0 %v733
  %v735 = vpop.xlane.xlu0 %734
  %v736 = vrcp.pop %v732
  %v737 = vrcp.pop %v735
  %v738 = vmul.f32 %v727, %v736
  %v739 = vmul.f32 %v729, %v737
  %740 = vrot.lane.b32.xlu0 %v402, 56
  %v741 = vpop.permute.xlu0 %740
  %742 = vrot.lane.b32.xlu0 %v407, 56
  %v743 = vpop.permute.xlu0 %742
  %v746 = vsel %vm515, %v738, 0
  %v749 = vsel %vm515, %v739, 0
  %v751 = vsel %vm243, %v743, 0
  %753 = vmatprep.subr.mxu0 0.0
  %754 = vmatpush1.msra.mxu0 0.0
  %755 = vmatprep.subr.mxu0 0.0
  %756 = vmatpush1.msra.mxu0 0.0
  %757 = vmatprep.subr.mxu0 0.0
  %758 = vmatpush1.msra.mxu0 0.0
  %759 = vmatprep.subr.mxu0 0.0
  %760 = vmatpush1.msra.mxu0 0.0
  %761 = vmatprep.subr.mxu0 0.0
  %762 = vmatpush1.msra.mxu0 0.0
  %763 = vmatprep.subr.mxu0 0.0
  %764 = vmatpush1.msra.mxu0 0.0
  %765 = vmatprep.subr.mxu0 0.0
  %766 = vmatpush1.msra.mxu0 0.0
  %767 = vmatprep.subr.mxu0 0.0
  %768 = vmatpush1.msra.mxu0 0.0
  %769 = vmatprep.subr.mxu0 0.0
  %770 = vmatpush1.msra.mxu0 0.0
  %771 = vmatprep.subr.mxu0 0.0
  %772 = vmatpush1.msra.mxu0 0.0
  %773 = vmatprep.subr.mxu0 0.0
  %774 = vmatpush1.msra.mxu0 0.0
  %775 = vmatprep.subr.mxu0 0.0
  %776 = vmatpush1.msra.mxu0 0.0
  %777 = vmatprep.subr.mxu0 0.0
  %778 = vmatpush1.msra.mxu0 0.0
  %779 = vmatprep.subr.mxu0 0.0
  %780 = vmatpush1.msra.mxu0 0.0
  %781 = vmatprep.subr.mxu0 0.0
  %782 = vmatpush1.msra.mxu0 %v751
  %783 = vmatprep.subr.mxu0 0.0
  %784 = vmatpush1.msra.mxu0 %v741
  %785 = vmatprep.subr.mxu0 0.0
  %786 = vmatpush2.msra.mxu0 0.0
  %787 = vmatprep.subr.mxu0 0.0
  %788 = vmatpush2.msra.mxu0 0.0
  %789 = vmatprep.subr.mxu0 0.0
  %790 = vmatpush2.msra.mxu0 0.0
  %791 = vmatprep.subr.mxu0 0.0
  %792 = vmatpush2.msra.mxu0 0.0
  %793 = vmatprep.subr.mxu0 0.0
  %794 = vmatpush2.msra.mxu0 0.0
  %795 = vmatprep.subr.mxu0 0.0
  %796 = vmatpush2.msra.mxu0 0.0
  %797 = vmatprep.subr.mxu0 0.0
  %798 = vmatpush2.msra.mxu0 0.0
  %799 = vmatprep.subr.mxu0 0.0
  %800 = vmatpush2.msra.mxu0 0.0
  %801 = vmatprep.subr.mxu0 0.0
  %802 = vmatpush2.msra.mxu0 0.0
  %803 = vmatprep.subr.mxu0 0.0
  %804 = vmatpush2.msra.mxu0 0.0
  %805 = vmatprep.subr.mxu0 0.0
  %806 = vmatpush2.msra.mxu0 0.0
  %807 = vmatprep.subr.mxu0 0.0
  %808 = vmatpush2.msra.mxu0 0.0
  %809 = vmatprep.subr.mxu0 0.0
  %810 = vmatpush2.msra.mxu0 0.0
  %811 = vmatprep.subr.mxu0 0.0
  %812 = vmatpush2.msra.mxu0 0.0
  %813 = vmatprep.subr.mxu0 0.0
  %814 = vmatpush2.msra.mxu0 0.0
  %815 = vmatprep.subr.mxu0 0.0
  %816 = vmatpush2.msra.mxu0 0.0
  %817 = vmatprep.mubr.f32.mxu0 0.0
  %818 = vmatmul.mubr.f32.gmra.mxu0 %v746
  %v819 = vpop.f32.mrf.mxu0
  %v820 = vadd.f32 0.0, %v819
  %v821 = vpop.f32.mrf.mxu0
  %822 = vmatprep.mubr.f32.mxu0 0.0
  %823 = vmatmul.mubr.f32.gmra.mxu0 %v749
  %v824 = vpop.f32.mrf.mxu0
  %v825 = vadd.f32 0.0, %v824
  %v826 = vpop.f32.mrf.mxu0
  %827 = vdwg.mxu0
  %v829 = vsel %vm431, %v820, 0
  %v832 = vsel %vm431, %v825, 0
  %834 = vmatprep.subr.mxu0 0.0
  %835 = vmatpush1.msra.mxu0 0.0
  %836 = vmatprep.subr.mxu0 0.0
  %837 = vmatpush1.msra.mxu0 0.0
  %838 = vmatprep.subr.mxu0 0.0
  %839 = vmatpush1.msra.mxu0 0.0
  %840 = vmatprep.subr.mxu0 0.0
  %841 = vmatpush1.msra.mxu0 0.0
  %842 = vmatprep.subr.mxu0 0.0
  %843 = vmatpush1.msra.mxu0 0.0
  %844 = vmatprep.subr.mxu0 0.0
  %845 = vmatpush1.msra.mxu0 0.0
  %846 = vmatprep.subr.mxu0 0.0
  %847 = vmatpush1.msra.mxu0 0.0
  %848 = vmatprep.subr.mxu0 0.0
  %849 = vmatpush1.msra.mxu0 0.0
  %850 = vmatprep.subr.mxu0 0.0
  %851 = vmatpush1.msra.mxu0 0.0
  %852 = vmatprep.subr.mxu0 0.0
  %853 = vmatpush1.msra.mxu0 0.0
  %854 = vmatprep.subr.mxu0 0.0
  %855 = vmatpush1.msra.mxu0 0.0
  %856 = vmatprep.subr.mxu0 0.0
  %857 = vmatpush1.msra.mxu0 0.0
  %858 = vmatprep.subr.mxu0 0.0
  %859 = vmatpush1.msra.mxu0 0.0
  %860 = vmatprep.subr.mxu0 0.0
  %861 = vmatpush1.msra.mxu0 0.0
  %862 = vmatprep.subr.mxu0 0.0
  %863 = vmatpush1.msra.mxu0 0.0
  %864 = vmatprep.subr.mxu0 0.0
  %865 = vmatpush1.msra.mxu0 %v416
  %866 = vmatprep.subr.mxu0 0.0
  %867 = vmatpush2.msra.mxu0 0.0
  %868 = vmatprep.subr.mxu0 0.0
  %869 = vmatpush2.msra.mxu0 0.0
  %870 = vmatprep.subr.mxu0 0.0
  %871 = vmatpush2.msra.mxu0 0.0
  %872 = vmatprep.subr.mxu0 0.0
  %873 = vmatpush2.msra.mxu0 0.0
  %874 = vmatprep.subr.mxu0 0.0
  %875 = vmatpush2.msra.mxu0 0.0
  %876 = vmatprep.subr.mxu0 0.0
  %877 = vmatpush2.msra.mxu0 0.0
  %878 = vmatprep.subr.mxu0 0.0
  %879 = vmatpush2.msra.mxu0 0.0
  %880 = vmatprep.subr.mxu0 0.0
  %881 = vmatpush2.msra.mxu0 0.0
  %882 = vmatprep.subr.mxu0 0.0
  %883 = vmatpush2.msra.mxu0 0.0
  %884 = vmatprep.subr.mxu0 0.0
  %885 = vmatpush2.msra.mxu0 0.0
  %886 = vmatprep.subr.mxu0 0.0
  %887 = vmatpush2.msra.mxu0 0.0
  %888 = vmatprep.subr.mxu0 0.0
  %889 = vmatpush2.msra.mxu0 0.0
  %890 = vmatprep.subr.mxu0 0.0
  %891 = vmatpush2.msra.mxu0 0.0
  %892 = vmatprep.subr.mxu0 0.0
  %893 = vmatpush2.msra.mxu0 0.0
  %894 = vmatprep.subr.mxu0 0.0
  %895 = vmatpush2.msra.mxu0 0.0
  %896 = vmatprep.subr.mxu0 0.0
  %897 = vmatpush2.msra.mxu0 0.0
  %898 = vmatprep.mubr.f32.mxu0 0.0
  %899 = vmatmul.mubr.f32.gmra.mxu0 %v829
  %v900 = vpop.f32.mrf.mxu0
  %v901 = vadd.f32 0.0, %v900
  %v902 = vpop.f32.mrf.mxu0
  %903 = vmatprep.mubr.f32.mxu0 0.0
  %904 = vmatmul.mubr.f32.gmra.mxu0 %v832
  %v905 = vpop.f32.mrf.mxu0
  %v906 = vadd.f32 0.0, %v905
  %v907 = vpop.f32.mrf.mxu0
  %908 = vdwg.mxu0
  %v910 = vsel %vm431, %v619, 0
  %v913 = vsel %vm431, %v624, 0
  %915 = vmatprep.subr.mxu0 0.0
  %916 = vmatpush1.msra.mxu0 0.0
  %917 = vmatprep.subr.mxu0 0.0
  %918 = vmatpush1.msra.mxu0 0.0
  %919 = vmatprep.subr.mxu0 0.0
  %920 = vmatpush1.msra.mxu0 0.0
  %921 = vmatprep.subr.mxu0 0.0
  %922 = vmatpush1.msra.mxu0 0.0
  %923 = vmatprep.subr.mxu0 0.0
  %924 = vmatpush1.msra.mxu0 0.0
  %925 = vmatprep.subr.mxu0 0.0
  %926 = vmatpush1.msra.mxu0 0.0
  %927 = vmatprep.subr.mxu0 0.0
  %928 = vmatpush1.msra.mxu0 0.0
  %929 = vmatprep.subr.mxu0 0.0
  %930 = vmatpush1.msra.mxu0 0.0
  %931 = vmatprep.subr.mxu0 0.0
  %932 = vmatpush1.msra.mxu0 0.0
  %933 = vmatprep.subr.mxu0 0.0
  %934 = vmatpush1.msra.mxu0 0.0
  %935 = vmatprep.subr.mxu0 0.0
  %936 = vmatpush1.msra.mxu0 0.0
  %937 = vmatprep.subr.mxu0 0.0
  %938 = vmatpush1.msra.mxu0 0.0
  %939 = vmatprep.subr.mxu0 0.0
  %940 = vmatpush1.msra.mxu0 0.0
  %941 = vmatprep.subr.mxu0 0.0
  %942 = vmatpush1.msra.mxu0 0.0
  %943 = vmatprep.subr.mxu0 0.0
  %944 = vmatpush1.msra.mxu0 0.0
  %945 = vmatprep.subr.mxu0 0.0
  %946 = vmatpush1.msra.mxu0 %v415
  %947 = vmatprep.subr.mxu0 0.0
  %948 = vmatpush2.msra.mxu0 0.0
  %949 = vmatprep.subr.mxu0 0.0
  %950 = vmatpush2.msra.mxu0 0.0
  %951 = vmatprep.subr.mxu0 0.0
  %952 = vmatpush2.msra.mxu0 0.0
  %953 = vmatprep.subr.mxu0 0.0
  %954 = vmatpush2.msra.mxu0 0.0
  %955 = vmatprep.subr.mxu0 0.0
  %956 = vmatpush2.msra.mxu0 0.0
  %957 = vmatprep.subr.mxu0 0.0
  %958 = vmatpush2.msra.mxu0 0.0
  %959 = vmatprep.subr.mxu0 0.0
  %960 = vmatpush2.msra.mxu0 0.0
  %961 = vmatprep.subr.mxu0 0.0
  %962 = vmatpush2.msra.mxu0 0.0
  %963 = vmatprep.subr.mxu0 0.0
  %964 = vmatpush2.msra.mxu0 0.0
  %965 = vmatprep.subr.mxu0 0.0
  %966 = vmatpush2.msra.mxu0 0.0
  %967 = vmatprep.subr.mxu0 0.0
  %968 = vmatpush2.msra.mxu0 0.0
  %969 = vmatprep.subr.mxu0 0.0
  %970 = vmatpush2.msra.mxu0 0.0
  %971 = vmatprep.subr.mxu0 0.0
  %972 = vmatpush2.msra.mxu0 0.0
  %973 = vmatprep.subr.mxu0 0.0
  %974 = vmatpush2.msra.mxu0 0.0
  %975 = vmatprep.subr.mxu0 0.0
  %976 = vmatpush2.msra.mxu0 0.0
  %977 = vmatprep.subr.mxu0 0.0
  %978 = vmatpush2.msra.mxu0 0.0
  %979 = vmatprep.mubr.f32.mxu0 0.0
  %980 = vmatmul.mubr.f32.gmra.mxu0 %v910
  %v981 = vpop.f32.mrf.mxu0
  %v982 = vadd.f32 %v901, %v981
  %v983 = vpop.f32.mrf.mxu0
  %984 = vmatprep.mubr.f32.mxu0 0.0
  %985 = vmatmul.mubr.f32.gmra.mxu0 %v913
  %v986 = vpop.f32.mrf.mxu0
  %v987 = vadd.f32 %v906, %v986
  %v988 = vpop.f32.mrf.mxu0
  %989 = vdwg.mxu0
  %990 = vrot.lane.b32.xlu0 %v402, 112
  %v991 = vpop.permute.xlu0 %990
  %992 = vrot.lane.b32.xlu0 %v407, 112
  %v993 = vpop.permute.xlu0 %992
  %994 = vrot.lane.b32.xlu0 %v402, 80
  %v995 = vpop.permute.xlu0 %994
  %996 = vrot.lane.b32.xlu0 %v407, 80
  %v997 = vpop.permute.xlu0 %996
  %v998 = vsel %vm431, %v991, 0
  %v1000 = vsel %vm431, %v993, 0
  %v1002 = vsel %vm431, %v995, 0
  %v1004 = vsel %vm431, %v997, 0
  %1006 = vmatprep.subr.mxu0 0.0
  %1007 = vmatpush1.xpose.msra.mxu0 0.0
  %1008 = vmatprep.subr.mxu0 0.0
  %1009 = vmatpush1.xpose.msra.mxu0 0.0
  %1010 = vmatprep.subr.mxu0 0.0
  %1011 = vmatpush1.xpose.msra.mxu0 0.0
  %1012 = vmatprep.subr.mxu0 0.0
  %1013 = vmatpush1.xpose.msra.mxu0 0.0
  %1014 = vmatprep.subr.mxu0 0.0
  %1015 = vmatpush1.xpose.msra.mxu0 0.0
  %1016 = vmatprep.subr.mxu0 0.0
  %1017 = vmatpush1.xpose.msra.mxu0 0.0
  %1018 = vmatprep.subr.mxu0 0.0
  %1019 = vmatpush1.xpose.msra.mxu0 0.0
  %1020 = vmatprep.subr.mxu0 0.0
  %1021 = vmatpush1.xpose.msra.mxu0 0.0
  %1022 = vmatprep.subr.mxu0 0.0
  %1023 = vmatpush1.xpose.msra.mxu0 0.0
  %1024 = vmatprep.subr.mxu0 0.0
  %1025 = vmatpush1.xpose.msra.mxu0 0.0
  %1026 = vmatprep.subr.mxu0 0.0
  %1027 = vmatpush1.xpose.msra.mxu0 0.0
  %1028 = vmatprep.subr.mxu0 0.0
  %1029 = vmatpush1.xpose.msra.mxu0 0.0
  %1030 = vmatprep.subr.mxu0 0.0
  %1031 = vmatpush1.xpose.msra.mxu0 0.0
  %1032 = vmatprep.subr.mxu0 0.0
  %1033 = vmatpush1.xpose.msra.mxu0 0.0
  %1034 = vmatprep.subr.mxu0 0.0
  %1035 = vmatpush1.xpose.msra.mxu0 %v1004
  %1036 = vmatprep.subr.mxu0 0.0
  %1037 = vmatpush1.xpose.msra.mxu0 %v1002
  %1038 = vmatprep.subr.mxu0 0.0
  %1039 = vmatpush2.xpose.msra.mxu0 0.0
  %1040 = vmatprep.subr.mxu0 0.0
  %1041 = vmatpush2.xpose.msra.mxu0 0.0
  %1042 = vmatprep.subr.mxu0 0.0
  %1043 = vmatpush2.xpose.msra.mxu0 0.0
  %1044 = vmatprep.subr.mxu0 0.0
  %1045 = vmatpush2.xpose.msra.mxu0 0.0
  %1046 = vmatprep.subr.mxu0 0.0
  %1047 = vmatpush2.xpose.msra.mxu0 0.0
  %1048 = vmatprep.subr.mxu0 0.0
  %1049 = vmatpush2.xpose.msra.mxu0 0.0
  %1050 = vmatprep.subr.mxu0 0.0
  %1051 = vmatpush2.xpose.msra.mxu0 0.0
  %1052 = vmatprep.subr.mxu0 0.0
  %1053 = vmatpush2.xpose.msra.mxu0 0.0
  %1054 = vmatprep.subr.mxu0 0.0
  %1055 = vmatpush2.xpose.msra.mxu0 0.0
  %1056 = vmatprep.subr.mxu0 0.0
  %1057 = vmatpush2.xpose.msra.mxu0 0.0
  %1058 = vmatprep.subr.mxu0 0.0
  %1059 = vmatpush2.xpose.msra.mxu0 0.0
  %1060 = vmatprep.subr.mxu0 0.0
  %1061 = vmatpush2.xpose.msra.mxu0 0.0
  %1062 = vmatprep.subr.mxu0 0.0
  %1063 = vmatpush2.xpose.msra.mxu0 0.0
  %1064 = vmatprep.subr.mxu0 0.0
  %1065 = vmatpush2.xpose.msra.mxu0 0.0
  %1066 = vmatprep.subr.mxu0 0.0
  %1067 = vmatpush2.xpose.msra.mxu0 0.0
  %1068 = vmatprep.subr.mxu0 0.0
  %1069 = vmatpush2.xpose.msra.mxu0 0.0
  %1070 = vmatprep.mubr.f32.mxu0 0.0
  %1071 = vmatmul.mubr.f32.gmra.mxu0 %v998
  %v1072 = vpop.f32.mrf.mxu0
  %v1073 = vadd.f32 %v423, %v1072
  %v1074 = vpop.f32.mrf.mxu0
  %1075 = vmatprep.mubr.f32.mxu0 0.0
  %1076 = vmatmul.mubr.f32.gmra.mxu0 %v1000
  %v1077 = vpop.f32.mrf.mxu0
  %v1078 = vadd.f32 %v423, %v1077
  %v1079 = vpop.f32.mrf.mxu0
  %1080 = vdwg.mxu0
  %v1081 = vsel %vm515, %v1073, -inf
  %1082 = vmax.xlane.f32.xlu0 %v1081
  %v1083 = vpop.xlane.xlu0 %1082
  %v1084 = vsel %vm519, %v1078, -inf
  %1085 = vmax.xlane.f32.xlu0 %v1084
  %v1086 = vpop.xlane.xlu0 %1085
  %v1087 = vsub.f32 %v1073, %v1083
  %v1088 = vsub.f32 %v1078, %v1086
  %v1089 = vmul.f32 %v1087, 1.442695
  %v1090 = vpow.pop %v1089
  %v1091 = vmul.f32 %v1088, 1.442695
  %v1092 = vpow.pop %v1091
  %v1093 = vsel %vm515, %v1090, 0.0
  %1094 = vadd.xlane.f32.xlu0 %v1093
  %v1095 = vpop.xlane.xlu0 %1094
  %v1096 = vsel %vm519, %v1092, 0.0
  %1097 = vadd.xlane.f32.xlu0 %v1096
  %v1098 = vpop.xlane.xlu0 %1097
  %v1099 = vrcp.pop %v1095
  %v1100 = vrcp.pop %v1098
  %v1101 = vmul.f32 %v1090, %v1099
  %v1102 = vmul.f32 %v1092, %v1100
  %1103 = vrot.lane.b32.xlu0 %v402, 48
  %v1104 = vpop.permute.xlu0 %1103
  %1105 = vrot.lane.b32.xlu0 %v407, 48
  %v1106 = vpop.permute.xlu0 %1105
  %v1109 = vsel %vm515, %v1101, 0
  %v1112 = vsel %vm515, %v1102, 0
  %v1114 = vsel %vm243, %v1106, 0
  %1116 = vmatprep.subr.mxu0 0.0
  %1117 = vmatpush1.msra.mxu0 0.0
  %1118 = vmatprep.subr.mxu0 0.0
  %1119 = vmatpush1.msra.mxu0 0.0
  %1120 = vmatprep.subr.mxu0 0.0
  %1121 = vmatpush1.msra.mxu0 0.0
  %1122 = vmatprep.subr.mxu0 0.0
  %1123 = vmatpush1.msra.mxu0 0.0
  %1124 = vmatprep.subr.mxu0 0.0
  %1125 = vmatpush1.msra.mxu0 0.0
  %1126 = vmatprep.subr.mxu0 0.0
  %1127 = vmatpush1.msra.mxu0 0.0
  %1128 = vmatprep.subr.mxu0 0.0
  %1129 = vmatpush1.msra.mxu0 0.0
  %1130 = vmatprep.subr.mxu0 0.0
  %1131 = vmatpush1.msra.mxu0 0.0
  %1132 = vmatprep.subr.mxu0 0.0
  %1133 = vmatpush1.msra.mxu0 0.0
  %1134 = vmatprep.subr.mxu0 0.0
  %1135 = vmatpush1.msra.mxu0 0.0
  %1136 = vmatprep.subr.mxu0 0.0
  %1137 = vmatpush1.msra.mxu0 0.0
  %1138 = vmatprep.subr.mxu0 0.0
  %1139 = vmatpush1.msra.mxu0 0.0
  %1140 = vmatprep.subr.mxu0 0.0
  %1141 = vmatpush1.msra.mxu0 0.0
  %1142 = vmatprep.subr.mxu0 0.0
  %1143 = vmatpush1.msra.mxu0 0.0
  %1144 = vmatprep.subr.mxu0 0.0
  %1145 = vmatpush1.msra.mxu0 %v1114
  %1146 = vmatprep.subr.mxu0 0.0
  %1147 = vmatpush1.msra.mxu0 %v1104
  %1148 = vmatprep.subr.mxu0 0.0
  %1149 = vmatpush2.msra.mxu0 0.0
  %1150 = vmatprep.subr.mxu0 0.0
  %1151 = vmatpush2.msra.mxu0 0.0
  %1152 = vmatprep.subr.mxu0 0.0
  %1153 = vmatpush2.msra.mxu0 0.0
  %1154 = vmatprep.subr.mxu0 0.0
  %1155 = vmatpush2.msra.mxu0 0.0
  %1156 = vmatprep.subr.mxu0 0.0
  %1157 = vmatpush2.msra.mxu0 0.0
  %1158 = vmatprep.subr.mxu0 0.0
  %1159 = vmatpush2.msra.mxu0 0.0
  %1160 = vmatprep.subr.mxu0 0.0
  %1161 = vmatpush2.msra.mxu0 0.0
  %1162 = vmatprep.subr.mxu0 0.0
  %1163 = vmatpush2.msra.mxu0 0.0
  %1164 = vmatprep.subr.mxu0 0.0
  %1165 = vmatpush2.msra.mxu0 0.0
  %1166 = vmatprep.subr.mxu0 0.0
  %1167 = vmatpush2.msra.mxu0 0.0
  %1168 = vmatprep.subr.mxu0 0.0
  %1169 = vmatpush2.msra.mxu0 0.0
  %1170 = vmatprep.subr.mxu0 0.0
  %1171 = vmatpush2.msra.mxu0 0.0
  %1172 = vmatprep.subr.mxu0 0.0
  %1173 = vmatpush2.msra.mxu0 0.0
  %1174 = vmatprep.subr.mxu0 0.0
  %1175 = vmatpush2.msra.mxu0 0.0
  %1176 = vmatprep.subr.mxu0 0.0
  %1177 = vmatpush2.msra.mxu0 0.0
  %1178 = vmatprep.subr.mxu0 0.0
  %1179 = vmatpush2.msra.mxu0 0.0
  %1180 = vmatprep.mubr.f32.mxu0 0.0
  %1181 = vmatmul.mubr.f32.gmra.mxu0 %v1109
  %v1182 = vpop.f32.mrf.mxu0
  %v1183 = vadd.f32 0.0, %v1182
  %v1184 = vpop.f32.mrf.mxu0
  %1185 = vmatprep.mubr.f32.mxu0 0.0
  %1186 = vmatmul.mubr.f32.gmra.mxu0 %v1112
  %v1187 = vpop.f32.mrf.mxu0
  %v1188 = vadd.f32 0.0, %v1187
  %v1189 = vpop.f32.mrf.mxu0
  %1190 = vdwg.mxu0
  %v1192 = vsel %vm431, %v1183, 0
  %v1195 = vsel %vm431, %v1188, 0
  %1197 = vmatprep.subr.mxu0 0.0
  %1198 = vmatpush1.msra.mxu0 0.0
  %1199 = vmatprep.subr.mxu0 0.0
  %1200 = vmatpush1.msra.mxu0 0.0
  %1201 = vmatprep.subr.mxu0 0.0
  %1202 = vmatpush1.msra.mxu0 0.0
  %1203 = vmatprep.subr.mxu0 0.0
  %1204 = vmatpush1.msra.mxu0 0.0
  %1205 = vmatprep.subr.mxu0 0.0
  %1206 = vmatpush1.msra.mxu0 0.0
  %1207 = vmatprep.subr.mxu0 0.0
  %1208 = vmatpush1.msra.mxu0 0.0
  %1209 = vmatprep.subr.mxu0 0.0
  %1210 = vmatpush1.msra.mxu0 0.0
  %1211 = vmatprep.subr.mxu0 0.0
  %1212 = vmatpush1.msra.mxu0 0.0
  %1213 = vmatprep.subr.mxu0 0.0
  %1214 = vmatpush1.msra.mxu0 0.0
  %1215 = vmatprep.subr.mxu0 0.0
  %1216 = vmatpush1.msra.mxu0 0.0
  %1217 = vmatprep.subr.mxu0 0.0
  %1218 = vmatpush1.msra.mxu0 0.0
  %1219 = vmatprep.subr.mxu0 0.0
  %1220 = vmatpush1.msra.mxu0 0.0
  %1221 = vmatprep.subr.mxu0 0.0
  %1222 = vmatpush1.msra.mxu0 0.0
  %1223 = vmatprep.subr.mxu0 0.0
  %1224 = vmatpush1.msra.mxu0 0.0
  %1225 = vmatprep.subr.mxu0 0.0
  %1226 = vmatpush1.msra.mxu0 0.0
  %1227 = vmatprep.subr.mxu0 0.0
  %1228 = vmatpush1.msra.mxu0 %v417
  %1229 = vmatprep.subr.mxu0 0.0
  %1230 = vmatpush2.msra.mxu0 0.0
  %1231 = vmatprep.subr.mxu0 0.0
  %1232 = vmatpush2.msra.mxu0 0.0
  %1233 = vmatprep.subr.mxu0 0.0
  %1234 = vmatpush2.msra.mxu0 0.0
  %1235 = vmatprep.subr.mxu0 0.0
  %1236 = vmatpush2.msra.mxu0 0.0
  %1237 = vmatprep.subr.mxu0 0.0
  %1238 = vmatpush2.msra.mxu0 0.0
  %1239 = vmatprep.subr.mxu0 0.0
  %1240 = vmatpush2.msra.mxu0 0.0
  %1241 = vmatprep.subr.mxu0 0.0
  %1242 = vmatpush2.msra.mxu0 0.0
  %1243 = vmatprep.subr.mxu0 0.0
  %1244 = vmatpush2.msra.mxu0 0.0
  %1245 = vmatprep.subr.mxu0 0.0
  %1246 = vmatpush2.msra.mxu0 0.0
  %1247 = vmatprep.subr.mxu0 0.0
  %1248 = vmatpush2.msra.mxu0 0.0
  %1249 = vmatprep.subr.mxu0 0.0
  %1250 = vmatpush2.msra.mxu0 0.0
  %1251 = vmatprep.subr.mxu0 0.0
  %1252 = vmatpush2.msra.mxu0 0.0
  %1253 = vmatprep.subr.mxu0 0.0
  %1254 = vmatpush2.msra.mxu0 0.0
  %1255 = vmatprep.subr.mxu0 0.0
  %1256 = vmatpush2.msra.mxu0 0.0
  %1257 = vmatprep.subr.mxu0 0.0
  %1258 = vmatpush2.msra.mxu0 0.0
  %1259 = vmatprep.subr.mxu0 0.0
  %1260 = vmatpush2.msra.mxu0 0.0
  %1261 = vmatprep.mubr.f32.mxu0 0.0
  %1262 = vmatmul.mubr.f32.gmra.mxu0 %v1192
  %v1263 = vpop.f32.mrf.mxu0
  %v1264 = vadd.f32 0.0, %v1263
  %v1265 = vpop.f32.mrf.mxu0
  %1266 = vmatprep.mubr.f32.mxu0 0.0
  %1267 = vmatmul.mubr.f32.gmra.mxu0 %v1195
  %v1268 = vpop.f32.mrf.mxu0
  %v1269 = vadd.f32 0.0, %v1268
  %v1270 = vpop.f32.mrf.mxu0
  %1271 = vdwg.mxu0
  %v1272 = vadd.f32 %v982, %v1264
  %v1273 = vadd.f32 %v987, %v1269
  %1274 = vrot.lane.b32.xlu0 %v402, 104
  %v1275 = vpop.permute.xlu0 %1274
  %1276 = vrot.lane.b32.xlu0 %v407, 104
  %v1277 = vpop.permute.xlu0 %1276
  %1278 = vrot.lane.b32.xlu0 %v402, 72
  %v1279 = vpop.permute.xlu0 %1278
  %1280 = vrot.lane.b32.xlu0 %v407, 72
  %v1281 = vpop.permute.xlu0 %1280
  %v1282 = vsel %vm431, %v1275, 0
  %v1284 = vsel %vm431, %v1277, 0
  %v1286 = vsel %vm431, %v1279, 0
  %v1288 = vsel %vm431, %v1281, 0
  %1290 = vmatprep.subr.mxu0 0.0
  %1291 = vmatpush1.xpose.msra.mxu0 0.0
  %1292 = vmatprep.subr.mxu0 0.0
  %1293 = vmatpush1.xpose.msra.mxu0 0.0
  %1294 = vmatprep.subr.mxu0 0.0
  %1295 = vmatpush1.xpose.msra.mxu0 0.0
  %1296 = vmatprep.subr.mxu0 0.0
  %1297 = vmatpush1.xpose.msra.mxu0 0.0
  %1298 = vmatprep.subr.mxu0 0.0
  %1299 = vmatpush1.xpose.msra.mxu0 0.0
  %1300 = vmatprep.subr.mxu0 0.0
  %1301 = vmatpush1.xpose.msra.mxu0 0.0
  %1302 = vmatprep.subr.mxu0 0.0
  %1303 = vmatpush1.xpose.msra.mxu0 0.0
  %1304 = vmatprep.subr.mxu0 0.0
  %1305 = vmatpush1.xpose.msra.mxu0 0.0
  %1306 = vmatprep.subr.mxu0 0.0
  %1307 = vmatpush1.xpose.msra.mxu0 0.0
  %1308 = vmatprep.subr.mxu0 0.0
  %1309 = vmatpush1.xpose.msra.mxu0 0.0
  %1310 = vmatprep.subr.mxu0 0.0
  %1311 = vmatpush1.xpose.msra.mxu0 0.0
  %1312 = vmatprep.subr.mxu0 0.0
  %1313 = vmatpush1.xpose.msra.mxu0 0.0
  %1314 = vmatprep.subr.mxu0 0.0
  %1315 = vmatpush1.xpose.msra.mxu0 0.0
  %1316 = vmatprep.subr.mxu0 0.0
  %1317 = vmatpush1.xpose.msra.mxu0 0.0
  %1318 = vmatprep.subr.mxu0 0.0
  %1319 = vmatpush1.xpose.msra.mxu0 %v1288
  %1320 = vmatprep.subr.mxu0 0.0
  %1321 = vmatpush1.xpose.msra.mxu0 %v1286
  %1322 = vmatprep.subr.mxu0 0.0
  %1323 = vmatpush2.xpose.msra.mxu0 0.0
  %1324 = vmatprep.subr.mxu0 0.0
  %1325 = vmatpush2.xpose.msra.mxu0 0.0
  %1326 = vmatprep.subr.mxu0 0.0
  %1327 = vmatpush2.xpose.msra.mxu0 0.0
  %1328 = vmatprep.subr.mxu0 0.0
  %1329 = vmatpush2.xpose.msra.mxu0 0.0
  %1330 = vmatprep.subr.mxu0 0.0
  %1331 = vmatpush2.xpose.msra.mxu0 0.0
  %1332 = vmatprep.subr.mxu0 0.0
  %1333 = vmatpush2.xpose.msra.mxu0 0.0
  %1334 = vmatprep.subr.mxu0 0.0
  %1335 = vmatpush2.xpose.msra.mxu0 0.0
  %1336 = vmatprep.subr.mxu0 0.0
  %1337 = vmatpush2.xpose.msra.mxu0 0.0
  %1338 = vmatprep.subr.mxu0 0.0
  %1339 = vmatpush2.xpose.msra.mxu0 0.0
  %1340 = vmatprep.subr.mxu0 0.0
  %1341 = vmatpush2.xpose.msra.mxu0 0.0
  %1342 = vmatprep.subr.mxu0 0.0
  %1343 = vmatpush2.xpose.msra.mxu0 0.0
  %1344 = vmatprep.subr.mxu0 0.0
  %1345 = vmatpush2.xpose.msra.mxu0 0.0
  %1346 = vmatprep.subr.mxu0 0.0
  %1347 = vmatpush2.xpose.msra.mxu0 0.0
  %1348 = vmatprep.subr.mxu0 0.0
  %1349 = vmatpush2.xpose.msra.mxu0 0.0
  %1350 = vmatprep.subr.mxu0 0.0
  %1351 = vmatpush2.xpose.msra.mxu0 0.0
  %1352 = vmatprep.subr.mxu0 0.0
  %1353 = vmatpush2.xpose.msra.mxu0 0.0
  %1354 = vmatprep.mubr.f32.mxu0 0.0
  %1355 = vmatmul.mubr.f32.gmra.mxu0 %v1282
  %v1356 = vpop.f32.mrf.mxu0
  %v1357 = vadd.f32 %v423, %v1356
  %v1358 = vpop.f32.mrf.mxu0
  %1359 = vmatprep.mubr.f32.mxu0 0.0
  %1360 = vmatmul.mubr.f32.gmra.mxu0 %v1284
  %v1361 = vpop.f32.mrf.mxu0
  %v1362 = vadd.f32 %v423, %v1361
  %v1363 = vpop.f32.mrf.mxu0
  %1364 = vdwg.mxu0
  %v1365 = vsel %vm515, %v1357, -inf
  %1366 = vmax.xlane.f32.xlu0 %v1365
  %v1367 = vpop.xlane.xlu0 %1366
  %v1368 = vsel %vm519, %v1362, -inf
  %1369 = vmax.xlane.f32.xlu0 %v1368
  %v1370 = vpop.xlane.xlu0 %1369
  %v1371 = vsub.f32 %v1357, %v1367
  %v1372 = vsub.f32 %v1362, %v1370
  %v1373 = vmul.f32 %v1371, 1.442695
  %v1374 = vpow.pop %v1373
  %v1375 = vmul.f32 %v1372, 1.442695
  %v1376 = vpow.pop %v1375
  %v1377 = vsel %vm515, %v1374, 0.0
  %1378 = vadd.xlane.f32.xlu0 %v1377
  %v1379 = vpop.xlane.xlu0 %1378
  %v1380 = vsel %vm519, %v1376, 0.0
  %1381 = vadd.xlane.f32.xlu0 %v1380
  %v1382 = vpop.xlane.xlu0 %1381
  %v1383 = vrcp.pop %v1379
  %v1384 = vrcp.pop %v1382
  %v1385 = vmul.f32 %v1374, %v1383
  %v1386 = vmul.f32 %v1376, %v1384
  %1387 = vrot.lane.b32.xlu0 %v402, 40
  %v1388 = vpop.permute.xlu0 %1387
  %1389 = vrot.lane.b32.xlu0 %v407, 40
  %v1390 = vpop.permute.xlu0 %1389
  %v1393 = vsel %vm515, %v1385, 0
  %v1396 = vsel %vm515, %v1386, 0
  %v1398 = vsel %vm243, %v1390, 0
  %1400 = vmatprep.subr.mxu0 0.0
  %1401 = vmatpush1.msra.mxu0 0.0
  %1402 = vmatprep.subr.mxu0 0.0
  %1403 = vmatpush1.msra.mxu0 0.0
  %1404 = vmatprep.subr.mxu0 0.0
  %1405 = vmatpush1.msra.mxu0 0.0
  %1406 = vmatprep.subr.mxu0 0.0
  %1407 = vmatpush1.msra.mxu0 0.0
  %1408 = vmatprep.subr.mxu0 0.0
  %1409 = vmatpush1.msra.mxu0 0.0
  %1410 = vmatprep.subr.mxu0 0.0
  %1411 = vmatpush1.msra.mxu0 0.0
  %1412 = vmatprep.subr.mxu0 0.0
  %1413 = vmatpush1.msra.mxu0 0.0
  %1414 = vmatprep.subr.mxu0 0.0
  %1415 = vmatpush1.msra.mxu0 0.0
  %1416 = vmatprep.subr.mxu0 0.0
  %1417 = vmatpush1.msra.mxu0 0.0
  %1418 = vmatprep.subr.mxu0 0.0
  %1419 = vmatpush1.msra.mxu0 0.0
  %1420 = vmatprep.subr.mxu0 0.0
  %1421 = vmatpush1.msra.mxu0 0.0
  %1422 = vmatprep.subr.mxu0 0.0
  %1423 = vmatpush1.msra.mxu0 0.0
  %1424 = vmatprep.subr.mxu0 0.0
  %1425 = vmatpush1.msra.mxu0 0.0
  %1426 = vmatprep.subr.mxu0 0.0
  %1427 = vmatpush1.msra.mxu0 0.0
  %1428 = vmatprep.subr.mxu0 0.0
  %1429 = vmatpush1.msra.mxu0 %v1398
  %1430 = vmatprep.subr.mxu0 0.0
  %1431 = vmatpush1.msra.mxu0 %v1388
  %1432 = vmatprep.subr.mxu0 0.0
  %1433 = vmatpush2.msra.mxu0 0.0
  %1434 = vmatprep.subr.mxu0 0.0
  %1435 = vmatpush2.msra.mxu0 0.0
  %1436 = vmatprep.subr.mxu0 0.0
  %1437 = vmatpush2.msra.mxu0 0.0
  %1438 = vmatprep.subr.mxu0 0.0
  %1439 = vmatpush2.msra.mxu0 0.0
  %1440 = vmatprep.subr.mxu0 0.0
  %1441 = vmatpush2.msra.mxu0 0.0
  %1442 = vmatprep.subr.mxu0 0.0
  %1443 = vmatpush2.msra.mxu0 0.0
  %1444 = vmatprep.subr.mxu0 0.0
  %1445 = vmatpush2.msra.mxu0 0.0
  %1446 = vmatprep.subr.mxu0 0.0
  %1447 = vmatpush2.msra.mxu0 0.0
  %1448 = vmatprep.subr.mxu0 0.0
  %1449 = vmatpush2.msra.mxu0 0.0
  %1450 = vmatprep.subr.mxu0 0.0
  %1451 = vmatpush2.msra.mxu0 0.0
  %1452 = vmatprep.subr.mxu0 0.0
  %1453 = vmatpush2.msra.mxu0 0.0
  %1454 = vmatprep.subr.mxu0 0.0
  %1455 = vmatpush2.msra.mxu0 0.0
  %1456 = vmatprep.subr.mxu0 0.0
  %1457 = vmatpush2.msra.mxu0 0.0
  %1458 = vmatprep.subr.mxu0 0.0
  %1459 = vmatpush2.msra.mxu0 0.0
  %1460 = vmatprep.subr.mxu0 0.0
  %1461 = vmatpush2.msra.mxu0 0.0
  %1462 = vmatprep.subr.mxu0 0.0
  %1463 = vmatpush2.msra.mxu0 0.0
  %1464 = vmatprep.mubr.f32.mxu0 0.0
  %1465 = vmatmul.mubr.f32.gmra.mxu0 %v1393
  %v1466 = vpop.f32.mrf.mxu0
  %v1467 = vadd.f32 0.0, %v1466
  %v1468 = vpop.f32.mrf.mxu0
  %1469 = vmatprep.mubr.f32.mxu0 0.0
  %1470 = vmatmul.mubr.f32.gmra.mxu0 %v1396
  %v1471 = vpop.f32.mrf.mxu0
  %v1472 = vadd.f32 0.0, %v1471
  %v1473 = vpop.f32.mrf.mxu0
  %1474 = vdwg.mxu0
  %v1476 = vsel %vm431, %v1467, 0
  %v1479 = vsel %vm431, %v1472, 0
  %1481 = vmatprep.subr.mxu0 0.0
  %1482 = vmatpush1.msra.mxu0 0.0
  %1483 = vmatprep.subr.mxu0 0.0
  %1484 = vmatpush1.msra.mxu0 0.0
  %1485 = vmatprep.subr.mxu0 0.0
  %1486 = vmatpush1.msra.mxu0 0.0
  %1487 = vmatprep.subr.mxu0 0.0
  %1488 = vmatpush1.msra.mxu0 0.0
  %1489 = vmatprep.subr.mxu0 0.0
  %1490 = vmatpush1.msra.mxu0 0.0
  %1491 = vmatprep.subr.mxu0 0.0
  %1492 = vmatpush1.msra.mxu0 0.0
  %1493 = vmatprep.subr.mxu0 0.0
  %1494 = vmatpush1.msra.mxu0 0.0
  %1495 = vmatprep.subr.mxu0 0.0
  %1496 = vmatpush1.msra.mxu0 0.0
  %1497 = vmatprep.subr.mxu0 0.0
  %1498 = vmatpush1.msra.mxu0 0.0
  %1499 = vmatprep.subr.mxu0 0.0
  %1500 = vmatpush1.msra.mxu0 0.0
  %1501 = vmatprep.subr.mxu0 0.0
  %1502 = vmatpush1.msra.mxu0 0.0
  %1503 = vmatprep.subr.mxu0 0.0
  %1504 = vmatpush1.msra.mxu0 0.0
  %1505 = vmatprep.subr.mxu0 0.0
  %1506 = vmatpush1.msra.mxu0 0.0
  %1507 = vmatprep.subr.mxu0 0.0
  %1508 = vmatpush1.msra.mxu0 0.0
  %1509 = vmatprep.subr.mxu0 0.0
  %1510 = vmatpush1.msra.mxu0 0.0
  %1511 = vmatprep.subr.mxu0 0.0
  %1512 = vmatpush1.msra.mxu0 %v418
  %1513 = vmatprep.subr.mxu0 0.0
  %1514 = vmatpush2.msra.mxu0 0.0
  %1515 = vmatprep.subr.mxu0 0.0
  %1516 = vmatpush2.msra.mxu0 0.0
  %1517 = vmatprep.subr.mxu0 0.0
  %1518 = vmatpush2.msra.mxu0 0.0
  %1519 = vmatprep.subr.mxu0 0.0
  %1520 = vmatpush2.msra.mxu0 0.0
  %1521 = vmatprep.subr.mxu0 0.0
  %1522 = vmatpush2.msra.mxu0 0.0
  %1523 = vmatprep.subr.mxu0 0.0
  %1524 = vmatpush2.msra.mxu0 0.0
  %1525 = vmatprep.subr.mxu0 0.0
  %1526 = vmatpush2.msra.mxu0 0.0
  %1527 = vmatprep.subr.mxu0 0.0
  %1528 = vmatpush2.msra.mxu0 0.0
  %1529 = vmatprep.subr.mxu0 0.0
  %1530 = vmatpush2.msra.mxu0 0.0
  %1531 = vmatprep.subr.mxu0 0.0
  %1532 = vmatpush2.msra.mxu0 0.0
  %1533 = vmatprep.subr.mxu0 0.0
  %1534 = vmatpush2.msra.mxu0 0.0
  %1535 = vmatprep.subr.mxu0 0.0
  %1536 = vmatpush2.msra.mxu0 0.0
  %1537 = vmatprep.subr.mxu0 0.0
  %1538 = vmatpush2.msra.mxu0 0.0
  %1539 = vmatprep.subr.mxu0 0.0
  %1540 = vmatpush2.msra.mxu0 0.0
  %1541 = vmatprep.subr.mxu0 0.0
  %1542 = vmatpush2.msra.mxu0 0.0
  %1543 = vmatprep.subr.mxu0 0.0
  %1544 = vmatpush2.msra.mxu0 0.0
  %1545 = vmatprep.mubr.f32.mxu0 0.0
  %1546 = vmatmul.mubr.f32.gmra.mxu0 %v1476
  %v1547 = vpop.f32.mrf.mxu0
  %v1548 = vadd.f32 0.0, %v1547
  %v1549 = vpop.f32.mrf.mxu0
  %1550 = vmatprep.mubr.f32.mxu0 0.0
  %1551 = vmatmul.mubr.f32.gmra.mxu0 %v1479
  %v1552 = vpop.f32.mrf.mxu0
  %v1553 = vadd.f32 0.0, %v1552
  %v1554 = vpop.f32.mrf.mxu0
  %1555 = vdwg.mxu0
  %v1556 = vadd.f32 %v1272, %v1548
  %v1557 = vadd.f32 %v1273, %v1553
  %v1559 = vlaneseq
  %v1560 = vshrl.u32 %v1559, 7
  %v1561 = vsub.s32 0, %v1560
  %v1562 = vrot.slane %v313, %v1561
  %v1565 = vrot.slane %v407, 4
  %v1566 = vrot.slane %v412, 4
  %v1567 = vsel %vm243, %v1565, %v1566
  %1568 = vrot.lane.b32.xlu0 %v1567, 96
  %v1569 = vpop.permute.xlu0 %1568
  %1570 = vrot.lane.b32.xlu0 %v1566, 96
  %v1571 = vpop.permute.xlu0 %1570
  %v1572 = vsel %vm431, %v1567, 0
  %v1574 = vsel %vm431, %v1566, 0
  %v1576 = vsel %vm431, %v1569, 0
  %v1578 = vsel %vm431, %v1571, 0
  %1580 = vmatprep.subr.mxu0 0.0
  %1581 = vmatpush1.xpose.msra.mxu0 0.0
  %1582 = vmatprep.subr.mxu0 0.0
  %1583 = vmatpush1.xpose.msra.mxu0 0.0
  %1584 = vmatprep.subr.mxu0 0.0
  %1585 = vmatpush1.xpose.msra.mxu0 0.0
  %1586 = vmatprep.subr.mxu0 0.0
  %1587 = vmatpush1.xpose.msra.mxu0 0.0
  %1588 = vmatprep.subr.mxu0 0.0
  %1589 = vmatpush1.xpose.msra.mxu0 0.0
  %1590 = vmatprep.subr.mxu0 0.0
  %1591 = vmatpush1.xpose.msra.mxu0 0.0
  %1592 = vmatprep.subr.mxu0 0.0
  %1593 = vmatpush1.xpose.msra.mxu0 0.0
  %1594 = vmatprep.subr.mxu0 0.0
  %1595 = vmatpush1.xpose.msra.mxu0 0.0
  %1596 = vmatprep.subr.mxu0 0.0
  %1597 = vmatpush1.xpose.msra.mxu0 0.0
  %1598 = vmatprep.subr.mxu0 0.0
  %1599 = vmatpush1.xpose.msra.mxu0 0.0
  %1600 = vmatprep.subr.mxu0 0.0
  %1601 = vmatpush1.xpose.msra.mxu0 0.0
  %1602 = vmatprep.subr.mxu0 0.0
  %1603 = vmatpush1.xpose.msra.mxu0 0.0
  %1604 = vmatprep.subr.mxu0 0.0
  %1605 = vmatpush1.xpose.msra.mxu0 0.0
  %1606 = vmatprep.subr.mxu0 0.0
  %1607 = vmatpush1.xpose.msra.mxu0 0.0
  %1608 = vmatprep.subr.mxu0 0.0
  %1609 = vmatpush1.xpose.msra.mxu0 %v1578
  %1610 = vmatprep.subr.mxu0 0.0
  %1611 = vmatpush1.xpose.msra.mxu0 %v1576
  %1612 = vmatprep.subr.mxu0 0.0
  %1613 = vmatpush2.xpose.msra.mxu0 0.0
  %1614 = vmatprep.subr.mxu0 0.0
  %1615 = vmatpush2.xpose.msra.mxu0 0.0
  %1616 = vmatprep.subr.mxu0 0.0
  %1617 = vmatpush2.xpose.msra.mxu0 0.0
  %1618 = vmatprep.subr.mxu0 0.0
  %1619 = vmatpush2.xpose.msra.mxu0 0.0
  %1620 = vmatprep.subr.mxu0 0.0
  %1621 = vmatpush2.xpose.msra.mxu0 0.0
  %1622 = vmatprep.subr.mxu0 0.0
  %1623 = vmatpush2.xpose.msra.mxu0 0.0
  %1624 = vmatprep.subr.mxu0 0.0
  %1625 = vmatpush2.xpose.msra.mxu0 0.0
  %1626 = vmatprep.subr.mxu0 0.0
  %1627 = vmatpush2.xpose.msra.mxu0 0.0
  %1628 = vmatprep.subr.mxu0 0.0
  %1629 = vmatpush2.xpose.msra.mxu0 0.0
  %1630 = vmatprep.subr.mxu0 0.0
  %1631 = vmatpush2.xpose.msra.mxu0 0.0
  %1632 = vmatprep.subr.mxu0 0.0
  %1633 = vmatpush2.xpose.msra.mxu0 0.0
  %1634 = vmatprep.subr.mxu0 0.0
  %1635 = vmatpush2.xpose.msra.mxu0 0.0
  %1636 = vmatprep.subr.mxu0 0.0
  %1637 = vmatpush2.xpose.msra.mxu0 0.0
  %1638 = vmatprep.subr.mxu0 0.0
  %1639 = vmatpush2.xpose.msra.mxu0 0.0
  %1640 = vmatprep.subr.mxu0 0.0
  %1641 = vmatpush2.xpose.msra.mxu0 0.0
  %1642 = vmatprep.subr.mxu0 0.0
  %1643 = vmatpush2.xpose.msra.mxu0 0.0
  %1644 = vmatprep.mubr.f32.mxu0 0.0
  %1645 = vmatmul.mubr.f32.gmra.mxu0 %v1572
  %v1646 = vpop.f32.mrf.mxu0
  %v1647 = vadd.f32 %v1562, %v1646
  %v1648 = vpop.f32.mrf.mxu0
  %1649 = vmatprep.mubr.f32.mxu0 0.0
  %1650 = vmatmul.mubr.f32.gmra.mxu0 %v1574
  %v1651 = vpop.f32.mrf.mxu0
  %v1652 = vadd.f32 %v1562, %v1651
  %v1653 = vpop.f32.mrf.mxu0
  %1654 = vdwg.mxu0
  %v1655 = vsel %vm515, %v1647, -inf
  %1656 = vmax.xlane.f32.xlu0 %v1655
  %v1657 = vpop.xlane.xlu0 %1656
  %v1658 = vsel %vm519, %v1652, -inf
  %1659 = vmax.xlane.f32.xlu0 %v1658
  %v1660 = vpop.xlane.xlu0 %1659
  %v1661 = vsub.f32 %v1647, %v1657
  %v1662 = vsub.f32 %v1652, %v1660
  %v1663 = vmul.f32 %v1661, 1.442695
  %v1664 = vpow.pop %v1663
  %v1665 = vmul.f32 %v1662, 1.442695
  %v1666 = vpow.pop %v1665
  %v1667 = vsel %vm515, %v1664, 0.0
  %1668 = vadd.xlane.f32.xlu0 %v1667
  %v1669 = vpop.xlane.xlu0 %1668
  %v1670 = vsel %vm519, %v1666, 0.0
  %1671 = vadd.xlane.f32.xlu0 %v1670
  %v1672 = vpop.xlane.xlu0 %1671
  %v1673 = vrcp.pop %v1669
  %v1674 = vrcp.pop %v1672
  %v1675 = vmul.f32 %v1664, %v1673
  %v1676 = vmul.f32 %v1666, %v1674
  %1677 = vrot.lane.b32.xlu0 %v1567, 64
  %v1678 = vpop.permute.xlu0 %1677
  %1679 = vrot.lane.b32.xlu0 %v1566, 64
  %v1680 = vpop.permute.xlu0 %1679
  %v1683 = vsel %vm515, %v1675, 0
  %v1686 = vsel %vm515, %v1676, 0
  %v1688 = vsel %vm243, %v1680, 0
  %1690 = vmatprep.subr.mxu0 0.0
  %1691 = vmatpush1.msra.mxu0 0.0
  %1692 = vmatprep.subr.mxu0 0.0
  %1693 = vmatpush1.msra.mxu0 0.0
  %1694 = vmatprep.subr.mxu0 0.0
  %1695 = vmatpush1.msra.mxu0 0.0
  %1696 = vmatprep.subr.mxu0 0.0
  %1697 = vmatpush1.msra.mxu0 0.0
  %1698 = vmatprep.subr.mxu0 0.0
  %1699 = vmatpush1.msra.mxu0 0.0
  %1700 = vmatprep.subr.mxu0 0.0
  %1701 = vmatpush1.msra.mxu0 0.0
  %1702 = vmatprep.subr.mxu0 0.0
  %1703 = vmatpush1.msra.mxu0 0.0
  %1704 = vmatprep.subr.mxu0 0.0
  %1705 = vmatpush1.msra.mxu0 0.0
  %1706 = vmatprep.subr.mxu0 0.0
  %1707 = vmatpush1.msra.mxu0 0.0
  %1708 = vmatprep.subr.mxu0 0.0
  %1709 = vmatpush1.msra.mxu0 0.0
  %1710 = vmatprep.subr.mxu0 0.0
  %1711 = vmatpush1.msra.mxu0 0.0
  %1712 = vmatprep.subr.mxu0 0.0
  %1713 = vmatpush1.msra.mxu0 0.0
  %1714 = vmatprep.subr.mxu0 0.0
  %1715 = vmatpush1.msra.mxu0 0.0
  %1716 = vmatprep.subr.mxu0 0.0
  %1717 = vmatpush1.msra.mxu0 0.0
  %1718 = vmatprep.subr.mxu0 0.0
  %1719 = vmatpush1.msra.mxu0 %v1688
  %1720 = vmatprep.subr.mxu0 0.0
  %1721 = vmatpush1.msra.mxu0 %v1678
  %1722 = vmatprep.subr.mxu0 0.0
  %1723 = vmatpush2.msra.mxu0 0.0
  %1724 = vmatprep.subr.mxu0 0.0
  %1725 = vmatpush2.msra.mxu0 0.0
  %1726 = vmatprep.subr.mxu0 0.0
  %1727 = vmatpush2.msra.mxu0 0.0
  %1728 = vmatprep.subr.mxu0 0.0
  %1729 = vmatpush2.msra.mxu0 0.0
  %1730 = vmatprep.subr.mxu0 0.0
  %1731 = vmatpush2.msra.mxu0 0.0
  %1732 = vmatprep.subr.mxu0 0.0
  %1733 = vmatpush2.msra.mxu0 0.0
  %1734 = vmatprep.subr.mxu0 0.0
  %1735 = vmatpush2.msra.mxu0 0.0
  %1736 = vmatprep.subr.mxu0 0.0
  %1737 = vmatpush2.msra.mxu0 0.0
  %1738 = vmatprep.subr.mxu0 0.0
  %1739 = vmatpush2.msra.mxu0 0.0
  %1740 = vmatprep.subr.mxu0 0.0
  %1741 = vmatpush2.msra.mxu0 0.0
  %1742 = vmatprep.subr.mxu0 0.0
  %1743 = vmatpush2.msra.mxu0 0.0
  %1744 = vmatprep.subr.mxu0 0.0
  %1745 = vmatpush2.msra.mxu0 0.0
  %1746 = vmatprep.subr.mxu0 0.0
  %1747 = vmatpush2.msra.mxu0 0.0
  %1748 = vmatprep.subr.mxu0 0.0
  %1749 = vmatpush2.msra.mxu0 0.0
  %1750 = vmatprep.subr.mxu0 0.0
  %1751 = vmatpush2.msra.mxu0 0.0
  %1752 = vmatprep.subr.mxu0 0.0
  %1753 = vmatpush2.msra.mxu0 0.0
  %1754 = vmatprep.mubr.f32.mxu0 0.0
  %1755 = vmatmul.mubr.f32.gmra.mxu0 %v1683
  %v1756 = vpop.f32.mrf.mxu0
  %v1757 = vadd.f32 0.0, %v1756
  %v1758 = vpop.f32.mrf.mxu0
  %1759 = vmatprep.mubr.f32.mxu0 0.0
  %1760 = vmatmul.mubr.f32.gmra.mxu0 %v1686
  %v1761 = vpop.f32.mrf.mxu0
  %v1762 = vadd.f32 0.0, %v1761
  %v1763 = vpop.f32.mrf.mxu0
  %1764 = vdwg.mxu0
  %1765 = vrot.lane.b32.xlu0 %v1567, 120
  %v1766 = vpop.permute.xlu0 %1765
  %1767 = vrot.lane.b32.xlu0 %v1566, 120
  %v1768 = vpop.permute.xlu0 %1767
  %1769 = vrot.lane.b32.xlu0 %v1567, 88
  %v1770 = vpop.permute.xlu0 %1769
  %1771 = vrot.lane.b32.xlu0 %v1566, 88
  %v1772 = vpop.permute.xlu0 %1771
  %v1773 = vsel %vm431, %v1766, 0
  %v1775 = vsel %vm431, %v1768, 0
  %v1777 = vsel %vm431, %v1770, 0
  %v1779 = vsel %vm431, %v1772, 0
  %1781 = vmatprep.subr.mxu0 0.0
  %1782 = vmatpush1.xpose.msra.mxu0 0.0
  %1783 = vmatprep.subr.mxu0 0.0
  %1784 = vmatpush1.xpose.msra.mxu0 0.0
  %1785 = vmatprep.subr.mxu0 0.0
  %1786 = vmatpush1.xpose.msra.mxu0 0.0
  %1787 = vmatprep.subr.mxu0 0.0
  %1788 = vmatpush1.xpose.msra.mxu0 0.0
  %1789 = vmatprep.subr.mxu0 0.0
  %1790 = vmatpush1.xpose.msra.mxu0 0.0
  %1791 = vmatprep.subr.mxu0 0.0
  %1792 = vmatpush1.xpose.msra.mxu0 0.0
  %1793 = vmatprep.subr.mxu0 0.0
  %1794 = vmatpush1.xpose.msra.mxu0 0.0
  %1795 = vmatprep.subr.mxu0 0.0
  %1796 = vmatpush1.xpose.msra.mxu0 0.0
  %1797 = vmatprep.subr.mxu0 0.0
  %1798 = vmatpush1.xpose.msra.mxu0 0.0
  %1799 = vmatprep.subr.mxu0 0.0
  %1800 = vmatpush1.xpose.msra.mxu0 0.0
  %1801 = vmatprep.subr.mxu0 0.0
  %1802 = vmatpush1.xpose.msra.mxu0 0.0
  %1803 = vmatprep.subr.mxu0 0.0
  %1804 = vmatpush1.xpose.msra.mxu0 0.0
  %1805 = vmatprep.subr.mxu0 0.0
  %1806 = vmatpush1.xpose.msra.mxu0 0.0
  %1807 = vmatprep.subr.mxu0 0.0
  %1808 = vmatpush1.xpose.msra.mxu0 0.0
  %1809 = vmatprep.subr.mxu0 0.0
  %1810 = vmatpush1.xpose.msra.mxu0 %v1779
  %1811 = vmatprep.subr.mxu0 0.0
  %1812 = vmatpush1.xpose.msra.mxu0 %v1777
  %1813 = vmatprep.subr.mxu0 0.0
  %1814 = vmatpush2.xpose.msra.mxu0 0.0
  %1815 = vmatprep.subr.mxu0 0.0
  %1816 = vmatpush2.xpose.msra.mxu0 0.0
  %1817 = vmatprep.subr.mxu0 0.0
  %1818 = vmatpush2.xpose.msra.mxu0 0.0
  %1819 = vmatprep.subr.mxu0 0.0
  %1820 = vmatpush2.xpose.msra.mxu0 0.0
  %1821 = vmatprep.subr.mxu0 0.0
  %1822 = vmatpush2.xpose.msra.mxu0 0.0
  %1823 = vmatprep.subr.mxu0 0.0
  %1824 = vmatpush2.xpose.msra.mxu0 0.0
  %1825 = vmatprep.subr.mxu0 0.0
  %1826 = vmatpush2.xpose.msra.mxu0 0.0
  %1827 = vmatprep.subr.mxu0 0.0
  %1828 = vmatpush2.xpose.msra.mxu0 0.0
  %1829 = vmatprep.subr.mxu0 0.0
  %1830 = vmatpush2.xpose.msra.mxu0 0.0
  %1831 = vmatprep.subr.mxu0 0.0
  %1832 = vmatpush2.xpose.msra.mxu0 0.0
  %1833 = vmatprep.subr.mxu0 0.0
  %1834 = vmatpush2.xpose.msra.mxu0 0.0
  %1835 = vmatprep.subr.mxu0 0.0
  %1836 = vmatpush2.xpose.msra.mxu0 0.0
  %1837 = vmatprep.subr.mxu0 0.0
  %1838 = vmatpush2.xpose.msra.mxu0 0.0
  %1839 = vmatprep.subr.mxu0 0.0
  %1840 = vmatpush2.xpose.msra.mxu0 0.0
  %1841 = vmatprep.subr.mxu0 0.0
  %1842 = vmatpush2.xpose.msra.mxu0 0.0
  %1843 = vmatprep.subr.mxu0 0.0
  %1844 = vmatpush2.xpose.msra.mxu0 0.0
  %1845 = vmatprep.mubr.f32.mxu0 0.0
  %1846 = vmatmul.mubr.f32.gmra.mxu0 %v1773
  %v1847 = vpop.f32.mrf.mxu0
  %v1848 = vadd.f32 %v1562, %v1847
  %v1849 = vpop.f32.mrf.mxu0
  %1850 = vmatprep.mubr.f32.mxu0 0.0
  %1851 = vmatmul.mubr.f32.gmra.mxu0 %v1775
  %v1852 = vpop.f32.mrf.mxu0
  %v1853 = vadd.f32 %v1562, %v1852
  %v1854 = vpop.f32.mrf.mxu0
  %1855 = vdwg.mxu0
  %v1856 = vsel %vm515, %v1848, -inf
  %1857 = vmax.xlane.f32.xlu0 %v1856
  %v1858 = vpop.xlane.xlu0 %1857
  %v1859 = vsel %vm519, %v1853, -inf
  %1860 = vmax.xlane.f32.xlu0 %v1859
  %v1861 = vpop.xlane.xlu0 %1860
  %v1862 = vsub.f32 %v1848, %v1858
  %v1863 = vsub.f32 %v1853, %v1861
  %v1864 = vmul.f32 %v1862, 1.442695
  %v1865 = vpow.pop %v1864
  %v1866 = vmul.f32 %v1863, 1.442695
  %v1867 = vpow.pop %v1866
  %v1868 = vsel %vm515, %v1865, 0.0
  %1869 = vadd.xlane.f32.xlu0 %v1868
  %v1870 = vpop.xlane.xlu0 %1869
  %v1871 = vsel %vm519, %v1867, 0.0
  %1872 = vadd.xlane.f32.xlu0 %v1871
  %v1873 = vpop.xlane.xlu0 %1872
  %v1874 = vrcp.pop %v1870
  %v1875 = vrcp.pop %v1873
  %v1876 = vmul.f32 %v1865, %v1874
  %v1877 = vmul.f32 %v1867, %v1875
  %1878 = vrot.lane.b32.xlu0 %v1567, 56
  %v1879 = vpop.permute.xlu0 %1878
  %1880 = vrot.lane.b32.xlu0 %v1566, 56
  %v1881 = vpop.permute.xlu0 %1880
  %v1884 = vsel %vm515, %v1876, 0
  %v1887 = vsel %vm515, %v1877, 0
  %v1889 = vsel %vm243, %v1881, 0
  %1891 = vmatprep.subr.mxu0 0.0
  %1892 = vmatpush1.msra.mxu0 0.0
  %1893 = vmatprep.subr.mxu0 0.0
  %1894 = vmatpush1.msra.mxu0 0.0
  %1895 = vmatprep.subr.mxu0 0.0
  %1896 = vmatpush1.msra.mxu0 0.0
  %1897 = vmatprep.subr.mxu0 0.0
  %1898 = vmatpush1.msra.mxu0 0.0
  %1899 = vmatprep.subr.mxu0 0.0
  %1900 = vmatpush1.msra.mxu0 0.0
  %1901 = vmatprep.subr.mxu0 0.0
  %1902 = vmatpush1.msra.mxu0 0.0
  %1903 = vmatprep.subr.mxu0 0.0
  %1904 = vmatpush1.msra.mxu0 0.0
  %1905 = vmatprep.subr.mxu0 0.0
  %1906 = vmatpush1.msra.mxu0 0.0
  %1907 = vmatprep.subr.mxu0 0.0
  %1908 = vmatpush1.msra.mxu0 0.0
  %1909 = vmatprep.subr.mxu0 0.0
  %1910 = vmatpush1.msra.mxu0 0.0
  %1911 = vmatprep.subr.mxu0 0.0
  %1912 = vmatpush1.msra.mxu0 0.0
  %1913 = vmatprep.subr.mxu0 0.0
  %1914 = vmatpush1.msra.mxu0 0.0
  %1915 = vmatprep.subr.mxu0 0.0
  %1916 = vmatpush1.msra.mxu0 0.0
  %1917 = vmatprep.subr.mxu0 0.0
  %1918 = vmatpush1.msra.mxu0 0.0
  %1919 = vmatprep.subr.mxu0 0.0
  %1920 = vmatpush1.msra.mxu0 %v1889
  %1921 = vmatprep.subr.mxu0 0.0
  %1922 = vmatpush1.msra.mxu0 %v1879
  %1923 = vmatprep.subr.mxu0 0.0
  %1924 = vmatpush2.msra.mxu0 0.0
  %1925 = vmatprep.subr.mxu0 0.0
  %1926 = vmatpush2.msra.mxu0 0.0
  %1927 = vmatprep.subr.mxu0 0.0
  %1928 = vmatpush2.msra.mxu0 0.0
  %1929 = vmatprep.subr.mxu0 0.0
  %1930 = vmatpush2.msra.mxu0 0.0
  %1931 = vmatprep.subr.mxu0 0.0
  %1932 = vmatpush2.msra.mxu0 0.0
  %1933 = vmatprep.subr.mxu0 0.0
  %1934 = vmatpush2.msra.mxu0 0.0
  %1935 = vmatprep.subr.mxu0 0.0
  %1936 = vmatpush2.msra.mxu0 0.0
  %1937 = vmatprep.subr.mxu0 0.0
  %1938 = vmatpush2.msra.mxu0 0.0
  %1939 = vmatprep.subr.mxu0 0.0
  %1940 = vmatpush2.msra.mxu0 0.0
  %1941 = vmatprep.subr.mxu0 0.0
  %1942 = vmatpush2.msra.mxu0 0.0
  %1943 = vmatprep.subr.mxu0 0.0
  %1944 = vmatpush2.msra.mxu0 0.0
  %1945 = vmatprep.subr.mxu0 0.0
  %1946 = vmatpush2.msra.mxu0 0.0
  %1947 = vmatprep.subr.mxu0 0.0
  %1948 = vmatpush2.msra.mxu0 0.0
  %1949 = vmatprep.subr.mxu0 0.0
  %1950 = vmatpush2.msra.mxu0 0.0
  %1951 = vmatprep.subr.mxu0 0.0
  %1952 = vmatpush2.msra.mxu0 0.0
  %1953 = vmatprep.subr.mxu0 0.0
  %1954 = vmatpush2.msra.mxu0 0.0
  %1955 = vmatprep.mubr.f32.mxu0 0.0
  %1956 = vmatmul.mubr.f32.gmra.mxu0 %v1884
  %v1957 = vpop.f32.mrf.mxu0
  %v1958 = vadd.f32 0.0, %v1957
  %v1959 = vpop.f32.mrf.mxu0
  %1960 = vmatprep.mubr.f32.mxu0 0.0
  %1961 = vmatmul.mubr.f32.gmra.mxu0 %v1887
  %v1962 = vpop.f32.mrf.mxu0
  %v1963 = vadd.f32 0.0, %v1962
  %v1964 = vpop.f32.mrf.mxu0
  %1965 = vdwg.mxu0
  %v1967 = vsel %vm431, %v1958, 0
  %v1970 = vsel %vm431, %v1963, 0
  %1972 = vmatprep.subr.mxu0 0.0
  %1973 = vmatpush1.msra.mxu0 0.0
  %1974 = vmatprep.subr.mxu0 0.0
  %1975 = vmatpush1.msra.mxu0 0.0
  %1976 = vmatprep.subr.mxu0 0.0
  %1977 = vmatpush1.msra.mxu0 0.0
  %1978 = vmatprep.subr.mxu0 0.0
  %1979 = vmatpush1.msra.mxu0 0.0
  %1980 = vmatprep.subr.mxu0 0.0
  %1981 = vmatpush1.msra.mxu0 0.0
  %1982 = vmatprep.subr.mxu0 0.0
  %1983 = vmatpush1.msra.mxu0 0.0
  %1984 = vmatprep.subr.mxu0 0.0
  %1985 = vmatpush1.msra.mxu0 0.0
  %1986 = vmatprep.subr.mxu0 0.0
  %1987 = vmatpush1.msra.mxu0 0.0
  %1988 = vmatprep.subr.mxu0 0.0
  %1989 = vmatpush1.msra.mxu0 0.0
  %1990 = vmatprep.subr.mxu0 0.0
  %1991 = vmatpush1.msra.mxu0 0.0
  %1992 = vmatprep.subr.mxu0 0.0
  %1993 = vmatpush1.msra.mxu0 0.0
  %1994 = vmatprep.subr.mxu0 0.0
  %1995 = vmatpush1.msra.mxu0 0.0
  %1996 = vmatprep.subr.mxu0 0.0
  %1997 = vmatpush1.msra.mxu0 0.0
  %1998 = vmatprep.subr.mxu0 0.0
  %1999 = vmatpush1.msra.mxu0 0.0
  %2000 = vmatprep.subr.mxu0 0.0
  %2001 = vmatpush1.msra.mxu0 0.0
  %2002 = vmatprep.subr.mxu0 0.0
  %2003 = vmatpush1.msra.mxu0 %v416
  %2004 = vmatprep.subr.mxu0 0.0
  %2005 = vmatpush2.msra.mxu0 0.0
  %2006 = vmatprep.subr.mxu0 0.0
  %2007 = vmatpush2.msra.mxu0 0.0
  %2008 = vmatprep.subr.mxu0 0.0
  %2009 = vmatpush2.msra.mxu0 0.0
  %2010 = vmatprep.subr.mxu0 0.0
  %2011 = vmatpush2.msra.mxu0 0.0
  %2012 = vmatprep.subr.mxu0 0.0
  %2013 = vmatpush2.msra.mxu0 0.0
  %2014 = vmatprep.subr.mxu0 0.0
  %2015 = vmatpush2.msra.mxu0 0.0
  %2016 = vmatprep.subr.mxu0 0.0
  %2017 = vmatpush2.msra.mxu0 0.0
  %2018 = vmatprep.subr.mxu0 0.0
  %2019 = vmatpush2.msra.mxu0 0.0
  %2020 = vmatprep.subr.mxu0 0.0
  %2021 = vmatpush2.msra.mxu0 0.0
  %2022 = vmatprep.subr.mxu0 0.0
  %2023 = vmatpush2.msra.mxu0 0.0
  %2024 = vmatprep.subr.mxu0 0.0
  %2025 = vmatpush2.msra.mxu0 0.0
  %2026 = vmatprep.subr.mxu0 0.0
  %2027 = vmatpush2.msra.mxu0 0.0
  %2028 = vmatprep.subr.mxu0 0.0
  %2029 = vmatpush2.msra.mxu0 0.0
  %2030 = vmatprep.subr.mxu0 0.0
  %2031 = vmatpush2.msra.mxu0 0.0
  %2032 = vmatprep.subr.mxu0 0.0
  %2033 = vmatpush2.msra.mxu0 0.0
  %2034 = vmatprep.subr.mxu0 0.0
  %2035 = vmatpush2.msra.mxu0 0.0
  %2036 = vmatprep.mubr.f32.mxu0 0.0
  %2037 = vmatmul.mubr.f32.gmra.mxu0 %v1967
  %v2038 = vpop.f32.mrf.mxu0
  %v2039 = vadd.f32 0.0, %v2038
  %v2040 = vpop.f32.mrf.mxu0
  %2041 = vmatprep.mubr.f32.mxu0 0.0
  %2042 = vmatmul.mubr.f32.gmra.mxu0 %v1970
  %v2043 = vpop.f32.mrf.mxu0
  %v2044 = vadd.f32 0.0, %v2043
  %v2045 = vpop.f32.mrf.mxu0
  %2046 = vdwg.mxu0
  %v2048 = vsel %vm431, %v1757, 0
  %v2051 = vsel %vm431, %v1762, 0
  %2053 = vmatprep.subr.mxu0 0.0
  %2054 = vmatpush1.msra.mxu0 0.0
  %2055 = vmatprep.subr.mxu0 0.0
  %2056 = vmatpush1.msra.mxu0 0.0
  %2057 = vmatprep.subr.mxu0 0.0
  %2058 = vmatpush1.msra.mxu0 0.0
  %2059 = vmatprep.subr.mxu0 0.0
  %2060 = vmatpush1.msra.mxu0 0.0
  %2061 = vmatprep.subr.mxu0 0.0
  %2062 = vmatpush1.msra.mxu0 0.0
  %2063 = vmatprep.subr.mxu0 0.0
  %2064 = vmatpush1.msra.mxu0 0.0
  %2065 = vmatprep.subr.mxu0 0.0
  %2066 = vmatpush1.msra.mxu0 0.0
  %2067 = vmatprep.subr.mxu0 0.0
  %2068 = vmatpush1.msra.mxu0 0.0
  %2069 = vmatprep.subr.mxu0 0.0
  %2070 = vmatpush1.msra.mxu0 0.0
  %2071 = vmatprep.subr.mxu0 0.0
  %2072 = vmatpush1.msra.mxu0 0.0
  %2073 = vmatprep.subr.mxu0 0.0
  %2074 = vmatpush1.msra.mxu0 0.0
  %2075 = vmatprep.subr.mxu0 0.0
  %2076 = vmatpush1.msra.mxu0 0.0
  %2077 = vmatprep.subr.mxu0 0.0
  %2078 = vmatpush1.msra.mxu0 0.0
  %2079 = vmatprep.subr.mxu0 0.0
  %2080 = vmatpush1.msra.mxu0 0.0
  %2081 = vmatprep.subr.mxu0 0.0
  %2082 = vmatpush1.msra.mxu0 0.0
  %2083 = vmatprep.subr.mxu0 0.0
  %2084 = vmatpush1.msra.mxu0 %v415
  %2085 = vmatprep.subr.mxu0 0.0
  %2086 = vmatpush2.msra.mxu0 0.0
  %2087 = vmatprep.subr.mxu0 0.0
  %2088 = vmatpush2.msra.mxu0 0.0
  %2089 = vmatprep.subr.mxu0 0.0
  %2090 = vmatpush2.msra.mxu0 0.0
  %2091 = vmatprep.subr.mxu0 0.0
  %2092 = vmatpush2.msra.mxu0 0.0
  %2093 = vmatprep.subr.mxu0 0.0
  %2094 = vmatpush2.msra.mxu0 0.0
  %2095 = vmatprep.subr.mxu0 0.0
  %2096 = vmatpush2.msra.mxu0 0.0
  %2097 = vmatprep.subr.mxu0 0.0
  %2098 = vmatpush2.msra.mxu0 0.0
  %2099 = vmatprep.subr.mxu0 0.0
  %2100 = vmatpush2.msra.mxu0 0.0
  %2101 = vmatprep.subr.mxu0 0.0
  %2102 = vmatpush2.msra.mxu0 0.0
  %2103 = vmatprep.subr.mxu0 0.0
  %2104 = vmatpush2.msra.mxu0 0.0
  %2105 = vmatprep.subr.mxu0 0.0
  %2106 = vmatpush2.msra.mxu0 0.0
  %2107 = vmatprep.subr.mxu0 0.0
  %2108 = vmatpush2.msra.mxu0 0.0
  %2109 = vmatprep.subr.mxu0 0.0
  %2110 = vmatpush2.msra.mxu0 0.0
  %2111 = vmatprep.subr.mxu0 0.0
  %2112 = vmatpush2.msra.mxu0 0.0
  %2113 = vmatprep.subr.mxu0 0.0
  %2114 = vmatpush2.msra.mxu0 0.0
  %2115 = vmatprep.subr.mxu0 0.0
  %2116 = vmatpush2.msra.mxu0 0.0
  %2117 = vmatprep.mubr.f32.mxu0 0.0
  %2118 = vmatmul.mubr.f32.gmra.mxu0 %v2048
  %v2119 = vpop.f32.mrf.mxu0
  %v2120 = vadd.f32 %v2039, %v2119
  %v2121 = vpop.f32.mrf.mxu0
  %2122 = vmatprep.mubr.f32.mxu0 0.0
  %2123 = vmatmul.mubr.f32.gmra.mxu0 %v2051
  %v2124 = vpop.f32.mrf.mxu0
  %v2125 = vadd.f32 %v2044, %v2124
  %v2126 = vpop.f32.mrf.mxu0
  %2127 = vdwg.mxu0
  %2128 = vrot.lane.b32.xlu0 %v1567, 112
  %v2129 = vpop.permute.xlu0 %2128
  %2130 = vrot.lane.b32.xlu0 %v1566, 112
  %v2131 = vpop.permute.xlu0 %2130
  %2132 = vrot.lane.b32.xlu0 %v1567, 80
  %v2133 = vpop.permute.xlu0 %2132
  %2134 = vrot.lane.b32.xlu0 %v1566, 80
  %v2135 = vpop.permute.xlu0 %2134
  %v2136 = vsel %vm431, %v2129, 0
  %v2138 = vsel %vm431, %v2131, 0
  %v2140 = vsel %vm431, %v2133, 0
  %v2142 = vsel %vm431, %v2135, 0
  %2144 = vmatprep.subr.mxu0 0.0
  %2145 = vmatpush1.xpose.msra.mxu0 0.0
  %2146 = vmatprep.subr.mxu0 0.0
  %2147 = vmatpush1.xpose.msra.mxu0 0.0
  %2148 = vmatprep.subr.mxu0 0.0
  %2149 = vmatpush1.xpose.msra.mxu0 0.0
  %2150 = vmatprep.subr.mxu0 0.0
  %2151 = vmatpush1.xpose.msra.mxu0 0.0
  %2152 = vmatprep.subr.mxu0 0.0
  %2153 = vmatpush1.xpose.msra.mxu0 0.0
  %2154 = vmatprep.subr.mxu0 0.0
  %2155 = vmatpush1.xpose.msra.mxu0 0.0
  %2156 = vmatprep.subr.mxu0 0.0
  %2157 = vmatpush1.xpose.msra.mxu0 0.0
  %2158 = vmatprep.subr.mxu0 0.0
  %2159 = vmatpush1.xpose.msra.mxu0 0.0
  %2160 = vmatprep.subr.mxu0 0.0
  %2161 = vmatpush1.xpose.msra.mxu0 0.0
  %2162 = vmatprep.subr.mxu0 0.0
  %2163 = vmatpush1.xpose.msra.mxu0 0.0
  %2164 = vmatprep.subr.mxu0 0.0
  %2165 = vmatpush1.xpose.msra.mxu0 0.0
  %2166 = vmatprep.subr.mxu0 0.0
  %2167 = vmatpush1.xpose.msra.mxu0 0.0
  %2168 = vmatprep.subr.mxu0 0.0
  %2169 = vmatpush1.xpose.msra.mxu0 0.0
  %2170 = vmatprep.subr.mxu0 0.0
  %2171 = vmatpush1.xpose.msra.mxu0 0.0
  %2172 = vmatprep.subr.mxu0 0.0
  %2173 = vmatpush1.xpose.msra.mxu0 %v2142
  %2174 = vmatprep.subr.mxu0 0.0
  %2175 = vmatpush1.xpose.msra.mxu0 %v2140
  %2176 = vmatprep.subr.mxu0 0.0
  %2177 = vmatpush2.xpose.msra.mxu0 0.0
  %2178 = vmatprep.subr.mxu0 0.0
  %2179 = vmatpush2.xpose.msra.mxu0 0.0
  %2180 = vmatprep.subr.mxu0 0.0
  %2181 = vmatpush2.xpose.msra.mxu0 0.0
  %2182 = vmatprep.subr.mxu0 0.0
  %2183 = vmatpush2.xpose.msra.mxu0 0.0
  %2184 = vmatprep.subr.mxu0 0.0
  %2185 = vmatpush2.xpose.msra.mxu0 0.0
  %2186 = vmatprep.subr.mxu0 0.0
  %2187 = vmatpush2.xpose.msra.mxu0 0.0
  %2188 = vmatprep.subr.mxu0 0.0
  %2189 = vmatpush2.xpose.msra.mxu0 0.0
  %2190 = vmatprep.subr.mxu0 0.0
  %2191 = vmatpush2.xpose.msra.mxu0 0.0
  %2192 = vmatprep.subr.mxu0 0.0
  %2193 = vmatpush2.xpose.msra.mxu0 0.0
  %2194 = vmatprep.subr.mxu0 0.0
  %2195 = vmatpush2.xpose.msra.mxu0 0.0
  %2196 = vmatprep.subr.mxu0 0.0
  %2197 = vmatpush2.xpose.msra.mxu0 0.0
  %2198 = vmatprep.subr.mxu0 0.0
  %2199 = vmatpush2.xpose.msra.mxu0 0.0
  %2200 = vmatprep.subr.mxu0 0.0
  %2201 = vmatpush2.xpose.msra.mxu0 0.0
  %2202 = vmatprep.subr.mxu0 0.0
  %2203 = vmatpush2.xpose.msra.mxu0 0.0
  %2204 = vmatprep.subr.mxu0 0.0
  %2205 = vmatpush2.xpose.msra.mxu0 0.0
  %2206 = vmatprep.subr.mxu0 0.0
  %2207 = vmatpush2.xpose.msra.mxu0 0.0
  %2208 = vmatprep.mubr.f32.mxu0 0.0
  %2209 = vmatmul.mubr.f32.gmra.mxu0 %v2136
  %v2210 = vpop.f32.mrf.mxu0
  %v2211 = vadd.f32 %v1562, %v2210
  %v2212 = vpop.f32.mrf.mxu0
  %2213 = vmatprep.mubr.f32.mxu0 0.0
  %2214 = vmatmul.mubr.f32.gmra.mxu0 %v2138
  %v2215 = vpop.f32.mrf.mxu0
  %v2216 = vadd.f32 %v1562, %v2215
  %v2217 = vpop.f32.mrf.mxu0
  %2218 = vdwg.mxu0
  %v2219 = vsel %vm515, %v2211, -inf
  %2220 = vmax.xlane.f32.xlu0 %v2219
  %v2221 = vpop.xlane.xlu0 %2220
  %v2222 = vsel %vm519, %v2216, -inf
  %2223 = vmax.xlane.f32.xlu0 %v2222
  %v2224 = vpop.xlane.xlu0 %2223
  %v2225 = vsub.f32 %v2211, %v2221
  %v2226 = vsub.f32 %v2216, %v2224
  %v2227 = vmul.f32 %v2225, 1.442695
  %v2228 = vpow.pop %v2227
  %v2229 = vmul.f32 %v2226, 1.442695
  %v2230 = vpow.pop %v2229
  %v2231 = vsel %vm515, %v2228, 0.0
  %2232 = vadd.xlane.f32.xlu0 %v2231
  %v2233 = vpop.xlane.xlu0 %2232
  %v2234 = vsel %vm519, %v2230, 0.0
  %2235 = vadd.xlane.f32.xlu0 %v2234
  %v2236 = vpop.xlane.xlu0 %2235
  %v2237 = vrcp.pop %v2233
  %v2238 = vrcp.pop %v2236
  %v2239 = vmul.f32 %v2228, %v2237
  %v2240 = vmul.f32 %v2230, %v2238
  %2241 = vrot.lane.b32.xlu0 %v1567, 48
  %v2242 = vpop.permute.xlu0 %2241
  %2243 = vrot.lane.b32.xlu0 %v1566, 48
  %v2244 = vpop.permute.xlu0 %2243
  %v2247 = vsel %vm515, %v2239, 0
  %v2250 = vsel %vm515, %v2240, 0
  %v2252 = vsel %vm243, %v2244, 0
  %2254 = vmatprep.subr.mxu0 0.0
  %2255 = vmatpush1.msra.mxu0 0.0
  %2256 = vmatprep.subr.mxu0 0.0
  %2257 = vmatpush1.msra.mxu0 0.0
  %2258 = vmatprep.subr.mxu0 0.0
  %2259 = vmatpush1.msra.mxu0 0.0
  %2260 = vmatprep.subr.mxu0 0.0
  %2261 = vmatpush1.msra.mxu0 0.0
  %2262 = vmatprep.subr.mxu0 0.0
  %2263 = vmatpush1.msra.mxu0 0.0
  %2264 = vmatprep.subr.mxu0 0.0
  %2265 = vmatpush1.msra.mxu0 0.0
  %2266 = vmatprep.subr.mxu0 0.0
  %2267 = vmatpush1.msra.mxu0 0.0
  %2268 = vmatprep.subr.mxu0 0.0
  %2269 = vmatpush1.msra.mxu0 0.0
  %2270 = vmatprep.subr.mxu0 0.0
  %2271 = vmatpush1.msra.mxu0 0.0
  %2272 = vmatprep.subr.mxu0 0.0
  %2273 = vmatpush1.msra.mxu0 0.0
  %2274 = vmatprep.subr.mxu0 0.0
  %2275 = vmatpush1.msra.mxu0 0.0
  %2276 = vmatprep.subr.mxu0 0.0
  %2277 = vmatpush1.msra.mxu0 0.0
  %2278 = vmatprep.subr.mxu0 0.0
  %2279 = vmatpush1.msra.mxu0 0.0
  %2280 = vmatprep.subr.mxu0 0.0
  %2281 = vmatpush1.msra.mxu0 0.0
  %2282 = vmatprep.subr.mxu0 0.0
  %2283 = vmatpush1.msra.mxu0 %v2252
  %2284 = vmatprep.subr.mxu0 0.0
  %2285 = vmatpush1.msra.mxu0 %v2242
  %2286 = vmatprep.subr.mxu0 0.0
  %2287 = vmatpush2.msra.mxu0 0.0
  %2288 = vmatprep.subr.mxu0 0.0
  %2289 = vmatpush2.msra.mxu0 0.0
  %2290 = vmatprep.subr.mxu0 0.0
  %2291 = vmatpush2.msra.mxu0 0.0
  %2292 = vmatprep.subr.mxu0 0.0
  %2293 = vmatpush2.msra.mxu0 0.0
  %2294 = vmatprep.subr.mxu0 0.0
  %2295 = vmatpush2.msra.mxu0 0.0
  %2296 = vmatprep.subr.mxu0 0.0
  %2297 = vmatpush2.msra.mxu0 0.0
  %2298 = vmatprep.subr.mxu0 0.0
  %2299 = vmatpush2.msra.mxu0 0.0
  %2300 = vmatprep.subr.mxu0 0.0
  %2301 = vmatpush2.msra.mxu0 0.0
  %2302 = vmatprep.subr.mxu0 0.0
  %2303 = vmatpush2.msra.mxu0 0.0
  %2304 = vmatprep.subr.mxu0 0.0
  %2305 = vmatpush2.msra.mxu0 0.0
  %2306 = vmatprep.subr.mxu0 0.0
  %2307 = vmatpush2.msra.mxu0 0.0
  %2308 = vmatprep.subr.mxu0 0.0
  %2309 = vmatpush2.msra.mxu0 0.0
  %2310 = vmatprep.subr.mxu0 0.0
  %2311 = vmatpush2.msra.mxu0 0.0
  %2312 = vmatprep.subr.mxu0 0.0
  %2313 = vmatpush2.msra.mxu0 0.0
  %2314 = vmatprep.subr.mxu0 0.0
  %2315 = vmatpush2.msra.mxu0 0.0
  %2316 = vmatprep.subr.mxu0 0.0
  %2317 = vmatpush2.msra.mxu0 0.0
  %2318 = vmatprep.mubr.f32.mxu0 0.0
  %2319 = vmatmul.mubr.f32.gmra.mxu0 %v2247
  %v2320 = vpop.f32.mrf.mxu0
  %v2321 = vadd.f32 0.0, %v2320
  %v2322 = vpop.f32.mrf.mxu0
  %2323 = vmatprep.mubr.f32.mxu0 0.0
  %2324 = vmatmul.mubr.f32.gmra.mxu0 %v2250
  %v2325 = vpop.f32.mrf.mxu0
  %v2326 = vadd.f32 0.0, %v2325
  %v2327 = vpop.f32.mrf.mxu0
  %2328 = vdwg.mxu0
  %v2330 = vsel %vm431, %v2321, 0
  %v2333 = vsel %vm431, %v2326, 0
  %2335 = vmatprep.subr.mxu0 0.0
  %2336 = vmatpush1.msra.mxu0 0.0
  %2337 = vmatprep.subr.mxu0 0.0
  %2338 = vmatpush1.msra.mxu0 0.0
  %2339 = vmatprep.subr.mxu0 0.0
  %2340 = vmatpush1.msra.mxu0 0.0
  %2341 = vmatprep.subr.mxu0 0.0
  %2342 = vmatpush1.msra.mxu0 0.0
  %2343 = vmatprep.subr.mxu0 0.0
  %2344 = vmatpush1.msra.mxu0 0.0
  %2345 = vmatprep.subr.mxu0 0.0
  %2346 = vmatpush1.msra.mxu0 0.0
  %2347 = vmatprep.subr.mxu0 0.0
  %2348 = vmatpush1.msra.mxu0 0.0
  %2349 = vmatprep.subr.mxu0 0.0
  %2350 = vmatpush1.msra.mxu0 0.0
  %2351 = vmatprep.subr.mxu0 0.0
  %2352 = vmatpush1.msra.mxu0 0.0
  %2353 = vmatprep.subr.mxu0 0.0
  %2354 = vmatpush1.msra.mxu0 0.0
  %2355 = vmatprep.subr.mxu0 0.0
  %2356 = vmatpush1.msra.mxu0 0.0
  %2357 = vmatprep.subr.mxu0 0.0
  %2358 = vmatpush1.msra.mxu0 0.0
  %2359 = vmatprep.subr.mxu0 0.0
  %2360 = vmatpush1.msra.mxu0 0.0
  %2361 = vmatprep.subr.mxu0 0.0
  %2362 = vmatpush1.msra.mxu0 0.0
  %2363 = vmatprep.subr.mxu0 0.0
  %2364 = vmatpush1.msra.mxu0 0.0
  %2365 = vmatprep.subr.mxu0 0.0
  %2366 = vmatpush1.msra.mxu0 %v417
  %2367 = vmatprep.subr.mxu0 0.0
  %2368 = vmatpush2.msra.mxu0 0.0
  %2369 = vmatprep.subr.mxu0 0.0
  %2370 = vmatpush2.msra.mxu0 0.0
  %2371 = vmatprep.subr.mxu0 0.0
  %2372 = vmatpush2.msra.mxu0 0.0
  %2373 = vmatprep.subr.mxu0 0.0
  %2374 = vmatpush2.msra.mxu0 0.0
  %2375 = vmatprep.subr.mxu0 0.0
  %2376 = vmatpush2.msra.mxu0 0.0
  %2377 = vmatprep.subr.mxu0 0.0
  %2378 = vmatpush2.msra.mxu0 0.0
  %2379 = vmatprep.subr.mxu0 0.0
  %2380 = vmatpush2.msra.mxu0 0.0
  %2381 = vmatprep.subr.mxu0 0.0
  %2382 = vmatpush2.msra.mxu0 0.0
  %2383 = vmatprep.subr.mxu0 0.0
  %2384 = vmatpush2.msra.mxu0 0.0
  %2385 = vmatprep.subr.mxu0 0.0
  %2386 = vmatpush2.msra.mxu0 0.0
  %2387 = vmatprep.subr.mxu0 0.0
  %2388 = vmatpush2.msra.mxu0 0.0
  %2389 = vmatprep.subr.mxu0 0.0
  %2390 = vmatpush2.msra.mxu0 0.0
  %2391 = vmatprep.subr.mxu0 0.0
  %2392 = vmatpush2.msra.mxu0 0.0
  %2393 = vmatprep.subr.mxu0 0.0
  %2394 = vmatpush2.msra.mxu0 0.0
  %2395 = vmatprep.subr.mxu0 0.0
  %2396 = vmatpush2.msra.mxu0 0.0
  %2397 = vmatprep.subr.mxu0 0.0
  %2398 = vmatpush2.msra.mxu0 0.0
  %2399 = vmatprep.mubr.f32.mxu0 0.0
  %2400 = vmatmul.mubr.f32.gmra.mxu0 %v2330
  %v2401 = vpop.f32.mrf.mxu0
  %v2402 = vadd.f32 0.0, %v2401
  %v2403 = vpop.f32.mrf.mxu0
  %2404 = vmatprep.mubr.f32.mxu0 0.0
  %2405 = vmatmul.mubr.f32.gmra.mxu0 %v2333
  %v2406 = vpop.f32.mrf.mxu0
  %v2407 = vadd.f32 0.0, %v2406
  %v2408 = vpop.f32.mrf.mxu0
  %2409 = vdwg.mxu0
  %v2410 = vadd.f32 %v2120, %v2402
  %v2411 = vadd.f32 %v2125, %v2407
  %2412 = vrot.lane.b32.xlu0 %v1567, 104
  %v2413 = vpop.permute.xlu0 %2412
  %2414 = vrot.lane.b32.xlu0 %v1566, 104
  %v2415 = vpop.permute.xlu0 %2414
  %2416 = vrot.lane.b32.xlu0 %v1567, 72
  %v2417 = vpop.permute.xlu0 %2416
  %2418 = vrot.lane.b32.xlu0 %v1566, 72
  %v2419 = vpop.permute.xlu0 %2418
  %v2420 = vsel %vm431, %v2413, 0
  %v2422 = vsel %vm431, %v2415, 0
  %v2424 = vsel %vm431, %v2417, 0
  %v2426 = vsel %vm431, %v2419, 0
  %2428 = vmatprep.subr.mxu0 0.0
  %2429 = vmatpush1.xpose.msra.mxu0 0.0
  %2430 = vmatprep.subr.mxu0 0.0
  %2431 = vmatpush1.xpose.msra.mxu0 0.0
  %2432 = vmatprep.subr.mxu0 0.0
  %2433 = vmatpush1.xpose.msra.mxu0 0.0
  %2434 = vmatprep.subr.mxu0 0.0
  %2435 = vmatpush1.xpose.msra.mxu0 0.0
  %2436 = vmatprep.subr.mxu0 0.0
  %2437 = vmatpush1.xpose.msra.mxu0 0.0
  %2438 = vmatprep.subr.mxu0 0.0
  %2439 = vmatpush1.xpose.msra.mxu0 0.0
  %2440 = vmatprep.subr.mxu0 0.0
  %2441 = vmatpush1.xpose.msra.mxu0 0.0
  %2442 = vmatprep.subr.mxu0 0.0
  %2443 = vmatpush1.xpose.msra.mxu0 0.0
  %2444 = vmatprep.subr.mxu0 0.0
  %2445 = vmatpush1.xpose.msra.mxu0 0.0
  %2446 = vmatprep.subr.mxu0 0.0
  %2447 = vmatpush1.xpose.msra.mxu0 0.0
  %2448 = vmatprep.subr.mxu0 0.0
  %2449 = vmatpush1.xpose.msra.mxu0 0.0
  %2450 = vmatprep.subr.mxu0 0.0
  %2451 = vmatpush1.xpose.msra.mxu0 0.0
  %2452 = vmatprep.subr.mxu0 0.0
  %2453 = vmatpush1.xpose.msra.mxu0 0.0
  %2454 = vmatprep.subr.mxu0 0.0
  %2455 = vmatpush1.xpose.msra.mxu0 0.0
  %2456 = vmatprep.subr.mxu0 0.0
  %2457 = vmatpush1.xpose.msra.mxu0 %v2426
  %2458 = vmatprep.subr.mxu0 0.0
  %2459 = vmatpush1.xpose.msra.mxu0 %v2424
  %2460 = vmatprep.subr.mxu0 0.0
  %2461 = vmatpush2.xpose.msra.mxu0 0.0
  %2462 = vmatprep.subr.mxu0 0.0
  %2463 = vmatpush2.xpose.msra.mxu0 0.0
  %2464 = vmatprep.subr.mxu0 0.0
  %2465 = vmatpush2.xpose.msra.mxu0 0.0
  %2466 = vmatprep.subr.mxu0 0.0
  %2467 = vmatpush2.xpose.msra.mxu0 0.0
  %2468 = vmatprep.subr.mxu0 0.0
  %2469 = vmatpush2.xpose.msra.mxu0 0.0
  %2470 = vmatprep.subr.mxu0 0.0
  %2471 = vmatpush2.xpose.msra.mxu0 0.0
  %2472 = vmatprep.subr.mxu0 0.0
  %2473 = vmatpush2.xpose.msra.mxu0 0.0
  %2474 = vmatprep.subr.mxu0 0.0
  %2475 = vmatpush2.xpose.msra.mxu0 0.0
  %2476 = vmatprep.subr.mxu0 0.0
  %2477 = vmatpush2.xpose.msra.mxu0 0.0
  %2478 = vmatprep.subr.mxu0 0.0
  %2479 = vmatpush2.xpose.msra.mxu0 0.0
  %2480 = vmatprep.subr.mxu0 0.0
  %2481 = vmatpush2.xpose.msra.mxu0 0.0
  %2482 = vmatprep.subr.mxu0 0.0
  %2483 = vmatpush2.xpose.msra.mxu0 0.0
  %2484 = vmatprep.subr.mxu0 0.0
  %2485 = vmatpush2.xpose.msra.mxu0 0.0
  %2486 = vmatprep.subr.mxu0 0.0
  %2487 = vmatpush2.xpose.msra.mxu0 0.0
  %2488 = vmatprep.subr.mxu0 0.0
  %2489 = vmatpush2.xpose.msra.mxu0 0.0
  %2490 = vmatprep.subr.mxu0 0.0
  %2491 = vmatpush2.xpose.msra.mxu0 0.0
  %2492 = vmatprep.mubr.f32.mxu0 0.0
  %2493 = vmatmul.mubr.f32.gmra.mxu0 %v2420
  %v2494 = vpop.f32.mrf.mxu0
  %v2495 = vadd.f32 %v1562, %v2494
  %v2496 = vpop.f32.mrf.mxu0
  %2497 = vmatprep.mubr.f32.mxu0 0.0
  %2498 = vmatmul.mubr.f32.gmra.mxu0 %v2422
  %v2499 = vpop.f32.mrf.mxu0
  %v2500 = vadd.f32 %v1562, %v2499
  %v2501 = vpop.f32.mrf.mxu0
  %2502 = vdwg.mxu0
  %v2503 = vsel %vm515, %v2495, -inf
  %2504 = vmax.xlane.f32.xlu0 %v2503
  %v2505 = vpop.xlane.xlu0 %2504
  %v2506 = vsel %vm519, %v2500, -inf
  %2507 = vmax.xlane.f32.xlu0 %v2506
  %v2508 = vpop.xlane.xlu0 %2507
  %v2509 = vsub.f32 %v2495, %v2505
  %v2510 = vsub.f32 %v2500, %v2508
  %v2511 = vmul.f32 %v2509, 1.442695
  %v2512 = vpow.pop %v2511
  %v2513 = vmul.f32 %v2510, 1.442695
  %v2514 = vpow.pop %v2513
  %v2515 = vsel %vm515, %v2512, 0.0
  %2516 = vadd.xlane.f32.xlu0 %v2515
  %v2517 = vpop.xlane.xlu0 %2516
  %v2518 = vsel %vm519, %v2514, 0.0
  %2519 = vadd.xlane.f32.xlu0 %v2518
  %v2520 = vpop.xlane.xlu0 %2519
  %v2521 = vrcp.pop %v2517
  %v2522 = vrcp.pop %v2520
  %v2523 = vmul.f32 %v2512, %v2521
  %v2524 = vmul.f32 %v2514, %v2522
  %2525 = vrot.lane.b32.xlu0 %v1567, 40
  %v2526 = vpop.permute.xlu0 %2525
  %2527 = vrot.lane.b32.xlu0 %v1566, 40
  %v2528 = vpop.permute.xlu0 %2527
  %v2531 = vsel %vm515, %v2523, 0
  %v2534 = vsel %vm515, %v2524, 0
  %v2536 = vsel %vm243, %v2528, 0
  %2538 = vmatprep.subr.mxu0 0.0
  %2539 = vmatpush1.msra.mxu0 0.0
  %2540 = vmatprep.subr.mxu0 0.0
  %2541 = vmatpush1.msra.mxu0 0.0
  %2542 = vmatprep.subr.mxu0 0.0
  %2543 = vmatpush1.msra.mxu0 0.0
  %2544 = vmatprep.subr.mxu0 0.0
  %2545 = vmatpush1.msra.mxu0 0.0
  %2546 = vmatprep.subr.mxu0 0.0
  %2547 = vmatpush1.msra.mxu0 0.0
  %2548 = vmatprep.subr.mxu0 0.0
  %2549 = vmatpush1.msra.mxu0 0.0
  %2550 = vmatprep.subr.mxu0 0.0
  %2551 = vmatpush1.msra.mxu0 0.0
  %2552 = vmatprep.subr.mxu0 0.0
  %2553 = vmatpush1.msra.mxu0 0.0
  %2554 = vmatprep.subr.mxu0 0.0
  %2555 = vmatpush1.msra.mxu0 0.0
  %2556 = vmatprep.subr.mxu0 0.0
  %2557 = vmatpush1.msra.mxu0 0.0
  %2558 = vmatprep.subr.mxu0 0.0
  %2559 = vmatpush1.msra.mxu0 0.0
  %2560 = vmatprep.subr.mxu0 0.0
  %2561 = vmatpush1.msra.mxu0 0.0
  %2562 = vmatprep.subr.mxu0 0.0
  %2563 = vmatpush1.msra.mxu0 0.0
  %2564 = vmatprep.subr.mxu0 0.0
  %2565 = vmatpush1.msra.mxu0 0.0
  %2566 = vmatprep.subr.mxu0 0.0
  %2567 = vmatpush1.msra.mxu0 %v2536
  %2568 = vmatprep.subr.mxu0 0.0
  %2569 = vmatpush1.msra.mxu0 %v2526
  %2570 = vmatprep.subr.mxu0 0.0
  %2571 = vmatpush2.msra.mxu0 0.0
  %2572 = vmatprep.subr.mxu0 0.0
  %2573 = vmatpush2.msra.mxu0 0.0
  %2574 = vmatprep.subr.mxu0 0.0
  %2575 = vmatpush2.msra.mxu0 0.0
  %2576 = vmatprep.subr.mxu0 0.0
  %2577 = vmatpush2.msra.mxu0 0.0
  %2578 = vmatprep.subr.mxu0 0.0
  %2579 = vmatpush2.msra.mxu0 0.0
  %2580 = vmatprep.subr.mxu0 0.0
  %2581 = vmatpush2.msra.mxu0 0.0
  %2582 = vmatprep.subr.mxu0 0.0
  %2583 = vmatpush2.msra.mxu0 0.0
  %2584 = vmatprep.subr.mxu0 0.0
  %2585 = vmatpush2.msra.mxu0 0.0
  %2586 = vmatprep.subr.mxu0 0.0
  %2587 = vmatpush2.msra.mxu0 0.0
  %2588 = vmatprep.subr.mxu0 0.0
  %2589 = vmatpush2.msra.mxu0 0.0
  %2590 = vmatprep.subr.mxu0 0.0
  %2591 = vmatpush2.msra.mxu0 0.0
  %2592 = vmatprep.subr.mxu0 0.0
  %2593 = vmatpush2.msra.mxu0 0.0
  %2594 = vmatprep.subr.mxu0 0.0
  %2595 = vmatpush2.msra.mxu0 0.0
  %2596 = vmatprep.subr.mxu0 0.0
  %2597 = vmatpush2.msra.mxu0 0.0
  %2598 = vmatprep.subr.mxu0 0.0
  %2599 = vmatpush2.msra.mxu0 0.0
  %2600 = vmatprep.subr.mxu0 0.0
  %2601 = vmatpush2.msra.mxu0 0.0
  %2602 = vmatprep.mubr.f32.mxu0 0.0
  %2603 = vmatmul.mubr.f32.gmra.mxu0 %v2531
  %v2604 = vpop.f32.mrf.mxu0
  %v2605 = vadd.f32 0.0, %v2604
  %v2606 = vpop.f32.mrf.mxu0
  %2607 = vmatprep.mubr.f32.mxu0 0.0
  %2608 = vmatmul.mubr.f32.gmra.mxu0 %v2534
  %v2609 = vpop.f32.mrf.mxu0
  %v2610 = vadd.f32 0.0, %v2609
  %v2611 = vpop.f32.mrf.mxu0
  %2612 = vdwg.mxu0
  %v2614 = vsel %vm431, %v2605, 0
  %v2617 = vsel %vm431, %v2610, 0
  %2619 = vmatprep.subr.mxu0 0.0
  %2620 = vmatpush1.msra.mxu0 0.0
  %2621 = vmatprep.subr.mxu0 0.0
  %2622 = vmatpush1.msra.mxu0 0.0
  %2623 = vmatprep.subr.mxu0 0.0
  %2624 = vmatpush1.msra.mxu0 0.0
  %2625 = vmatprep.subr.mxu0 0.0
  %2626 = vmatpush1.msra.mxu0 0.0
  %2627 = vmatprep.subr.mxu0 0.0
  %2628 = vmatpush1.msra.mxu0 0.0
  %2629 = vmatprep.subr.mxu0 0.0
  %2630 = vmatpush1.msra.mxu0 0.0
  %2631 = vmatprep.subr.mxu0 0.0
  %2632 = vmatpush1.msra.mxu0 0.0
  %2633 = vmatprep.subr.mxu0 0.0
  %2634 = vmatpush1.msra.mxu0 0.0
  %2635 = vmatprep.subr.mxu0 0.0
  %2636 = vmatpush1.msra.mxu0 0.0
  %2637 = vmatprep.subr.mxu0 0.0
  %2638 = vmatpush1.msra.mxu0 0.0
  %2639 = vmatprep.subr.mxu0 0.0
  %2640 = vmatpush1.msra.mxu0 0.0
  %2641 = vmatprep.subr.mxu0 0.0
  %2642 = vmatpush1.msra.mxu0 0.0
  %2643 = vmatprep.subr.mxu0 0.0
  %2644 = vmatpush1.msra.mxu0 0.0
  %2645 = vmatprep.subr.mxu0 0.0
  %2646 = vmatpush1.msra.mxu0 0.0
  %2647 = vmatprep.subr.mxu0 0.0
  %2648 = vmatpush1.msra.mxu0 0.0
  %2649 = vmatprep.subr.mxu0 0.0
  %2650 = vmatpush1.msra.mxu0 %v418
  %2651 = vmatprep.subr.mxu0 0.0
  %2652 = vmatpush2.msra.mxu0 0.0
  %2653 = vmatprep.subr.mxu0 0.0
  %2654 = vmatpush2.msra.mxu0 0.0
  %2655 = vmatprep.subr.mxu0 0.0
  %2656 = vmatpush2.msra.mxu0 0.0
  %2657 = vmatprep.subr.mxu0 0.0
  %2658 = vmatpush2.msra.mxu0 0.0
  %2659 = vmatprep.subr.mxu0 0.0
  %2660 = vmatpush2.msra.mxu0 0.0
  %2661 = vmatprep.subr.mxu0 0.0
  %2662 = vmatpush2.msra.mxu0 0.0
  %2663 = vmatprep.subr.mxu0 0.0
  %2664 = vmatpush2.msra.mxu0 0.0
  %2665 = vmatprep.subr.mxu0 0.0
  %2666 = vmatpush2.msra.mxu0 0.0
  %2667 = vmatprep.subr.mxu0 0.0
  %2668 = vmatpush2.msra.mxu0 0.0
  %2669 = vmatprep.subr.mxu0 0.0
  %2670 = vmatpush2.msra.mxu0 0.0
  %2671 = vmatprep.subr.mxu0 0.0
  %2672 = vmatpush2.msra.mxu0 0.0
  %2673 = vmatprep.subr.mxu0 0.0
  %2674 = vmatpush2.msra.mxu0 0.0
  %2675 = vmatprep.subr.mxu0 0.0
  %2676 = vmatpush2.msra.mxu0 0.0
  %2677 = vmatprep.subr.mxu0 0.0
  %2678 = vmatpush2.msra.mxu0 0.0
  %2679 = vmatprep.subr.mxu0 0.0
  %2680 = vmatpush2.msra.mxu0 0.0
  %2681 = vmatprep.subr.mxu0 0.0
  %2682 = vmatpush2.msra.mxu0 0.0
  %2683 = vmatprep.mubr.f32.mxu0 0.0
  %2684 = vmatmul.mubr.f32.gmra.mxu0 %v2614
  %v2685 = vpop.f32.mrf.mxu0
  %v2686 = vadd.f32 0.0, %v2685
  %v2687 = vpop.f32.mrf.mxu0
  %2688 = vmatprep.mubr.f32.mxu0 0.0
  %2689 = vmatmul.mubr.f32.gmra.mxu0 %v2617
  %v2690 = vpop.f32.mrf.mxu0
  %v2691 = vadd.f32 0.0, %v2690
  %v2692 = vpop.f32.mrf.mxu0
  %2693 = vdwg.mxu0
  %v2694 = vadd.f32 %v2410, %v2686
  %v2695 = vadd.f32 %v2411, %v2691
  %v2698 = vrot.slane %v2694, 4
  %v2699 = vrot.slane %v2695, 4
  %v2700 = vsel %vm243, %v2698, %v2699
  %v2703 = vsel %vm243, %v1557, %v2698
  %v2704 = vld [vmem:[%s7] sm:$0x1]
  %v2706 = vlaneseq
  %v2707 = vshrl.u32 %v2706, 7
  %v2708 = vsub.s32 0, %v2707
  %v2709 = vrot.slane %v2704, %v2708
  %v2711 = vadd.f32 %v1556, %v2709
  %v2712 = vadd.f32 %v2703, %v2709
  %v2713 = vadd.f32 %v2700, %v2709
  %v2714 = vadd.f32 %v302, %v2711
  %v2715 = vadd.f32 %v303, %v2712
  %v2716 = vadd.f32 %v304, %v2713
  %v2717 = vsel %vm250, %v2714, 0.0
  %2718 = vadd.xlane.f32.xlu0 %v2717
  %v2719 = vpop.xlane.xlu0 %2718
  %v2720 = vsel %vm250, %v2715, 0.0
  %2721 = vadd.xlane.f32.xlu0 %v2720
  %v2722 = vpop.xlane.xlu0 %2721
  %v2723 = vsel %vm250, %v2716, 0.0
  %2724 = vadd.xlane.f32.xlu0 %v2723
  %v2725 = vpop.xlane.xlu0 %2724
  %v2726 = vmul.f32 %v2719, %v260
  %v2727 = vmul.f32 %v2722, %v260
  %v2728 = vmul.f32 %v2725, %v260
  %v2729 = vsub.f32 %v2714, %v2726
  %v2730 = vsub.f32 %v2715, %v2727
  %v2731 = vsub.f32 %v2716, %v2728
  %v2732 = vmul.f32 %v2729, %v2729
  %v2733 = vmul.f32 %v2730, %v2730
  %v2734 = vmul.f32 %v2731, %v2731
  %v2735 = vsel %vm250, %v2732, 0.0
  %2736 = vadd.xlane.f32.xlu0 %v2735
  %v2737 = vpop.xlane.xlu0 %2736
  %v2738 = vsel %vm250, %v2733, 0.0
  %2739 = vadd.xlane.f32.xlu0 %v2738
  %v2740 = vpop.xlane.xlu0 %2739
  %v2741 = vsel %vm250, %v2734, 0.0
  %2742 = vadd.xlane.f32.xlu0 %v2741
  %v2743 = vpop.xlane.xlu0 %2742
  %v2744 = vmul.f32 %v2737, %v260
  %v2745 = vmul.f32 %v2740, %v260
  %v2746 = vmul.f32 %v2743, %v260
  %v2747 = vadd.f32 %v2744, 1e-05
  %v2748 = vadd.f32 %v2745, 1e-05
  %v2749 = vadd.f32 %v2746, 1e-05
  %v2750 = vrsqrt.pop %v2747
  %v2751 = vrsqrt.pop %v2748
  %v2752 = vrsqrt.pop %v2749
  %v2753 = vmul.f32 %v2729, %v2750
  %v2754 = vmul.f32 %v2730, %v2751
  %v2755 = vmul.f32 %v2731, %v2752
  %v2756 = vlaneseq
  %v2757 = vshrl.u32 %v2756, 7
  %v2758 = vsub.s32 0, %v2757
  %v2759 = vrot.slane %v314, %v2758
  %v2760 = vmul.f32 %v2753, %v2759
  %v2761 = vmul.f32 %v2754, %v2759
  %v2762 = vmul.f32 %v2755, %v2759
  %v2763 = vlaneseq
  %v2764 = vshrl.u32 %v2763, 7
  %v2765 = vsub.s32 1, %v2764
  %v2766 = vrot.slane %v314, %v2765
  %v2767 = vadd.f32 %v2760, %v2766
  %v2768 = vadd.f32 %v2761, %v2766
  %v2769 = vadd.f32 %v2762, %v2766
  %v2770 = vld [vmem:[%s8] sm:$0xff]
  %v2771 = vld [vmem:[%s8 + $0x8] sm:$0xff]
  %v2772 = vld [vmem:[%s8 + $0x10] sm:$0xff]
  %v2773 = vld [vmem:[%s8 + $0x18] sm:$0xff]
  %v2774 = vld [vmem:[%s9] sm:$0x1]
  %v2776 = vlaneseq
  %v2777 = vshrl.u32 %v2776, 7
  %v2778 = vsub.s32 0, %v2777
  %v2779 = vrot.slane %v2774, %v2778
  %v2782 = vsel %vm250, %v2767, 0
  %v2785 = vsel %vm250, %v2768, 0
  %v2788 = vsel %vm250, %v2769, 0
  %2790 = vmatprep.subr.mxu0 0.0
  %2791 = vmatpush1.msra.mxu0 0.0
  %2792 = vmatprep.subr.mxu0 0.0
  %2793 = vmatpush1.msra.mxu0 0.0
  %2794 = vmatprep.subr.mxu0 0.0
  %2795 = vmatpush1.msra.mxu0 0.0
  %2796 = vmatprep.subr.mxu0 0.0
  %2797 = vmatpush1.msra.mxu0 0.0
  %2798 = vmatprep.subr.mxu0 0.0
  %2799 = vmatpush1.msra.mxu0 0.0
  %2800 = vmatprep.subr.mxu0 0.0
  %2801 = vmatpush1.msra.mxu0 0.0
  %2802 = vmatprep.subr.mxu0 0.0
  %2803 = vmatpush1.msra.mxu0 0.0
  %2804 = vmatprep.subr.mxu0 0.0
  %2805 = vmatpush1.msra.mxu0 0.0
  %2806 = vmatprep.subr.mxu0 0.0
  %2807 = vmatpush1.msra.mxu0 0.0
  %2808 = vmatprep.subr.mxu0 0.0
  %2809 = vmatpush1.msra.mxu0 0.0
  %2810 = vmatprep.subr.mxu0 0.0
  %2811 = vmatpush1.msra.mxu0 0.0
  %2812 = vmatprep.subr.mxu0 0.0
  %2813 = vmatpush1.msra.mxu0 0.0
  %2814 = vmatprep.subr.mxu0 0.0
  %2815 = vmatpush1.msra.mxu0 %v2773
  %2816 = vmatprep.subr.mxu0 0.0
  %2817 = vmatpush1.msra.mxu0 %v2772
  %2818 = vmatprep.subr.mxu0 0.0
  %2819 = vmatpush1.msra.mxu0 %v2771
  %2820 = vmatprep.subr.mxu0 0.0
  %2821 = vmatpush1.msra.mxu0 %v2770
  %2822 = vmatprep.subr.mxu0 0.0
  %2823 = vmatpush2.msra.mxu0 0.0
  %2824 = vmatprep.subr.mxu0 0.0
  %2825 = vmatpush2.msra.mxu0 0.0
  %2826 = vmatprep.subr.mxu0 0.0
  %2827 = vmatpush2.msra.mxu0 0.0
  %2828 = vmatprep.subr.mxu0 0.0
  %2829 = vmatpush2.msra.mxu0 0.0
  %2830 = vmatprep.subr.mxu0 0.0
  %2831 = vmatpush2.msra.mxu0 0.0
  %2832 = vmatprep.subr.mxu0 0.0
  %2833 = vmatpush2.msra.mxu0 0.0
  %2834 = vmatprep.subr.mxu0 0.0
  %2835 = vmatpush2.msra.mxu0 0.0
  %2836 = vmatprep.subr.mxu0 0.0
  %2837 = vmatpush2.msra.mxu0 0.0
  %2838 = vmatprep.subr.mxu0 0.0
  %2839 = vmatpush2.msra.mxu0 0.0
  %2840 = vmatprep.subr.mxu0 0.0
  %2841 = vmatpush2.msra.mxu0 0.0
  %2842 = vmatprep.subr.mxu0 0.0
  %2843 = vmatpush2.msra.mxu0 0.0
  %2844 = vmatprep.subr.mxu0 0.0
  %2845 = vmatpush2.msra.mxu0 0.0
  %2846 = vmatprep.subr.mxu0 0.0
  %2847 = vmatpush2.msra.mxu0 0.0
  %2848 = vmatprep.subr.mxu0 0.0
  %2849 = vmatpush2.msra.mxu0 0.0
  %2850 = vmatprep.subr.mxu0 0.0
  %2851 = vmatpush2.msra.mxu0 0.0
  %2852 = vmatprep.subr.mxu0 0.0
  %2853 = vmatpush2.msra.mxu0 0.0
  %2854 = vmatprep.mubr.f32.mxu0 0.0
  %2855 = vmatmul.mubr.f32.gmra.mxu0 %v2782
  %v2856 = vpop.f32.mrf.mxu0
  %v2857 = vadd.f32 %v2779, %v2856
  %v2858 = vpop.f32.mrf.mxu0
  %2859 = vmatprep.mubr.f32.mxu0 0.0
  %2860 = vmatmul.mubr.f32.gmra.mxu0 %v2785
  %v2861 = vpop.f32.mrf.mxu0
  %v2862 = vadd.f32 %v2779, %v2861
  %v2863 = vpop.f32.mrf.mxu0
  %2864 = vmatprep.mubr.f32.mxu0 0.0
  %2865 = vmatmul.mubr.f32.gmra.mxu0 %v2788
  %v2866 = vpop.f32.mrf.mxu0
  %v2867 = vadd.f32 %v2779, %v2866
  %v2868 = vpop.f32.mrf.mxu0
  %2869 = vdwg.mxu0
  %v2870 = vmax.f32 %v2857, 0.0
  %v2871 = vmax.f32 %v2862, 0.0
  %v2872 = vmax.f32 %v2867, 0.0
  %v2873 = vld [vmem:[%s10] sm:$0xff]
  %v2874 = vld [vmem:[%s10 + $0x8] sm:$0xff]
  %v2875 = vld [vmem:[%s10 + $0x10] sm:$0xff]
  %v2876 = vld [vmem:[%s10 + $0x18] sm:$0xff]
  %v2877 = vld [vmem:[%s10 + $0x20] sm:$0xff]
  %v2878 = vld [vmem:[%s10 + $0x28] sm:$0xff]
  %v2879 = vld [vmem:[%s10 + $0x30] sm:$0xff]
  %v2880 = vld [vmem:[%s10 + $0x38] sm:$0xff]
  %v2881 = vld [vmem:[%s10 + $0x40] sm:$0xff]
  %v2882 = vld [vmem:[%s10 + $0x48] sm:$0xff]
  %v2883 = vld [vmem:[%s10 + $0x50] sm:$0xff]
  %v2884 = vld [vmem:[%s10 + $0x58] sm:$0xff]
  %v2885 = vld [vmem:[%s10 + $0x60] sm:$0xff]
  %v2886 = vld [vmem:[%s10 + $0x68] sm:$0xff]
  %v2887 = vld [vmem:[%s10 + $0x70] sm:$0xff]
  %v2888 = vld [vmem:[%s10 + $0x78] sm:$0xff]
  %v2889 = vld [vmem:[%s11] sm:$0x1]
  %v2891 = vlaneseq
  %v2892 = vshrl.u32 %v2891, 7
  %v2893 = vsub.s32 0, %v2892
  %v2894 = vrot.slane %v2889, %v2893
  %2896 = vmatprep.subr.mxu0 0.0
  %2897 = vmatpush1.msra.mxu0 %v2888
  %2898 = vmatprep.subr.mxu0 0.0
  %2899 = vmatpush1.msra.mxu0 %v2887
  %2900 = vmatprep.subr.mxu0 0.0
  %2901 = vmatpush1.msra.mxu0 %v2886
  %2902 = vmatprep.subr.mxu0 0.0
  %2903 = vmatpush1.msra.mxu0 %v2885
  %2904 = vmatprep.subr.mxu0 0.0
  %2905 = vmatpush1.msra.mxu0 %v2884
  %2906 = vmatprep.subr.mxu0 0.0
  %2907 = vmatpush1.msra.mxu0 %v2883
  %2908 = vmatprep.subr.mxu0 0.0
  %2909 = vmatpush1.msra.mxu0 %v2882
  %2910 = vmatprep.subr.mxu0 0.0
  %2911 = vmatpush1.msra.mxu0 %v2881
  %2912 = vmatprep.subr.mxu0 0.0
  %2913 = vmatpush1.msra.mxu0 %v2880
  %2914 = vmatprep.subr.mxu0 0.0
  %2915 = vmatpush1.msra.mxu0 %v2879
  %2916 = vmatprep.subr.mxu0 0.0
  %2917 = vmatpush1.msra.mxu0 %v2878
  %2918 = vmatprep.subr.mxu0 0.0
  %2919 = vmatpush1.msra.mxu0 %v2877
  %2920 = vmatprep.subr.mxu0 0.0
  %2921 = vmatpush1.msra.mxu0 %v2876
  %2922 = vmatprep.subr.mxu0 0.0
  %2923 = vmatpush1.msra.mxu0 %v2875
  %2924 = vmatprep.subr.mxu0 0.0
  %2925 = vmatpush1.msra.mxu0 %v2874
  %2926 = vmatprep.subr.mxu0 0.0
  %2927 = vmatpush1.msra.mxu0 %v2873
  %2928 = vmatprep.subr.mxu0 0.0
  %2929 = vmatpush2.msra.mxu0 0.0
  %2930 = vmatprep.subr.mxu0 0.0
  %2931 = vmatpush2.msra.mxu0 0.0
  %2932 = vmatprep.subr.mxu0 0.0
  %2933 = vmatpush2.msra.mxu0 0.0
  %2934 = vmatprep.subr.mxu0 0.0
  %2935 = vmatpush2.msra.mxu0 0.0
  %2936 = vmatprep.subr.mxu0 0.0
  %2937 = vmatpush2.msra.mxu0 0.0
  %2938 = vmatprep.subr.mxu0 0.0
  %2939 = vmatpush2.msra.mxu0 0.0
  %2940 = vmatprep.subr.mxu0 0.0
  %2941 = vmatpush2.msra.mxu0 0.0
  %2942 = vmatprep.subr.mxu0 0.0
  %2943 = vmatpush2.msra.mxu0 0.0
  %2944 = vmatprep.subr.mxu0 0.0
  %2945 = vmatpush2.msra.mxu0 0.0
  %2946 = vmatprep.subr.mxu0 0.0
  %2947 = vmatpush2.msra.mxu0 0.0
  %2948 = vmatprep.subr.mxu0 0.0
  %2949 = vmatpush2.msra.mxu0 0.0
  %2950 = vmatprep.subr.mxu0 0.0
  %2951 = vmatpush2.msra.mxu0 0.0
  %2952 = vmatprep.subr.mxu0 0.0
  %2953 = vmatpush2.msra.mxu0 0.0
  %2954 = vmatprep.subr.mxu0 0.0
  %2955 = vmatpush2.msra.mxu0 0.0
  %2956 = vmatprep.subr.mxu0 0.0
  %2957 = vmatpush2.msra.mxu0 0.0
  %2958 = vmatprep.subr.mxu0 0.0
  %2959 = vmatpush2.msra.mxu0 0.0
  %2960 = vmatprep.mubr.f32.mxu0 0.0
  %2961 = vmatmul.mubr.f32.gmra.mxu0 %v2870
  %v2962 = vpop.f32.mrf.mxu0
  %v2963 = vadd.f32 %v2894, %v2962
  %v2964 = vpop.f32.mrf.mxu0
  %2965 = vmatprep.mubr.f32.mxu0 0.0
  %2966 = vmatmul.mubr.f32.gmra.mxu0 %v2871
  %v2967 = vpop.f32.mrf.mxu0
  %v2968 = vadd.f32 %v2894, %v2967
  %v2969 = vpop.f32.mrf.mxu0
  %2970 = vmatprep.mubr.f32.mxu0 0.0
  %2971 = vmatmul.mubr.f32.gmra.mxu0 %v2872
  %v2972 = vpop.f32.mrf.mxu0
  %v2973 = vadd.f32 %v2894, %v2972
  %v2974 = vpop.f32.mrf.mxu0
  %2975 = vdwg.mxu0
  %v2976 = vadd.f32 %v302, %v2963
  %v2977 = vadd.f32 %v303, %v2968
  %v2978 = vadd.f32 %v304, %v2973
  %v2979 = vsel %vm250, %v2976, 0.0
  %2980 = vadd.xlane.f32.xlu0 %v2979
  %v2981 = vpop.xlane.xlu0 %2980
  %v2982 = vsel %vm250, %v2977, 0.0
  %2983 = vadd.xlane.f32.xlu0 %v2982
  %v2984 = vpop.xlane.xlu0 %2983
  %v2985 = vsel %vm250, %v2978, 0.0
  %2986 = vadd.xlane.f32.xlu0 %v2985
  %v2987 = vpop.xlane.xlu0 %2986
  %v2988 = vmul.f32 %v2981, %v260
  %v2989 = vmul.f32 %v2984, %v260
  %v2990 = vmul.f32 %v2987, %v260
  %v2991 = vsub.f32 %v2976, %v2988
  %v2992 = vsub.f32 %v2977, %v2989
  %v2993 = vsub.f32 %v2978, %v2990
  %v2994 = vmul.f32 %v2991, %v2991
  %v2995 = vmul.f32 %v2992, %v2992
  %v2996 = vmul.f32 %v2993, %v2993
  %v2997 = vsel %vm250, %v2994, 0.0
  %2998 = vadd.xlane.f32.xlu0 %v2997
  %v2999 = vpop.xlane.xlu0 %2998
  %v3000 = vsel %vm250, %v2995, 0.0
  %3001 = vadd.xlane.f32.xlu0 %v3000
  %v3002 = vpop.xlane.xlu0 %3001
  %v3003 = vsel %vm250, %v2996, 0.0
  %3004 = vadd.xlane.f32.xlu0 %v3003
  %v3005 = vpop.xlane.xlu0 %3004
  %v3006 = vmul.f32 %v2999, %v260
  %v3007 = vmul.f32 %v3002, %v260
  %v3008 = vmul.f32 %v3005, %v260
  %v3009 = vadd.f32 %v3006, 1e-05
  %v3010 = vadd.f32 %v3007, 1e-05
  %v3011 = vadd.f32 %v3008, 1e-05
  %v3012 = vrsqrt.pop %v3009
  %v3013 = vrsqrt.pop %v3010
  %v3014 = vrsqrt.pop %v3011
  %v3015 = vmul.f32 %v2991, %v3012
  %v3016 = vmul.f32 %v2992, %v3013
  %v3017 = vmul.f32 %v2993, %v3014
  %v3018 = vmul.f32 %v3015, %v2759
  %v3019 = vmul.f32 %v3016, %v2759
  %v3020 = vmul.f32 %v3017, %v2759
  %v3021 = vadd.f32 %v3018, %v2766
  %v3022 = vadd.f32 %v3019, %v2766
  %v3023 = vadd.f32 %v3020, %v2766
  %s3024 = scalar_lea.vmem %s12, 2
  %v3025 = vld [vmem:[%s3024] sm:$0x3]
  %s3026 = scalar_lea.vmem %s4, 32
  %v3027 = vld [vmem:[%s3026] sm:$0xff]
  %v3028 = vld [vmem:[%s3026 + $0x8] sm:$0xff]
  %v3029 = vld [vmem:[%s3026 + $0x10] sm:$0xff]
  %v3030 = vld [vmem:[%s3026 + $0x18] sm:$0xff]
  %s3031 = scalar_lea.vmem %s5, 1
  %v3032 = vld [vmem:[%s3031] sm:$0x1]
  %v3034 = vlaneseq
  %v3035 = vshrl.u32 %v3034, 7
  %v3036 = vsub.s32 0, %v3035
  %v3037 = vrot.slane %v3032, %v3036
  %v3040 = vsel %vm250, %v3021, 0
  %v3043 = vsel %vm250, %v3022, 0
  %v3046 = vsel %vm250, %v3023, 0
  %3048 = vmatprep.subr.mxu0 0.0
  %3049 = vmatpush1.msra.mxu0 0.0
  %3050 = vmatprep.subr.mxu0 0.0
  %3051 = vmatpush1.msra.mxu0 0.0
  %3052 = vmatprep.subr.mxu0 0.0
  %3053 = vmatpush1.msra.mxu0 0.0
  %3054 = vmatprep.subr.mxu0 0.0
  %3055 = vmatpush1.msra.mxu0 0.0
  %3056 = vmatprep.subr.mxu0 0.0
  %3057 = vmatpush1.msra.mxu0 0.0
  %3058 = vmatprep.subr.mxu0 0.0
  %3059 = vmatpush1.msra.mxu0 0.0
  %3060 = vmatprep.subr.mxu0 0.0
  %3061 = vmatpush1.msra.mxu0 0.0
  %3062 = vmatprep.subr.mxu0 0.0
  %3063 = vmatpush1.msra.mxu0 0.0
  %3064 = vmatprep.subr.mxu0 0.0
  %3065 = vmatpush1.msra.mxu0 0.0
  %3066 = vmatprep.subr.mxu0 0.0
  %3067 = vmatpush1.msra.mxu0 0.0
  %3068 = vmatprep.subr.mxu0 0.0
  %3069 = vmatpush1.msra.mxu0 0.0
  %3070 = vmatprep.subr.mxu0 0.0
  %3071 = vmatpush1.msra.mxu0 0.0
  %3072 = vmatprep.subr.mxu0 0.0
  %3073 = vmatpush1.msra.mxu0 %v3030
  %3074 = vmatprep.subr.mxu0 0.0
  %3075 = vmatpush1.msra.mxu0 %v3029
  %3076 = vmatprep.subr.mxu0 0.0
  %3077 = vmatpush1.msra.mxu0 %v3028
  %3078 = vmatprep.subr.mxu0 0.0
  %3079 = vmatpush1.msra.mxu0 %v3027
  %3080 = vmatprep.subr.mxu0 0.0
  %3081 = vmatpush2.msra.mxu0 0.0
  %3082 = vmatprep.subr.mxu0 0.0
  %3083 = vmatpush2.msra.mxu0 0.0
  %3084 = vmatprep.subr.mxu0 0.0
  %3085 = vmatpush2.msra.mxu0 0.0
  %3086 = vmatprep.subr.mxu0 0.0
  %3087 = vmatpush2.msra.mxu0 0.0
  %3088 = vmatprep.subr.mxu0 0.0
  %3089 = vmatpush2.msra.mxu0 0.0
  %3090 = vmatprep.subr.mxu0 0.0
  %3091 = vmatpush2.msra.mxu0 0.0
  %3092 = vmatprep.subr.mxu0 0.0
  %3093 = vmatpush2.msra.mxu0 0.0
  %3094 = vmatprep.subr.mxu0 0.0
  %3095 = vmatpush2.msra.mxu0 0.0
  %3096 = vmatprep.subr.mxu0 0.0
  %3097 = vmatpush2.msra.mxu0 0.0
  %3098 = vmatprep.subr.mxu0 0.0
  %3099 = vmatpush2.msra.mxu0 0.0
  %3100 = vmatprep.subr.mxu0 0.0
  %3101 = vmatpush2.msra.mxu0 0.0
  %3102 = vmatprep.subr.mxu0 0.0
  %3103 = vmatpush2.msra.mxu0 0.0
  %3104 = vmatprep.subr.mxu0 0.0
  %3105 = vmatpush2.msra.mxu0 0.0
  %3106 = vmatprep.subr.mxu0 0.0
  %3107 = vmatpush2.msra.mxu0 0.0
  %3108 = vmatprep.subr.mxu0 0.0
  %3109 = vmatpush2.msra.mxu0 0.0
  %3110 = vmatprep.subr.mxu0 0.0
  %3111 = vmatpush2.msra.mxu0 0.0
  %3112 = vmatprep.mubr.f32.mxu0 0.0
  %3113 = vmatmul.mubr.f32.gmra.mxu0 %v3040
  %v3114 = vpop.f32.mrf.mxu0
  %v3115 = vadd.f32 %v3037, %v3114
  %v3116 = vpop.f32.mrf.mxu0
  %3117 = vmatprep.mubr.f32.mxu0 0.0
  %3118 = vmatmul.mubr.f32.gmra.mxu0 %v3043
  %v3119 = vpop.f32.mrf.mxu0
  %v3120 = vadd.f32 %v3037, %v3119
  %v3121 = vpop.f32.mrf.mxu0
  %3122 = vmatprep.mubr.f32.mxu0 0.0
  %3123 = vmatmul.mubr.f32.gmra.mxu0 %v3046
  %v3124 = vpop.f32.mrf.mxu0
  %v3125 = vadd.f32 %v3037, %v3124
  %v3126 = vpop.f32.mrf.mxu0
  %3127 = vdwg.mxu0
  %s3128 = scalar_lea.vmem %s6, 32
  %v3129 = vld [vmem:[%s3128] sm:$0xff]
  %v3130 = vld [vmem:[%s3128 + $0x8] sm:$0xff]
  %v3131 = vld [vmem:[%s3128 + $0x10] sm:$0xff]
  %v3132 = vld [vmem:[%s3128 + $0x18] sm:$0xff]
  %3135 = vrot.lane.b32.xlu0 %v3115, 96
  %v3136 = vpop.permute.xlu0 %3135
  %3137 = vrot.lane.b32.xlu0 %v3120, 96
  %v3138 = vpop.permute.xlu0 %3137
  %v3139 = vsel %vm431, %v3115, 0
  %v3141 = vsel %vm431, %v3120, 0
  %v3143 = vsel %vm431, %v3136, 0
  %v3145 = vsel %vm431, %v3138, 0
  %3147 = vmatprep.subr.mxu0 0.0
  %3148 = vmatpush1.xpose.msra.mxu0 0.0
  %3149 = vmatprep.subr.mxu0 0.0
  %3150 = vmatpush1.xpose.msra.mxu0 0.0
  %3151 = vmatprep.subr.mxu0 0.0
  %3152 = vmatpush1.xpose.msra.mxu0 0.0
  %3153 = vmatprep.subr.mxu0 0.0
  %3154 = vmatpush1.xpose.msra.mxu0 0.0
  %3155 = vmatprep.subr.mxu0 0.0
  %3156 = vmatpush1.xpose.msra.mxu0 0.0
  %3157 = vmatprep.subr.mxu0 0.0
  %3158 = vmatpush1.xpose.msra.mxu0 0.0
  %3159 = vmatprep.subr.mxu0 0.0
  %3160 = vmatpush1.xpose.msra.mxu0 0.0
  %3161 = vmatprep.subr.mxu0 0.0
  %3162 = vmatpush1.xpose.msra.mxu0 0.0
  %3163 = vmatprep.subr.mxu0 0.0
  %3164 = vmatpush1.xpose.msra.mxu0 0.0
  %3165 = vmatprep.subr.mxu0 0.0
  %3166 = vmatpush1.xpose.msra.mxu0 0.0
  %3167 = vmatprep.subr.mxu0 0.0
  %3168 = vmatpush1.xpose.msra.mxu0 0.0
  %3169 = vmatprep.subr.mxu0 0.0
  %3170 = vmatpush1.xpose.msra.mxu0 0.0
  %3171 = vmatprep.subr.mxu0 0.0
  %3172 = vmatpush1.xpose.msra.mxu0 0.0
  %3173 = vmatprep.subr.mxu0 0.0
  %3174 = vmatpush1.xpose.msra.mxu0 0.0
  %3175 = vmatprep.subr.mxu0 0.0
  %3176 = vmatpush1.xpose.msra.mxu0 %v3145
  %3177 = vmatprep.subr.mxu0 0.0
  %3178 = vmatpush1.xpose.msra.mxu0 %v3143
  %3179 = vmatprep.subr.mxu0 0.0
  %3180 = vmatpush2.xpose.msra.mxu0 0.0
  %3181 = vmatprep.subr.mxu0 0.0
  %3182 = vmatpush2.xpose.msra.mxu0 0.0
  %3183 = vmatprep.subr.mxu0 0.0
  %3184 = vmatpush2.xpose.msra.mxu0 0.0
  %3185 = vmatprep.subr.mxu0 0.0
  %3186 = vmatpush2.xpose.msra.mxu0 0.0
  %3187 = vmatprep.subr.mxu0 0.0
  %3188 = vmatpush2.xpose.msra.mxu0 0.0
  %3189 = vmatprep.subr.mxu0 0.0
  %3190 = vmatpush2.xpose.msra.mxu0 0.0
  %3191 = vmatprep.subr.mxu0 0.0
  %3192 = vmatpush2.xpose.msra.mxu0 0.0
  %3193 = vmatprep.subr.mxu0 0.0
  %3194 = vmatpush2.xpose.msra.mxu0 0.0
  %3195 = vmatprep.subr.mxu0 0.0
  %3196 = vmatpush2.xpose.msra.mxu0 0.0
  %3197 = vmatprep.subr.mxu0 0.0
  %3198 = vmatpush2.xpose.msra.mxu0 0.0
  %3199 = vmatprep.subr.mxu0 0.0
  %3200 = vmatpush2.xpose.msra.mxu0 0.0
  %3201 = vmatprep.subr.mxu0 0.0
  %3202 = vmatpush2.xpose.msra.mxu0 0.0
  %3203 = vmatprep.subr.mxu0 0.0
  %3204 = vmatpush2.xpose.msra.mxu0 0.0
  %3205 = vmatprep.subr.mxu0 0.0
  %3206 = vmatpush2.xpose.msra.mxu0 0.0
  %3207 = vmatprep.subr.mxu0 0.0
  %3208 = vmatpush2.xpose.msra.mxu0 0.0
  %3209 = vmatprep.subr.mxu0 0.0
  %3210 = vmatpush2.xpose.msra.mxu0 0.0
  %3211 = vmatprep.mubr.f32.mxu0 0.0
  %3212 = vmatmul.mubr.f32.gmra.mxu0 %v3139
  %v3213 = vpop.f32.mrf.mxu0
  %v3214 = vadd.f32 %v423, %v3213
  %v3215 = vpop.f32.mrf.mxu0
  %3216 = vmatprep.mubr.f32.mxu0 0.0
  %3217 = vmatmul.mubr.f32.gmra.mxu0 %v3141
  %v3218 = vpop.f32.mrf.mxu0
  %v3219 = vadd.f32 %v423, %v3218
  %v3220 = vpop.f32.mrf.mxu0
  %3221 = vdwg.mxu0
  %v3222 = vsel %vm515, %v3214, -inf
  %3223 = vmax.xlane.f32.xlu0 %v3222
  %v3224 = vpop.xlane.xlu0 %3223
  %v3225 = vsel %vm519, %v3219, -inf
  %3226 = vmax.xlane.f32.xlu0 %v3225
  %v3227 = vpop.xlane.xlu0 %3226
  %v3228 = vsub.f32 %v3214, %v3224
  %v3229 = vsub.f32 %v3219, %v3227
  %v3230 = vmul.f32 %v3228, 1.442695
  %v3231 = vpow.pop %v3230
  %v3232 = vmul.f32 %v3229, 1.442695
  %v3233 = vpow.pop %v3232
  %v3234 = vsel %vm515, %v3231, 0.0
  %3235 = vadd.xlane.f32.xlu0 %v3234
  %v3236 = vpop.xlane.xlu0 %3235
  %v3237 = vsel %vm519, %v3233, 0.0
  %3238 = vadd.xlane.f32.xlu0 %v3237
  %v3239 = vpop.xlane.xlu0 %3238
  %v3240 = vrcp.pop %v3236
  %v3241 = vrcp.pop %v3239
  %v3242 = vmul.f32 %v3231, %v3240
  %v3243 = vmul.f32 %v3233, %v3241
  %3244 = vrot.lane.b32.xlu0 %v3115, 64
  %v3245 = vpop.permute.xlu0 %3244
  %3246 = vrot.lane.b32.xlu0 %v3120, 64
  %v3247 = vpop.permute.xlu0 %3246
  %v3250 = vsel %vm515, %v3242, 0
  %v3253 = vsel %vm515, %v3243, 0
  %v3255 = vsel %vm243, %v3247, 0
  %3257 = vmatprep.subr.mxu0 0.0
  %3258 = vmatpush1.msra.mxu0 0.0
  %3259 = vmatprep.subr.mxu0 0.0
  %3260 = vmatpush1.msra.mxu0 0.0
  %3261 = vmatprep.subr.mxu0 0.0
  %3262 = vmatpush1.msra.mxu0 0.0
  %3263 = vmatprep.subr.mxu0 0.0
  %3264 = vmatpush1.msra.mxu0 0.0
  %3265 = vmatprep.subr.mxu0 0.0
  %3266 = vmatpush1.msra.mxu0 0.0
  %3267 = vmatprep.subr.mxu0 0.0
  %3268 = vmatpush1.msra.mxu0 0.0
  %3269 = vmatprep.subr.mxu0 0.0
  %3270 = vmatpush1.msra.mxu0 0.0
  %3271 = vmatprep.subr.mxu0 0.0
  %3272 = vmatpush1.msra.mxu0 0.0
  %3273 = vmatprep.subr.mxu0 0.0
  %3274 = vmatpush1.msra.mxu0 0.0
  %3275 = vmatprep.subr.mxu0 0.0
  %3276 = vmatpush1.msra.mxu0 0.0
  %3277 = vmatprep.subr.mxu0 0.0
  %3278 = vmatpush1.msra.mxu0 0.0
  %3279 = vmatprep.subr.mxu0 0.0
  %3280 = vmatpush1.msra.mxu0 0.0
  %3281 = vmatprep.subr.mxu0 0.0
  %3282 = vmatpush1.msra.mxu0 0.0
  %3283 = vmatprep.subr.mxu0 0.0
  %3284 = vmatpush1.msra.mxu0 0.0
  %3285 = vmatprep.subr.mxu0 0.0
  %3286 = vmatpush1.msra.mxu0 %v3255
  %3287 = vmatprep.subr.mxu0 0.0
  %3288 = vmatpush1.msra.mxu0 %v3245
  %3289 = vmatprep.subr.mxu0 0.0
  %3290 = vmatpush2.msra.mxu0 0.0
  %3291 = vmatprep.subr.mxu0 0.0
  %3292 = vmatpush2.msra.mxu0 0.0
  %3293 = vmatprep.subr.mxu0 0.0
  %3294 = vmatpush2.msra.mxu0 0.0
  %3295 = vmatprep.subr.mxu0 0.0
  %3296 = vmatpush2.msra.mxu0 0.0
  %3297 = vmatprep.subr.mxu0 0.0
  %3298 = vmatpush2.msra.mxu0 0.0
  %3299 = vmatprep.subr.mxu0 0.0
  %3300 = vmatpush2.msra.mxu0 0.0
  %3301 = vmatprep.subr.mxu0 0.0
  %3302 = vmatpush2.msra.mxu0 0.0
  %3303 = vmatprep.subr.mxu0 0.0
  %3304 = vmatpush2.msra.mxu0 0.0
  %3305 = vmatprep.subr.mxu0 0.0
  %3306 = vmatpush2.msra.mxu0 0.0
  %3307 = vmatprep.subr.mxu0 0.0
  %3308 = vmatpush2.msra.mxu0 0.0
  %3309 = vmatprep.subr.mxu0 0.0
  %3310 = vmatpush2.msra.mxu0 0.0
  %3311 = vmatprep.subr.mxu0 0.0
  %3312 = vmatpush2.msra.mxu0 0.0
  %3313 = vmatprep.subr.mxu0 0.0
  %3314 = vmatpush2.msra.mxu0 0.0
  %3315 = vmatprep.subr.mxu0 0.0
  %3316 = vmatpush2.msra.mxu0 0.0
  %3317 = vmatprep.subr.mxu0 0.0
  %3318 = vmatpush2.msra.mxu0 0.0
  %3319 = vmatprep.subr.mxu0 0.0
  %3320 = vmatpush2.msra.mxu0 0.0
  %3321 = vmatprep.mubr.f32.mxu0 0.0
  %3322 = vmatmul.mubr.f32.gmra.mxu0 %v3250
  %v3323 = vpop.f32.mrf.mxu0
  %v3324 = vadd.f32 0.0, %v3323
  %v3325 = vpop.f32.mrf.mxu0
  %3326 = vmatprep.mubr.f32.mxu0 0.0
  %3327 = vmatmul.mubr.f32.gmra.mxu0 %v3253
  %v3328 = vpop.f32.mrf.mxu0
  %v3329 = vadd.f32 0.0, %v3328
  %v3330 = vpop.f32.mrf.mxu0
  %3331 = vdwg.mxu0
  %3332 = vrot.lane.b32.xlu0 %v3115, 120
  %v3333 = vpop.permute.xlu0 %3332
  %3334 = vrot.lane.b32.xlu0 %v3120, 120
  %v3335 = vpop.permute.xlu0 %3334
  %3336 = vrot.lane.b32.xlu0 %v3115, 88
  %v3337 = vpop.permute.xlu0 %3336
  %3338 = vrot.lane.b32.xlu0 %v3120, 88
  %v3339 = vpop.permute.xlu0 %3338
  %v3340 = vsel %vm431, %v3333, 0
  %v3342 = vsel %vm431, %v3335, 0
  %v3344 = vsel %vm431, %v3337, 0
  %v3346 = vsel %vm431, %v3339, 0
  %3348 = vmatprep.subr.mxu0 0.0
  %3349 = vmatpush1.xpose.msra.mxu0 0.0
  %3350 = vmatprep.subr.mxu0 0.0
  %3351 = vmatpush1.xpose.msra.mxu0 0.0
  %3352 = vmatprep.subr.mxu0 0.0
  %3353 = vmatpush1.xpose.msra.mxu0 0.0
  %3354 = vmatprep.subr.mxu0 0.0
  %3355 = vmatpush1.xpose.msra.mxu0 0.0
  %3356 = vmatprep.subr.mxu0 0.0
  %3357 = vmatpush1.xpose.msra.mxu0 0.0
  %3358 = vmatprep.subr.mxu0 0.0
  %3359 = vmatpush1.xpose.msra.mxu0 0.0
  %3360 = vmatprep.subr.mxu0 0.0
  %3361 = vmatpush1.xpose.msra.mxu0 0.0
  %3362 = vmatprep.subr.mxu0 0.0
  %3363 = vmatpush1.xpose.msra.mxu0 0.0
  %3364 = vmatprep.subr.mxu0 0.0
  %3365 = vmatpush1.xpose.msra.mxu0 0.0
  %3366 = vmatprep.subr.mxu0 0.0
  %3367 = vmatpush1.xpose.msra.mxu0 0.0
  %3368 = vmatprep.subr.mxu0 0.0
  %3369 = vmatpush1.xpose.msra.mxu0 0.0
  %3370 = vmatprep.subr.mxu0 0.0
  %3371 = vmatpush1.xpose.msra.mxu0 0.0
  %3372 = vmatprep.subr.mxu0 0.0
  %3373 = vmatpush1.xpose.msra.mxu0 0.0
  %3374 = vmatprep.subr.mxu0 0.0
  %3375 = vmatpush1.xpose.msra.mxu0 0.0
  %3376 = vmatprep.subr.mxu0 0.0
  %3377 = vmatpush1.xpose.msra.mxu0 %v3346
  %3378 = vmatprep.subr.mxu0 0.0
  %3379 = vmatpush1.xpose.msra.mxu0 %v3344
  %3380 = vmatprep.subr.mxu0 0.0
  %3381 = vmatpush2.xpose.msra.mxu0 0.0
  %3382 = vmatprep.subr.mxu0 0.0
  %3383 = vmatpush2.xpose.msra.mxu0 0.0
  %3384 = vmatprep.subr.mxu0 0.0
  %3385 = vmatpush2.xpose.msra.mxu0 0.0
  %3386 = vmatprep.subr.mxu0 0.0
  %3387 = vmatpush2.xpose.msra.mxu0 0.0
  %3388 = vmatprep.subr.mxu0 0.0
  %3389 = vmatpush2.xpose.msra.mxu0 0.0
  %3390 = vmatprep.subr.mxu0 0.0
  %3391 = vmatpush2.xpose.msra.mxu0 0.0
  %3392 = vmatprep.subr.mxu0 0.0
  %3393 = vmatpush2.xpose.msra.mxu0 0.0
  %3394 = vmatprep.subr.mxu0 0.0
  %3395 = vmatpush2.xpose.msra.mxu0 0.0
  %3396 = vmatprep.subr.mxu0 0.0
  %3397 = vmatpush2.xpose.msra.mxu0 0.0
  %3398 = vmatprep.subr.mxu0 0.0
  %3399 = vmatpush2.xpose.msra.mxu0 0.0
  %3400 = vmatprep.subr.mxu0 0.0
  %3401 = vmatpush2.xpose.msra.mxu0 0.0
  %3402 = vmatprep.subr.mxu0 0.0
  %3403 = vmatpush2.xpose.msra.mxu0 0.0
  %3404 = vmatprep.subr.mxu0 0.0
  %3405 = vmatpush2.xpose.msra.mxu0 0.0
  %3406 = vmatprep.subr.mxu0 0.0
  %3407 = vmatpush2.xpose.msra.mxu0 0.0
  %3408 = vmatprep.subr.mxu0 0.0
  %3409 = vmatpush2.xpose.msra.mxu0 0.0
  %3410 = vmatprep.subr.mxu0 0.0
  %3411 = vmatpush2.xpose.msra.mxu0 0.0
  %3412 = vmatprep.mubr.f32.mxu0 0.0
  %3413 = vmatmul.mubr.f32.gmra.mxu0 %v3340
  %v3414 = vpop.f32.mrf.mxu0
  %v3415 = vadd.f32 %v423, %v3414
  %v3416 = vpop.f32.mrf.mxu0
  %3417 = vmatprep.mubr.f32.mxu0 0.0
  %3418 = vmatmul.mubr.f32.gmra.mxu0 %v3342
  %v3419 = vpop.f32.mrf.mxu0
  %v3420 = vadd.f32 %v423, %v3419
  %v3421 = vpop.f32.mrf.mxu0
  %3422 = vdwg.mxu0
  %v3423 = vsel %vm515, %v3415, -inf
  %3424 = vmax.xlane.f32.xlu0 %v3423
  %v3425 = vpop.xlane.xlu0 %3424
  %v3426 = vsel %vm519, %v3420, -inf
  %3427 = vmax.xlane.f32.xlu0 %v3426
  %v3428 = vpop.xlane.xlu0 %3427
  %v3429 = vsub.f32 %v3415, %v3425
  %v3430 = vsub.f32 %v3420, %v3428
  %v3431 = vmul.f32 %v3429, 1.442695
  %v3432 = vpow.pop %v3431
  %v3433 = vmul.f32 %v3430, 1.442695
  %v3434 = vpow.pop %v3433
  %v3435 = vsel %vm515, %v3432, 0.0
  %3436 = vadd.xlane.f32.xlu0 %v3435
  %v3437 = vpop.xlane.xlu0 %3436
  %v3438 = vsel %vm519, %v3434, 0.0
  %3439 = vadd.xlane.f32.xlu0 %v3438
  %v3440 = vpop.xlane.xlu0 %3439
  %v3441 = vrcp.pop %v3437
  %v3442 = vrcp.pop %v3440
  %v3443 = vmul.f32 %v3432, %v3441
  %v3444 = vmul.f32 %v3434, %v3442
  %3445 = vrot.lane.b32.xlu0 %v3115, 56
  %v3446 = vpop.permute.xlu0 %3445
  %3447 = vrot.lane.b32.xlu0 %v3120, 56
  %v3448 = vpop.permute.xlu0 %3447
  %v3451 = vsel %vm515, %v3443, 0
  %v3454 = vsel %vm515, %v3444, 0
  %v3456 = vsel %vm243, %v3448, 0
  %3458 = vmatprep.subr.mxu0 0.0
  %3459 = vmatpush1.msra.mxu0 0.0
  %3460 = vmatprep.subr.mxu0 0.0
  %3461 = vmatpush1.msra.mxu0 0.0
  %3462 = vmatprep.subr.mxu0 0.0
  %3463 = vmatpush1.msra.mxu0 0.0
  %3464 = vmatprep.subr.mxu0 0.0
  %3465 = vmatpush1.msra.mxu0 0.0
  %3466 = vmatprep.subr.mxu0 0.0
  %3467 = vmatpush1.msra.mxu0 0.0
  %3468 = vmatprep.subr.mxu0 0.0
  %3469 = vmatpush1.msra.mxu0 0.0
  %3470 = vmatprep.subr.mxu0 0.0
  %3471 = vmatpush1.msra.mxu0 0.0
  %3472 = vmatprep.subr.mxu0 0.0
  %3473 = vmatpush1.msra.mxu0 0.0
  %3474 = vmatprep.subr.mxu0 0.0
  %3475 = vmatpush1.msra.mxu0 0.0
  %3476 = vmatprep.subr.mxu0 0.0
  %3477 = vmatpush1.msra.mxu0 0.0
  %3478 = vmatprep.subr.mxu0 0.0
  %3479 = vmatpush1.msra.mxu0 0.0
  %3480 = vmatprep.subr.mxu0 0.0
  %3481 = vmatpush1.msra.mxu0 0.0
  %3482 = vmatprep.subr.mxu0 0.0
  %3483 = vmatpush1.msra.mxu0 0.0
  %3484 = vmatprep.subr.mxu0 0.0
  %3485 = vmatpush1.msra.mxu0 0.0
  %3486 = vmatprep.subr.mxu0 0.0
  %3487 = vmatpush1.msra.mxu0 %v3456
  %3488 = vmatprep.subr.mxu0 0.0
  %3489 = vmatpush1.msra.mxu0 %v3446
  %3490 = vmatprep.subr.mxu0 0.0
  %3491 = vmatpush2.msra.mxu0 0.0
  %3492 = vmatprep.subr.mxu0 0.0
  %3493 = vmatpush2.msra.mxu0 0.0
  %3494 = vmatprep.subr.mxu0 0.0
  %3495 = vmatpush2.msra.mxu0 0.0
  %3496 = vmatprep.subr.mxu0 0.0
  %3497 = vmatpush2.msra.mxu0 0.0
  %3498 = vmatprep.subr.mxu0 0.0
  %3499 = vmatpush2.msra.mxu0 0.0
  %3500 = vmatprep.subr.mxu0 0.0
  %3501 = vmatpush2.msra.mxu0 0.0
  %3502 = vmatprep.subr.mxu0 0.0
  %3503 = vmatpush2.msra.mxu0 0.0
  %3504 = vmatprep.subr.mxu0 0.0
  %3505 = vmatpush2.msra.mxu0 0.0
  %3506 = vmatprep.subr.mxu0 0.0
  %3507 = vmatpush2.msra.mxu0 0.0
  %3508 = vmatprep.subr.mxu0 0.0
  %3509 = vmatpush2.msra.mxu0 0.0
  %3510 = vmatprep.subr.mxu0 0.0
  %3511 = vmatpush2.msra.mxu0 0.0
  %3512 = vmatprep.subr.mxu0 0.0
  %3513 = vmatpush2.msra.mxu0 0.0
  %3514 = vmatprep.subr.mxu0 0.0
  %3515 = vmatpush2.msra.mxu0 0.0
  %3516 = vmatprep.subr.mxu0 0.0
  %3517 = vmatpush2.msra.mxu0 0.0
  %3518 = vmatprep.subr.mxu0 0.0
  %3519 = vmatpush2.msra.mxu0 0.0
  %3520 = vmatprep.subr.mxu0 0.0
  %3521 = vmatpush2.msra.mxu0 0.0
  %3522 = vmatprep.mubr.f32.mxu0 0.0
  %3523 = vmatmul.mubr.f32.gmra.mxu0 %v3451
  %v3524 = vpop.f32.mrf.mxu0
  %v3525 = vadd.f32 0.0, %v3524
  %v3526 = vpop.f32.mrf.mxu0
  %3527 = vmatprep.mubr.f32.mxu0 0.0
  %3528 = vmatmul.mubr.f32.gmra.mxu0 %v3454
  %v3529 = vpop.f32.mrf.mxu0
  %v3530 = vadd.f32 0.0, %v3529
  %v3531 = vpop.f32.mrf.mxu0
  %3532 = vdwg.mxu0
  %v3534 = vsel %vm431, %v3525, 0
  %v3537 = vsel %vm431, %v3530, 0
  %3539 = vmatprep.subr.mxu0 0.0
  %3540 = vmatpush1.msra.mxu0 0.0
  %3541 = vmatprep.subr.mxu0 0.0
  %3542 = vmatpush1.msra.mxu0 0.0
  %3543 = vmatprep.subr.mxu0 0.0
  %3544 = vmatpush1.msra.mxu0 0.0
  %3545 = vmatprep.subr.mxu0 0.0
  %3546 = vmatpush1.msra.mxu0 0.0
  %3547 = vmatprep.subr.mxu0 0.0
  %3548 = vmatpush1.msra.mxu0 0.0
  %3549 = vmatprep.subr.mxu0 0.0
  %3550 = vmatpush1.msra.mxu0 0.0
  %3551 = vmatprep.subr.mxu0 0.0
  %3552 = vmatpush1.msra.mxu0 0.0
  %3553 = vmatprep.subr.mxu0 0.0
  %3554 = vmatpush1.msra.mxu0 0.0
  %3555 = vmatprep.subr.mxu0 0.0
  %3556 = vmatpush1.msra.mxu0 0.0
  %3557 = vmatprep.subr.mxu0 0.0
  %3558 = vmatpush1.msra.mxu0 0.0
  %3559 = vmatprep.subr.mxu0 0.0
  %3560 = vmatpush1.msra.mxu0 0.0
  %3561 = vmatprep.subr.mxu0 0.0
  %3562 = vmatpush1.msra.mxu0 0.0
  %3563 = vmatprep.subr.mxu0 0.0
  %3564 = vmatpush1.msra.mxu0 0.0
  %3565 = vmatprep.subr.mxu0 0.0
  %3566 = vmatpush1.msra.mxu0 0.0
  %3567 = vmatprep.subr.mxu0 0.0
  %3568 = vmatpush1.msra.mxu0 0.0
  %3569 = vmatprep.subr.mxu0 0.0
  %3570 = vmatpush1.msra.mxu0 %v3130
  %3571 = vmatprep.subr.mxu0 0.0
  %3572 = vmatpush2.msra.mxu0 0.0
  %3573 = vmatprep.subr.mxu0 0.0
  %3574 = vmatpush2.msra.mxu0 0.0
  %3575 = vmatprep.subr.mxu0 0.0
  %3576 = vmatpush2.msra.mxu0 0.0
  %3577 = vmatprep.subr.mxu0 0.0
  %3578 = vmatpush2.msra.mxu0 0.0
  %3579 = vmatprep.subr.mxu0 0.0
  %3580 = vmatpush2.msra.mxu0 0.0
  %3581 = vmatprep.subr.mxu0 0.0
  %3582 = vmatpush2.msra.mxu0 0.0
  %3583 = vmatprep.subr.mxu0 0.0
  %3584 = vmatpush2.msra.mxu0 0.0
  %3585 = vmatprep.subr.mxu0 0.0
  %3586 = vmatpush2.msra.mxu0 0.0
  %3587 = vmatprep.subr.mxu0 0.0
  %3588 = vmatpush2.msra.mxu0 0.0
  %3589 = vmatprep.subr.mxu0 0.0
  %3590 = vmatpush2.msra.mxu0 0.0
  %3591 = vmatprep.subr.mxu0 0.0
  %3592 = vmatpush2.msra.mxu0 0.0
  %3593 = vmatprep.subr.mxu0 0.0
  %3594 = vmatpush2.msra.mxu0 0.0
  %3595 = vmatprep.subr.mxu0 0.0
  %3596 = vmatpush2.msra.mxu0 0.0
  %3597 = vmatprep.subr.mxu0 0.0
  %3598 = vmatpush2.msra.mxu0 0.0
  %3599 = vmatprep.subr.mxu0 0.0
  %3600 = vmatpush2.msra.mxu0 0.0
  %3601 = vmatprep.subr.mxu0 0.0
  %3602 = vmatpush2.msra.mxu0 0.0
  %3603 = vmatprep.mubr.f32.mxu0 0.0
  %3604 = vmatmul.mubr.f32.gmra.mxu0 %v3534
  %v3605 = vpop.f32.mrf.mxu0
  %v3606 = vadd.f32 0.0, %v3605
  %v3607 = vpop.f32.mrf.mxu0
  %3608 = vmatprep.mubr.f32.mxu0 0.0
  %3609 = vmatmul.mubr.f32.gmra.mxu0 %v3537
  %v3610 = vpop.f32.mrf.mxu0
  %v3611 = vadd.f32 0.0, %v3610
  %v3612 = vpop.f32.mrf.mxu0
  %3613 = vdwg.mxu0
  %v3615 = vsel %vm431, %v3324, 0
  %v3618 = vsel %vm431, %v3329, 0
  %3620 = vmatprep.subr.mxu0 0.0
  %3621 = vmatpush1.msra.mxu0 0.0
  %3622 = vmatprep.subr.mxu0 0.0
  %3623 = vmatpush1.msra.mxu0 0.0
  %3624 = vmatprep.subr.mxu0 0.0
  %3625 = vmatpush1.msra.mxu0 0.0
  %3626 = vmatprep.subr.mxu0 0.0
  %3627 = vmatpush1.msra.mxu0 0.0
  %3628 = vmatprep.subr.mxu0 0.0
  %3629 = vmatpush1.msra.mxu0 0.0
  %3630 = vmatprep.subr.mxu0 0.0
  %3631 = vmatpush1.msra.mxu0 0.0
  %3632 = vmatprep.subr.mxu0 0.0
  %3633 = vmatpush1.msra.mxu0 0.0
  %3634 = vmatprep.subr.mxu0 0.0
  %3635 = vmatpush1.msra.mxu0 0.0
  %3636 = vmatprep.subr.mxu0 0.0
  %3637 = vmatpush1.msra.mxu0 0.0
  %3638 = vmatprep.subr.mxu0 0.0
  %3639 = vmatpush1.msra.mxu0 0.0
  %3640 = vmatprep.subr.mxu0 0.0
  %3641 = vmatpush1.msra.mxu0 0.0
  %3642 = vmatprep.subr.mxu0 0.0
  %3643 = vmatpush1.msra.mxu0 0.0
  %3644 = vmatprep.subr.mxu0 0.0
  %3645 = vmatpush1.msra.mxu0 0.0
  %3646 = vmatprep.subr.mxu0 0.0
  %3647 = vmatpush1.msra.mxu0 0.0
  %3648 = vmatprep.subr.mxu0 0.0
  %3649 = vmatpush1.msra.mxu0 0.0
  %3650 = vmatprep.subr.mxu0 0.0
  %3651 = vmatpush1.msra.mxu0 %v3129
  %3652 = vmatprep.subr.mxu0 0.0
  %3653 = vmatpush2.msra.mxu0 0.0
  %3654 = vmatprep.subr.mxu0 0.0
  %3655 = vmatpush2.msra.mxu0 0.0
  %3656 = vmatprep.subr.mxu0 0.0
  %3657 = vmatpush2.msra.mxu0 0.0
  %3658 = vmatprep.subr.mxu0 0.0
  %3659 = vmatpush2.msra.mxu0 0.0
  %3660 = vmatprep.subr.mxu0 0.0
  %3661 = vmatpush2.msra.mxu0 0.0
  %3662 = vmatprep.subr.mxu0 0.0
  %3663 = vmatpush2.msra.mxu0 0.0
  %3664 = vmatprep.subr.mxu0 0.0
  %3665 = vmatpush2.msra.mxu0 0.0
  %3666 = vmatprep.subr.mxu0 0.0
  %3667 = vmatpush2.msra.mxu0 0.0
  %3668 = vmatprep.subr.mxu0 0.0
  %3669 = vmatpush2.msra.mxu0 0.0
  %3670 = vmatprep.subr.mxu0 0.0
  %3671 = vmatpush2.msra.mxu0 0.0
  %3672 = vmatprep.subr.mxu0 0.0
  %3673 = vmatpush2.msra.mxu0 0.0
  %3674 = vmatprep.subr.mxu0 0.0
  %3675 = vmatpush2.msra.mxu0 0.0
  %3676 = vmatprep.subr.mxu0 0.0
  %3677 = vmatpush2.msra.mxu0 0.0
  %3678 = vmatprep.subr.mxu0 0.0
  %3679 = vmatpush2.msra.mxu0 0.0
  %3680 = vmatprep.subr.mxu0 0.0
  %3681 = vmatpush2.msra.mxu0 0.0
  %3682 = vmatprep.subr.mxu0 0.0
  %3683 = vmatpush2.msra.mxu0 0.0
  %3684 = vmatprep.mubr.f32.mxu0 0.0
  %3685 = vmatmul.mubr.f32.gmra.mxu0 %v3615
  %v3686 = vpop.f32.mrf.mxu0
  %v3687 = vadd.f32 %v3606, %v3686
  %v3688 = vpop.f32.mrf.mxu0
  %3689 = vmatprep.mubr.f32.mxu0 0.0
  %3690 = vmatmul.mubr.f32.gmra.mxu0 %v3618
  %v3691 = vpop.f32.mrf.mxu0
  %v3692 = vadd.f32 %v3611, %v3691
  %v3693 = vpop.f32.mrf.mxu0
  %3694 = vdwg.mxu0
  %3695 = vrot.lane.b32.xlu0 %v3115, 112
  %v3696 = vpop.permute.xlu0 %3695
  %3697 = vrot.lane.b32.xlu0 %v3120, 112
  %v3698 = vpop.permute.xlu0 %3697
  %3699 = vrot.lane.b32.xlu0 %v3115, 80
  %v3700 = vpop.permute.xlu0 %3699
  %3701 = vrot.lane.b32.xlu0 %v3120, 80
  %v3702 = vpop.permute.xlu0 %3701
  %v3703 = vsel %vm431, %v3696, 0
  %v3705 = vsel %vm431, %v3698, 0
  %v3707 = vsel %vm431, %v3700, 0
  %v3709 = vsel %vm431, %v3702, 0
  %3711 = vmatprep.subr.mxu0 0.0
  %3712 = vmatpush1.xpose.msra.mxu0 0.0
  %3713 = vmatprep.subr.mxu0 0.0
  %3714 = vmatpush1.xpose.msra.mxu0 0.0
  %3715 = vmatprep.subr.mxu0 0.0
  %3716 = vmatpush1.xpose.msra.mxu0 0.0
  %3717 = vmatprep.subr.mxu0 0.0
  %3718 = vmatpush1.xpose.msra.mxu0 0.0
  %3719 = vmatprep.subr.mxu0 0.0
  %3720 = vmatpush1.xpose.msra.mxu0 0.0
  %3721 = vmatprep.subr.mxu0 0.0
  %3722 = vmatpush1.xpose.msra.mxu0 0.0
  %3723 = vmatprep.subr.mxu0 0.0
  %3724 = vmatpush1.xpose.msra.mxu0 0.0
  %3725 = vmatprep.subr.mxu0 0.0
  %3726 = vmatpush1.xpose.msra.mxu0 0.0
  %3727 = vmatprep.subr.mxu0 0.0
  %3728 = vmatpush1.xpose.msra.mxu0 0.0
  %3729 = vmatprep.subr.mxu0 0.0
  %3730 = vmatpush1.xpose.msra.mxu0 0.0
  %3731 = vmatprep.subr.mxu0 0.0
  %3732 = vmatpush1.xpose.msra.mxu0 0.0
  %3733 = vmatprep.subr.mxu0 0.0
  %3734 = vmatpush1.xpose.msra.mxu0 0.0
  %3735 = vmatprep.subr.mxu0 0.0
  %3736 = vmatpush1.xpose.msra.mxu0 0.0
  %3737 = vmatprep.subr.mxu0 0.0
  %3738 = vmatpush1.xpose.msra.mxu0 0.0
  %3739 = vmatprep.subr.mxu0 0.0
  %3740 = vmatpush1.xpose.msra.mxu0 %v3709
  %3741 = vmatprep.subr.mxu0 0.0
  %3742 = vmatpush1.xpose.msra.mxu0 %v3707
  %3743 = vmatprep.subr.mxu0 0.0
  %3744 = vmatpush2.xpose.msra.mxu0 0.0
  %3745 = vmatprep.subr.mxu0 0.0
  %3746 = vmatpush2.xpose.msra.mxu0 0.0
  %3747 = vmatprep.subr.mxu0 0.0
  %3748 = vmatpush2.xpose.msra.mxu0 0.0
  %3749 = vmatprep.subr.mxu0 0.0
  %3750 = vmatpush2.xpose.msra.mxu0 0.0
  %3751 = vmatprep.subr.mxu0 0.0
  %3752 = vmatpush2.xpose.msra.mxu0 0.0
  %3753 = vmatprep.subr.mxu0 0.0
  %3754 = vmatpush2.xpose.msra.mxu0 0.0
  %3755 = vmatprep.subr.mxu0 0.0
  %3756 = vmatpush2.xpose.msra.mxu0 0.0
  %3757 = vmatprep.subr.mxu0 0.0
  %3758 = vmatpush2.xpose.msra.mxu0 0.0
  %3759 = vmatprep.subr.mxu0 0.0
  %3760 = vmatpush2.xpose.msra.mxu0 0.0
  %3761 = vmatprep.subr.mxu0 0.0
  %3762 = vmatpush2.xpose.msra.mxu0 0.0
  %3763 = vmatprep.subr.mxu0 0.0
  %3764 = vmatpush2.xpose.msra.mxu0 0.0
  %3765 = vmatprep.subr.mxu0 0.0
  %3766 = vmatpush2.xpose.msra.mxu0 0.0
  %3767 = vmatprep.subr.mxu0 0.0
  %3768 = vmatpush2.xpose.msra.mxu0 0.0
  %3769 = vmatprep.subr.mxu0 0.0
  %3770 = vmatpush2.xpose.msra.mxu0 0.0
  %3771 = vmatprep.subr.mxu0 0.0
  %3772 = vmatpush2.xpose.msra.mxu0 0.0
  %3773 = vmatprep.subr.mxu0 0.0
  %3774 = vmatpush2.xpose.msra.mxu0 0.0
  %3775 = vmatprep.mubr.f32.mxu0 0.0
  %3776 = vmatmul.mubr.f32.gmra.mxu0 %v3703
  %v3777 = vpop.f32.mrf.mxu0
  %v3778 = vadd.f32 %v423, %v3777
  %v3779 = vpop.f32.mrf.mxu0
  %3780 = vmatprep.mubr.f32.mxu0 0.0
  %3781 = vmatmul.mubr.f32.gmra.mxu0 %v3705
  %v3782 = vpop.f32.mrf.mxu0
  %v3783 = vadd.f32 %v423, %v3782
  %v3784 = vpop.f32.mrf.mxu0
  %3785 = vdwg.mxu0
  %v3786 = vsel %vm515, %v3778, -inf
  %3787 = vmax.xlane.f32.xlu0 %v3786
  %v3788 = vpop.xlane.xlu0 %3787
  %v3789 = vsel %vm519, %v3783, -inf
  %3790 = vmax.xlane.f32.xlu0 %v3789
  %v3791 = vpop.xlane.xlu0 %3790
  %v3792 = vsub.f32 %v3778, %v3788
  %v3793 = vsub.f32 %v3783, %v3791
  %v3794 = vmul.f32 %v3792, 1.442695
  %v3795 = vpow.pop %v3794
  %v3796 = vmul.f32 %v3793, 1.442695
  %v3797 = vpow.pop %v3796
  %v3798 = vsel %vm515, %v3795, 0.0
  %3799 = vadd.xlane.f32.xlu0 %v3798
  %v3800 = vpop.xlane.xlu0 %3799
  %v3801 = vsel %vm519, %v3797, 0.0
  %3802 = vadd.xlane.f32.xlu0 %v3801
  %v3803 = vpop.xlane.xlu0 %3802
  %v3804 = vrcp.pop %v3800
  %v3805 = vrcp.pop %v3803
  %v3806 = vmul.f32 %v3795, %v3804
  %v3807 = vmul.f32 %v3797, %v3805
  %3808 = vrot.lane.b32.xlu0 %v3115, 48
  %v3809 = vpop.permute.xlu0 %3808
  %3810 = vrot.lane.b32.xlu0 %v3120, 48
  %v3811 = vpop.permute.xlu0 %3810
  %v3814 = vsel %vm515, %v3806, 0
  %v3817 = vsel %vm515, %v3807, 0
  %v3819 = vsel %vm243, %v3811, 0
  %3821 = vmatprep.subr.mxu0 0.0
  %3822 = vmatpush1.msra.mxu0 0.0
  %3823 = vmatprep.subr.mxu0 0.0
  %3824 = vmatpush1.msra.mxu0 0.0
  %3825 = vmatprep.subr.mxu0 0.0
  %3826 = vmatpush1.msra.mxu0 0.0
  %3827 = vmatprep.subr.mxu0 0.0
  %3828 = vmatpush1.msra.mxu0 0.0
  %3829 = vmatprep.subr.mxu0 0.0
  %3830 = vmatpush1.msra.mxu0 0.0
  %3831 = vmatprep.subr.mxu0 0.0
  %3832 = vmatpush1.msra.mxu0 0.0
  %3833 = vmatprep.subr.mxu0 0.0
  %3834 = vmatpush1.msra.mxu0 0.0
  %3835 = vmatprep.subr.mxu0 0.0
  %3836 = vmatpush1.msra.mxu0 0.0
  %3837 = vmatprep.subr.mxu0 0.0
  %3838 = vmatpush1.msra.mxu0 0.0
  %3839 = vmatprep.subr.mxu0 0.0
  %3840 = vmatpush1.msra.mxu0 0.0
  %3841 = vmatprep.subr.mxu0 0.0
  %3842 = vmatpush1.msra.mxu0 0.0
  %3843 = vmatprep.subr.mxu0 0.0
  %3844 = vmatpush1.msra.mxu0 0.0
  %3845 = vmatprep.subr.mxu0 0.0
  %3846 = vmatpush1.msra.mxu0 0.0
  %3847 = vmatprep.subr.mxu0 0.0
  %3848 = vmatpush1.msra.mxu0 0.0
  %3849 = vmatprep.subr.mxu0 0.0
  %3850 = vmatpush1.msra.mxu0 %v3819
  %3851 = vmatprep.subr.mxu0 0.0
  %3852 = vmatpush1.msra.mxu0 %v3809
  %3853 = vmatprep.subr.mxu0 0.0
  %3854 = vmatpush2.msra.mxu0 0.0
  %3855 = vmatprep.subr.mxu0 0.0
  %3856 = vmatpush2.msra.mxu0 0.0
  %3857 = vmatprep.subr.mxu0 0.0
  %3858 = vmatpush2.msra.mxu0 0.0
  %3859 = vmatprep.subr.mxu0 0.0
  %3860 = vmatpush2.msra.mxu0 0.0
  %3861 = vmatprep.subr.mxu0 0.0
  %3862 = vmatpush2.msra.mxu0 0.0
  %3863 = vmatprep.subr.mxu0 0.0
  %3864 = vmatpush2.msra.mxu0 0.0
  %3865 = vmatprep.subr.mxu0 0.0
  %3866 = vmatpush2.msra.mxu0 0.0
  %3867 = vmatprep.subr.mxu0 0.0
  %3868 = vmatpush2.msra.mxu0 0.0
  %3869 = vmatprep.subr.mxu0 0.0
  %3870 = vmatpush2.msra.mxu0 0.0
  %3871 = vmatprep.subr.mxu0 0.0
  %3872 = vmatpush2.msra.mxu0 0.0
  %3873 = vmatprep.subr.mxu0 0.0
  %3874 = vmatpush2.msra.mxu0 0.0
  %3875 = vmatprep.subr.mxu0 0.0
  %3876 = vmatpush2.msra.mxu0 0.0
  %3877 = vmatprep.subr.mxu0 0.0
  %3878 = vmatpush2.msra.mxu0 0.0
  %3879 = vmatprep.subr.mxu0 0.0
  %3880 = vmatpush2.msra.mxu0 0.0
  %3881 = vmatprep.subr.mxu0 0.0
  %3882 = vmatpush2.msra.mxu0 0.0
  %3883 = vmatprep.subr.mxu0 0.0
  %3884 = vmatpush2.msra.mxu0 0.0
  %3885 = vmatprep.mubr.f32.mxu0 0.0
  %3886 = vmatmul.mubr.f32.gmra.mxu0 %v3814
  %v3887 = vpop.f32.mrf.mxu0
  %v3888 = vadd.f32 0.0, %v3887
  %v3889 = vpop.f32.mrf.mxu0
  %3890 = vmatprep.mubr.f32.mxu0 0.0
  %3891 = vmatmul.mubr.f32.gmra.mxu0 %v3817
  %v3892 = vpop.f32.mrf.mxu0
  %v3893 = vadd.f32 0.0, %v3892
  %v3894 = vpop.f32.mrf.mxu0
  %3895 = vdwg.mxu0
  %v3897 = vsel %vm431, %v3888, 0
  %v3900 = vsel %vm431, %v3893, 0
  %3902 = vmatprep.subr.mxu0 0.0
  %3903 = vmatpush1.msra.mxu0 0.0
  %3904 = vmatprep.subr.mxu0 0.0
  %3905 = vmatpush1.msra.mxu0 0.0
  %3906 = vmatprep.subr.mxu0 0.0
  %3907 = vmatpush1.msra.mxu0 0.0
  %3908 = vmatprep.subr.mxu0 0.0
  %3909 = vmatpush1.msra.mxu0 0.0
  %3910 = vmatprep.subr.mxu0 0.0
  %3911 = vmatpush1.msra.mxu0 0.0
  %3912 = vmatprep.subr.mxu0 0.0
  %3913 = vmatpush1.msra.mxu0 0.0
  %3914 = vmatprep.subr.mxu0 0.0
  %3915 = vmatpush1.msra.mxu0 0.0
  %3916 = vmatprep.subr.mxu0 0.0
  %3917 = vmatpush1.msra.mxu0 0.0
  %3918 = vmatprep.subr.mxu0 0.0
  %3919 = vmatpush1.msra.mxu0 0.0
  %3920 = vmatprep.subr.mxu0 0.0
  %3921 = vmatpush1.msra.mxu0 0.0
  %3922 = vmatprep.subr.mxu0 0.0
  %3923 = vmatpush1.msra.mxu0 0.0
  %3924 = vmatprep.subr.mxu0 0.0
  %3925 = vmatpush1.msra.mxu0 0.0
  %3926 = vmatprep.subr.mxu0 0.0
  %3927 = vmatpush1.msra.mxu0 0.0
  %3928 = vmatprep.subr.mxu0 0.0
  %3929 = vmatpush1.msra.mxu0 0.0
  %3930 = vmatprep.subr.mxu0 0.0
  %3931 = vmatpush1.msra.mxu0 0.0
  %3932 = vmatprep.subr.mxu0 0.0
  %3933 = vmatpush1.msra.mxu0 %v3131
  %3934 = vmatprep.subr.mxu0 0.0
  %3935 = vmatpush2.msra.mxu0 0.0
  %3936 = vmatprep.subr.mxu0 0.0
  %3937 = vmatpush2.msra.mxu0 0.0
  %3938 = vmatprep.subr.mxu0 0.0
  %3939 = vmatpush2.msra.mxu0 0.0
  %3940 = vmatprep.subr.mxu0 0.0
  %3941 = vmatpush2.msra.mxu0 0.0
  %3942 = vmatprep.subr.mxu0 0.0
  %3943 = vmatpush2.msra.mxu0 0.0
  %3944 = vmatprep.subr.mxu0 0.0
  %3945 = vmatpush2.msra.mxu0 0.0
  %3946 = vmatprep.subr.mxu0 0.0
  %3947 = vmatpush2.msra.mxu0 0.0
  %3948 = vmatprep.subr.mxu0 0.0
  %3949 = vmatpush2.msra.mxu0 0.0
  %3950 = vmatprep.subr.mxu0 0.0
  %3951 = vmatpush2.msra.mxu0 0.0
  %3952 = vmatprep.subr.mxu0 0.0
  %3953 = vmatpush2.msra.mxu0 0.0
  %3954 = vmatprep.subr.mxu0 0.0
  %3955 = vmatpush2.msra.mxu0 0.0
  %3956 = vmatprep.subr.mxu0 0.0
  %3957 = vmatpush2.msra.mxu0 0.0
  %3958 = vmatprep.subr.mxu0 0.0
  %3959 = vmatpush2.msra.mxu0 0.0
  %3960 = vmatprep.subr.mxu0 0.0
  %3961 = vmatpush2.msra.mxu0 0.0
  %3962 = vmatprep.subr.mxu0 0.0
  %3963 = vmatpush2.msra.mxu0 0.0
  %3964 = vmatprep.subr.mxu0 0.0
  %3965 = vmatpush2.msra.mxu0 0.0
  %3966 = vmatprep.mubr.f32.mxu0 0.0
  %3967 = vmatmul.mubr.f32.gmra.mxu0 %v3897
  %v3968 = vpop.f32.mrf.mxu0
  %v3969 = vadd.f32 0.0, %v3968
  %v3970 = vpop.f32.mrf.mxu0
  %3971 = vmatprep.mubr.f32.mxu0 0.0
  %3972 = vmatmul.mubr.f32.gmra.mxu0 %v3900
  %v3973 = vpop.f32.mrf.mxu0
  %v3974 = vadd.f32 0.0, %v3973
  %v3975 = vpop.f32.mrf.mxu0
  %3976 = vdwg.mxu0
  %v3977 = vadd.f32 %v3687, %v3969
  %v3978 = vadd.f32 %v3692, %v3974
  %3979 = vrot.lane.b32.xlu0 %v3115, 104
  %v3980 = vpop.permute.xlu0 %3979
  %3981 = vrot.lane.b32.xlu0 %v3120, 104
  %v3982 = vpop.permute.xlu0 %3981
  %3983 = vrot.lane.b32.xlu0 %v3115, 72
  %v3984 = vpop.permute.xlu0 %3983
  %3985 = vrot.lane.b32.xlu0 %v3120, 72
  %v3986 = vpop.permute.xlu0 %3985
  %v3987 = vsel %vm431, %v3980, 0
  %v3989 = vsel %vm431, %v3982, 0
  %v3991 = vsel %vm431, %v3984, 0
  %v3993 = vsel %vm431, %v3986, 0
  %3995 = vmatprep.subr.mxu0 0.0
  %3996 = vmatpush1.xpose.msra.mxu0 0.0
  %3997 = vmatprep.subr.mxu0 0.0
  %3998 = vmatpush1.xpose.msra.mxu0 0.0
  %3999 = vmatprep.subr.mxu0 0.0
  %4000 = vmatpush1.xpose.msra.mxu0 0.0
  %4001 = vmatprep.subr.mxu0 0.0
  %4002 = vmatpush1.xpose.msra.mxu0 0.0
  %4003 = vmatprep.subr.mxu0 0.0
  %4004 = vmatpush1.xpose.msra.mxu0 0.0
  %4005 = vmatprep.subr.mxu0 0.0
  %4006 = vmatpush1.xpose.msra.mxu0 0.0
  %4007 = vmatprep.subr.mxu0 0.0
  %4008 = vmatpush1.xpose.msra.mxu0 0.0
  %4009 = vmatprep.subr.mxu0 0.0
  %4010 = vmatpush1.xpose.msra.mxu0 0.0
  %4011 = vmatprep.subr.mxu0 0.0
  %4012 = vmatpush1.xpose.msra.mxu0 0.0
  %4013 = vmatprep.subr.mxu0 0.0
  %4014 = vmatpush1.xpose.msra.mxu0 0.0
  %4015 = vmatprep.subr.mxu0 0.0
  %4016 = vmatpush1.xpose.msra.mxu0 0.0
  %4017 = vmatprep.subr.mxu0 0.0
  %4018 = vmatpush1.xpose.msra.mxu0 0.0
  %4019 = vmatprep.subr.mxu0 0.0
  %4020 = vmatpush1.xpose.msra.mxu0 0.0
  %4021 = vmatprep.subr.mxu0 0.0
  %4022 = vmatpush1.xpose.msra.mxu0 0.0
  %4023 = vmatprep.subr.mxu0 0.0
  %4024 = vmatpush1.xpose.msra.mxu0 %v3993
  %4025 = vmatprep.subr.mxu0 0.0
  %4026 = vmatpush1.xpose.msra.mxu0 %v3991
  %4027 = vmatprep.subr.mxu0 0.0
  %4028 = vmatpush2.xpose.msra.mxu0 0.0
  %4029 = vmatprep.subr.mxu0 0.0
  %4030 = vmatpush2.xpose.msra.mxu0 0.0
  %4031 = vmatprep.subr.mxu0 0.0
  %4032 = vmatpush2.xpose.msra.mxu0 0.0
  %4033 = vmatprep.subr.mxu0 0.0
  %4034 = vmatpush2.xpose.msra.mxu0 0.0
  %4035 = vmatprep.subr.mxu0 0.0
  %4036 = vmatpush2.xpose.msra.mxu0 0.0
  %4037 = vmatprep.subr.mxu0 0.0
  %4038 = vmatpush2.xpose.msra.mxu0 0.0
  %4039 = vmatprep.subr.mxu0 0.0
  %4040 = vmatpush2.xpose.msra.mxu0 0.0
  %4041 = vmatprep.subr.mxu0 0.0
  %4042 = vmatpush2.xpose.msra.mxu0 0.0
  %4043 = vmatprep.subr.mxu0 0.0
  %4044 = vmatpush2.xpose.msra.mxu0 0.0
  %4045 = vmatprep.subr.mxu0 0.0
  %4046 = vmatpush2.xpose.msra.mxu0 0.0
  %4047 = vmatprep.subr.mxu0 0.0
  %4048 = vmatpush2.xpose.msra.mxu0 0.0
  %4049 = vmatprep.subr.mxu0 0.0
  %4050 = vmatpush2.xpose.msra.mxu0 0.0
  %4051 = vmatprep.subr.mxu0 0.0
  %4052 = vmatpush2.xpose.msra.mxu0 0.0
  %4053 = vmatprep.subr.mxu0 0.0
  %4054 = vmatpush2.xpose.msra.mxu0 0.0
  %4055 = vmatprep.subr.mxu0 0.0
  %4056 = vmatpush2.xpose.msra.mxu0 0.0
  %4057 = vmatprep.subr.mxu0 0.0
  %4058 = vmatpush2.xpose.msra.mxu0 0.0
  %4059 = vmatprep.mubr.f32.mxu0 0.0
  %4060 = vmatmul.mubr.f32.gmra.mxu0 %v3987
  %v4061 = vpop.f32.mrf.mxu0
  %v4062 = vadd.f32 %v423, %v4061
  %v4063 = vpop.f32.mrf.mxu0
  %4064 = vmatprep.mubr.f32.mxu0 0.0
  %4065 = vmatmul.mubr.f32.gmra.mxu0 %v3989
  %v4066 = vpop.f32.mrf.mxu0
  %v4067 = vadd.f32 %v423, %v4066
  %v4068 = vpop.f32.mrf.mxu0
  %4069 = vdwg.mxu0
  %v4070 = vsel %vm515, %v4062, -inf
  %4071 = vmax.xlane.f32.xlu0 %v4070
  %v4072 = vpop.xlane.xlu0 %4071
  %v4073 = vsel %vm519, %v4067, -inf
  %4074 = vmax.xlane.f32.xlu0 %v4073
  %v4075 = vpop.xlane.xlu0 %4074
  %v4076 = vsub.f32 %v4062, %v4072
  %v4077 = vsub.f32 %v4067, %v4075
  %v4078 = vmul.f32 %v4076, 1.442695
  %v4079 = vpow.pop %v4078
  %v4080 = vmul.f32 %v4077, 1.442695
  %v4081 = vpow.pop %v4080
  %v4082 = vsel %vm515, %v4079, 0.0
  %4083 = vadd.xlane.f32.xlu0 %v4082
  %v4084 = vpop.xlane.xlu0 %4083
  %v4085 = vsel %vm519, %v4081, 0.0
  %4086 = vadd.xlane.f32.xlu0 %v4085
  %v4087 = vpop.xlane.xlu0 %4086
  %v4088 = vrcp.pop %v4084
  %v4089 = vrcp.pop %v4087
  %v4090 = vmul.f32 %v4079, %v4088
  %v4091 = vmul.f32 %v4081, %v4089
  %4092 = vrot.lane.b32.xlu0 %v3115, 40
  %v4093 = vpop.permute.xlu0 %4092
  %4094 = vrot.lane.b32.xlu0 %v3120, 40
  %v4095 = vpop.permute.xlu0 %4094
  %v4098 = vsel %vm515, %v4090, 0
  %v4101 = vsel %vm515, %v4091, 0
  %v4103 = vsel %vm243, %v4095, 0
  %4105 = vmatprep.subr.mxu0 0.0
  %4106 = vmatpush1.msra.mxu0 0.0
  %4107 = vmatprep.subr.mxu0 0.0
  %4108 = vmatpush1.msra.mxu0 0.0
  %4109 = vmatprep.subr.mxu0 0.0
  %4110 = vmatpush1.msra.mxu0 0.0
  %4111 = vmatprep.subr.mxu0 0.0
  %4112 = vmatpush1.msra.mxu0 0.0
  %4113 = vmatprep.subr.mxu0 0.0
  %4114 = vmatpush1.msra.mxu0 0.0
  %4115 = vmatprep.subr.mxu0 0.0
  %4116 = vmatpush1.msra.mxu0 0.0
  %4117 = vmatprep.subr.mxu0 0.0
  %4118 = vmatpush1.msra.mxu0 0.0
  %4119 = vmatprep.subr.mxu0 0.0
  %4120 = vmatpush1.msra.mxu0 0.0
  %4121 = vmatprep.subr.mxu0 0.0
  %4122 = vmatpush1.msra.mxu0 0.0
  %4123 = vmatprep.subr.mxu0 0.0
  %4124 = vmatpush1.msra.mxu0 0.0
  %4125 = vmatprep.subr.mxu0 0.0
  %4126 = vmatpush1.msra.mxu0 0.0
  %4127 = vmatprep.subr.mxu0 0.0
  %4128 = vmatpush1.msra.mxu0 0.0
  %4129 = vmatprep.subr.mxu0 0.0
  %4130 = vmatpush1.msra.mxu0 0.0
  %4131 = vmatprep.subr.mxu0 0.0
  %4132 = vmatpush1.msra.mxu0 0.0
  %4133 = vmatprep.subr.mxu0 0.0
  %4134 = vmatpush1.msra.mxu0 %v4103
  %4135 = vmatprep.subr.mxu0 0.0
  %4136 = vmatpush1.msra.mxu0 %v4093
  %4137 = vmatprep.subr.mxu0 0.0
  %4138 = vmatpush2.msra.mxu0 0.0
  %4139 = vmatprep.subr.mxu0 0.0
  %4140 = vmatpush2.msra.mxu0 0.0
  %4141 = vmatprep.subr.mxu0 0.0
  %4142 = vmatpush2.msra.mxu0 0.0
  %4143 = vmatprep.subr.mxu0 0.0
  %4144 = vmatpush2.msra.mxu0 0.0
  %4145 = vmatprep.subr.mxu0 0.0
  %4146 = vmatpush2.msra.mxu0 0.0
  %4147 = vmatprep.subr.mxu0 0.0
  %4148 = vmatpush2.msra.mxu0 0.0
  %4149 = vmatprep.subr.mxu0 0.0
  %4150 = vmatpush2.msra.mxu0 0.0
  %4151 = vmatprep.subr.mxu0 0.0
  %4152 = vmatpush2.msra.mxu0 0.0
  %4153 = vmatprep.subr.mxu0 0.0
  %4154 = vmatpush2.msra.mxu0 0.0
  %4155 = vmatprep.subr.mxu0 0.0
  %4156 = vmatpush2.msra.mxu0 0.0
  %4157 = vmatprep.subr.mxu0 0.0
  %4158 = vmatpush2.msra.mxu0 0.0
  %4159 = vmatprep.subr.mxu0 0.0
  %4160 = vmatpush2.msra.mxu0 0.0
  %4161 = vmatprep.subr.mxu0 0.0
  %4162 = vmatpush2.msra.mxu0 0.0
  %4163 = vmatprep.subr.mxu0 0.0
  %4164 = vmatpush2.msra.mxu0 0.0
  %4165 = vmatprep.subr.mxu0 0.0
  %4166 = vmatpush2.msra.mxu0 0.0
  %4167 = vmatprep.subr.mxu0 0.0
  %4168 = vmatpush2.msra.mxu0 0.0
  %4169 = vmatprep.mubr.f32.mxu0 0.0
  %4170 = vmatmul.mubr.f32.gmra.mxu0 %v4098
  %v4171 = vpop.f32.mrf.mxu0
  %v4172 = vadd.f32 0.0, %v4171
  %v4173 = vpop.f32.mrf.mxu0
  %4174 = vmatprep.mubr.f32.mxu0 0.0
  %4175 = vmatmul.mubr.f32.gmra.mxu0 %v4101
  %v4176 = vpop.f32.mrf.mxu0
  %v4177 = vadd.f32 0.0, %v4176
  %v4178 = vpop.f32.mrf.mxu0
  %4179 = vdwg.mxu0
  %v4181 = vsel %vm431, %v4172, 0
  %v4184 = vsel %vm431, %v4177, 0
  %4186 = vmatprep.subr.mxu0 0.0
  %4187 = vmatpush1.msra.mxu0 0.0
  %4188 = vmatprep.subr.mxu0 0.0
  %4189 = vmatpush1.msra.mxu0 0.0
  %4190 = vmatprep.subr.mxu0 0.0
  %4191 = vmatpush1.msra.mxu0 0.0
  %4192 = vmatprep.subr.mxu0 0.0
  %4193 = vmatpush1.msra.mxu0 0.0
  %4194 = vmatprep.subr.mxu0 0.0
  %4195 = vmatpush1.msra.mxu0 0.0
  %4196 = vmatprep.subr.mxu0 0.0
  %4197 = vmatpush1.msra.mxu0 0.0
  %4198 = vmatprep.subr.mxu0 0.0
  %4199 = vmatpush1.msra.mxu0 0.0
  %4200 = vmatprep.subr.mxu0 0.0
  %4201 = vmatpush1.msra.mxu0 0.0
  %4202 = vmatprep.subr.mxu0 0.0
  %4203 = vmatpush1.msra.mxu0 0.0
  %4204 = vmatprep.subr.mxu0 0.0
  %4205 = vmatpush1.msra.mxu0 0.0
  %4206 = vmatprep.subr.mxu0 0.0
  %4207 = vmatpush1.msra.mxu0 0.0
  %4208 = vmatprep.subr.mxu0 0.0
  %4209 = vmatpush1.msra.mxu0 0.0
  %4210 = vmatprep.subr.mxu0 0.0
  %4211 = vmatpush1.msra.mxu0 0.0
  %4212 = vmatprep.subr.mxu0 0.0
  %4213 = vmatpush1.msra.mxu0 0.0
  %4214 = vmatprep.subr.mxu0 0.0
  %4215 = vmatpush1.msra.mxu0 0.0
  %4216 = vmatprep.subr.mxu0 0.0
  %4217 = vmatpush1.msra.mxu0 %v3132
  %4218 = vmatprep.subr.mxu0 0.0
  %4219 = vmatpush2.msra.mxu0 0.0
  %4220 = vmatprep.subr.mxu0 0.0
  %4221 = vmatpush2.msra.mxu0 0.0
  %4222 = vmatprep.subr.mxu0 0.0
  %4223 = vmatpush2.msra.mxu0 0.0
  %4224 = vmatprep.subr.mxu0 0.0
  %4225 = vmatpush2.msra.mxu0 0.0
  %4226 = vmatprep.subr.mxu0 0.0
  %4227 = vmatpush2.msra.mxu0 0.0
  %4228 = vmatprep.subr.mxu0 0.0
  %4229 = vmatpush2.msra.mxu0 0.0
  %4230 = vmatprep.subr.mxu0 0.0
  %4231 = vmatpush2.msra.mxu0 0.0
  %4232 = vmatprep.subr.mxu0 0.0
  %4233 = vmatpush2.msra.mxu0 0.0
  %4234 = vmatprep.subr.mxu0 0.0
  %4235 = vmatpush2.msra.mxu0 0.0
  %4236 = vmatprep.subr.mxu0 0.0
  %4237 = vmatpush2.msra.mxu0 0.0
  %4238 = vmatprep.subr.mxu0 0.0
  %4239 = vmatpush2.msra.mxu0 0.0
  %4240 = vmatprep.subr.mxu0 0.0
  %4241 = vmatpush2.msra.mxu0 0.0
  %4242 = vmatprep.subr.mxu0 0.0
  %4243 = vmatpush2.msra.mxu0 0.0
  %4244 = vmatprep.subr.mxu0 0.0
  %4245 = vmatpush2.msra.mxu0 0.0
  %4246 = vmatprep.subr.mxu0 0.0
  %4247 = vmatpush2.msra.mxu0 0.0
  %4248 = vmatprep.subr.mxu0 0.0
  %4249 = vmatpush2.msra.mxu0 0.0
  %4250 = vmatprep.mubr.f32.mxu0 0.0
  %4251 = vmatmul.mubr.f32.gmra.mxu0 %v4181
  %v4252 = vpop.f32.mrf.mxu0
  %v4253 = vadd.f32 0.0, %v4252
  %v4254 = vpop.f32.mrf.mxu0
  %4255 = vmatprep.mubr.f32.mxu0 0.0
  %4256 = vmatmul.mubr.f32.gmra.mxu0 %v4184
  %v4257 = vpop.f32.mrf.mxu0
  %v4258 = vadd.f32 0.0, %v4257
  %v4259 = vpop.f32.mrf.mxu0
  %4260 = vdwg.mxu0
  %v4261 = vadd.f32 %v3977, %v4253
  %v4262 = vadd.f32 %v3978, %v4258
  %v4264 = vrot.slane %v3120, 4
  %v4265 = vrot.slane %v3125, 4
  %v4266 = vsel %vm243, %v4264, %v4265
  %4267 = vrot.lane.b32.xlu0 %v4266, 96
  %v4268 = vpop.permute.xlu0 %4267
  %4269 = vrot.lane.b32.xlu0 %v4265, 96
  %v4270 = vpop.permute.xlu0 %4269
  %v4271 = vsel %vm431, %v4266, 0
  %v4273 = vsel %vm431, %v4265, 0
  %v4275 = vsel %vm431, %v4268, 0
  %v4277 = vsel %vm431, %v4270, 0
  %4279 = vmatprep.subr.mxu0 0.0
  %4280 = vmatpush1.xpose.msra.mxu0 0.0
  %4281 = vmatprep.subr.mxu0 0.0
  %4282 = vmatpush1.xpose.msra.mxu0 0.0
  %4283 = vmatprep.subr.mxu0 0.0
  %4284 = vmatpush1.xpose.msra.mxu0 0.0
  %4285 = vmatprep.subr.mxu0 0.0
  %4286 = vmatpush1.xpose.msra.mxu0 0.0
  %4287 = vmatprep.subr.mxu0 0.0
  %4288 = vmatpush1.xpose.msra.mxu0 0.0
  %4289 = vmatprep.subr.mxu0 0.0
  %4290 = vmatpush1.xpose.msra.mxu0 0.0
  %4291 = vmatprep.subr.mxu0 0.0
  %4292 = vmatpush1.xpose.msra.mxu0 0.0
  %4293 = vmatprep.subr.mxu0 0.0
  %4294 = vmatpush1.xpose.msra.mxu0 0.0
  %4295 = vmatprep.subr.mxu0 0.0
  %4296 = vmatpush1.xpose.msra.mxu0 0.0
  %4297 = vmatprep.subr.mxu0 0.0
  %4298 = vmatpush1.xpose.msra.mxu0 0.0
  %4299 = vmatprep.subr.mxu0 0.0
  %4300 = vmatpush1.xpose.msra.mxu0 0.0
  %4301 = vmatprep.subr.mxu0 0.0
  %4302 = vmatpush1.xpose.msra.mxu0 0.0
  %4303 = vmatprep.subr.mxu0 0.0
  %4304 = vmatpush1.xpose.msra.mxu0 0.0
  %4305 = vmatprep.subr.mxu0 0.0
  %4306 = vmatpush1.xpose.msra.mxu0 0.0
  %4307 = vmatprep.subr.mxu0 0.0
  %4308 = vmatpush1.xpose.msra.mxu0 %v4277
  %4309 = vmatprep.subr.mxu0 0.0
  %4310 = vmatpush1.xpose.msra.mxu0 %v4275
  %4311 = vmatprep.subr.mxu0 0.0
  %4312 = vmatpush2.xpose.msra.mxu0 0.0
  %4313 = vmatprep.subr.mxu0 0.0
  %4314 = vmatpush2.xpose.msra.mxu0 0.0
  %4315 = vmatprep.subr.mxu0 0.0
  %4316 = vmatpush2.xpose.msra.mxu0 0.0
  %4317 = vmatprep.subr.mxu0 0.0
  %4318 = vmatpush2.xpose.msra.mxu0 0.0
  %4319 = vmatprep.subr.mxu0 0.0
  %4320 = vmatpush2.xpose.msra.mxu0 0.0
  %4321 = vmatprep.subr.mxu0 0.0
  %4322 = vmatpush2.xpose.msra.mxu0 0.0
  %4323 = vmatprep.subr.mxu0 0.0
  %4324 = vmatpush2.xpose.msra.mxu0 0.0
  %4325 = vmatprep.subr.mxu0 0.0
  %4326 = vmatpush2.xpose.msra.mxu0 0.0
  %4327 = vmatprep.subr.mxu0 0.0
  %4328 = vmatpush2.xpose.msra.mxu0 0.0
  %4329 = vmatprep.subr.mxu0 0.0
  %4330 = vmatpush2.xpose.msra.mxu0 0.0
  %4331 = vmatprep.subr.mxu0 0.0
  %4332 = vmatpush2.xpose.msra.mxu0 0.0
  %4333 = vmatprep.subr.mxu0 0.0
  %4334 = vmatpush2.xpose.msra.mxu0 0.0
  %4335 = vmatprep.subr.mxu0 0.0
  %4336 = vmatpush2.xpose.msra.mxu0 0.0
  %4337 = vmatprep.subr.mxu0 0.0
  %4338 = vmatpush2.xpose.msra.mxu0 0.0
  %4339 = vmatprep.subr.mxu0 0.0
  %4340 = vmatpush2.xpose.msra.mxu0 0.0
  %4341 = vmatprep.subr.mxu0 0.0
  %4342 = vmatpush2.xpose.msra.mxu0 0.0
  %4343 = vmatprep.mubr.f32.mxu0 0.0
  %4344 = vmatmul.mubr.f32.gmra.mxu0 %v4271
  %v4345 = vpop.f32.mrf.mxu0
  %v4346 = vadd.f32 %v1562, %v4345
  %v4347 = vpop.f32.mrf.mxu0
  %4348 = vmatprep.mubr.f32.mxu0 0.0
  %4349 = vmatmul.mubr.f32.gmra.mxu0 %v4273
  %v4350 = vpop.f32.mrf.mxu0
  %v4351 = vadd.f32 %v1562, %v4350
  %v4352 = vpop.f32.mrf.mxu0
  %4353 = vdwg.mxu0
  %v4354 = vsel %vm515, %v4346, -inf
  %4355 = vmax.xlane.f32.xlu0 %v4354
  %v4356 = vpop.xlane.xlu0 %4355
  %v4357 = vsel %vm519, %v4351, -inf
  %4358 = vmax.xlane.f32.xlu0 %v4357
  %v4359 = vpop.xlane.xlu0 %4358
  %v4360 = vsub.f32 %v4346, %v4356
  %v4361 = vsub.f32 %v4351, %v4359
  %v4362 = vmul.f32 %v4360, 1.442695
  %v4363 = vpow.pop %v4362
  %v4364 = vmul.f32 %v4361, 1.442695
  %v4365 = vpow.pop %v4364
  %v4366 = vsel %vm515, %v4363, 0.0
  %4367 = vadd.xlane.f32.xlu0 %v4366
  %v4368 = vpop.xlane.xlu0 %4367
  %v4369 = vsel %vm519, %v4365, 0.0
  %4370 = vadd.xlane.f32.xlu0 %v4369
  %v4371 = vpop.xlane.xlu0 %4370
  %v4372 = vrcp.pop %v4368
  %v4373 = vrcp.pop %v4371
  %v4374 = vmul.f32 %v4363, %v4372
  %v4375 = vmul.f32 %v4365, %v4373
  %4376 = vrot.lane.b32.xlu0 %v4266, 64
  %v4377 = vpop.permute.xlu0 %4376
  %4378 = vrot.lane.b32.xlu0 %v4265, 64
  %v4379 = vpop.permute.xlu0 %4378
  %v4382 = vsel %vm515, %v4374, 0
  %v4385 = vsel %vm515, %v4375, 0
  %v4387 = vsel %vm243, %v4379, 0
  %4389 = vmatprep.subr.mxu0 0.0
  %4390 = vmatpush1.msra.mxu0 0.0
  %4391 = vmatprep.subr.mxu0 0.0
  %4392 = vmatpush1.msra.mxu0 0.0
  %4393 = vmatprep.subr.mxu0 0.0
  %4394 = vmatpush1.msra.mxu0 0.0
  %4395 = vmatprep.subr.mxu0 0.0
  %4396 = vmatpush1.msra.mxu0 0.0
  %4397 = vmatprep.subr.mxu0 0.0
  %4398 = vmatpush1.msra.mxu0 0.0
  %4399 = vmatprep.subr.mxu0 0.0
  %4400 = vmatpush1.msra.mxu0 0.0
  %4401 = vmatprep.subr.mxu0 0.0
  %4402 = vmatpush1.msra.mxu0 0.0
  %4403 = vmatprep.subr.mxu0 0.0
  %4404 = vmatpush1.msra.mxu0 0.0
  %4405 = vmatprep.subr.mxu0 0.0
  %4406 = vmatpush1.msra.mxu0 0.0
  %4407 = vmatprep.subr.mxu0 0.0
  %4408 = vmatpush1.msra.mxu0 0.0
  %4409 = vmatprep.subr.mxu0 0.0
  %4410 = vmatpush1.msra.mxu0 0.0
  %4411 = vmatprep.subr.mxu0 0.0
  %4412 = vmatpush1.msra.mxu0 0.0
  %4413 = vmatprep.subr.mxu0 0.0
  %4414 = vmatpush1.msra.mxu0 0.0
  %4415 = vmatprep.subr.mxu0 0.0
  %4416 = vmatpush1.msra.mxu0 0.0
  %4417 = vmatprep.subr.mxu0 0.0
  %4418 = vmatpush1.msra.mxu0 %v4387
  %4419 = vmatprep.subr.mxu0 0.0
  %4420 = vmatpush1.msra.mxu0 %v4377
  %4421 = vmatprep.subr.mxu0 0.0
  %4422 = vmatpush2.msra.mxu0 0.0
  %4423 = vmatprep.subr.mxu0 0.0
  %4424 = vmatpush2.msra.mxu0 0.0
  %4425 = vmatprep.subr.mxu0 0.0
  %4426 = vmatpush2.msra.mxu0 0.0
  %4427 = vmatprep.subr.mxu0 0.0
  %4428 = vmatpush2.msra.mxu0 0.0
  %4429 = vmatprep.subr.mxu0 0.0
  %4430 = vmatpush2.msra.mxu0 0.0
  %4431 = vmatprep.subr.mxu0 0.0
  %4432 = vmatpush2.msra.mxu0 0.0
  %4433 = vmatprep.subr.mxu0 0.0
  %4434 = vmatpush2.msra.mxu0 0.0
  %4435 = vmatprep.subr.mxu0 0.0
  %4436 = vmatpush2.msra.mxu0 0.0
  %4437 = vmatprep.subr.mxu0 0.0
  %4438 = vmatpush2.msra.mxu0 0.0
  %4439 = vmatprep.subr.mxu0 0.0
  %4440 = vmatpush2.msra.mxu0 0.0
  %4441 = vmatprep.subr.mxu0 0.0
  %4442 = vmatpush2.msra.mxu0 0.0
  %4443 = vmatprep.subr.mxu0 0.0
  %4444 = vmatpush2.msra.mxu0 0.0
  %4445 = vmatprep.subr.mxu0 0.0
  %4446 = vmatpush2.msra.mxu0 0.0
  %4447 = vmatprep.subr.mxu0 0.0
  %4448 = vmatpush2.msra.mxu0 0.0
  %4449 = vmatprep.subr.mxu0 0.0
  %4450 = vmatpush2.msra.mxu0 0.0
  %4451 = vmatprep.subr.mxu0 0.0
  %4452 = vmatpush2.msra.mxu0 0.0
  %4453 = vmatprep.mubr.f32.mxu0 0.0
  %4454 = vmatmul.mubr.f32.gmra.mxu0 %v4382
  %v4455 = vpop.f32.mrf.mxu0
  %v4456 = vadd.f32 0.0, %v4455
  %v4457 = vpop.f32.mrf.mxu0
  %4458 = vmatprep.mubr.f32.mxu0 0.0
  %4459 = vmatmul.mubr.f32.gmra.mxu0 %v4385
  %v4460 = vpop.f32.mrf.mxu0
  %v4461 = vadd.f32 0.0, %v4460
  %v4462 = vpop.f32.mrf.mxu0
  %4463 = vdwg.mxu0
  %4464 = vrot.lane.b32.xlu0 %v4266, 120
  %v4465 = vpop.permute.xlu0 %4464
  %4466 = vrot.lane.b32.xlu0 %v4265, 120
  %v4467 = vpop.permute.xlu0 %4466
  %4468 = vrot.lane.b32.xlu0 %v4266, 88
  %v4469 = vpop.permute.xlu0 %4468
  %4470 = vrot.lane.b32.xlu0 %v4265, 88
  %v4471 = vpop.permute.xlu0 %4470
  %v4472 = vsel %vm431, %v4465, 0
  %v4474 = vsel %vm431, %v4467, 0
  %v4476 = vsel %vm431, %v4469, 0
  %v4478 = vsel %vm431, %v4471, 0
  %4480 = vmatprep.subr.mxu0 0.0
  %4481 = vmatpush1.xpose.msra.mxu0 0.0
  %4482 = vmatprep.subr.mxu0 0.0
  %4483 = vmatpush1.xpose.msra.mxu0 0.0
  %4484 = vmatprep.subr.mxu0 0.0
  %4485 = vmatpush1.xpose.msra.mxu0 0.0
  %4486 = vmatprep.subr.mxu0 0.0
  %4487 = vmatpush1.xpose.msra.mxu0 0.0
  %4488 = vmatprep.subr.mxu0 0.0
  %4489 = vmatpush1.xpose.msra.mxu0 0.0
  %4490 = vmatprep.subr.mxu0 0.0
  %4491 = vmatpush1.xpose.msra.mxu0 0.0
  %4492 = vmatprep.subr.mxu0 0.0
  %4493 = vmatpush1.xpose.msra.mxu0 0.0
  %4494 = vmatprep.subr.mxu0 0.0
  %4495 = vmatpush1.xpose.msra.mxu0 0.0
  %4496 = vmatprep.subr.mxu0 0.0
  %4497 = vmatpush1.xpose.msra.mxu0 0.0
  %4498 = vmatprep.subr.mxu0 0.0
  %4499 = vmatpush1.xpose.msra.mxu0 0.0
  %4500 = vmatprep.subr.mxu0 0.0
  %4501 = vmatpush1.xpose.msra.mxu0 0.0
  %4502 = vmatprep.subr.mxu0 0.0
  %4503 = vmatpush1.xpose.msra.mxu0 0.0
  %4504 = vmatprep.subr.mxu0 0.0
  %4505 = vmatpush1.xpose.msra.mxu0 0.0
  %4506 = vmatprep.subr.mxu0 0.0
  %4507 = vmatpush1.xpose.msra.mxu0 0.0
  %4508 = vmatprep.subr.mxu0 0.0
  %4509 = vmatpush1.xpose.msra.mxu0 %v4478
  %4510 = vmatprep.subr.mxu0 0.0
  %4511 = vmatpush1.xpose.msra.mxu0 %v4476
  %4512 = vmatprep.subr.mxu0 0.0
  %4513 = vmatpush2.xpose.msra.mxu0 0.0
  %4514 = vmatprep.subr.mxu0 0.0
  %4515 = vmatpush2.xpose.msra.mxu0 0.0
  %4516 = vmatprep.subr.mxu0 0.0
  %4517 = vmatpush2.xpose.msra.mxu0 0.0
  %4518 = vmatprep.subr.mxu0 0.0
  %4519 = vmatpush2.xpose.msra.mxu0 0.0
  %4520 = vmatprep.subr.mxu0 0.0
  %4521 = vmatpush2.xpose.msra.mxu0 0.0
  %4522 = vmatprep.subr.mxu0 0.0
  %4523 = vmatpush2.xpose.msra.mxu0 0.0
  %4524 = vmatprep.subr.mxu0 0.0
  %4525 = vmatpush2.xpose.msra.mxu0 0.0
  %4526 = vmatprep.subr.mxu0 0.0
  %4527 = vmatpush2.xpose.msra.mxu0 0.0
  %4528 = vmatprep.subr.mxu0 0.0
  %4529 = vmatpush2.xpose.msra.mxu0 0.0
  %4530 = vmatprep.subr.mxu0 0.0
  %4531 = vmatpush2.xpose.msra.mxu0 0.0
  %4532 = vmatprep.subr.mxu0 0.0
  %4533 = vmatpush2.xpose.msra.mxu0 0.0
  %4534 = vmatprep.subr.mxu0 0.0
  %4535 = vmatpush2.xpose.msra.mxu0 0.0
  %4536 = vmatprep.subr.mxu0 0.0
  %4537 = vmatpush2.xpose.msra.mxu0 0.0
  %4538 = vmatprep.subr.mxu0 0.0
  %4539 = vmatpush2.xpose.msra.mxu0 0.0
  %4540 = vmatprep.subr.mxu0 0.0
  %4541 = vmatpush2.xpose.msra.mxu0 0.0
  %4542 = vmatprep.subr.mxu0 0.0
  %4543 = vmatpush2.xpose.msra.mxu0 0.0
  %4544 = vmatprep.mubr.f32.mxu0 0.0
  %4545 = vmatmul.mubr.f32.gmra.mxu0 %v4472
  %v4546 = vpop.f32.mrf.mxu0
  %v4547 = vadd.f32 %v1562, %v4546
  %v4548 = vpop.f32.mrf.mxu0
  %4549 = vmatprep.mubr.f32.mxu0 0.0
  %4550 = vmatmul.mubr.f32.gmra.mxu0 %v4474
  %v4551 = vpop.f32.mrf.mxu0
  %v4552 = vadd.f32 %v1562, %v4551
  %v4553 = vpop.f32.mrf.mxu0
  %4554 = vdwg.mxu0
  %v4555 = vsel %vm515, %v4547, -inf
  %4556 = vmax.xlane.f32.xlu0 %v4555
  %v4557 = vpop.xlane.xlu0 %4556
  %v4558 = vsel %vm519, %v4552, -inf
  %4559 = vmax.xlane.f32.xlu0 %v4558
  %v4560 = vpop.xlane.xlu0 %4559
  %v4561 = vsub.f32 %v4547, %v4557
  %v4562 = vsub.f32 %v4552, %v4560
  %v4563 = vmul.f32 %v4561, 1.442695
  %v4564 = vpow.pop %v4563
  %v4565 = vmul.f32 %v4562, 1.442695
  %v4566 = vpow.pop %v4565
  %v4567 = vsel %vm515, %v4564, 0.0
  %4568 = vadd.xlane.f32.xlu0 %v4567
  %v4569 = vpop.xlane.xlu0 %4568
  %v4570 = vsel %vm519, %v4566, 0.0
  %4571 = vadd.xlane.f32.xlu0 %v4570
  %v4572 = vpop.xlane.xlu0 %4571
  %v4573 = vrcp.pop %v4569
  %v4574 = vrcp.pop %v4572
  %v4575 = vmul.f32 %v4564, %v4573
  %v4576 = vmul.f32 %v4566, %v4574
  %4577 = vrot.lane.b32.xlu0 %v4266, 56
  %v4578 = vpop.permute.xlu0 %4577
  %4579 = vrot.lane.b32.xlu0 %v4265, 56
  %v4580 = vpop.permute.xlu0 %4579
  %v4583 = vsel %vm515, %v4575, 0
  %v4586 = vsel %vm515, %v4576, 0
  %v4588 = vsel %vm243, %v4580, 0
  %4590 = vmatprep.subr.mxu0 0.0
  %4591 = vmatpush1.msra.mxu0 0.0
  %4592 = vmatprep.subr.mxu0 0.0
  %4593 = vmatpush1.msra.mxu0 0.0
  %4594 = vmatprep.subr.mxu0 0.0
  %4595 = vmatpush1.msra.mxu0 0.0
  %4596 = vmatprep.subr.mxu0 0.0
  %4597 = vmatpush1.msra.mxu0 0.0
  %4598 = vmatprep.subr.mxu0 0.0
  %4599 = vmatpush1.msra.mxu0 0.0
  %4600 = vmatprep.subr.mxu0 0.0
  %4601 = vmatpush1.msra.mxu0 0.0
  %4602 = vmatprep.subr.mxu0 0.0
  %4603 = vmatpush1.msra.mxu0 0.0
  %4604 = vmatprep.subr.mxu0 0.0
  %4605 = vmatpush1.msra.mxu0 0.0
  %4606 = vmatprep.subr.mxu0 0.0
  %4607 = vmatpush1.msra.mxu0 0.0
  %4608 = vmatprep.subr.mxu0 0.0
  %4609 = vmatpush1.msra.mxu0 0.0
  %4610 = vmatprep.subr.mxu0 0.0
  %4611 = vmatpush1.msra.mxu0 0.0
  %4612 = vmatprep.subr.mxu0 0.0
  %4613 = vmatpush1.msra.mxu0 0.0
  %4614 = vmatprep.subr.mxu0 0.0
  %4615 = vmatpush1.msra.mxu0 0.0
  %4616 = vmatprep.subr.mxu0 0.0
  %4617 = vmatpush1.msra.mxu0 0.0
  %4618 = vmatprep.subr.mxu0 0.0
  %4619 = vmatpush1.msra.mxu0 %v4588
  %4620 = vmatprep.subr.mxu0 0.0
  %4621 = vmatpush1.msra.mxu0 %v4578
  %4622 = vmatprep.subr.mxu0 0.0
  %4623 = vmatpush2.msra.mxu0 0.0
  %4624 = vmatprep.subr.mxu0 0.0
  %4625 = vmatpush2.msra.mxu0 0.0
  %4626 = vmatprep.subr.mxu0 0.0
  %4627 = vmatpush2.msra.mxu0 0.0
  %4628 = vmatprep.subr.mxu0 0.0
  %4629 = vmatpush2.msra.mxu0 0.0
  %4630 = vmatprep.subr.mxu0 0.0
  %4631 = vmatpush2.msra.mxu0 0.0
  %4632 = vmatprep.subr.mxu0 0.0
  %4633 = vmatpush2.msra.mxu0 0.0
  %4634 = vmatprep.subr.mxu0 0.0
  %4635 = vmatpush2.msra.mxu0 0.0
  %4636 = vmatprep.subr.mxu0 0.0
  %4637 = vmatpush2.msra.mxu0 0.0
  %4638 = vmatprep.subr.mxu0 0.0
  %4639 = vmatpush2.msra.mxu0 0.0
  %4640 = vmatprep.subr.mxu0 0.0
  %4641 = vmatpush2.msra.mxu0 0.0
  %4642 = vmatprep.subr.mxu0 0.0
  %4643 = vmatpush2.msra.mxu0 0.0
  %4644 = vmatprep.subr.mxu0 0.0
  %4645 = vmatpush2.msra.mxu0 0.0
  %4646 = vmatprep.subr.mxu0 0.0
  %4647 = vmatpush2.msra.mxu0 0.0
  %4648 = vmatprep.subr.mxu0 0.0
  %4649 = vmatpush2.msra.mxu0 0.0
  %4650 = vmatprep.subr.mxu0 0.0
  %4651 = vmatpush2.msra.mxu0 0.0
  %4652 = vmatprep.subr.mxu0 0.0
  %4653 = vmatpush2.msra.mxu0 0.0
  %4654 = vmatprep.mubr.f32.mxu0 0.0
  %4655 = vmatmul.mubr.f32.gmra.mxu0 %v4583
  %v4656 = vpop.f32.mrf.mxu0
  %v4657 = vadd.f32 0.0, %v4656
  %v4658 = vpop.f32.mrf.mxu0
  %4659 = vmatprep.mubr.f32.mxu0 0.0
  %4660 = vmatmul.mubr.f32.gmra.mxu0 %v4586
  %v4661 = vpop.f32.mrf.mxu0
  %v4662 = vadd.f32 0.0, %v4661
  %v4663 = vpop.f32.mrf.mxu0
  %4664 = vdwg.mxu0
  %v4666 = vsel %vm431, %v4657, 0
  %v4669 = vsel %vm431, %v4662, 0
  %4671 = vmatprep.subr.mxu0 0.0
  %4672 = vmatpush1.msra.mxu0 0.0
  %4673 = vmatprep.subr.mxu0 0.0
  %4674 = vmatpush1.msra.mxu0 0.0
  %4675 = vmatprep.subr.mxu0 0.0
  %4676 = vmatpush1.msra.mxu0 0.0
  %4677 = vmatprep.subr.mxu0 0.0
  %4678 = vmatpush1.msra.mxu0 0.0
  %4679 = vmatprep.subr.mxu0 0.0
  %4680 = vmatpush1.msra.mxu0 0.0
  %4681 = vmatprep.subr.mxu0 0.0
  %4682 = vmatpush1.msra.mxu0 0.0
  %4683 = vmatprep.subr.mxu0 0.0
  %4684 = vmatpush1.msra.mxu0 0.0
  %4685 = vmatprep.subr.mxu0 0.0
  %4686 = vmatpush1.msra.mxu0 0.0
  %4687 = vmatprep.subr.mxu0 0.0
  %4688 = vmatpush1.msra.mxu0 0.0
  %4689 = vmatprep.subr.mxu0 0.0
  %4690 = vmatpush1.msra.mxu0 0.0
  %4691 = vmatprep.subr.mxu0 0.0
  %4692 = vmatpush1.msra.mxu0 0.0
  %4693 = vmatprep.subr.mxu0 0.0
  %4694 = vmatpush1.msra.mxu0 0.0
  %4695 = vmatprep.subr.mxu0 0.0
  %4696 = vmatpush1.msra.mxu0 0.0
  %4697 = vmatprep.subr.mxu0 0.0
  %4698 = vmatpush1.msra.mxu0 0.0
  %4699 = vmatprep.subr.mxu0 0.0
  %4700 = vmatpush1.msra.mxu0 0.0
  %4701 = vmatprep.subr.mxu0 0.0
  %4702 = vmatpush1.msra.mxu0 %v3130
  %4703 = vmatprep.subr.mxu0 0.0
  %4704 = vmatpush2.msra.mxu0 0.0
  %4705 = vmatprep.subr.mxu0 0.0
  %4706 = vmatpush2.msra.mxu0 0.0
  %4707 = vmatprep.subr.mxu0 0.0
  %4708 = vmatpush2.msra.mxu0 0.0
  %4709 = vmatprep.subr.mxu0 0.0
  %4710 = vmatpush2.msra.mxu0 0.0
  %4711 = vmatprep.subr.mxu0 0.0
  %4712 = vmatpush2.msra.mxu0 0.0
  %4713 = vmatprep.subr.mxu0 0.0
  %4714 = vmatpush2.msra.mxu0 0.0
  %4715 = vmatprep.subr.mxu0 0.0
  %4716 = vmatpush2.msra.mxu0 0.0
  %4717 = vmatprep.subr.mxu0 0.0
  %4718 = vmatpush2.msra.mxu0 0.0
  %4719 = vmatprep.subr.mxu0 0.0
  %4720 = vmatpush2.msra.mxu0 0.0
  %4721 = vmatprep.subr.mxu0 0.0
  %4722 = vmatpush2.msra.mxu0 0.0
  %4723 = vmatprep.subr.mxu0 0.0
  %4724 = vmatpush2.msra.mxu0 0.0
  %4725 = vmatprep.subr.mxu0 0.0
  %4726 = vmatpush2.msra.mxu0 0.0
  %4727 = vmatprep.subr.mxu0 0.0
  %4728 = vmatpush2.msra.mxu0 0.0
  %4729 = vmatprep.subr.mxu0 0.0
  %4730 = vmatpush2.msra.mxu0 0.0
  %4731 = vmatprep.subr.mxu0 0.0
  %4732 = vmatpush2.msra.mxu0 0.0
  %4733 = vmatprep.subr.mxu0 0.0
  %4734 = vmatpush2.msra.mxu0 0.0
  %4735 = vmatprep.mubr.f32.mxu0 0.0
  %4736 = vmatmul.mubr.f32.gmra.mxu0 %v4666
  %v4737 = vpop.f32.mrf.mxu0
  %v4738 = vadd.f32 0.0, %v4737
  %v4739 = vpop.f32.mrf.mxu0
  %4740 = vmatprep.mubr.f32.mxu0 0.0
  %4741 = vmatmul.mubr.f32.gmra.mxu0 %v4669
  %v4742 = vpop.f32.mrf.mxu0
  %v4743 = vadd.f32 0.0, %v4742
  %v4744 = vpop.f32.mrf.mxu0
  %4745 = vdwg.mxu0
  %v4747 = vsel %vm431, %v4456, 0
  %v4750 = vsel %vm431, %v4461, 0
  %4752 = vmatprep.subr.mxu0 0.0
  %4753 = vmatpush1.msra.mxu0 0.0
  %4754 = vmatprep.subr.mxu0 0.0
  %4755 = vmatpush1.msra.mxu0 0.0
  %4756 = vmatprep.subr.mxu0 0.0
  %4757 = vmatpush1.msra.mxu0 0.0
  %4758 = vmatprep.subr.mxu0 0.0
  %4759 = vmatpush1.msra.mxu0 0.0
  %4760 = vmatprep.subr.mxu0 0.0
  %4761 = vmatpush1.msra.mxu0 0.0
  %4762 = vmatprep.subr.mxu0 0.0
  %4763 = vmatpush1.msra.mxu0 0.0
  %4764 = vmatprep.subr.mxu0 0.0
  %4765 = vmatpush1.msra.mxu0 0.0
  %4766 = vmatprep.subr.mxu0 0.0
  %4767 = vmatpush1.msra.mxu0 0.0
  %4768 = vmatprep.subr.mxu0 0.0
  %4769 = vmatpush1.msra.mxu0 0.0
  %4770 = vmatprep.subr.mxu0 0.0
  %4771 = vmatpush1.msra.mxu0 0.0
  %4772 = vmatprep.subr.mxu0 0.0
  %4773 = vmatpush1.msra.mxu0 0.0
  %4774 = vmatprep.subr.mxu0 0.0
  %4775 = vmatpush1.msra.mxu0 0.0
  %4776 = vmatprep.subr.mxu0 0.0
  %4777 = vmatpush1.msra.mxu0 0.0
  %4778 = vmatprep.subr.mxu0 0.0
  %4779 = vmatpush1.msra.mxu0 0.0
  %4780 = vmatprep.subr.mxu0 0.0
  %4781 = vmatpush1.msra.mxu0 0.0
  %4782 = vmatprep.subr.mxu0 0.0
  %4783 = vmatpush1.msra.mxu0 %v3129
  %4784 = vmatprep.subr.mxu0 0.0
  %4785 = vmatpush2.msra.mxu0 0.0
  %4786 = vmatprep.subr.mxu0 0.0
  %4787 = vmatpush2.msra.mxu0 0.0
  %4788 = vmatprep.subr.mxu0 0.0
  %4789 = vmatpush2.msra.mxu0 0.0
  %4790 = vmatprep.subr.mxu0 0.0
  %4791 = vmatpush2.msra.mxu0 0.0
  %4792 = vmatprep.subr.mxu0 0.0
  %4793 = vmatpush2.msra.mxu0 0.0
  %4794 = vmatprep.subr.mxu0 0.0
  %4795 = vmatpush2.msra.mxu0 0.0
  %4796 = vmatprep.subr.mxu0 0.0
  %4797 = vmatpush2.msra.mxu0 0.0
  %4798 = vmatprep.subr.mxu0 0.0
  %4799 = vmatpush2.msra.mxu0 0.0
  %4800 = vmatprep.subr.mxu0 0.0
  %4801 = vmatpush2.msra.mxu0 0.0
  %4802 = vmatprep.subr.mxu0 0.0
  %4803 = vmatpush2.msra.mxu0 0.0
  %4804 = vmatprep.subr.mxu0 0.0
  %4805 = vmatpush2.msra.mxu0 0.0
  %4806 = vmatprep.subr.mxu0 0.0
  %4807 = vmatpush2.msra.mxu0 0.0
  %4808 = vmatprep.subr.mxu0 0.0
  %4809 = vmatpush2.msra.mxu0 0.0
  %4810 = vmatprep.subr.mxu0 0.0
  %4811 = vmatpush2.msra.mxu0 0.0
  %4812 = vmatprep.subr.mxu0 0.0
  %4813 = vmatpush2.msra.mxu0 0.0
  %4814 = vmatprep.subr.mxu0 0.0
  %4815 = vmatpush2.msra.mxu0 0.0
  %4816 = vmatprep.mubr.f32.mxu0 0.0
  %4817 = vmatmul.mubr.f32.gmra.mxu0 %v4747
  %v4818 = vpop.f32.mrf.mxu0
  %v4819 = vadd.f32 %v4738, %v4818
  %v4820 = vpop.f32.mrf.mxu0
  %4821 = vmatprep.mubr.f32.mxu0 0.0
  %4822 = vmatmul.mubr.f32.gmra.mxu0 %v4750
  %v4823 = vpop.f32.mrf.mxu0
  %v4824 = vadd.f32 %v4743, %v4823
  %v4825 = vpop.f32.mrf.mxu0
  %4826 = vdwg.mxu0
  %4827 = vrot.lane.b32.xlu0 %v4266, 112
  %v4828 = vpop.permute.xlu0 %4827
  %4829 = vrot.lane.b32.xlu0 %v4265, 112
  %v4830 = vpop.permute.xlu0 %4829
  %4831 = vrot.lane.b32.xlu0 %v4266, 80
  %v4832 = vpop.permute.xlu0 %4831
  %4833 = vrot.lane.b32.xlu0 %v4265, 80
  %v4834 = vpop.permute.xlu0 %4833
  %v4835 = vsel %vm431, %v4828, 0
  %v4837 = vsel %vm431, %v4830, 0
  %v4839 = vsel %vm431, %v4832, 0
  %v4841 = vsel %vm431, %v4834, 0
  %4843 = vmatprep.subr.mxu0 0.0
  %4844 = vmatpush1.xpose.msra.mxu0 0.0
  %4845 = vmatprep.subr.mxu0 0.0
  %4846 = vmatpush1.xpose.msra.mxu0 0.0
  %4847 = vmatprep.subr.mxu0 0.0
  %4848 = vmatpush1.xpose.msra.mxu0 0.0
  %4849 = vmatprep.subr.mxu0 0.0
  %4850 = vmatpush1.xpose.msra.mxu0 0.0
  %4851 = vmatprep.subr.mxu0 0.0
  %4852 = vmatpush1.xpose.msra.mxu0 0.0
  %4853 = vmatprep.subr.mxu0 0.0
  %4854 = vmatpush1.xpose.msra.mxu0 0.0
  %4855 = vmatprep.subr.mxu0 0.0
  %4856 = vmatpush1.xpose.msra.mxu0 0.0
  %4857 = vmatprep.subr.mxu0 0.0
  %4858 = vmatpush1.xpose.msra.mxu0 0.0
  %4859 = vmatprep.subr.mxu0 0.0
  %4860 = vmatpush1.xpose.msra.mxu0 0.0
  %4861 = vmatprep.subr.mxu0 0.0
  %4862 = vmatpush1.xpose.msra.mxu0 0.0
  %4863 = vmatprep.subr.mxu0 0.0
  %4864 = vmatpush1.xpose.msra.mxu0 0.0
  %4865 = vmatprep.subr.mxu0 0.0
  %4866 = vmatpush1.xpose.msra.mxu0 0.0
  %4867 = vmatprep.subr.mxu0 0.0
  %4868 = vmatpush1.xpose.msra.mxu0 0.0
  %4869 = vmatprep.subr.mxu0 0.0
  %4870 = vmatpush1.xpose.msra.mxu0 0.0
  %4871 = vmatprep.subr.mxu0 0.0
  %4872 = vmatpush1.xpose.msra.mxu0 %v4841
  %4873 = vmatprep.subr.mxu0 0.0
  %4874 = vmatpush1.xpose.msra.mxu0 %v4839
  %4875 = vmatprep.subr.mxu0 0.0
  %4876 = vmatpush2.xpose.msra.mxu0 0.0
  %4877 = vmatprep.subr.mxu0 0.0
  %4878 = vmatpush2.xpose.msra.mxu0 0.0
  %4879 = vmatprep.subr.mxu0 0.0
  %4880 = vmatpush2.xpose.msra.mxu0 0.0
  %4881 = vmatprep.subr.mxu0 0.0
  %4882 = vmatpush2.xpose.msra.mxu0 0.0
  %4883 = vmatprep.subr.mxu0 0.0
  %4884 = vmatpush2.xpose.msra.mxu0 0.0
  %4885 = vmatprep.subr.mxu0 0.0
  %4886 = vmatpush2.xpose.msra.mxu0 0.0
  %4887 = vmatprep.subr.mxu0 0.0
  %4888 = vmatpush2.xpose.msra.mxu0 0.0
  %4889 = vmatprep.subr.mxu0 0.0
  %4890 = vmatpush2.xpose.msra.mxu0 0.0
  %4891 = vmatprep.subr.mxu0 0.0
  %4892 = vmatpush2.xpose.msra.mxu0 0.0
  %4893 = vmatprep.subr.mxu0 0.0
  %4894 = vmatpush2.xpose.msra.mxu0 0.0
  %4895 = vmatprep.subr.mxu0 0.0
  %4896 = vmatpush2.xpose.msra.mxu0 0.0
  %4897 = vmatprep.subr.mxu0 0.0
  %4898 = vmatpush2.xpose.msra.mxu0 0.0
  %4899 = vmatprep.subr.mxu0 0.0
  %4900 = vmatpush2.xpose.msra.mxu0 0.0
  %4901 = vmatprep.subr.mxu0 0.0
  %4902 = vmatpush2.xpose.msra.mxu0 0.0
  %4903 = vmatprep.subr.mxu0 0.0
  %4904 = vmatpush2.xpose.msra.mxu0 0.0
  %4905 = vmatprep.subr.mxu0 0.0
  %4906 = vmatpush2.xpose.msra.mxu0 0.0
  %4907 = vmatprep.mubr.f32.mxu0 0.0
  %4908 = vmatmul.mubr.f32.gmra.mxu0 %v4835
  %v4909 = vpop.f32.mrf.mxu0
  %v4910 = vadd.f32 %v1562, %v4909
  %v4911 = vpop.f32.mrf.mxu0
  %4912 = vmatprep.mubr.f32.mxu0 0.0
  %4913 = vmatmul.mubr.f32.gmra.mxu0 %v4837
  %v4914 = vpop.f32.mrf.mxu0
  %v4915 = vadd.f32 %v1562, %v4914
  %v4916 = vpop.f32.mrf.mxu0
  %4917 = vdwg.mxu0
  %v4918 = vsel %vm515, %v4910, -inf
  %4919 = vmax.xlane.f32.xlu0 %v4918
  %v4920 = vpop.xlane.xlu0 %4919
  %v4921 = vsel %vm519, %v4915, -inf
  %4922 = vmax.xlane.f32.xlu0 %v4921
  %v4923 = vpop.xlane.xlu0 %4922
  %v4924 = vsub.f32 %v4910, %v4920
  %v4925 = vsub.f32 %v4915, %v4923
  %v4926 = vmul.f32 %v4924, 1.442695
  %v4927 = vpow.pop %v4926
  %v4928 = vmul.f32 %v4925, 1.442695
  %v4929 = vpow.pop %v4928
  %v4930 = vsel %vm515, %v4927, 0.0
  %4931 = vadd.xlane.f32.xlu0 %v4930
  %v4932 = vpop.xlane.xlu0 %4931
  %v4933 = vsel %vm519, %v4929, 0.0
  %4934 = vadd.xlane.f32.xlu0 %v4933
  %v4935 = vpop.xlane.xlu0 %4934
  %v4936 = vrcp.pop %v4932
  %v4937 = vrcp.pop %v4935
  %v4938 = vmul.f32 %v4927, %v4936
  %v4939 = vmul.f32 %v4929, %v4937
  %4940 = vrot.lane.b32.xlu0 %v4266, 48
  %v4941 = vpop.permute.xlu0 %4940
  %4942 = vrot.lane.b32.xlu0 %v4265, 48
  %v4943 = vpop.permute.xlu0 %4942
  %v4946 = vsel %vm515, %v4938, 0
  %v4949 = vsel %vm515, %v4939, 0
  %v4951 = vsel %vm243, %v4943, 0
  %4953 = vmatprep.subr.mxu0 0.0
  %4954 = vmatpush1.msra.mxu0 0.0
  %4955 = vmatprep.subr.mxu0 0.0
  %4956 = vmatpush1.msra.mxu0 0.0
  %4957 = vmatprep.subr.mxu0 0.0
  %4958 = vmatpush1.msra.mxu0 0.0
  %4959 = vmatprep.subr.mxu0 0.0
  %4960 = vmatpush1.msra.mxu0 0.0
  %4961 = vmatprep.subr.mxu0 0.0
  %4962 = vmatpush1.msra.mxu0 0.0
  %4963 = vmatprep.subr.mxu0 0.0
  %4964 = vmatpush1.msra.mxu0 0.0
  %4965 = vmatprep.subr.mxu0 0.0
  %4966 = vmatpush1.msra.mxu0 0.0
  %4967 = vmatprep.subr.mxu0 0.0
  %4968 = vmatpush1.msra.mxu0 0.0
  %4969 = vmatprep.subr.mxu0 0.0
  %4970 = vmatpush1.msra.mxu0 0.0
  %4971 = vmatprep.subr.mxu0 0.0
  %4972 = vmatpush1.msra.mxu0 0.0
  %4973 = vmatprep.subr.mxu0 0.0
  %4974 = vmatpush1.msra.mxu0 0.0
  %4975 = vmatprep.subr.mxu0 0.0
  %4976 = vmatpush1.msra.mxu0 0.0
  %4977 = vmatprep.subr.mxu0 0.0
  %4978 = vmatpush1.msra.mxu0 0.0
  %4979 = vmatprep.subr.mxu0 0.0
  %4980 = vmatpush1.msra.mxu0 0.0
  %4981 = vmatprep.subr.mxu0 0.0
  %4982 = vmatpush1.msra.mxu0 %v4951
  %4983 = vmatprep.subr.mxu0 0.0
  %4984 = vmatpush1.msra.mxu0 %v4941
  %4985 = vmatprep.subr.mxu0 0.0
  %4986 = vmatpush2.msra.mxu0 0.0
  %4987 = vmatprep.subr.mxu0 0.0
  %4988 = vmatpush2.msra.mxu0 0.0
  %4989 = vmatprep.subr.mxu0 0.0
  %4990 = vmatpush2.msra.mxu0 0.0
  %4991 = vmatprep.subr.mxu0 0.0
  %4992 = vmatpush2.msra.mxu0 0.0
  %4993 = vmatprep.subr.mxu0 0.0
  %4994 = vmatpush2.msra.mxu0 0.0
  %4995 = vmatprep.subr.mxu0 0.0
  %4996 = vmatpush2.msra.mxu0 0.0
  %4997 = vmatprep.subr.mxu0 0.0
  %4998 = vmatpush2.msra.mxu0 0.0
  %4999 = vmatprep.subr.mxu0 0.0
  %5000 = vmatpush2.msra.mxu0 0.0
  %5001 = vmatprep.subr.mxu0 0.0
  %5002 = vmatpush2.msra.mxu0 0.0
  %5003 = vmatprep.subr.mxu0 0.0
  %5004 = vmatpush2.msra.mxu0 0.0
  %5005 = vmatprep.subr.mxu0 0.0
  %5006 = vmatpush2.msra.mxu0 0.0
  %5007 = vmatprep.subr.mxu0 0.0
  %5008 = vmatpush2.msra.mxu0 0.0
  %5009 = vmatprep.subr.mxu0 0.0
  %5010 = vmatpush2.msra.mxu0 0.0
  %5011 = vmatprep.subr.mxu0 0.0
  %5012 = vmatpush2.msra.mxu0 0.0
  %5013 = vmatprep.subr.mxu0 0.0
  %5014 = vmatpush2.msra.mxu0 0.0
  %5015 = vmatprep.subr.mxu0 0.0
  %5016 = vmatpush2.msra.mxu0 0.0
  %5017 = vmatprep.mubr.f32.mxu0 0.0
  %5018 = vmatmul.mubr.f32.gmra.mxu0 %v4946
  %v5019 = vpop.f32.mrf.mxu0
  %v5020 = vadd.f32 0.0, %v5019
  %v5021 = vpop.f32.mrf.mxu0
  %5022 = vmatprep.mubr.f32.mxu0 0.0
  %5023 = vmatmul.mubr.f32.gmra.mxu0 %v4949
  %v5024 = vpop.f32.mrf.mxu0
  %v5025 = vadd.f32 0.0, %v5024
  %v5026 = vpop.f32.mrf.mxu0
  %5027 = vdwg.mxu0
  %v5029 = vsel %vm431, %v5020, 0
  %v5032 = vsel %vm431, %v5025, 0
  %5034 = vmatprep.subr.mxu0 0.0
  %5035 = vmatpush1.msra.mxu0 0.0
  %5036 = vmatprep.subr.mxu0 0.0
  %5037 = vmatpush1.msra.mxu0 0.0
  %5038 = vmatprep.subr.mxu0 0.0
  %5039 = vmatpush1.msra.mxu0 0.0
  %5040 = vmatprep.subr.mxu0 0.0
  %5041 = vmatpush1.msra.mxu0 0.0
  %5042 = vmatprep.subr.mxu0 0.0
  %5043 = vmatpush1.msra.mxu0 0.0
  %5044 = vmatprep.subr.mxu0 0.0
  %5045 = vmatpush1.msra.mxu0 0.0
  %5046 = vmatprep.subr.mxu0 0.0
  %5047 = vmatpush1.msra.mxu0 0.0
  %5048 = vmatprep.subr.mxu0 0.0
  %5049 = vmatpush1.msra.mxu0 0.0
  %5050 = vmatprep.subr.mxu0 0.0
  %5051 = vmatpush1.msra.mxu0 0.0
  %5052 = vmatprep.subr.mxu0 0.0
  %5053 = vmatpush1.msra.mxu0 0.0
  %5054 = vmatprep.subr.mxu0 0.0
  %5055 = vmatpush1.msra.mxu0 0.0
  %5056 = vmatprep.subr.mxu0 0.0
  %5057 = vmatpush1.msra.mxu0 0.0
  %5058 = vmatprep.subr.mxu0 0.0
  %5059 = vmatpush1.msra.mxu0 0.0
  %5060 = vmatprep.subr.mxu0 0.0
  %5061 = vmatpush1.msra.mxu0 0.0
  %5062 = vmatprep.subr.mxu0 0.0
  %5063 = vmatpush1.msra.mxu0 0.0
  %5064 = vmatprep.subr.mxu0 0.0
  %5065 = vmatpush1.msra.mxu0 %v3131
  %5066 = vmatprep.subr.mxu0 0.0
  %5067 = vmatpush2.msra.mxu0 0.0
  %5068 = vmatprep.subr.mxu0 0.0
  %5069 = vmatpush2.msra.mxu0 0.0
  %5070 = vmatprep.subr.mxu0 0.0
  %5071 = vmatpush2.msra.mxu0 0.0
  %5072 = vmatprep.subr.mxu0 0.0
  %5073 = vmatpush2.msra.mxu0 0.0
  %5074 = vmatprep.subr.mxu0 0.0
  %5075 = vmatpush2.msra.mxu0 0.0
  %5076 = vmatprep.subr.mxu0 0.0
  %5077 = vmatpush2.msra.mxu0 0.0
  %5078 = vmatprep.subr.mxu0 0.0
  %5079 = vmatpush2.msra.mxu0 0.0
  %5080 = vmatprep.subr.mxu0 0.0
  %5081 = vmatpush2.msra.mxu0 0.0
  %5082 = vmatprep.subr.mxu0 0.0
  %5083 = vmatpush2.msra.mxu0 0.0
  %5084 = vmatprep.subr.mxu0 0.0
  %5085 = vmatpush2.msra.mxu0 0.0
  %5086 = vmatprep.subr.mxu0 0.0
  %5087 = vmatpush2.msra.mxu0 0.0
  %5088 = vmatprep.subr.mxu0 0.0
  %5089 = vmatpush2.msra.mxu0 0.0
  %5090 = vmatprep.subr.mxu0 0.0
  %5091 = vmatpush2.msra.mxu0 0.0
  %5092 = vmatprep.subr.mxu0 0.0
  %5093 = vmatpush2.msra.mxu0 0.0
  %5094 = vmatprep.subr.mxu0 0.0
  %5095 = vmatpush2.msra.mxu0 0.0
  %5096 = vmatprep.subr.mxu0 0.0
  %5097 = vmatpush2.msra.mxu0 0.0
  %5098 = vmatprep.mubr.f32.mxu0 0.0
  %5099 = vmatmul.mubr.f32.gmra.mxu0 %v5029
  %v5100 = vpop.f32.mrf.mxu0
  %v5101 = vadd.f32 0.0, %v5100
  %v5102 = vpop.f32.mrf.mxu0
  %5103 = vmatprep.mubr.f32.mxu0 0.0
  %5104 = vmatmul.mubr.f32.gmra.mxu0 %v5032
  %v5105 = vpop.f32.mrf.mxu0
  %v5106 = vadd.f32 0.0, %v5105
  %v5107 = vpop.f32.mrf.mxu0
  %5108 = vdwg.mxu0
  %v5109 = vadd.f32 %v4819, %v5101
  %v5110 = vadd.f32 %v4824, %v5106
  %5111 = vrot.lane.b32.xlu0 %v4266, 104
  %v5112 = vpop.permute.xlu0 %5111
  %5113 = vrot.lane.b32.xlu0 %v4265, 104
  %v5114 = vpop.permute.xlu0 %5113
  %5115 = vrot.lane.b32.xlu0 %v4266, 72
  %v5116 = vpop.permute.xlu0 %5115
  %5117 = vrot.lane.b32.xlu0 %v4265, 72
  %v5118 = vpop.permute.xlu0 %5117
  %v5119 = vsel %vm431, %v5112, 0
  %v5121 = vsel %vm431, %v5114, 0
  %v5123 = vsel %vm431, %v5116, 0
  %v5125 = vsel %vm431, %v5118, 0
  %5127 = vmatprep.subr.mxu0 0.0
  %5128 = vmatpush1.xpose.msra.mxu0 0.0
  %5129 = vmatprep.subr.mxu0 0.0
  %5130 = vmatpush1.xpose.msra.mxu0 0.0
  %5131 = vmatprep.subr.mxu0 0.0
  %5132 = vmatpush1.xpose.msra.mxu0 0.0
  %5133 = vmatprep.subr.mxu0 0.0
  %5134 = vmatpush1.xpose.msra.mxu0 0.0
  %5135 = vmatprep.subr.mxu0 0.0
  %5136 = vmatpush1.xpose.msra.mxu0 0.0
  %5137 = vmatprep.subr.mxu0 0.0
  %5138 = vmatpush1.xpose.msra.mxu0 0.0
  %5139 = vmatprep.subr.mxu0 0.0
  %5140 = vmatpush1.xpose.msra.mxu0 0.0
  %5141 = vmatprep.subr.mxu0 0.0
  %5142 = vmatpush1.xpose.msra.mxu0 0.0
  %5143 = vmatprep.subr.mxu0 0.0
  %5144 = vmatpush1.xpose.msra.mxu0 0.0
  %5145 = vmatprep.subr.mxu0 0.0
  %5146 = vmatpush1.xpose.msra.mxu0 0.0
  %5147 = vmatprep.subr.mxu0 0.0
  %5148 = vmatpush1.xpose.msra.mxu0 0.0
  %5149 = vmatprep.subr.mxu0 0.0
  %5150 = vmatpush1.xpose.msra.mxu0 0.0
  %5151 = vmatprep.subr.mxu0 0.0
  %5152 = vmatpush1.xpose.msra.mxu0 0.0
  %5153 = vmatprep.subr.mxu0 0.0
  %5154 = vmatpush1.xpose.msra.mxu0 0.0
  %5155 = vmatprep.subr.mxu0 0.0
  %5156 = vmatpush1.xpose.msra.mxu0 %v5125
  %5157 = vmatprep.subr.mxu0 0.0
  %5158 = vmatpush1.xpose.msra.mxu0 %v5123
  %5159 = vmatprep.subr.mxu0 0.0
  %5160 = vmatpush2.xpose.msra.mxu0 0.0
  %5161 = vmatprep.subr.mxu0 0.0
  %5162 = vmatpush2.xpose.msra.mxu0 0.0
  %5163 = vmatprep.subr.mxu0 0.0
  %5164 = vmatpush2.xpose.msra.mxu0 0.0
  %5165 = vmatprep.subr.mxu0 0.0
  %5166 = vmatpush2.xpose.msra.mxu0 0.0
  %5167 = vmatprep.subr.mxu0 0.0
  %5168 = vmatpush2.xpose.msra.mxu0 0.0
  %5169 = vmatprep.subr.mxu0 0.0
  %5170 = vmatpush2.xpose.msra.mxu0 0.0
  %5171 = vmatprep.subr.mxu0 0.0
  %5172 = vmatpush2.xpose.msra.mxu0 0.0
  %5173 = vmatprep.subr.mxu0 0.0
  %5174 = vmatpush2.xpose.msra.mxu0 0.0
  %5175 = vmatprep.subr.mxu0 0.0
  %5176 = vmatpush2.xpose.msra.mxu0 0.0
  %5177 = vmatprep.subr.mxu0 0.0
  %5178 = vmatpush2.xpose.msra.mxu0 0.0
  %5179 = vmatprep.subr.mxu0 0.0
  %5180 = vmatpush2.xpose.msra.mxu0 0.0
  %5181 = vmatprep.subr.mxu0 0.0
  %5182 = vmatpush2.xpose.msra.mxu0 0.0
  %5183 = vmatprep.subr.mxu0 0.0
  %5184 = vmatpush2.xpose.msra.mxu0 0.0
  %5185 = vmatprep.subr.mxu0 0.0
  %5186 = vmatpush2.xpose.msra.mxu0 0.0
  %5187 = vmatprep.subr.mxu0 0.0
  %5188 = vmatpush2.xpose.msra.mxu0 0.0
  %5189 = vmatprep.subr.mxu0 0.0
  %5190 = vmatpush2.xpose.msra.mxu0 0.0
  %5191 = vmatprep.mubr.f32.mxu0 0.0
  %5192 = vmatmul.mubr.f32.gmra.mxu0 %v5119
  %v5193 = vpop.f32.mrf.mxu0
  %v5194 = vadd.f32 %v1562, %v5193
  %v5195 = vpop.f32.mrf.mxu0
  %5196 = vmatprep.mubr.f32.mxu0 0.0
  %5197 = vmatmul.mubr.f32.gmra.mxu0 %v5121
  %v5198 = vpop.f32.mrf.mxu0
  %v5199 = vadd.f32 %v1562, %v5198
  %v5200 = vpop.f32.mrf.mxu0
  %5201 = vdwg.mxu0
  %v5202 = vsel %vm515, %v5194, -inf
  %5203 = vmax.xlane.f32.xlu0 %v5202
  %v5204 = vpop.xlane.xlu0 %5203
  %v5205 = vsel %vm519, %v5199, -inf
  %5206 = vmax.xlane.f32.xlu0 %v5205
  %v5207 = vpop.xlane.xlu0 %5206
  %v5208 = vsub.f32 %v5194, %v5204
  %v5209 = vsub.f32 %v5199, %v5207
  %v5210 = vmul.f32 %v5208, 1.442695
  %v5211 = vpow.pop %v5210
  %v5212 = vmul.f32 %v5209, 1.442695
  %v5213 = vpow.pop %v5212
  %v5214 = vsel %vm515, %v5211, 0.0
  %5215 = vadd.xlane.f32.xlu0 %v5214
  %v5216 = vpop.xlane.xlu0 %5215
  %v5217 = vsel %vm519, %v5213, 0.0
  %5218 = vadd.xlane.f32.xlu0 %v5217
  %v5219 = vpop.xlane.xlu0 %5218
  %v5220 = vrcp.pop %v5216
  %v5221 = vrcp.pop %v5219
  %v5222 = vmul.f32 %v5211, %v5220
  %v5223 = vmul.f32 %v5213, %v5221
  %5224 = vrot.lane.b32.xlu0 %v4266, 40
  %v5225 = vpop.permute.xlu0 %5224
  %5226 = vrot.lane.b32.xlu0 %v4265, 40
  %v5227 = vpop.permute.xlu0 %5226
  %v5230 = vsel %vm515, %v5222, 0
  %v5233 = vsel %vm515, %v5223, 0
  %v5235 = vsel %vm243, %v5227, 0
  %5237 = vmatprep.subr.mxu0 0.0
  %5238 = vmatpush1.msra.mxu0 0.0
  %5239 = vmatprep.subr.mxu0 0.0
  %5240 = vmatpush1.msra.mxu0 0.0
  %5241 = vmatprep.subr.mxu0 0.0
  %5242 = vmatpush1.msra.mxu0 0.0
  %5243 = vmatprep.subr.mxu0 0.0
  %5244 = vmatpush1.msra.mxu0 0.0
  %5245 = vmatprep.subr.mxu0 0.0
  %5246 = vmatpush1.msra.mxu0 0.0
  %5247 = vmatprep.subr.mxu0 0.0
  %5248 = vmatpush1.msra.mxu0 0.0
  %5249 = vmatprep.subr.mxu0 0.0
  %5250 = vmatpush1.msra.mxu0 0.0
  %5251 = vmatprep.subr.mxu0 0.0
  %5252 = vmatpush1.msra.mxu0 0.0
  %5253 = vmatprep.subr.mxu0 0.0
  %5254 = vmatpush1.msra.mxu0 0.0
  %5255 = vmatprep.subr.mxu0 0.0
  %5256 = vmatpush1.msra.mxu0 0.0
  %5257 = vmatprep.subr.mxu0 0.0
  %5258 = vmatpush1.msra.mxu0 0.0
  %5259 = vmatprep.subr.mxu0 0.0
  %5260 = vmatpush1.msra.mxu0 0.0
  %5261 = vmatprep.subr.mxu0 0.0
  %5262 = vmatpush1.msra.mxu0 0.0
  %5263 = vmatprep.subr.mxu0 0.0
  %5264 = vmatpush1.msra.mxu0 0.0
  %5265 = vmatprep.subr.mxu0 0.0
  %5266 = vmatpush1.msra.mxu0 %v5235
  %5267 = vmatprep.subr.mxu0 0.0
  %5268 = vmatpush1.msra.mxu0 %v5225
  %5269 = vmatprep.subr.mxu0 0.0
  %5270 = vmatpush2.msra.mxu0 0.0
  %5271 = vmatprep.subr.mxu0 0.0
  %5272 = vmatpush2.msra.mxu0 0.0
  %5273 = vmatprep.subr.mxu0 0.0
  %5274 = vmatpush2.msra.mxu0 0.0
  %5275 = vmatprep.subr.mxu0 0.0
  %5276 = vmatpush2.msra.mxu0 0.0
  %5277 = vmatprep.subr.mxu0 0.0
  %5278 = vmatpush2.msra.mxu0 0.0
  %5279 = vmatprep.subr.mxu0 0.0
  %5280 = vmatpush2.msra.mxu0 0.0
  %5281 = vmatprep.subr.mxu0 0.0
  %5282 = vmatpush2.msra.mxu0 0.0
  %5283 = vmatprep.subr.mxu0 0.0
  %5284 = vmatpush2.msra.mxu0 0.0
  %5285 = vmatprep.subr.mxu0 0.0
  %5286 = vmatpush2.msra.mxu0 0.0
  %5287 = vmatprep.subr.mxu0 0.0
  %5288 = vmatpush2.msra.mxu0 0.0
  %5289 = vmatprep.subr.mxu0 0.0
  %5290 = vmatpush2.msra.mxu0 0.0
  %5291 = vmatprep.subr.mxu0 0.0
  %5292 = vmatpush2.msra.mxu0 0.0
  %5293 = vmatprep.subr.mxu0 0.0
  %5294 = vmatpush2.msra.mxu0 0.0
  %5295 = vmatprep.subr.mxu0 0.0
  %5296 = vmatpush2.msra.mxu0 0.0
  %5297 = vmatprep.subr.mxu0 0.0
  %5298 = vmatpush2.msra.mxu0 0.0
  %5299 = vmatprep.subr.mxu0 0.0
  %5300 = vmatpush2.msra.mxu0 0.0
  %5301 = vmatprep.mubr.f32.mxu0 0.0
  %5302 = vmatmul.mubr.f32.gmra.mxu0 %v5230
  %v5303 = vpop.f32.mrf.mxu0
  %v5304 = vadd.f32 0.0, %v5303
  %v5305 = vpop.f32.mrf.mxu0
  %5306 = vmatprep.mubr.f32.mxu0 0.0
  %5307 = vmatmul.mubr.f32.gmra.mxu0 %v5233
  %v5308 = vpop.f32.mrf.mxu0
  %v5309 = vadd.f32 0.0, %v5308
  %v5310 = vpop.f32.mrf.mxu0
  %5311 = vdwg.mxu0
  %v5313 = vsel %vm431, %v5304, 0
  %v5316 = vsel %vm431, %v5309, 0
  %5318 = vmatprep.subr.mxu0 0.0
  %5319 = vmatpush1.msra.mxu0 0.0
  %5320 = vmatprep.subr.mxu0 0.0
  %5321 = vmatpush1.msra.mxu0 0.0
  %5322 = vmatprep.subr.mxu0 0.0
  %5323 = vmatpush1.msra.mxu0 0.0
  %5324 = vmatprep.subr.mxu0 0.0
  %5325 = vmatpush1.msra.mxu0 0.0
  %5326 = vmatprep.subr.mxu0 0.0
  %5327 = vmatpush1.msra.mxu0 0.0
  %5328 = vmatprep.subr.mxu0 0.0
  %5329 = vmatpush1.msra.mxu0 0.0
  %5330 = vmatprep.subr.mxu0 0.0
  %5331 = vmatpush1.msra.mxu0 0.0
  %5332 = vmatprep.subr.mxu0 0.0
  %5333 = vmatpush1.msra.mxu0 0.0
  %5334 = vmatprep.subr.mxu0 0.0
  %5335 = vmatpush1.msra.mxu0 0.0
  %5336 = vmatprep.subr.mxu0 0.0
  %5337 = vmatpush1.msra.mxu0 0.0
  %5338 = vmatprep.subr.mxu0 0.0
  %5339 = vmatpush1.msra.mxu0 0.0
  %5340 = vmatprep.subr.mxu0 0.0
  %5341 = vmatpush1.msra.mxu0 0.0
  %5342 = vmatprep.subr.mxu0 0.0
  %5343 = vmatpush1.msra.mxu0 0.0
  %5344 = vmatprep.subr.mxu0 0.0
  %5345 = vmatpush1.msra.mxu0 0.0
  %5346 = vmatprep.subr.mxu0 0.0
  %5347 = vmatpush1.msra.mxu0 0.0
  %5348 = vmatprep.subr.mxu0 0.0
  %5349 = vmatpush1.msra.mxu0 %v3132
  %5350 = vmatprep.subr.mxu0 0.0
  %5351 = vmatpush2.msra.mxu0 0.0
  %5352 = vmatprep.subr.mxu0 0.0
  %5353 = vmatpush2.msra.mxu0 0.0
  %5354 = vmatprep.subr.mxu0 0.0
  %5355 = vmatpush2.msra.mxu0 0.0
  %5356 = vmatprep.subr.mxu0 0.0
  %5357 = vmatpush2.msra.mxu0 0.0
  %5358 = vmatprep.subr.mxu0 0.0
  %5359 = vmatpush2.msra.mxu0 0.0
  %5360 = vmatprep.subr.mxu0 0.0
  %5361 = vmatpush2.msra.mxu0 0.0
  %5362 = vmatprep.subr.mxu0 0.0
  %5363 = vmatpush2.msra.mxu0 0.0
  %5364 = vmatprep.subr.mxu0 0.0
  %5365 = vmatpush2.msra.mxu0 0.0
  %5366 = vmatprep.subr.mxu0 0.0
  %5367 = vmatpush2.msra.mxu0 0.0
  %5368 = vmatprep.subr.mxu0 0.0
  %5369 = vmatpush2.msra.mxu0 0.0
  %5370 = vmatprep.subr.mxu0 0.0
  %5371 = vmatpush2.msra.mxu0 0.0
  %5372 = vmatprep.subr.mxu0 0.0
  %5373 = vmatpush2.msra.mxu0 0.0
  %5374 = vmatprep.subr.mxu0 0.0
  %5375 = vmatpush2.msra.mxu0 0.0
  %5376 = vmatprep.subr.mxu0 0.0
  %5377 = vmatpush2.msra.mxu0 0.0
  %5378 = vmatprep.subr.mxu0 0.0
  %5379 = vmatpush2.msra.mxu0 0.0
  %5380 = vmatprep.subr.mxu0 0.0
  %5381 = vmatpush2.msra.mxu0 0.0
  %5382 = vmatprep.mubr.f32.mxu0 0.0
  %5383 = vmatmul.mubr.f32.gmra.mxu0 %v5313
  %v5384 = vpop.f32.mrf.mxu0
  %v5385 = vadd.f32 0.0, %v5384
  %v5386 = vpop.f32.mrf.mxu0
  %5387 = vmatprep.mubr.f32.mxu0 0.0
  %5388 = vmatmul.mubr.f32.gmra.mxu0 %v5316
  %v5389 = vpop.f32.mrf.mxu0
  %v5390 = vadd.f32 0.0, %v5389
  %v5391 = vpop.f32.mrf.mxu0
  %5392 = vdwg.mxu0
  %v5393 = vadd.f32 %v5109, %v5385
  %v5394 = vadd.f32 %v5110, %v5390
  %v5397 = vrot.slane %v5393, 4
  %v5398 = vrot.slane %v5394, 4
  %v5399 = vsel %vm243, %v5397, %v5398
  %v5402 = vsel %vm243, %v4262, %v5397
  %s5403 = scalar_lea.vmem %s7, 1
  %v5404 = vld [vmem:[%s5403] sm:$0x1]
  %v5406 = vlaneseq
  %v5407 = vshrl.u32 %v5406, 7
  %v5408 = vsub.s32 0, %v5407
  %v5409 = vrot.slane %v5404, %v5408
  %v5411 = vadd.f32 %v4261, %v5409
  %v5412 = vadd.f32 %v5402, %v5409
  %v5413 = vadd.f32 %v5399, %v5409
  %v5414 = vadd.f32 %v3021, %v5411
  %v5415 = vadd.f32 %v3022, %v5412
  %v5416 = vadd.f32 %v3023, %v5413
  %v5417 = vsel %vm250, %v5414, 0.0
  %5418 = vadd.xlane.f32.xlu0 %v5417
  %v5419 = vpop.xlane.xlu0 %5418
  %v5420 = vsel %vm250, %v5415, 0.0
  %5421 = vadd.xlane.f32.xlu0 %v5420
  %v5422 = vpop.xlane.xlu0 %5421
  %v5423 = vsel %vm250, %v5416, 0.0
  %5424 = vadd.xlane.f32.xlu0 %v5423
  %v5425 = vpop.xlane.xlu0 %5424
  %v5426 = vmul.f32 %v5419, %v260
  %v5427 = vmul.f32 %v5422, %v260
  %v5428 = vmul.f32 %v5425, %v260
  %v5429 = vsub.f32 %v5414, %v5426
  %v5430 = vsub.f32 %v5415, %v5427
  %v5431 = vsub.f32 %v5416, %v5428
  %v5432 = vmul.f32 %v5429, %v5429
  %v5433 = vmul.f32 %v5430, %v5430
  %v5434 = vmul.f32 %v5431, %v5431
  %v5435 = vsel %vm250, %v5432, 0.0
  %5436 = vadd.xlane.f32.xlu0 %v5435
  %v5437 = vpop.xlane.xlu0 %5436
  %v5438 = vsel %vm250, %v5433, 0.0
  %5439 = vadd.xlane.f32.xlu0 %v5438
  %v5440 = vpop.xlane.xlu0 %5439
  %v5441 = vsel %vm250, %v5434, 0.0
  %5442 = vadd.xlane.f32.xlu0 %v5441
  %v5443 = vpop.xlane.xlu0 %5442
  %v5444 = vmul.f32 %v5437, %v260
  %v5445 = vmul.f32 %v5440, %v260
  %v5446 = vmul.f32 %v5443, %v260
  %v5447 = vadd.f32 %v5444, 1e-05
  %v5448 = vadd.f32 %v5445, 1e-05
  %v5449 = vadd.f32 %v5446, 1e-05
  %v5450 = vrsqrt.pop %v5447
  %v5451 = vrsqrt.pop %v5448
  %v5452 = vrsqrt.pop %v5449
  %v5453 = vmul.f32 %v5429, %v5450
  %v5454 = vmul.f32 %v5430, %v5451
  %v5455 = vmul.f32 %v5431, %v5452
  %v5456 = vlaneseq
  %v5457 = vshrl.u32 %v5456, 7
  %v5458 = vsub.s32 0, %v5457
  %v5459 = vrot.slane %v3025, %v5458
  %v5460 = vmul.f32 %v5453, %v5459
  %v5461 = vmul.f32 %v5454, %v5459
  %v5462 = vmul.f32 %v5455, %v5459
  %v5463 = vlaneseq
  %v5464 = vshrl.u32 %v5463, 7
  %v5465 = vsub.s32 1, %v5464
  %v5466 = vrot.slane %v3025, %v5465
  %v5467 = vadd.f32 %v5460, %v5466
  %v5468 = vadd.f32 %v5461, %v5466
  %v5469 = vadd.f32 %v5462, %v5466
  %s5470 = scalar_lea.vmem %s8, 32
  %v5471 = vld [vmem:[%s5470] sm:$0xff]
  %v5472 = vld [vmem:[%s5470 + $0x8] sm:$0xff]
  %v5473 = vld [vmem:[%s5470 + $0x10] sm:$0xff]
  %v5474 = vld [vmem:[%s5470 + $0x18] sm:$0xff]
  %s5475 = scalar_lea.vmem %s9, 1
  %v5476 = vld [vmem:[%s5475] sm:$0x1]
  %v5478 = vlaneseq
  %v5479 = vshrl.u32 %v5478, 7
  %v5480 = vsub.s32 0, %v5479
  %v5481 = vrot.slane %v5476, %v5480
  %v5484 = vsel %vm250, %v5467, 0
  %v5487 = vsel %vm250, %v5468, 0
  %v5490 = vsel %vm250, %v5469, 0
  %5492 = vmatprep.subr.mxu0 0.0
  %5493 = vmatpush1.msra.mxu0 0.0
  %5494 = vmatprep.subr.mxu0 0.0
  %5495 = vmatpush1.msra.mxu0 0.0
  %5496 = vmatprep.subr.mxu0 0.0
  %5497 = vmatpush1.msra.mxu0 0.0
  %5498 = vmatprep.subr.mxu0 0.0
  %5499 = vmatpush1.msra.mxu0 0.0
  %5500 = vmatprep.subr.mxu0 0.0
  %5501 = vmatpush1.msra.mxu0 0.0
  %5502 = vmatprep.subr.mxu0 0.0
  %5503 = vmatpush1.msra.mxu0 0.0
  %5504 = vmatprep.subr.mxu0 0.0
  %5505 = vmatpush1.msra.mxu0 0.0
  %5506 = vmatprep.subr.mxu0 0.0
  %5507 = vmatpush1.msra.mxu0 0.0
  %5508 = vmatprep.subr.mxu0 0.0
  %5509 = vmatpush1.msra.mxu0 0.0
  %5510 = vmatprep.subr.mxu0 0.0
  %5511 = vmatpush1.msra.mxu0 0.0
  %5512 = vmatprep.subr.mxu0 0.0
  %5513 = vmatpush1.msra.mxu0 0.0
  %5514 = vmatprep.subr.mxu0 0.0
  %5515 = vmatpush1.msra.mxu0 0.0
  %5516 = vmatprep.subr.mxu0 0.0
  %5517 = vmatpush1.msra.mxu0 %v5474
  %5518 = vmatprep.subr.mxu0 0.0
  %5519 = vmatpush1.msra.mxu0 %v5473
  %5520 = vmatprep.subr.mxu0 0.0
  %5521 = vmatpush1.msra.mxu0 %v5472
  %5522 = vmatprep.subr.mxu0 0.0
  %5523 = vmatpush1.msra.mxu0 %v5471
  %5524 = vmatprep.subr.mxu0 0.0
  %5525 = vmatpush2.msra.mxu0 0.0
  %5526 = vmatprep.subr.mxu0 0.0
  %5527 = vmatpush2.msra.mxu0 0.0
  %5528 = vmatprep.subr.mxu0 0.0
  %5529 = vmatpush2.msra.mxu0 0.0
  %5530 = vmatprep.subr.mxu0 0.0
  %5531 = vmatpush2.msra.mxu0 0.0
  %5532 = vmatprep.subr.mxu0 0.0
  %5533 = vmatpush2.msra.mxu0 0.0
  %5534 = vmatprep.subr.mxu0 0.0
  %5535 = vmatpush2.msra.mxu0 0.0
  %5536 = vmatprep.subr.mxu0 0.0
  %5537 = vmatpush2.msra.mxu0 0.0
  %5538 = vmatprep.subr.mxu0 0.0
  %5539 = vmatpush2.msra.mxu0 0.0
  %5540 = vmatprep.subr.mxu0 0.0
  %5541 = vmatpush2.msra.mxu0 0.0
  %5542 = vmatprep.subr.mxu0 0.0
  %5543 = vmatpush2.msra.mxu0 0.0
  %5544 = vmatprep.subr.mxu0 0.0
  %5545 = vmatpush2.msra.mxu0 0.0
  %5546 = vmatprep.subr.mxu0 0.0
  %5547 = vmatpush2.msra.mxu0 0.0
  %5548 = vmatprep.subr.mxu0 0.0
  %5549 = vmatpush2.msra.mxu0 0.0
  %5550 = vmatprep.subr.mxu0 0.0
  %5551 = vmatpush2.msra.mxu0 0.0
  %5552 = vmatprep.subr.mxu0 0.0
  %5553 = vmatpush2.msra.mxu0 0.0
  %5554 = vmatprep.subr.mxu0 0.0
  %5555 = vmatpush2.msra.mxu0 0.0
  %5556 = vmatprep.mubr.f32.mxu0 0.0
  %5557 = vmatmul.mubr.f32.gmra.mxu0 %v5484
  %v5558 = vpop.f32.mrf.mxu0
  %v5559 = vadd.f32 %v5481, %v5558
  %v5560 = vpop.f32.mrf.mxu0
  %5561 = vmatprep.mubr.f32.mxu0 0.0
  %5562 = vmatmul.mubr.f32.gmra.mxu0 %v5487
  %v5563 = vpop.f32.mrf.mxu0
  %v5564 = vadd.f32 %v5481, %v5563
  %v5565 = vpop.f32.mrf.mxu0
  %5566 = vmatprep.mubr.f32.mxu0 0.0
  %5567 = vmatmul.mubr.f32.gmra.mxu0 %v5490
  %v5568 = vpop.f32.mrf.mxu0
  %v5569 = vadd.f32 %v5481, %v5568
  %v5570 = vpop.f32.mrf.mxu0
  %5571 = vdwg.mxu0
  %v5572 = vmax.f32 %v5559, 0.0
  %v5573 = vmax.f32 %v5564, 0.0
  %v5574 = vmax.f32 %v5569, 0.0
  %s5575 = scalar_lea.vmem %s10, 128
  %v5576 = vld [vmem:[%s5575] sm:$0xff]
  %v5577 = vld [vmem:[%s5575 + $0x8] sm:$0xff]
  %v5578 = vld [vmem:[%s5575 + $0x10] sm:$0xff]
  %v5579 = vld [vmem:[%s5575 + $0x18] sm:$0xff]
  %v5580 = vld [vmem:[%s5575 + $0x20] sm:$0xff]
  %v5581 = vld [vmem:[%s5575 + $0x28] sm:$0xff]
  %v5582 = vld [vmem:[%s5575 + $0x30] sm:$0xff]
  %v5583 = vld [vmem:[%s5575 + $0x38] sm:$0xff]
  %v5584 = vld [vmem:[%s5575 + $0x40] sm:$0xff]
  %v5585 = vld [vmem:[%s5575 + $0x48] sm:$0xff]
  %v5586 = vld [vmem:[%s5575 + $0x50] sm:$0xff]
  %v5587 = vld [vmem:[%s5575 + $0x58] sm:$0xff]
  %v5588 = vld [vmem:[%s5575 + $0x60] sm:$0xff]
  %v5589 = vld [vmem:[%s5575 + $0x68] sm:$0xff]
  %v5590 = vld [vmem:[%s5575 + $0x70] sm:$0xff]
  %v5591 = vld [vmem:[%s5575 + $0x78] sm:$0xff]
  %s5592 = scalar_lea.vmem %s11, 1
  %v5593 = vld [vmem:[%s5592] sm:$0x1]
  %v5595 = vlaneseq
  %v5596 = vshrl.u32 %v5595, 7
  %v5597 = vsub.s32 0, %v5596
  %v5598 = vrot.slane %v5593, %v5597
  %5600 = vmatprep.subr.mxu0 0.0
  %5601 = vmatpush1.msra.mxu0 %v5591
  %5602 = vmatprep.subr.mxu0 0.0
  %5603 = vmatpush1.msra.mxu0 %v5590
  %5604 = vmatprep.subr.mxu0 0.0
  %5605 = vmatpush1.msra.mxu0 %v5589
  %5606 = vmatprep.subr.mxu0 0.0
  %5607 = vmatpush1.msra.mxu0 %v5588
  %5608 = vmatprep.subr.mxu0 0.0
  %5609 = vmatpush1.msra.mxu0 %v5587
  %5610 = vmatprep.subr.mxu0 0.0
  %5611 = vmatpush1.msra.mxu0 %v5586
  %5612 = vmatprep.subr.mxu0 0.0
  %5613 = vmatpush1.msra.mxu0 %v5585
  %5614 = vmatprep.subr.mxu0 0.0
  %5615 = vmatpush1.msra.mxu0 %v5584
  %5616 = vmatprep.subr.mxu0 0.0
  %5617 = vmatpush1.msra.mxu0 %v5583
  %5618 = vmatprep.subr.mxu0 0.0
  %5619 = vmatpush1.msra.mxu0 %v5582
  %5620 = vmatprep.subr.mxu0 0.0
  %5621 = vmatpush1.msra.mxu0 %v5581
  %5622 = vmatprep.subr.mxu0 0.0
  %5623 = vmatpush1.msra.mxu0 %v5580
  %5624 = vmatprep.subr.mxu0 0.0
  %5625 = vmatpush1.msra.mxu0 %v5579
  %5626 = vmatprep.subr.mxu0 0.0
  %5627 = vmatpush1.msra.mxu0 %v5578
  %5628 = vmatprep.subr.mxu0 0.0
  %5629 = vmatpush1.msra.mxu0 %v5577
  %5630 = vmatprep.subr.mxu0 0.0
  %5631 = vmatpush1.msra.mxu0 %v5576
  %5632 = vmatprep.subr.mxu0 0.0
  %5633 = vmatpush2.msra.mxu0 0.0
  %5634 = vmatprep.subr.mxu0 0.0
  %5635 = vmatpush2.msra.mxu0 0.0
  %5636 = vmatprep.subr.mxu0 0.0
  %5637 = vmatpush2.msra.mxu0 0.0
  %5638 = vmatprep.subr.mxu0 0.0
  %5639 = vmatpush2.msra.mxu0 0.0
  %5640 = vmatprep.subr.mxu0 0.0
  %5641 = vmatpush2.msra.mxu0 0.0
  %5642 = vmatprep.subr.mxu0 0.0
  %5643 = vmatpush2.msra.mxu0 0.0
  %5644 = vmatprep.subr.mxu0 0.0
  %5645 = vmatpush2.msra.mxu0 0.0
  %5646 = vmatprep.subr.mxu0 0.0
  %5647 = vmatpush2.msra.mxu0 0.0
  %5648 = vmatprep.subr.mxu0 0.0
  %5649 = vmatpush2.msra.mxu0 0.0
  %5650 = vmatprep.subr.mxu0 0.0
  %5651 = vmatpush2.msra.mxu0 0.0
  %5652 = vmatprep.subr.mxu0 0.0
  %5653 = vmatpush2.msra.mxu0 0.0
  %5654 = vmatprep.subr.mxu0 0.0
  %5655 = vmatpush2.msra.mxu0 0.0
  %5656 = vmatprep.subr.mxu0 0.0
  %5657 = vmatpush2.msra.mxu0 0.0
  %5658 = vmatprep.subr.mxu0 0.0
  %5659 = vmatpush2.msra.mxu0 0.0
  %5660 = vmatprep.subr.mxu0 0.0
  %5661 = vmatpush2.msra.mxu0 0.0
  %5662 = vmatprep.subr.mxu0 0.0
  %5663 = vmatpush2.msra.mxu0 0.0
  %5664 = vmatprep.mubr.f32.mxu0 0.0
  %5665 = vmatmul.mubr.f32.gmra.mxu0 %v5572
  %v5666 = vpop.f32.mrf.mxu0
  %v5667 = vadd.f32 %v5598, %v5666
  %v5668 = vpop.f32.mrf.mxu0
  %5669 = vmatprep.mubr.f32.mxu0 0.0
  %5670 = vmatmul.mubr.f32.gmra.mxu0 %v5573
  %v5671 = vpop.f32.mrf.mxu0
  %v5672 = vadd.f32 %v5598, %v5671
  %v5673 = vpop.f32.mrf.mxu0
  %5674 = vmatprep.mubr.f32.mxu0 0.0
  %5675 = vmatmul.mubr.f32.gmra.mxu0 %v5574
  %v5676 = vpop.f32.mrf.mxu0
  %v5677 = vadd.f32 %v5598, %v5676
  %v5678 = vpop.f32.mrf.mxu0
  %5679 = vdwg.mxu0
  %v5680 = vadd.f32 %v3021, %v5667
  %v5681 = vadd.f32 %v3022, %v5672
  %v5682 = vadd.f32 %v3023, %v5677
  %v5683 = vsel %vm250, %v5680, 0.0
  %5684 = vadd.xlane.f32.xlu0 %v5683
  %v5685 = vpop.xlane.xlu0 %5684
  %v5686 = vsel %vm250, %v5681, 0.0
  %5687 = vadd.xlane.f32.xlu0 %v5686
  %v5688 = vpop.xlane.xlu0 %5687
  %v5689 = vsel %vm250, %v5682, 0.0
  %5690 = vadd.xlane.f32.xlu0 %v5689
  %v5691 = vpop.xlane.xlu0 %5690
  %v5692 = vmul.f32 %v5685, %v260
  %v5693 = vmul.f32 %v5688, %v260
  %v5694 = vmul.f32 %v5691, %v260
  %v5695 = vsub.f32 %v5680, %v5692
  %v5696 = vsub.f32 %v5681, %v5693
  %v5697 = vsub.f32 %v5682, %v5694
  %v5698 = vmul.f32 %v5695, %v5695
  %v5699 = vmul.f32 %v5696, %v5696
  %v5700 = vmul.f32 %v5697, %v5697
  %v5701 = vsel %vm250, %v5698, 0.0
  %5702 = vadd.xlane.f32.xlu0 %v5701
  %v5703 = vpop.xlane.xlu0 %5702
  %v5704 = vsel %vm250, %v5699, 0.0
  %5705 = vadd.xlane.f32.xlu0 %v5704
  %v5706 = vpop.xlane.xlu0 %5705
  %v5707 = vsel %vm250, %v5700, 0.0
  %5708 = vadd.xlane.f32.xlu0 %v5707
  %v5709 = vpop.xlane.xlu0 %5708
  %v5710 = vmul.f32 %v5703, %v260
  %v5711 = vmul.f32 %v5706, %v260
  %v5712 = vmul.f32 %v5709, %v260
  %v5713 = vadd.f32 %v5710, 1e-05
  %v5714 = vadd.f32 %v5711, 1e-05
  %v5715 = vadd.f32 %v5712, 1e-05
  %v5716 = vrsqrt.pop %v5713
  %v5717 = vrsqrt.pop %v5714
  %v5718 = vrsqrt.pop %v5715
  %v5719 = vmul.f32 %v5695, %v5716
  %v5720 = vmul.f32 %v5696, %v5717
  %v5721 = vmul.f32 %v5697, %v5718
  %v5722 = vmul.f32 %v5719, %v5459
  %v5723 = vmul.f32 %v5720, %v5459
  %v5724 = vmul.f32 %v5721, %v5459
  %v5725 = vadd.f32 %v5722, %v5466
  %v5726 = vadd.f32 %v5723, %v5466
  %v5727 = vadd.f32 %v5724, %v5466
  %5728 = vst.msk [vmem:[%s13] sm:$0xff] %vm250, %v5725
  %vm5729 = vcmask 257024
  %5730 = vst.msk [vmem:[%s13 + $0x8] sm:$0xf] %vm5729, %v5726
  %s5731 = scalar_lea.vmem %s13, 16
  %vm5732 = vcmask 261124
  %5733 = vst.msk [vmem:[%s5731 - $0x4] sm:$0xf0] %vm5732, %v5726
  %5734 = vst.msk [vmem:[%s5731 + $0x4] sm:$0xff] %vm250, %v5727
  // Predicated region
  $region54: #{encoder_forward.1} parent=0 // pred_check
    _
  $region55: #{encoder_forward.1} parent=0 // pred_check_branch
    %5736 = sbr.rel (0) target = $region57
  $region56: #{encoder_forward.1} parent=0 // pred_region
    _
  $region57: #{encoder_forward.1} parent=0 // pred_fallthru
    _
  // Predicated region
  $region58: #{encoder_forward.1} parent=0 // pred_check
    _
  $region59: #{encoder_forward.1} parent=0 // pred_check_branch
    %5738 = sbr.rel (0) target = $region61
  $region60: #{encoder_forward.1} parent=0 // pred_region
    _
  $region61: #{encoder_forward.1} parent=0 // pred_fallthru
    _

</llo_original>
